<compile_context>
chip_gen: v6e
topology: v6e:2x2x1
jax: 0.10.0
libtpu: 0.0.40
codegen_flags: <defaults>
</compile_context>

<pallas_src>
import jax
import jax.numpy as jnp
from jax.experimental import pallas as pl
from jax.experimental.pallas import tpu as pltpu

LANES = 1024          # flattened 32x32 padded-image lane space
PAD = 128             # lane-aligned zero pad on the left of every buffer
BUFW = 1536           # PAD + LANES + slack for the largest (+264) tap offset


# --------------------------------------------------------------------------
# Fused per-image forward-pass kernel (grid axis = batch).
# --------------------------------------------------------------------------
def _net2_kernel(x_ref, w1_ref, b1_ref, wr1_ref, br1_ref, wr2_ref, br2_ref,
                 w2_ref, b2_ref, wf1_ref, bf1_ref, wf2_ref, bf2_ref,
                 wf3_ref, bf3_ref, mask_ref, o_ref,
                 buf_a, buf_b, buf_c, buf_d):
    f32 = jnp.float32
    relu = lambda v: jnp.maximum(v, 0.0)

    # Zero the window buffers: their pad regions must read back exact zeros
    # (they implement the convolution zero-padding).  ~64 full-vreg stores.
    buf_a[...] = jnp.zeros(buf_a.shape, f32)
    buf_b[...] = jnp.zeros(buf_b.shape, f32)
    buf_c[...] = jnp.zeros(buf_c.shape, f32)
    buf_d[...] = jnp.zeros(buf_d.shape, f32)

    mask = mask_ref[...]                                    # (1, 1024) valid 14x14 lanes

    # ---- conv1: 1->6ch, 5x5, pad 2 (input pre-padded), ReLU ----------------
    # cin = 1, so a VPU tap accumulation (25 broadcast FMAs on (8,1024)) beats
    # a K=25 MXU pass.  Output pixel (i,j) lives at lane 32*i + j.
    w1 = w1_ref[...]                                        # (8, 25), rows 6..7 zero
    acc = jnp.zeros((8, LANES), f32)
    for di in range(5):
        for dj in range(5):
            t = di * 5 + dj
            off = 32 * di + dj
            win = x_ref[0, :, off:off + LANES]              # (1, 1024)
            acc = acc + win * w1[:, t:t + 1]
    a1 = relu(acc + b1_ref[...])                            # (8, 1024)
    buf_b[:, PAD:PAD + LANES] = a1

    # ---- maxpool 2x2: pooled (i',j') at lane 64*i' + 2*j' -------------------
    p1 = jnp.maximum(
        jnp.maximum(buf_b[:, PAD + 0:PAD + 0 + LANES],
                    buf_b[:, PAD + 1:PAD + 1 + LANES]),
        jnp.maximum(buf_b[:, PAD + 32:PAD + 32 + LANES],
                    buf_b[:, PAD + 33:PAD + 33 + LANES]))
    h1 = p1 * mask                                          # zero all invalid lanes
    buf_a[:, PAD:PAD + LANES] = h1

    # ---- residual block: two 3x3 convs (pad 1), one MXU dot each -----------
    def conv3x3(src, w, b):
        pieces = []
        for di in range(3):
            for dj in range(3):
                off = 64 * (di - 1) + 2 * (dj - 1)          # may be negative
                pieces.append(src[:, PAD + off:PAD + off + LANES])   # (8, 1024)
        cols = jnp.concatenate(pieces, axis=0)              # (72, 1024), tile aligned
        return jnp.dot(w, cols, preferred_element_type=f32) + b

    ra = relu(conv3x3(buf_a, wr1_ref[...], br1_ref[...])) * mask
    buf_b[:, PAD:PAD + LANES] = ra
    identity = buf_a[:, PAD:PAD + LANES]
    rb = relu(conv3x3(buf_b, wr2_ref[...], br2_ref[...]) + identity)
    buf_a[:, PAD:PAD + LANES] = rb

    # ---- conv2: 6->16ch, 5x5, valid; single (16,200)@(200,1024) MXU dot ----
    pieces = []
    for di in range(5):
        for dj in range(5):
            off = 64 * di + 2 * dj
            pieces.append(buf_a[:, PAD + off:PAD + off + LANES])     # (8, 1024)
    cols2 = jnp.concatenate(pieces, axis=0)                 # (200, 1024)
    a2 = relu(jnp.dot(w2_ref[...], cols2, preferred_element_type=f32)
              + b2_ref[...])                                # (16, 1024)
    buf_c[:, PAD:PAD + LANES] = a2

    # ---- maxpool 2x2: pooled (i',j') at lane 128*i' + 4*j' ------------------
    p2 = jnp.maximum(
        jnp.maximum(buf_c[:, PAD + 0:PAD + 0 + LANES],
                    buf_c[:, PAD + 2:PAD + 2 + LANES]),
        jnp.maximum(buf_c[:, PAD + 64:PAD + 64 + LANES],
                    buf_c[:, PAD + 66:PAD + 66 + LANES]))
    buf_d[:, PAD:PAD + 896] = p2[:, 0:896]

    # ---- flatten (i',j',c) via 25 shifted (16,128) windows + FC stack ------
    fpieces = []
    for i in range(5):
        for j in range(5):
            off = 128 * i + 4 * j
            fpieces.append(buf_d[:, PAD + off:PAD + off + 128])      # (16, 128)
    cols_f = jnp.concatenate(fpieces, axis=0)               # (400, 128)
    h = relu(jnp.dot(wf1_ref[...], cols_f, preferred_element_type=f32)
             + bf1_ref[...])                                # (120, 128)
    h = relu(jnp.dot(wf2_ref[...], h, preferred_element_type=f32)
             + bf2_ref[...])                                # (84, 128)
    logits = jnp.dot(wf3_ref[...], h, preferred_element_type=f32) + bf3_ref[...]

    # ---- softmax over the 10 classes (sublane axis); lane 0 is the image ---
    m = jnp.max(logits, axis=0, keepdims=True)
    e = jnp.exp(logits - m)
    probs = e / jnp.sum(e, axis=0, keepdims=True)
    o_ref[0] = probs[:, 0:1]                                # (10, 1)


# --------------------------------------------------------------------------
# Host-side wrapper: weight repacking (one-off XLA) + the single pallas_call.
# --------------------------------------------------------------------------
def _const_spec(shape):
    zeros = (0,) * len(shape)
    return pl.BlockSpec(shape, lambda b, _z=zeros: _z)


def _conv_mat_cin8(w):
    """(Cout, Cin, kh, kw) -> (Cout, kh*kw*8), tap-major / Cin-inner, Cin padded to 8."""
    co, ci, kh, kw = w.shape
    m = jnp.transpose(w, (0, 2, 3, 1))                      # (co, kh, kw, ci)
    m = jnp.pad(m, ((0, 0), (0, 0), (0, 0), (0, 8 - ci)))
    return m.reshape(co, kh * kw * 8)


def net2_forward(params, x_nchw):
    n = x_nchw.shape[0]
    f32 = jnp.float32

    # Input: pad=2, flatten 32x32 onto lanes, right-pad to 1280 for tap windows.
    x = x_nchw.astype(f32).reshape(n, 28, 28)
    xpad = jnp.pad(x, ((0, 0), (2, 2), (2, 2)))             # (n, 32, 32)
    xflat = jnp.pad(xpad.reshape(n, 1, 32 * 32), ((0, 0), (0, 0), (0, 256)))

    # conv1 weights: (6,1,5,5) -> (8,25), output channels padded to 8.
    w1 = jnp.pad(params["conv1_w"].reshape(6, 25), ((0, 2), (0, 0)))
    b1 = jnp.pad(params["conv1_b"].reshape(6, 1), ((0, 2), (0, 0)))
    # residual-block 3x3 convs: (6,6,3,3) -> (8,72).
    wr1 = jnp.pad(_conv_mat_cin8(params["rb1a_w"]), ((0, 2), (0, 0)))
    br1 = jnp.pad(params["rb1a_b"].reshape(6, 1), ((0, 2), (0, 0)))
    wr2 = jnp.pad(_conv_mat_cin8(params["rb1b_w"]), ((0, 2), (0, 0)))
    br2 = jnp.pad(params["rb1b_b"].reshape(6, 1), ((0, 2), (0, 0)))
    # conv2: (16,6,5,5) -> (16,200).
    w2 = _conv_mat_cin8(params["conv2_w"])
    b2 = params["conv2_b"].reshape(16, 1)
    # fc1: PyTorch NCHW flatten f = c*25 + k  <->  kernel row order k*16 + c.
    wf1 = (params["fc1_w"].reshape(16, 25, 120)
           .transpose(1, 0, 2).reshape(400, 120).T)         # (120, 400)
    bf1 = params["fc1_b"].reshape(120, 1)
    wf2 = params["fc2_w"].T                                  # (84, 120)
    bf2 = params["fc2_b"].reshape(84, 1)
    wf3 = params["fc3_w"].T                                  # (10, 84)
    bf3 = params["fc3_b"].reshape(10, 1)

    # Mask of valid 14x14 grid lanes (lane = 64*i' + 2*j', i',j' in 0..13).
    lane = jnp.arange(1024)
    mask14 = (((lane % 2) == 0) & ((lane % 64) <= 26) & ((lane // 64) <= 13))
    mask14 = mask14.astype(f32).reshape(1, 1024)

    inputs = [xflat, w1, b1, wr1, br1, wr2, br2, w2, b2,
              wf1, bf1, wf2, bf2, wf3, bf3, mask14]

    in_specs = [pl.BlockSpec((1, 1, 1280), lambda b: (b, 0, 0))]
    in_specs += [_const_spec(a.shape) for a in inputs[1:]]

    out = pl.pallas_call(
        _net2_kernel,
        out_shape=jax.ShapeDtypeStruct((n, 10, 1), f32),
        grid=(n,),
        in_specs=in_specs,
        out_specs=pl.BlockSpec((1, 10, 1), lambda b: (b, 0, 0)),
        scratch_shapes=[
            pltpu.VMEM((8, BUFW), f32),     # buf_a: h1 / rb output windows
            pltpu.VMEM((8, BUFW), f32),     # buf_b: conv1 / rb-mid windows
            pltpu.VMEM((16, BUFW), f32),    # buf_c: conv2 output windows
            pltpu.VMEM((16, 1024), f32),    # buf_d: pooled conv2 (fc1 windows)
        ],
        compiler_params=pltpu.CompilerParams(
            dimension_semantics=("parallel",),
            vmem_limit_bytes=32 * 1024 * 1024,
        ),
    )(*inputs)
    return out.reshape(n, 10)


# --------------------------------------------------------------------------
# Parameters (PyTorch-style init) and a pure-JAX reference for validation.
# --------------------------------------------------------------------------
def init_params(key):
    ks = jax.random.split(key, 14)

    def u(k, shape, fan_in):
        bound = 1.0 / (fan_in ** 0.5)
        return jax.random.uniform(k, shape, jnp.float32, -bound, bound)

    return {
        "conv1_w": u(ks[0], (6, 1, 5, 5), 25), "conv1_b": u(ks[1], (6,), 25),
        "rb1a_w": u(ks[2], (6, 6, 3, 3), 54), "rb1a_b": u(ks[3], (6,), 54),
        "rb1b_w": u(ks[4], (6, 6, 3, 3), 54), "rb1b_b": u(ks[5], (6,), 54),
        "conv2_w": u(ks[6], (16, 6, 5, 5), 150), "conv2_b": u(ks[7], (16,), 150),
        "fc1_w": u(ks[8], (400, 120), 400), "fc1_b": u(ks[9], (120,), 400),
        "fc2_w": u(ks[10], (120, 84), 120), "fc2_b": u(ks[11], (84,), 120),
        "fc3_w": u(ks[12], (84, 10), 84), "fc3_b": u(ks[13], (10,), 84),
    }


def _ref_forward(params, x_nchw):
    prec = jax.lax.Precision.HIGHEST

    def conv(x, w, b, pad):
        out = jax.lax.conv_general_dilated(
            x, w, window_strides=(1, 1), padding=[(pad, pad), (pad, pad)],
            dimension_numbers=("NCHW", "OIHW", "NCHW"), precision=prec)
        return out + b.reshape(1, -1, 1, 1)

    def pool(x):
        return jax.lax.reduce_window(x, -jnp.inf, jax.lax.max,
                                     (1, 1, 2, 2), (1, 1, 2, 2), "VALID")

    out = pool(jax.nn.relu(conv(x_nchw, params["conv1_w"], params["conv1_b"], 2)))
    identity = out
    h = jax.nn.relu(conv(out, params["rb1a_w"], params["rb1a_b"], 1))
    out = jax.nn.relu(conv(h, params["rb1b_w"], params["rb1b_b"], 1) + identity)
    out = pool(jax.nn.relu(conv(out, params["conv2_w"], params["conv2_b"], 0)))
    feat = out.reshape(out.shape[0], -1)                    # PyTorch NCHW flatten
    h = jax.nn.relu(jnp.dot(feat, params["fc1_w"], precision=prec) + params["fc1_b"])
    h = jax.nn.relu(jnp.dot(h, params["fc2_w"], precision=prec) + params["fc2_b"])
    logits = jnp.dot(h, params["fc3_w"], precision=prec) + params["fc3_b"]
    return jax.nn.softmax(logits, axis=1)


if __name__ == "__main__":
    key = jax.random.PRNGKey(0)
    pkey, xkey = jax.random.split(key)
    params = init_params(pkey)

    # Architecture fixes img_size=28, num_channels=1 (fc1 expects 16*5*5 feats).
    x = jax.random.normal(xkey, (2, 1, 28, 28), dtype=jnp.float32)

    fwd = jax.jit(lambda inp: net2_forward(params, inp))
    out = jax.block_until_ready(fwd(x))

    assert out.shape == (2, 10), out.shape
    assert bool(jnp.allclose(jnp.sum(out, axis=1), 1.0, atol=1e-5))

    ref = _ref_forward(params, x)
    # Tightened from 2e-2: 1e-3 bounds MXU f32 multi-pass rounding while being
    # ~100x below the error signature of any layout / permutation bug.
    err = float(jnp.max(jnp.abs(out - ref)))
    assert bool(jnp.allclose(out, ref, atol=1e-3)), err

    print("KERNEL_OK")
</pallas_src>

<mosaic_0001>
module attributes {stable_mosaic.version = 11 : i64} {
  func.func @_net2_kernel(%arg0: i32, %arg1: memref<1x1x1280xf32, #tpu.memory_space<vmem>>, %arg2: memref<8x25xf32, #tpu.memory_space<vmem>>, %arg3: memref<8x1xf32, #tpu.memory_space<vmem>>, %arg4: memref<8x72xf32, #tpu.memory_space<vmem>>, %arg5: memref<8x1xf32, #tpu.memory_space<vmem>>, %arg6: memref<8x72xf32, #tpu.memory_space<vmem>>, %arg7: memref<8x1xf32, #tpu.memory_space<vmem>>, %arg8: memref<16x200xf32, #tpu.memory_space<vmem>>, %arg9: memref<16x1xf32, #tpu.memory_space<vmem>>, %arg10: memref<120x400xf32, #tpu.memory_space<vmem>>, %arg11: memref<120x1xf32, #tpu.memory_space<vmem>>, %arg12: memref<84x120xf32, #tpu.memory_space<vmem>>, %arg13: memref<84x1xf32, #tpu.memory_space<vmem>>, %arg14: memref<10x84xf32, #tpu.memory_space<vmem>>, %arg15: memref<10x1xf32, #tpu.memory_space<vmem>>, %arg16: memref<1x1024xf32, #tpu.memory_space<vmem>>, %arg17: memref<1x10x1xf32, #tpu.memory_space<vmem>>, %arg18: memref<8x1536xf32, #tpu.memory_space<vmem>>, %arg19: memref<8x1536xf32, #tpu.memory_space<vmem>>, %arg20: memref<16x1536xf32, #tpu.memory_space<vmem>>, %arg21: memref<16x1024xf32, #tpu.memory_space<vmem>>) attributes {dimension_semantics = [#tpu.dimension_semantics<parallel>], iteration_bounds = array<i64: 2>, scalar_prefetch = 0 : i64, scratch_operands = 4 : i64, tpu.core_type = #tpu.core_type<tc>, window_params = [{transform_indices = @transform_0, window_bounds = array<i64: 1, 1, 1280>}, {pipeline_mode = #tpu.pipeline_mode<synchronous>, transform_indices = @transform_1, window_bounds = array<i64: 8, 25>}, {pipeline_mode = #tpu.pipeline_mode<synchronous>, transform_indices = @transform_2, window_bounds = array<i64: 8, 1>}, {pipeline_mode = #tpu.pipeline_mode<synchronous>, transform_indices = @transform_3, window_bounds = array<i64: 8, 72>}, {pipeline_mode = #tpu.pipeline_mode<synchronous>, transform_indices = @transform_4, window_bounds = array<i64: 8, 1>}, {pipeline_mode = #tpu.pipeline_mode<synchronous>, transform_indices = @transform_5, window_bounds = array<i64: 8, 72>}, {pipeline_mode = #tpu.pipeline_mode<synchronous>, transform_indices = @transform_6, window_bounds = array<i64: 8, 1>}, {pipeline_mode = #tpu.pipeline_mode<synchronous>, transform_indices = @transform_7, window_bounds = array<i64: 16, 200>}, {pipeline_mode = #tpu.pipeline_mode<synchronous>, transform_indices = @transform_8, window_bounds = array<i64: 16, 1>}, {pipeline_mode = #tpu.pipeline_mode<synchronous>, transform_indices = @transform_9, window_bounds = array<i64: 120, 400>}, {pipeline_mode = #tpu.pipeline_mode<synchronous>, transform_indices = @transform_10, window_bounds = array<i64: 120, 1>}, {pipeline_mode = #tpu.pipeline_mode<synchronous>, transform_indices = @transform_11, window_bounds = array<i64: 84, 120>}, {pipeline_mode = #tpu.pipeline_mode<synchronous>, transform_indices = @transform_12, window_bounds = array<i64: 84, 1>}, {pipeline_mode = #tpu.pipeline_mode<synchronous>, transform_indices = @transform_13, window_bounds = array<i64: 10, 84>}, {pipeline_mode = #tpu.pipeline_mode<synchronous>, transform_indices = @transform_14, window_bounds = array<i64: 10, 1>}, {pipeline_mode = #tpu.pipeline_mode<synchronous>, transform_indices = @transform_15, window_bounds = array<i64: 1, 1024>}, {transform_indices = @transform_16, window_bounds = array<i64: 1, 10, 1>}]} {
    %cst = arith.constant 0.000000e+00 : f32
    %0 = vector.broadcast %cst : f32 to vector<8x1536xf32>
    %c0 = arith.constant 0 : index
    %c0_0 = arith.constant 0 : index
    %1 = vector.load %arg18[%c0, %c0_0] : memref<8x1536xf32, #tpu.memory_space<vmem>>, vector<8x1536xf32>
    tpu.vector_store %arg18[%c0, %c0_0], %0 {strides = array<i32>} : memref<8x1536xf32, #tpu.memory_space<vmem>>, vector<8x1536xf32>,
    %cst_1 = arith.constant 0.000000e+00 : f32
    %2 = vector.broadcast %cst_1 : f32 to vector<8x1536xf32>
    %c0_2 = arith.constant 0 : index
    %c0_3 = arith.constant 0 : index
    %3 = vector.load %arg19[%c0_2, %c0_3] : memref<8x1536xf32, #tpu.memory_space<vmem>>, vector<8x1536xf32>
    tpu.vector_store %arg19[%c0_2, %c0_3], %2 {strides = array<i32>} : memref<8x1536xf32, #tpu.memory_space<vmem>>, vector<8x1536xf32>,
    %cst_4 = arith.constant 0.000000e+00 : f32
    %4 = vector.broadcast %cst_4 : f32 to vector<16x1536xf32>
    %c0_5 = arith.constant 0 : index
    %c0_6 = arith.constant 0 : index
    %5 = vector.load %arg20[%c0_5, %c0_6] : memref<16x1536xf32, #tpu.memory_space<vmem>>, vector<16x1536xf32>
    tpu.vector_store %arg20[%c0_5, %c0_6], %4 {strides = array<i32>} : memref<16x1536xf32, #tpu.memory_space<vmem>>, vector<16x1536xf32>,
    %cst_7 = arith.constant 0.000000e+00 : f32
    %6 = vector.broadcast %cst_7 : f32 to vector<16x1024xf32>
    %c0_8 = arith.constant 0 : index
    %c0_9 = arith.constant 0 : index
    %7 = vector.load %arg21[%c0_8, %c0_9] : memref<16x1024xf32, #tpu.memory_space<vmem>>, vector<16x1024xf32>
    tpu.vector_store %arg21[%c0_8, %c0_9], %6 {strides = array<i32>} : memref<16x1024xf32, #tpu.memory_space<vmem>>, vector<16x1024xf32>,
    %c0_10 = arith.constant 0 : index
    %c0_11 = arith.constant 0 : index
    %8 = vector.load %arg16[%c0_10, %c0_11] : memref<1x1024xf32, #tpu.memory_space<vmem>>, vector<1x1024xf32>
    %c0_12 = arith.constant 0 : index
    %c0_13 = arith.constant 0 : index
    %9 = vector.load %arg2[%c0_12, %c0_13] : memref<8x25xf32, #tpu.memory_space<vmem>>, vector<8x25xf32>
    %cst_14 = arith.constant 0.000000e+00 : f32
    %10 = vector.broadcast %cst_14 : f32 to vector<8x1024xf32>
    %c0_15 = arith.constant 0 : index
    %c0_16 = arith.constant 0 : index
    %c0_17 = arith.constant 0 : index
    %11 = vector.load %arg1[%c0_15, %c0_16, %c0_17] : memref<1x1x1280xf32, #tpu.memory_space<vmem>>, vector<1x1x1024xf32>
    %12 = vector.shape_cast %11 : vector<1x1x1024xf32> to vector<1x1024xf32>
    %13 = vector.extract_strided_slice %9 {offsets = [0, 0], sizes = [8, 1], strides = [1, 1]} : vector<8x25xf32> to vector<8x1xf32>
    %14 = vector.broadcast %12 : vector<1x1024xf32> to vector<8x1024xf32>
    %15 = vector.broadcast %13 : vector<8x1xf32> to vector<8x1024xf32>
    %16 = arith.mulf %14, %15 : vector<8x1024xf32>
    %17 = arith.addf %10, %16 : vector<8x1024xf32>
    %c0_18 = arith.constant 0 : index
    %c0_19 = arith.constant 0 : index
    %c1 = arith.constant 1 : index
    %18 = vector.load %arg1[%c0_18, %c0_19, %c1] : memref<1x1x1280xf32, #tpu.memory_space<vmem>>, vector<1x1x1024xf32>
    %19 = vector.shape_cast %18 : vector<1x1x1024xf32> to vector<1x1024xf32>
    %20 = vector.extract_strided_slice %9 {offsets = [0, 1], sizes = [8, 1], strides = [1, 1]} : vector<8x25xf32> to vector<8x1xf32>
    %21 = vector.broadcast %19 : vector<1x1024xf32> to vector<8x1024xf32>
    %22 = vector.broadcast %20 : vector<8x1xf32> to vector<8x1024xf32>
    %23 = arith.mulf %21, %22 : vector<8x1024xf32>
    %24 = arith.addf %17, %23 : vector<8x1024xf32>
    %c0_20 = arith.constant 0 : index
    %c0_21 = arith.constant 0 : index
    %c2 = arith.constant 2 : index
    %25 = vector.load %arg1[%c0_20, %c0_21, %c2] : memref<1x1x1280xf32, #tpu.memory_space<vmem>>, vector<1x1x1024xf32>
    %26 = vector.shape_cast %25 : vector<1x1x1024xf32> to vector<1x1024xf32>
    %27 = vector.extract_strided_slice %9 {offsets = [0, 2], sizes = [8, 1], strides = [1, 1]} : vector<8x25xf32> to vector<8x1xf32>
    %28 = vector.broadcast %26 : vector<1x1024xf32> to vector<8x1024xf32>
    %29 = vector.broadcast %27 : vector<8x1xf32> to vector<8x1024xf32>
    %30 = arith.mulf %28, %29 : vector<8x1024xf32>
    %31 = arith.addf %24, %30 : vector<8x1024xf32>
    %c0_22 = arith.constant 0 : index
    %c0_23 = arith.constant 0 : index
    %c3 = arith.constant 3 : index
    %32 = vector.load %arg1[%c0_22, %c0_23, %c3] : memref<1x1x1280xf32, #tpu.memory_space<vmem>>, vector<1x1x1024xf32>
    %33 = vector.shape_cast %32 : vector<1x1x1024xf32> to vector<1x1024xf32>
    %34 = vector.extract_strided_slice %9 {offsets = [0, 3], sizes = [8, 1], strides = [1, 1]} : vector<8x25xf32> to vector<8x1xf32>
    %35 = vector.broadcast %33 : vector<1x1024xf32> to vector<8x1024xf32>
    %36 = vector.broadcast %34 : vector<8x1xf32> to vector<8x1024xf32>
    %37 = arith.mulf %35, %36 : vector<8x1024xf32>
    %38 = arith.addf %31, %37 : vector<8x1024xf32>
    %c0_24 = arith.constant 0 : index
    %c0_25 = arith.constant 0 : index
    %c4 = arith.constant 4 : index
    %39 = vector.load %arg1[%c0_24, %c0_25, %c4] : memref<1x1x1280xf32, #tpu.memory_space<vmem>>, vector<1x1x1024xf32>
    %40 = vector.shape_cast %39 : vector<1x1x1024xf32> to vector<1x1024xf32>
    %41 = vector.extract_strided_slice %9 {offsets = [0, 4], sizes = [8, 1], strides = [1, 1]} : vector<8x25xf32> to vector<8x1xf32>
    %42 = vector.broadcast %40 : vector<1x1024xf32> to vector<8x1024xf32>
    %43 = vector.broadcast %41 : vector<8x1xf32> to vector<8x1024xf32>
    %44 = arith.mulf %42, %43 : vector<8x1024xf32>
    %45 = arith.addf %38, %44 : vector<8x1024xf32>
    %c0_26 = arith.constant 0 : index
    %c0_27 = arith.constant 0 : index
    %c32 = arith.constant 32 : index
    %46 = vector.load %arg1[%c0_26, %c0_27, %c32] : memref<1x1x1280xf32, #tpu.memory_space<vmem>>, vector<1x1x1024xf32>
    %47 = vector.shape_cast %46 : vector<1x1x1024xf32> to vector<1x1024xf32>
    %48 = vector.extract_strided_slice %9 {offsets = [0, 5], sizes = [8, 1], strides = [1, 1]} : vector<8x25xf32> to vector<8x1xf32>
    %49 = vector.broadcast %47 : vector<1x1024xf32> to vector<8x1024xf32>
    %50 = vector.broadcast %48 : vector<8x1xf32> to vector<8x1024xf32>
    %51 = arith.mulf %49, %50 : vector<8x1024xf32>
    %52 = arith.addf %45, %51 : vector<8x1024xf32>
    %c0_28 = arith.constant 0 : index
    %c0_29 = arith.constant 0 : index
    %c33 = arith.constant 33 : index
    %53 = vector.load %arg1[%c0_28, %c0_29, %c33] : memref<1x1x1280xf32, #tpu.memory_space<vmem>>, vector<1x1x1024xf32>
    %54 = vector.shape_cast %53 : vector<1x1x1024xf32> to vector<1x1024xf32>
    %55 = vector.extract_strided_slice %9 {offsets = [0, 6], sizes = [8, 1], strides = [1, 1]} : vector<8x25xf32> to vector<8x1xf32>
    %56 = vector.broadcast %54 : vector<1x1024xf32> to vector<8x1024xf32>
    %57 = vector.broadcast %55 : vector<8x1xf32> to vector<8x1024xf32>
    %58 = arith.mulf %56, %57 : vector<8x1024xf32>
    %59 = arith.addf %52, %58 : vector<8x1024xf32>
    %c0_30 = arith.constant 0 : index
    %c0_31 = arith.constant 0 : index
    %c34 = arith.constant 34 : index
    %60 = vector.load %arg1[%c0_30, %c0_31, %c34] : memref<1x1x1280xf32, #tpu.memory_space<vmem>>, vector<1x1x1024xf32>
    %61 = vector.shape_cast %60 : vector<1x1x1024xf32> to vector<1x1024xf32>
    %62 = vector.extract_strided_slice %9 {offsets = [0, 7], sizes = [8, 1], strides = [1, 1]} : vector<8x25xf32> to vector<8x1xf32>
    %63 = vector.broadcast %61 : vector<1x1024xf32> to vector<8x1024xf32>
    %64 = vector.broadcast %62 : vector<8x1xf32> to vector<8x1024xf32>
    %65 = arith.mulf %63, %64 : vector<8x1024xf32>
    %66 = arith.addf %59, %65 : vector<8x1024xf32>
    %c0_32 = arith.constant 0 : index
    %c0_33 = arith.constant 0 : index
    %c35 = arith.constant 35 : index
    %67 = vector.load %arg1[%c0_32, %c0_33, %c35] : memref<1x1x1280xf32, #tpu.memory_space<vmem>>, vector<1x1x1024xf32>
    %68 = vector.shape_cast %67 : vector<1x1x1024xf32> to vector<1x1024xf32>
    %69 = vector.extract_strided_slice %9 {offsets = [0, 8], sizes = [8, 1], strides = [1, 1]} : vector<8x25xf32> to vector<8x1xf32>
    %70 = vector.broadcast %68 : vector<1x1024xf32> to vector<8x1024xf32>
    %71 = vector.broadcast %69 : vector<8x1xf32> to vector<8x1024xf32>
    %72 = arith.mulf %70, %71 : vector<8x1024xf32>
    %73 = arith.addf %66, %72 : vector<8x1024xf32>
    %c0_34 = arith.constant 0 : index
    %c0_35 = arith.constant 0 : index
    %c36 = arith.constant 36 : index
    %74 = vector.load %arg1[%c0_34, %c0_35, %c36] : memref<1x1x1280xf32, #tpu.memory_space<vmem>>, vector<1x1x1024xf32>
    %75 = vector.shape_cast %74 : vector<1x1x1024xf32> to vector<1x1024xf32>
    %76 = vector.extract_strided_slice %9 {offsets = [0, 9], sizes = [8, 1], strides = [1, 1]} : vector<8x25xf32> to vector<8x1xf32>
    %77 = vector.broadcast %75 : vector<1x1024xf32> to vector<8x1024xf32>
    %78 = vector.broadcast %76 : vector<8x1xf32> to vector<8x1024xf32>
    %79 = arith.mulf %77, %78 : vector<8x1024xf32>
    %80 = arith.addf %73, %79 : vector<8x1024xf32>
    %c0_36 = arith.constant 0 : index
    %c0_37 = arith.constant 0 : index
    %c64 = arith.constant 64 : index
    %81 = vector.load %arg1[%c0_36, %c0_37, %c64] : memref<1x1x1280xf32, #tpu.memory_space<vmem>>, vector<1x1x1024xf32>
    %82 = vector.shape_cast %81 : vector<1x1x1024xf32> to vector<1x1024xf32>
    %83 = vector.extract_strided_slice %9 {offsets = [0, 10], sizes = [8, 1], strides = [1, 1]} : vector<8x25xf32> to vector<8x1xf32>
    %84 = vector.broadcast %82 : vector<1x1024xf32> to vector<8x1024xf32>
    %85 = vector.broadcast %83 : vector<8x1xf32> to vector<8x1024xf32>
    %86 = arith.mulf %84, %85 : vector<8x1024xf32>
    %87 = arith.addf %80, %86 : vector<8x1024xf32>
    %c0_38 = arith.constant 0 : index
    %c0_39 = arith.constant 0 : index
    %c65 = arith.constant 65 : index
    %88 = vector.load %arg1[%c0_38, %c0_39, %c65] : memref<1x1x1280xf32, #tpu.memory_space<vmem>>, vector<1x1x1024xf32>
    %89 = vector.shape_cast %88 : vector<1x1x1024xf32> to vector<1x1024xf32>
    %90 = vector.extract_strided_slice %9 {offsets = [0, 11], sizes = [8, 1], strides = [1, 1]} : vector<8x25xf32> to vector<8x1xf32>
    %91 = vector.broadcast %89 : vector<1x1024xf32> to vector<8x1024xf32>
    %92 = vector.broadcast %90 : vector<8x1xf32> to vector<8x1024xf32>
    %93 = arith.mulf %91, %92 : vector<8x1024xf32>
    %94 = arith.addf %87, %93 : vector<8x1024xf32>
    %c0_40 = arith.constant 0 : index
    %c0_41 = arith.constant 0 : index
    %c66 = arith.constant 66 : index
    %95 = vector.load %arg1[%c0_40, %c0_41, %c66] : memref<1x1x1280xf32, #tpu.memory_space<vmem>>, vector<1x1x1024xf32>
    %96 = vector.shape_cast %95 : vector<1x1x1024xf32> to vector<1x1024xf32>
    %97 = vector.extract_strided_slice %9 {offsets = [0, 12], sizes = [8, 1], strides = [1, 1]} : vector<8x25xf32> to vector<8x1xf32>
    %98 = vector.broadcast %96 : vector<1x1024xf32> to vector<8x1024xf32>
    %99 = vector.broadcast %97 : vector<8x1xf32> to vector<8x1024xf32>
    %100 = arith.mulf %98, %99 : vector<8x1024xf32>
    %101 = arith.addf %94, %100 : vector<8x1024xf32>
    %c0_42 = arith.constant 0 : index
    %c0_43 = arith.constant 0 : index
    %c67 = arith.constant 67 : index
    %102 = vector.load %arg1[%c0_42, %c0_43, %c67] : memref<1x1x1280xf32, #tpu.memory_space<vmem>>, vector<1x1x1024xf32>
    %103 = vector.shape_cast %102 : vector<1x1x1024xf32> to vector<1x1024xf32>
    %104 = vector.extract_strided_slice %9 {offsets = [0, 13], sizes = [8, 1], strides = [1, 1]} : vector<8x25xf32> to vector<8x1xf32>
    %105 = vector.broadcast %103 : vector<1x1024xf32> to vector<8x1024xf32>
    %106 = vector.broadcast %104 : vector<8x1xf32> to vector<8x1024xf32>
    %107 = arith.mulf %105, %106 : vector<8x1024xf32>
    %108 = arith.addf %101, %107 : vector<8x1024xf32>
    %c0_44 = arith.constant 0 : index
    %c0_45 = arith.constant 0 : index
    %c68 = arith.constant 68 : index
    %109 = vector.load %arg1[%c0_44, %c0_45, %c68] : memref<1x1x1280xf32, #tpu.memory_space<vmem>>, vector<1x1x1024xf32>
    %110 = vector.shape_cast %109 : vector<1x1x1024xf32> to vector<1x1024xf32>
    %111 = vector.extract_strided_slice %9 {offsets = [0, 14], sizes = [8, 1], strides = [1, 1]} : vector<8x25xf32> to vector<8x1xf32>
    %112 = vector.broadcast %110 : vector<1x1024xf32> to vector<8x1024xf32>
    %113 = vector.broadcast %111 : vector<8x1xf32> to vector<8x1024xf32>
    %114 = arith.mulf %112, %113 : vector<8x1024xf32>
    %115 = arith.addf %108, %114 : vector<8x1024xf32>
    %c0_46 = arith.constant 0 : index
    %c0_47 = arith.constant 0 : index
    %c96 = arith.constant 96 : index
    %116 = vector.load %arg1[%c0_46, %c0_47, %c96] : memref<1x1x1280xf32, #tpu.memory_space<vmem>>, vector<1x1x1024xf32>
    %117 = vector.shape_cast %116 : vector<1x1x1024xf32> to vector<1x1024xf32>
    %118 = vector.extract_strided_slice %9 {offsets = [0, 15], sizes = [8, 1], strides = [1, 1]} : vector<8x25xf32> to vector<8x1xf32>
    %119 = vector.broadcast %117 : vector<1x1024xf32> to vector<8x1024xf32>
    %120 = vector.broadcast %118 : vector<8x1xf32> to vector<8x1024xf32>
    %121 = arith.mulf %119, %120 : vector<8x1024xf32>
    %122 = arith.addf %115, %121 : vector<8x1024xf32>
    %c0_48 = arith.constant 0 : index
    %c0_49 = arith.constant 0 : index
    %c97 = arith.constant 97 : index
    %123 = vector.load %arg1[%c0_48, %c0_49, %c97] : memref<1x1x1280xf32, #tpu.memory_space<vmem>>, vector<1x1x1024xf32>
    %124 = vector.shape_cast %123 : vector<1x1x1024xf32> to vector<1x1024xf32>
    %125 = vector.extract_strided_slice %9 {offsets = [0, 16], sizes = [8, 1], strides = [1, 1]} : vector<8x25xf32> to vector<8x1xf32>
    %126 = vector.broadcast %124 : vector<1x1024xf32> to vector<8x1024xf32>
    %127 = vector.broadcast %125 : vector<8x1xf32> to vector<8x1024xf32>
    %128 = arith.mulf %126, %127 : vector<8x1024xf32>
    %129 = arith.addf %122, %128 : vector<8x1024xf32>
    %c0_50 = arith.constant 0 : index
    %c0_51 = arith.constant 0 : index
    %c98 = arith.constant 98 : index
    %130 = vector.load %arg1[%c0_50, %c0_51, %c98] : memref<1x1x1280xf32, #tpu.memory_space<vmem>>, vector<1x1x1024xf32>
    %131 = vector.shape_cast %130 : vector<1x1x1024xf32> to vector<1x1024xf32>
    %132 = vector.extract_strided_slice %9 {offsets = [0, 17], sizes = [8, 1], strides = [1, 1]} : vector<8x25xf32> to vector<8x1xf32>
    %133 = vector.broadcast %131 : vector<1x1024xf32> to vector<8x1024xf32>
    %134 = vector.broadcast %132 : vector<8x1xf32> to vector<8x1024xf32>
    %135 = arith.mulf %133, %134 : vector<8x1024xf32>
    %136 = arith.addf %129, %135 : vector<8x1024xf32>
    %c0_52 = arith.constant 0 : index
    %c0_53 = arith.constant 0 : index
    %c99 = arith.constant 99 : index
    %137 = vector.load %arg1[%c0_52, %c0_53, %c99] : memref<1x1x1280xf32, #tpu.memory_space<vmem>>, vector<1x1x1024xf32>
    %138 = vector.shape_cast %137 : vector<1x1x1024xf32> to vector<1x1024xf32>
    %139 = vector.extract_strided_slice %9 {offsets = [0, 18], sizes = [8, 1], strides = [1, 1]} : vector<8x25xf32> to vector<8x1xf32>
    %140 = vector.broadcast %138 : vector<1x1024xf32> to vector<8x1024xf32>
    %141 = vector.broadcast %139 : vector<8x1xf32> to vector<8x1024xf32>
    %142 = arith.mulf %140, %141 : vector<8x1024xf32>
    %143 = arith.addf %136, %142 : vector<8x1024xf32>
    %c0_54 = arith.constant 0 : index
    %c0_55 = arith.constant 0 : index
    %c100 = arith.constant 100 : index
    %144 = vector.load %arg1[%c0_54, %c0_55, %c100] : memref<1x1x1280xf32, #tpu.memory_space<vmem>>, vector<1x1x1024xf32>
    %145 = vector.shape_cast %144 : vector<1x1x1024xf32> to vector<1x1024xf32>
    %146 = vector.extract_strided_slice %9 {offsets = [0, 19], sizes = [8, 1], strides = [1, 1]} : vector<8x25xf32> to vector<8x1xf32>
    %147 = vector.broadcast %145 : vector<1x1024xf32> to vector<8x1024xf32>
    %148 = vector.broadcast %146 : vector<8x1xf32> to vector<8x1024xf32>
    %149 = arith.mulf %147, %148 : vector<8x1024xf32>
    %150 = arith.addf %143, %149 : vector<8x1024xf32>
    %c0_56 = arith.constant 0 : index
    %c0_57 = arith.constant 0 : index
    %c128 = arith.constant 128 : index
    %151 = vector.load %arg1[%c0_56, %c0_57, %c128] : memref<1x1x1280xf32, #tpu.memory_space<vmem>>, vector<1x1x1024xf32>
    %152 = vector.shape_cast %151 : vector<1x1x1024xf32> to vector<1x1024xf32>
    %153 = vector.extract_strided_slice %9 {offsets = [0, 20], sizes = [8, 1], strides = [1, 1]} : vector<8x25xf32> to vector<8x1xf32>
    %154 = vector.broadcast %152 : vector<1x1024xf32> to vector<8x1024xf32>
    %155 = vector.broadcast %153 : vector<8x1xf32> to vector<8x1024xf32>
    %156 = arith.mulf %154, %155 : vector<8x1024xf32>
    %157 = arith.addf %150, %156 : vector<8x1024xf32>
    %c0_58 = arith.constant 0 : index
    %c0_59 = arith.constant 0 : index
    %c129 = arith.constant 129 : index
    %158 = vector.load %arg1[%c0_58, %c0_59, %c129] : memref<1x1x1280xf32, #tpu.memory_space<vmem>>, vector<1x1x1024xf32>
    %159 = vector.shape_cast %158 : vector<1x1x1024xf32> to vector<1x1024xf32>
    %160 = vector.extract_strided_slice %9 {offsets = [0, 21], sizes = [8, 1], strides = [1, 1]} : vector<8x25xf32> to vector<8x1xf32>
    %161 = vector.broadcast %159 : vector<1x1024xf32> to vector<8x1024xf32>
    %162 = vector.broadcast %160 : vector<8x1xf32> to vector<8x1024xf32>
    %163 = arith.mulf %161, %162 : vector<8x1024xf32>
    %164 = arith.addf %157, %163 : vector<8x1024xf32>
    %c0_60 = arith.constant 0 : index
    %c0_61 = arith.constant 0 : index
    %c130 = arith.constant 130 : index
    %165 = vector.load %arg1[%c0_60, %c0_61, %c130] : memref<1x1x1280xf32, #tpu.memory_space<vmem>>, vector<1x1x1024xf32>
    %166 = vector.shape_cast %165 : vector<1x1x1024xf32> to vector<1x1024xf32>
    %167 = vector.extract_strided_slice %9 {offsets = [0, 22], sizes = [8, 1], strides = [1, 1]} : vector<8x25xf32> to vector<8x1xf32>
    %168 = vector.broadcast %166 : vector<1x1024xf32> to vector<8x1024xf32>
    %169 = vector.broadcast %167 : vector<8x1xf32> to vector<8x1024xf32>
    %170 = arith.mulf %168, %169 : vector<8x1024xf32>
    %171 = arith.addf %164, %170 : vector<8x1024xf32>
    %c0_62 = arith.constant 0 : index
    %c0_63 = arith.constant 0 : index
    %c131 = arith.constant 131 : index
    %172 = vector.load %arg1[%c0_62, %c0_63, %c131] : memref<1x1x1280xf32, #tpu.memory_space<vmem>>, vector<1x1x1024xf32>
    %173 = vector.shape_cast %172 : vector<1x1x1024xf32> to vector<1x1024xf32>
    %174 = vector.extract_strided_slice %9 {offsets = [0, 23], sizes = [8, 1], strides = [1, 1]} : vector<8x25xf32> to vector<8x1xf32>
    %175 = vector.broadcast %173 : vector<1x1024xf32> to vector<8x1024xf32>
    %176 = vector.broadcast %174 : vector<8x1xf32> to vector<8x1024xf32>
    %177 = arith.mulf %175, %176 : vector<8x1024xf32>
    %178 = arith.addf %171, %177 : vector<8x1024xf32>
    %c0_64 = arith.constant 0 : index
    %c0_65 = arith.constant 0 : index
    %c132 = arith.constant 132 : index
    %179 = vector.load %arg1[%c0_64, %c0_65, %c132] : memref<1x1x1280xf32, #tpu.memory_space<vmem>>, vector<1x1x1024xf32>
    %180 = vector.shape_cast %179 : vector<1x1x1024xf32> to vector<1x1024xf32>
    %181 = vector.extract_strided_slice %9 {offsets = [0, 24], sizes = [8, 1], strides = [1, 1]} : vector<8x25xf32> to vector<8x1xf32>
    %182 = vector.broadcast %180 : vector<1x1024xf32> to vector<8x1024xf32>
    %183 = vector.broadcast %181 : vector<8x1xf32> to vector<8x1024xf32>
    %184 = arith.mulf %182, %183 : vector<8x1024xf32>
    %185 = arith.addf %178, %184 : vector<8x1024xf32>
    %c0_66 = arith.constant 0 : index
    %c0_67 = arith.constant 0 : index
    %186 = vector.load %arg3[%c0_66, %c0_67] : memref<8x1xf32, #tpu.memory_space<vmem>>, vector<8x1xf32>
    %187 = vector.broadcast %186 : vector<8x1xf32> to vector<8x1024xf32>
    %188 = arith.addf %185, %187 : vector<8x1024xf32>
    %cst_68 = arith.constant 0.000000e+00 : f32
    %189 = vector.broadcast %cst_68 : f32 to vector<8x1024xf32>
    %190 = arith.maximumf %188, %189 : vector<8x1024xf32>
    %c0_69 = arith.constant 0 : index
    %c128_70 = arith.constant 128 : index
    %191 = vector.load %arg19[%c0_69, %c128_70] : memref<8x1536xf32, #tpu.memory_space<vmem>>, vector<8x1024xf32>
    tpu.vector_store %arg19[%c0_69, %c128_70], %190 {strides = array<i32>} : memref<8x1536xf32, #tpu.memory_space<vmem>>, vector<8x1024xf32>,
    %c0_71 = arith.constant 0 : index
    %c128_72 = arith.constant 128 : index
    %192 = vector.load %arg19[%c0_71, %c128_72] : memref<8x1536xf32, #tpu.memory_space<vmem>>, vector<8x1024xf32>
    %c0_73 = arith.constant 0 : index
    %c129_74 = arith.constant 129 : index
    %193 = vector.load %arg19[%c0_73, %c129_74] : memref<8x1536xf32, #tpu.memory_space<vmem>>, vector<8x1024xf32>
    %194 = arith.maximumf %192, %193 : vector<8x1024xf32>
    %c0_75 = arith.constant 0 : index
    %c160 = arith.constant 160 : index
    %195 = vector.load %arg19[%c0_75, %c160] : memref<8x1536xf32, #tpu.memory_space<vmem>>, vector<8x1024xf32>
    %c0_76 = arith.constant 0 : index
    %c161 = arith.constant 161 : index
    %196 = vector.load %arg19[%c0_76, %c161] : memref<8x1536xf32, #tpu.memory_space<vmem>>, vector<8x1024xf32>
    %197 = arith.maximumf %195, %196 : vector<8x1024xf32>
    %198 = arith.maximumf %194, %197 : vector<8x1024xf32>
    %199 = vector.broadcast %8 : vector<1x1024xf32> to vector<8x1024xf32>
    %200 = arith.mulf %198, %199 : vector<8x1024xf32>
    %c0_77 = arith.constant 0 : index
    %c128_78 = arith.constant 128 : index
    %201 = vector.load %arg18[%c0_77, %c128_78] : memref<8x1536xf32, #tpu.memory_space<vmem>>, vector<8x1024xf32>
    tpu.vector_store %arg18[%c0_77, %c128_78], %200 {strides = array<i32>} : memref<8x1536xf32, #tpu.memory_space<vmem>>, vector<8x1024xf32>,
    %c0_79 = arith.constant 0 : index
    %c0_80 = arith.constant 0 : index
    %202 = vector.load %arg4[%c0_79, %c0_80] : memref<8x72xf32, #tpu.memory_space<vmem>>, vector<8x72xf32>
    %c0_81 = arith.constant 0 : index
    %c0_82 = arith.constant 0 : index
    %203 = vector.load %arg5[%c0_81, %c0_82] : memref<8x1xf32, #tpu.memory_space<vmem>>, vector<8x1xf32>
    %c0_83 = arith.constant 0 : index
    %c62 = arith.constant 62 : index
    %204 = vector.load %arg18[%c0_83, %c62] : memref<8x1536xf32, #tpu.memory_space<vmem>>, vector<8x1024xf32>
    %c0_84 = arith.constant 0 : index
    %c64_85 = arith.constant 64 : index
    %205 = vector.load %arg18[%c0_84, %c64_85] : memref<8x1536xf32, #tpu.memory_space<vmem>>, vector<8x1024xf32>
    %c0_86 = arith.constant 0 : index
    %c66_87 = arith.constant 66 : index
    %206 = vector.load %arg18[%c0_86, %c66_87] : memref<8x1536xf32, #tpu.memory_space<vmem>>, vector<8x1024xf32>
    %c0_88 = arith.constant 0 : index
    %c126 = arith.constant 126 : index
    %207 = vector.load %arg18[%c0_88, %c126] : memref<8x1536xf32, #tpu.memory_space<vmem>>, vector<8x1024xf32>
    %c0_89 = arith.constant 0 : index
    %c128_90 = arith.constant 128 : index
    %208 = vector.load %arg18[%c0_89, %c128_90] : memref<8x1536xf32, #tpu.memory_space<vmem>>, vector<8x1024xf32>
    %c0_91 = arith.constant 0 : index
    %c130_92 = arith.constant 130 : index
    %209 = vector.load %arg18[%c0_91, %c130_92] : memref<8x1536xf32, #tpu.memory_space<vmem>>, vector<8x1024xf32>
    %c0_93 = arith.constant 0 : index
    %c190 = arith.constant 190 : index
    %210 = vector.load %arg18[%c0_93, %c190] : memref<8x1536xf32, #tpu.memory_space<vmem>>, vector<8x1024xf32>
    %c0_94 = arith.constant 0 : index
    %c192 = arith.constant 192 : index
    %211 = vector.load %arg18[%c0_94, %c192] : memref<8x1536xf32, #tpu.memory_space<vmem>>, vector<8x1024xf32>
    %c0_95 = arith.constant 0 : index
    %c194 = arith.constant 194 : index
    %212 = vector.load %arg18[%c0_95, %c194] : memref<8x1536xf32, #tpu.memory_space<vmem>>, vector<8x1024xf32>
    %213 = tpu.concatenate %204, %205, %206, %207, %208, %209, %210, %211, %212 in 0 : vector<8x1024xf32>, vector<8x1024xf32>, vector<8x1024xf32>, vector<8x1024xf32>, vector<8x1024xf32>, vector<8x1024xf32>, vector<8x1024xf32>, vector<8x1024xf32>, vector<8x1024xf32> -> vector<72x1024xf32>
    %cst_96 = arith.constant dense<0.000000e+00> : vector<8x1024xf32>
    %214 = tpu.matmul %202, %213, %cst_96 {dimension_numbers = #tpu.dot_dimension_numbers<[1], [0], [0], [1], [0, 0, 1, 1], [], []>} : vector<8x72xf32>, vector<72x1024xf32>, vector<8x1024xf32> -> vector<8x1024xf32>
    %215 = vector.broadcast %203 : vector<8x1xf32> to vector<8x1024xf32>
    %216 = arith.addf %214, %215 : vector<8x1024xf32>
    %cst_97 = arith.constant 0.000000e+00 : f32
    %217 = vector.broadcast %cst_97 : f32 to vector<8x1024xf32>
    %218 = arith.maximumf %216, %217 : vector<8x1024xf32>
    %219 = vector.broadcast %8 : vector<1x1024xf32> to vector<8x1024xf32>
    %220 = arith.mulf %218, %219 : vector<8x1024xf32>
    %c0_98 = arith.constant 0 : index
    %c128_99 = arith.constant 128 : index
    %221 = vector.load %arg19[%c0_98, %c128_99] : memref<8x1536xf32, #tpu.memory_space<vmem>>, vector<8x1024xf32>
    tpu.vector_store %arg19[%c0_98, %c128_99], %220 {strides = array<i32>} : memref<8x1536xf32, #tpu.memory_space<vmem>>, vector<8x1024xf32>,
    %c0_100 = arith.constant 0 : index
    %c128_101 = arith.constant 128 : index
    %222 = vector.load %arg18[%c0_100, %c128_101] : memref<8x1536xf32, #tpu.memory_space<vmem>>, vector<8x1024xf32>
    %c0_102 = arith.constant 0 : index
    %c0_103 = arith.constant 0 : index
    %223 = vector.load %arg6[%c0_102, %c0_103] : memref<8x72xf32, #tpu.memory_space<vmem>>, vector<8x72xf32>
    %c0_104 = arith.constant 0 : index
    %c0_105 = arith.constant 0 : index
    %224 = vector.load %arg7[%c0_104, %c0_105] : memref<8x1xf32, #tpu.memory_space<vmem>>, vector<8x1xf32>
    %c0_106 = arith.constant 0 : index
    %c62_107 = arith.constant 62 : index
    %225 = vector.load %arg19[%c0_106, %c62_107] : memref<8x1536xf32, #tpu.memory_space<vmem>>, vector<8x1024xf32>
    %c0_108 = arith.constant 0 : index
    %c64_109 = arith.constant 64 : index
    %226 = vector.load %arg19[%c0_108, %c64_109] : memref<8x1536xf32, #tpu.memory_space<vmem>>, vector<8x1024xf32>
    %c0_110 = arith.constant 0 : index
    %c66_111 = arith.constant 66 : index
    %227 = vector.load %arg19[%c0_110, %c66_111] : memref<8x1536xf32, #tpu.memory_space<vmem>>, vector<8x1024xf32>
    %c0_112 = arith.constant 0 : index
    %c126_113 = arith.constant 126 : index
    %228 = vector.load %arg19[%c0_112, %c126_113] : memref<8x1536xf32, #tpu.memory_space<vmem>>, vector<8x1024xf32>
    %c0_114 = arith.constant 0 : index
    %c128_115 = arith.constant 128 : index
    %229 = vector.load %arg19[%c0_114, %c128_115] : memref<8x1536xf32, #tpu.memory_space<vmem>>, vector<8x1024xf32>
    %c0_116 = arith.constant 0 : index
    %c130_117 = arith.constant 130 : index
    %230 = vector.load %arg19[%c0_116, %c130_117] : memref<8x1536xf32, #tpu.memory_space<vmem>>, vector<8x1024xf32>
    %c0_118 = arith.constant 0 : index
    %c190_119 = arith.constant 190 : index
    %231 = vector.load %arg19[%c0_118, %c190_119] : memref<8x1536xf32, #tpu.memory_space<vmem>>, vector<8x1024xf32>
    %c0_120 = arith.constant 0 : index
    %c192_121 = arith.constant 192 : index
    %232 = vector.load %arg19[%c0_120, %c192_121] : memref<8x1536xf32, #tpu.memory_space<vmem>>, vector<8x1024xf32>
    %c0_122 = arith.constant 0 : index
    %c194_123 = arith.constant 194 : index
    %233 = vector.load %arg19[%c0_122, %c194_123] : memref<8x1536xf32, #tpu.memory_space<vmem>>, vector<8x1024xf32>
    %234 = tpu.concatenate %225, %226, %227, %228, %229, %230, %231, %232, %233 in 0 : vector<8x1024xf32>, vector<8x1024xf32>, vector<8x1024xf32>, vector<8x1024xf32>, vector<8x1024xf32>, vector<8x1024xf32>, vector<8x1024xf32>, vector<8x1024xf32>, vector<8x1024xf32> -> vector<72x1024xf32>
    %cst_124 = arith.constant dense<0.000000e+00> : vector<8x1024xf32>
    %235 = tpu.matmul %223, %234, %cst_124 {dimension_numbers = #tpu.dot_dimension_numbers<[1], [0], [0], [1], [0, 0, 1, 1], [], []>} : vector<8x72xf32>, vector<72x1024xf32>, vector<8x1024xf32> -> vector<8x1024xf32>
    %236 = vector.broadcast %224 : vector<8x1xf32> to vector<8x1024xf32>
    %237 = arith.addf %235, %236 : vector<8x1024xf32>
    %238 = arith.addf %237, %222 : vector<8x1024xf32>
    %cst_125 = arith.constant 0.000000e+00 : f32
    %239 = vector.broadcast %cst_125 : f32 to vector<8x1024xf32>
    %240 = arith.maximumf %238, %239 : vector<8x1024xf32>
    %c0_126 = arith.constant 0 : index
    %c128_127 = arith.constant 128 : index
    %241 = vector.load %arg18[%c0_126, %c128_127] : memref<8x1536xf32, #tpu.memory_space<vmem>>, vector<8x1024xf32>
    tpu.vector_store %arg18[%c0_126, %c128_127], %240 {strides = array<i32>} : memref<8x1536xf32, #tpu.memory_space<vmem>>, vector<8x1024xf32>,
    %c0_128 = arith.constant 0 : index
    %c128_129 = arith.constant 128 : index
    %242 = vector.load %arg18[%c0_128, %c128_129] : memref<8x1536xf32, #tpu.memory_space<vmem>>, vector<8x1024xf32>
    %c0_130 = arith.constant 0 : index
    %c130_131 = arith.constant 130 : index
    %243 = vector.load %arg18[%c0_130, %c130_131] : memref<8x1536xf32, #tpu.memory_space<vmem>>, vector<8x1024xf32>
    %c0_132 = arith.constant 0 : index
    %c132_133 = arith.constant 132 : index
    %244 = vector.load %arg18[%c0_132, %c132_133] : memref<8x1536xf32, #tpu.memory_space<vmem>>, vector<8x1024xf32>
    %c0_134 = arith.constant 0 : index
    %c134 = arith.constant 134 : index
    %245 = vector.load %arg18[%c0_134, %c134] : memref<8x1536xf32, #tpu.memory_space<vmem>>, vector<8x1024xf32>
    %c0_135 = arith.constant 0 : index
    %c136 = arith.constant 136 : index
    %246 = vector.load %arg18[%c0_135, %c136] : memref<8x1536xf32, #tpu.memory_space<vmem>>, vector<8x1024xf32>
    %c0_136 = arith.constant 0 : index
    %c192_137 = arith.constant 192 : index
    %247 = vector.load %arg18[%c0_136, %c192_137] : memref<8x1536xf32, #tpu.memory_space<vmem>>, vector<8x1024xf32>
    %c0_138 = arith.constant 0 : index
    %c194_139 = arith.constant 194 : index
    %248 = vector.load %arg18[%c0_138, %c194_139] : memref<8x1536xf32, #tpu.memory_space<vmem>>, vector<8x1024xf32>
    %c0_140 = arith.constant 0 : index
    %c196 = arith.constant 196 : index
    %249 = vector.load %arg18[%c0_140, %c196] : memref<8x1536xf32, #tpu.memory_space<vmem>>, vector<8x1024xf32>
    %c0_141 = arith.constant 0 : index
    %c198 = arith.constant 198 : index
    %250 = vector.load %arg18[%c0_141, %c198] : memref<8x1536xf32, #tpu.memory_space<vmem>>, vector<8x1024xf32>
    %c0_142 = arith.constant 0 : index
    %c200 = arith.constant 200 : index
    %251 = vector.load %arg18[%c0_142, %c200] : memref<8x1536xf32, #tpu.memory_space<vmem>>, vector<8x1024xf32>
    %c0_143 = arith.constant 0 : index
    %c256 = arith.constant 256 : index
    %252 = vector.load %arg18[%c0_143, %c256] : memref<8x1536xf32, #tpu.memory_space<vmem>>, vector<8x1024xf32>
    %c0_144 = arith.constant 0 : index
    %c258 = arith.constant 258 : index
    %253 = vector.load %arg18[%c0_144, %c258] : memref<8x1536xf32, #tpu.memory_space<vmem>>, vector<8x1024xf32>
    %c0_145 = arith.constant 0 : index
    %c260 = arith.constant 260 : index
    %254 = vector.load %arg18[%c0_145, %c260] : memref<8x1536xf32, #tpu.memory_space<vmem>>, vector<8x1024xf32>
    %c0_146 = arith.constant 0 : index
    %c262 = arith.constant 262 : index
    %255 = vector.load %arg18[%c0_146, %c262] : memref<8x1536xf32, #tpu.memory_space<vmem>>, vector<8x1024xf32>
    %c0_147 = arith.constant 0 : index
    %c264 = arith.constant 264 : index
    %256 = vector.load %arg18[%c0_147, %c264] : memref<8x1536xf32, #tpu.memory_space<vmem>>, vector<8x1024xf32>
    %c0_148 = arith.constant 0 : index
    %c320 = arith.constant 320 : index
    %257 = vector.load %arg18[%c0_148, %c320] : memref<8x1536xf32, #tpu.memory_space<vmem>>, vector<8x1024xf32>
    %c0_149 = arith.constant 0 : index
    %c322 = arith.constant 322 : index
    %258 = vector.load %arg18[%c0_149, %c322] : memref<8x1536xf32, #tpu.memory_space<vmem>>, vector<8x1024xf32>
    %c0_150 = arith.constant 0 : index
    %c324 = arith.constant 324 : index
    %259 = vector.load %arg18[%c0_150, %c324] : memref<8x1536xf32, #tpu.memory_space<vmem>>, vector<8x1024xf32>
    %c0_151 = arith.constant 0 : index
    %c326 = arith.constant 326 : index
    %260 = vector.load %arg18[%c0_151, %c326] : memref<8x1536xf32, #tpu.memory_space<vmem>>, vector<8x1024xf32>
    %c0_152 = arith.constant 0 : index
    %c328 = arith.constant 328 : index
    %261 = vector.load %arg18[%c0_152, %c328] : memref<8x1536xf32, #tpu.memory_space<vmem>>, vector<8x1024xf32>
    %c0_153 = arith.constant 0 : index
    %c384 = arith.constant 384 : index
    %262 = vector.load %arg18[%c0_153, %c384] : memref<8x1536xf32, #tpu.memory_space<vmem>>, vector<8x1024xf32>
    %c0_154 = arith.constant 0 : index
    %c386 = arith.constant 386 : index
    %263 = vector.load %arg18[%c0_154, %c386] : memref<8x1536xf32, #tpu.memory_space<vmem>>, vector<8x1024xf32>
    %c0_155 = arith.constant 0 : index
    %c388 = arith.constant 388 : index
    %264 = vector.load %arg18[%c0_155, %c388] : memref<8x1536xf32, #tpu.memory_space<vmem>>, vector<8x1024xf32>
    %c0_156 = arith.constant 0 : index
    %c390 = arith.constant 390 : index
    %265 = vector.load %arg18[%c0_156, %c390] : memref<8x1536xf32, #tpu.memory_space<vmem>>, vector<8x1024xf32>
    %c0_157 = arith.constant 0 : index
    %c392 = arith.constant 392 : index
    %266 = vector.load %arg18[%c0_157, %c392] : memref<8x1536xf32, #tpu.memory_space<vmem>>, vector<8x1024xf32>
    %267 = tpu.concatenate %242, %243, %244, %245, %246, %247, %248, %249, %250, %251, %252, %253, %254, %255, %256, %257 in 0 : vector<8x1024xf32>, vector<8x1024xf32>, vector<8x1024xf32>, vector<8x1024xf32>, vector<8x1024xf32>, vector<8x1024xf32>, vector<8x1024xf32>, vector<8x1024xf32>, vector<8x1024xf32>, vector<8x1024xf32>, vector<8x1024xf32>, vector<8x1024xf32>, vector<8x1024xf32>, vector<8x1024xf32>, vector<8x1024xf32>, vector<8x1024xf32> -> vector<128x1024xf32>
    %268 = tpu.concatenate %258, %259, %260, %261, %262, %263, %264, %265, %266 in 0 : vector<8x1024xf32>, vector<8x1024xf32>, vector<8x1024xf32>, vector<8x1024xf32>, vector<8x1024xf32>, vector<8x1024xf32>, vector<8x1024xf32>, vector<8x1024xf32>, vector<8x1024xf32> -> vector<72x1024xf32>
    %269 = tpu.concatenate %267, %268 in 0 : vector<128x1024xf32>, vector<72x1024xf32> -> vector<200x1024xf32>
    %c0_158 = arith.constant 0 : index
    %c0_159 = arith.constant 0 : index
    %270 = vector.load %arg8[%c0_158, %c0_159] : memref<16x200xf32, #tpu.memory_space<vmem>>, vector<16x200xf32>
    %cst_160 = arith.constant dense<0.000000e+00> : vector<16x1024xf32>
    %271 = tpu.matmul %270, %269, %cst_160 {dimension_numbers = #tpu.dot_dimension_numbers<[1], [0], [0], [1], [0, 0, 1, 1], [], []>} : vector<16x200xf32>, vector<200x1024xf32>, vector<16x1024xf32> -> vector<16x1024xf32>
    %c0_161 = arith.constant 0 : index
    %c0_162 = arith.constant 0 : index
    %272 = vector.load %arg9[%c0_161, %c0_162] : memref<16x1xf32, #tpu.memory_space<vmem>>, vector<16x1xf32>
    %273 = vector.broadcast %272 : vector<16x1xf32> to vector<16x1024xf32>
    %274 = arith.addf %271, %273 : vector<16x1024xf32>
    %cst_163 = arith.constant 0.000000e+00 : f32
    %275 = vector.broadcast %cst_163 : f32 to vector<16x1024xf32>
    %276 = arith.maximumf %274, %275 : vector<16x1024xf32>
    %c0_164 = arith.constant 0 : index
    %c128_165 = arith.constant 128 : index
    %277 = vector.load %arg20[%c0_164, %c128_165] : memref<16x1536xf32, #tpu.memory_space<vmem>>, vector<16x1024xf32>
    tpu.vector_store %arg20[%c0_164, %c128_165], %276 {strides = array<i32>} : memref<16x1536xf32, #tpu.memory_space<vmem>>, vector<16x1024xf32>,
    %c0_166 = arith.constant 0 : index
    %c128_167 = arith.constant 128 : index
    %278 = vector.load %arg20[%c0_166, %c128_167] : memref<16x1536xf32, #tpu.memory_space<vmem>>, vector<16x1024xf32>
    %c0_168 = arith.constant 0 : index
    %c130_169 = arith.constant 130 : index
    %279 = vector.load %arg20[%c0_168, %c130_169] : memref<16x1536xf32, #tpu.memory_space<vmem>>, vector<16x1024xf32>
    %280 = arith.maximumf %278, %279 : vector<16x1024xf32>
    %c0_170 = arith.constant 0 : index
    %c192_171 = arith.constant 192 : index
    %281 = vector.load %arg20[%c0_170, %c192_171] : memref<16x1536xf32, #tpu.memory_space<vmem>>, vector<16x1024xf32>
    %c0_172 = arith.constant 0 : index
    %c194_173 = arith.constant 194 : index
    %282 = vector.load %arg20[%c0_172, %c194_173] : memref<16x1536xf32, #tpu.memory_space<vmem>>, vector<16x1024xf32>
    %283 = arith.maximumf %281, %282 : vector<16x1024xf32>
    %284 = arith.maximumf %280, %283 : vector<16x1024xf32>
    %285 = vector.extract_strided_slice %284 {offsets = [0, 0], sizes = [16, 896], strides = [1, 1]} : vector<16x1024xf32> to vector<16x896xf32>
    %c0_174 = arith.constant 0 : index
    %c128_175 = arith.constant 128 : index
    %286 = vector.load %arg21[%c0_174, %c128_175] : memref<16x1024xf32, #tpu.memory_space<vmem>>, vector<16x896xf32>
    tpu.vector_store %arg21[%c0_174, %c128_175], %285 {strides = array<i32>} : memref<16x1024xf32, #tpu.memory_space<vmem>>, vector<16x896xf32>,
    %c0_176 = arith.constant 0 : index
    %c128_177 = arith.constant 128 : index
    %287 = vector.load %arg21[%c0_176, %c128_177] : memref<16x1024xf32, #tpu.memory_space<vmem>>, vector<16x128xf32>
    %c0_178 = arith.constant 0 : index
    %c132_179 = arith.constant 132 : index
    %288 = vector.load %arg21[%c0_178, %c132_179] : memref<16x1024xf32, #tpu.memory_space<vmem>>, vector<16x128xf32>
    %c0_180 = arith.constant 0 : index
    %c136_181 = arith.constant 136 : index
    %289 = vector.load %arg21[%c0_180, %c136_181] : memref<16x1024xf32, #tpu.memory_space<vmem>>, vector<16x128xf32>
    %c0_182 = arith.constant 0 : index
    %c140 = arith.constant 140 : index
    %290 = vector.load %arg21[%c0_182, %c140] : memref<16x1024xf32, #tpu.memory_space<vmem>>, vector<16x128xf32>
    %c0_183 = arith.constant 0 : index
    %c144 = arith.constant 144 : index
    %291 = vector.load %arg21[%c0_183, %c144] : memref<16x1024xf32, #tpu.memory_space<vmem>>, vector<16x128xf32>
    %c0_184 = arith.constant 0 : index
    %c256_185 = arith.constant 256 : index
    %292 = vector.load %arg21[%c0_184, %c256_185] : memref<16x1024xf32, #tpu.memory_space<vmem>>, vector<16x128xf32>
    %c0_186 = arith.constant 0 : index
    %c260_187 = arith.constant 260 : index
    %293 = vector.load %arg21[%c0_186, %c260_187] : memref<16x1024xf32, #tpu.memory_space<vmem>>, vector<16x128xf32>
    %c0_188 = arith.constant 0 : index
    %c264_189 = arith.constant 264 : index
    %294 = vector.load %arg21[%c0_188, %c264_189] : memref<16x1024xf32, #tpu.memory_space<vmem>>, vector<16x128xf32>
    %c0_190 = arith.constant 0 : index
    %c268 = arith.constant 268 : index
    %295 = vector.load %arg21[%c0_190, %c268] : memref<16x1024xf32, #tpu.memory_space<vmem>>, vector<16x128xf32>
    %c0_191 = arith.constant 0 : index
    %c272 = arith.constant 272 : index
    %296 = vector.load %arg21[%c0_191, %c272] : memref<16x1024xf32, #tpu.memory_space<vmem>>, vector<16x128xf32>
    %c0_192 = arith.constant 0 : index
    %c384_193 = arith.constant 384 : index
    %297 = vector.load %arg21[%c0_192, %c384_193] : memref<16x1024xf32, #tpu.memory_space<vmem>>, vector<16x128xf32>
    %c0_194 = arith.constant 0 : index
    %c388_195 = arith.constant 388 : index
    %298 = vector.load %arg21[%c0_194, %c388_195] : memref<16x1024xf32, #tpu.memory_space<vmem>>, vector<16x128xf32>
    %c0_196 = arith.constant 0 : index
    %c392_197 = arith.constant 392 : index
    %299 = vector.load %arg21[%c0_196, %c392_197] : memref<16x1024xf32, #tpu.memory_space<vmem>>, vector<16x128xf32>
    %c0_198 = arith.constant 0 : index
    %c396 = arith.constant 396 : index
    %300 = vector.load %arg21[%c0_198, %c396] : memref<16x1024xf32, #tpu.memory_space<vmem>>, vector<16x128xf32>
    %c0_199 = arith.constant 0 : index
    %c400 = arith.constant 400 : index
    %301 = vector.load %arg21[%c0_199, %c400] : memref<16x1024xf32, #tpu.memory_space<vmem>>, vector<16x128xf32>
    %c0_200 = arith.constant 0 : index
    %c512 = arith.constant 512 : index
    %302 = vector.load %arg21[%c0_200, %c512] : memref<16x1024xf32, #tpu.memory_space<vmem>>, vector<16x128xf32>
    %c0_201 = arith.constant 0 : index
    %c516 = arith.constant 516 : index
    %303 = vector.load %arg21[%c0_201, %c516] : memref<16x1024xf32, #tpu.memory_space<vmem>>, vector<16x128xf32>
    %c0_202 = arith.constant 0 : index
    %c520 = arith.constant 520 : index
    %304 = vector.load %arg21[%c0_202, %c520] : memref<16x1024xf32, #tpu.memory_space<vmem>>, vector<16x128xf32>
    %c0_203 = arith.constant 0 : index
    %c524 = arith.constant 524 : index
    %305 = vector.load %arg21[%c0_203, %c524] : memref<16x1024xf32, #tpu.memory_space<vmem>>, vector<16x128xf32>
    %c0_204 = arith.constant 0 : index
    %c528 = arith.constant 528 : index
    %306 = vector.load %arg21[%c0_204, %c528] : memref<16x1024xf32, #tpu.memory_space<vmem>>, vector<16x128xf32>
    %c0_205 = arith.constant 0 : index
    %c640 = arith.constant 640 : index
    %307 = vector.load %arg21[%c0_205, %c640] : memref<16x1024xf32, #tpu.memory_space<vmem>>, vector<16x128xf32>
    %c0_206 = arith.constant 0 : index
    %c644 = arith.constant 644 : index
    %308 = vector.load %arg21[%c0_206, %c644] : memref<16x1024xf32, #tpu.memory_space<vmem>>, vector<16x128xf32>
    %c0_207 = arith.constant 0 : index
    %c648 = arith.constant 648 : index
    %309 = vector.load %arg21[%c0_207, %c648] : memref<16x1024xf32, #tpu.memory_space<vmem>>, vector<16x128xf32>
    %c0_208 = arith.constant 0 : index
    %c652 = arith.constant 652 : index
    %310 = vector.load %arg21[%c0_208, %c652] : memref<16x1024xf32, #tpu.memory_space<vmem>>, vector<16x128xf32>
    %c0_209 = arith.constant 0 : index
    %c656 = arith.constant 656 : index
    %311 = vector.load %arg21[%c0_209, %c656] : memref<16x1024xf32, #tpu.memory_space<vmem>>, vector<16x128xf32>
    %312 = tpu.concatenate %287, %288, %289, %290, %291, %292, %293, %294, %295, %296, %297, %298, %299, %300, %301, %302 in 0 : vector<16x128xf32>, vector<16x128xf32>, vector<16x128xf32>, vector<16x128xf32>, vector<16x128xf32>, vector<16x128xf32>, vector<16x128xf32>, vector<16x128xf32>, vector<16x128xf32>, vector<16x128xf32>, vector<16x128xf32>, vector<16x128xf32>, vector<16x128xf32>, vector<16x128xf32>, vector<16x128xf32>, vector<16x128xf32> -> vector<256x128xf32>
    %313 = tpu.concatenate %303, %304, %305, %306, %307, %308, %309, %310, %311 in 0 : vector<16x128xf32>, vector<16x128xf32>, vector<16x128xf32>, vector<16x128xf32>, vector<16x128xf32>, vector<16x128xf32>, vector<16x128xf32>, vector<16x128xf32>, vector<16x128xf32> -> vector<144x128xf32>
    %314 = tpu.concatenate %312, %313 in 0 : vector<256x128xf32>, vector<144x128xf32> -> vector<400x128xf32>
    %c0_210 = arith.constant 0 : index
    %c0_211 = arith.constant 0 : index
    %315 = vector.load %arg10[%c0_210, %c0_211] : memref<120x400xf32, #tpu.memory_space<vmem>>, vector<120x400xf32>
    %cst_212 = arith.constant dense<0.000000e+00> : vector<120x128xf32>
    %316 = tpu.matmul %315, %314, %cst_212 {dimension_numbers = #tpu.dot_dimension_numbers<[1], [0], [0], [1], [0, 0, 1, 1], [], []>} : vector<120x400xf32>, vector<400x128xf32>, vector<120x128xf32> -> vector<120x128xf32>
    %c0_213 = arith.constant 0 : index
    %c0_214 = arith.constant 0 : index
    %317 = vector.load %arg11[%c0_213, %c0_214] : memref<120x1xf32, #tpu.memory_space<vmem>>, vector<120x1xf32>
    %318 = vector.broadcast %317 : vector<120x1xf32> to vector<120x128xf32>
    %319 = arith.addf %316, %318 : vector<120x128xf32>
    %cst_215 = arith.constant 0.000000e+00 : f32
    %320 = vector.broadcast %cst_215 : f32 to vector<120x128xf32>
    %321 = arith.maximumf %319, %320 : vector<120x128xf32>
    %c0_216 = arith.constant 0 : index
    %c0_217 = arith.constant 0 : index
    %322 = vector.load %arg12[%c0_216, %c0_217] : memref<84x120xf32, #tpu.memory_space<vmem>>, vector<84x120xf32>
    %cst_218 = arith.constant dense<0.000000e+00> : vector<84x128xf32>
    %323 = tpu.matmul %322, %321, %cst_218 {dimension_numbers = #tpu.dot_dimension_numbers<[1], [0], [0], [1], [0, 0, 1, 1], [], []>} : vector<84x120xf32>, vector<120x128xf32>, vector<84x128xf32> -> vector<84x128xf32>
    %c0_219 = arith.constant 0 : index
    %c0_220 = arith.constant 0 : index
    %324 = vector.load %arg13[%c0_219, %c0_220] : memref<84x1xf32, #tpu.memory_space<vmem>>, vector<84x1xf32>
    %325 = vector.broadcast %324 : vector<84x1xf32> to vector<84x128xf32>
    %326 = arith.addf %323, %325 : vector<84x128xf32>
    %cst_221 = arith.constant 0.000000e+00 : f32
    %327 = vector.broadcast %cst_221 : f32 to vector<84x128xf32>
    %328 = arith.maximumf %326, %327 : vector<84x128xf32>
    %c0_222 = arith.constant 0 : index
    %c0_223 = arith.constant 0 : index
    %329 = vector.load %arg14[%c0_222, %c0_223] : memref<10x84xf32, #tpu.memory_space<vmem>>, vector<10x84xf32>
    %cst_224 = arith.constant dense<0.000000e+00> : vector<10x128xf32>
    %330 = tpu.matmul %329, %328, %cst_224 {dimension_numbers = #tpu.dot_dimension_numbers<[1], [0], [0], [1], [0, 0, 1, 1], [], []>} : vector<10x84xf32>, vector<84x128xf32>, vector<10x128xf32> -> vector<10x128xf32>
    %c0_225 = arith.constant 0 : index
    %c0_226 = arith.constant 0 : index
    %331 = vector.load %arg15[%c0_225, %c0_226] : memref<10x1xf32, #tpu.memory_space<vmem>>, vector<10x1xf32>
    %332 = vector.broadcast %331 : vector<10x1xf32> to vector<10x128xf32>
    %333 = arith.addf %330, %332 : vector<10x128xf32>
    %cst_227 = arith.constant dense<0xFF800000> : vector<128xf32>
    %334 = vector.multi_reduction <maximumf>, %333, %cst_227 [0] : vector<10x128xf32> to vector<128xf32>
    %335 = vector.shape_cast %334 : vector<128xf32> to vector<1x128xf32>
    %336 = vector.broadcast %335 : vector<1x128xf32> to vector<10x128xf32>
    %337 = arith.subf %333, %336 : vector<10x128xf32>
    %338 = math.exp %337 : vector<10x128xf32>
    %cst_228 = arith.constant dense<0.000000e+00> : vector<128xf32>
    %339 = vector.multi_reduction <add>, %338, %cst_228 [0] : vector<10x128xf32> to vector<128xf32>
    %340 = vector.shape_cast %339 : vector<128xf32> to vector<1x128xf32>
    %341 = vector.broadcast %340 : vector<1x128xf32> to vector<10x128xf32>
    %342 = arith.divf %338, %341 : vector<10x128xf32>
    %343 = vector.extract_strided_slice %342 {offsets = [0, 0], sizes = [10, 1], strides = [1, 1]} : vector<10x128xf32> to vector<10x1xf32>
    %c0_229 = arith.constant 0 : index
    %c0_230 = arith.constant 0 : index
    %c0_231 = arith.constant 0 : index
    %344 = vector.load %arg17[%c0_229, %c0_230, %c0_231] : memref<1x10x1xf32, #tpu.memory_space<vmem>>, vector<1x10x1xf32>
    %345 = vector.shape_cast %344 : vector<1x10x1xf32> to vector<10x1xf32>
    %346 = vector.shape_cast %343 : vector<10x1xf32> to vector<1x10x1xf32>
    tpu.vector_store %arg17[%c0_229, %c0_230, %c0_231], %346 {strides = array<i32>} : memref<1x10x1xf32, #tpu.memory_space<vmem>>, vector<1x10x1xf32>,
    return
  }
  func.func @transform_0(%arg0: i32) -> (i32, i32, i32) {
    %c0_i32 = arith.constant 0 : i32
    %c0_i32_0 = arith.constant 0 : i32
    %c0_i32_1 = arith.constant 0 : i32
    return %arg0, %c0_i32, %c0_i32_0 : i32, i32, i32
  }
  func.func @transform_1(%arg0: i32) -> (i32, i32) {
    %c0_i32 = arith.constant 0 : i32
    %c0_i32_0 = arith.constant 0 : i32
    %c0_i32_1 = arith.constant 0 : i32
    return %c0_i32, %c0_i32_0 : i32, i32
  }
  func.func @transform_2(%arg0: i32) -> (i32, i32) {
    %c0_i32 = arith.constant 0 : i32
    %c0_i32_0 = arith.constant 0 : i32
    %c0_i32_1 = arith.constant 0 : i32
    return %c0_i32, %c0_i32_0 : i32, i32
  }
  func.func @transform_3(%arg0: i32) -> (i32, i32) {
    %c0_i32 = arith.constant 0 : i32
    %c0_i32_0 = arith.constant 0 : i32
    %c0_i32_1 = arith.constant 0 : i32
    return %c0_i32, %c0_i32_0 : i32, i32
  }
  func.func @transform_4(%arg0: i32) -> (i32, i32) {
    %c0_i32 = arith.constant 0 : i32
    %c0_i32_0 = arith.constant 0 : i32
    %c0_i32_1 = arith.constant 0 : i32
    return %c0_i32, %c0_i32_0 : i32, i32
  }
  func.func @transform_5(%arg0: i32) -> (i32, i32) {
    %c0_i32 = arith.constant 0 : i32
    %c0_i32_0 = arith.constant 0 : i32
    %c0_i32_1 = arith.constant 0 : i32
    return %c0_i32, %c0_i32_0 : i32, i32
  }
  func.func @transform_6(%arg0: i32) -> (i32, i32) {
    %c0_i32 = arith.constant 0 : i32
    %c0_i32_0 = arith.constant 0 : i32
    %c0_i32_1 = arith.constant 0 : i32
    return %c0_i32, %c0_i32_0 : i32, i32
  }
  func.func @transform_7(%arg0: i32) -> (i32, i32) {
    %c0_i32 = arith.constant 0 : i32
    %c0_i32_0 = arith.constant 0 : i32
    %c0_i32_1 = arith.constant 0 : i32
    return %c0_i32, %c0_i32_0 : i32, i32
  }
  func.func @transform_8(%arg0: i32) -> (i32, i32) {
    %c0_i32 = arith.constant 0 : i32
    %c0_i32_0 = arith.constant 0 : i32
    %c0_i32_1 = arith.constant 0 : i32
    return %c0_i32, %c0_i32_0 : i32, i32
  }
  func.func @transform_9(%arg0: i32) -> (i32, i32) {
    %c0_i32 = arith.constant 0 : i32
    %c0_i32_0 = arith.constant 0 : i32
    %c0_i32_1 = arith.constant 0 : i32
    return %c0_i32, %c0_i32_0 : i32, i32
  }
  func.func @transform_10(%arg0: i32) -> (i32, i32) {
    %c0_i32 = arith.constant 0 : i32
    %c0_i32_0 = arith.constant 0 : i32
    %c0_i32_1 = arith.constant 0 : i32
    return %c0_i32, %c0_i32_0 : i32, i32
  }
  func.func @transform_11(%arg0: i32) -> (i32, i32) {
    %c0_i32 = arith.constant 0 : i32
    %c0_i32_0 = arith.constant 0 : i32
    %c0_i32_1 = arith.constant 0 : i32
    return %c0_i32, %c0_i32_0 : i32, i32
  }
  func.func @transform_12(%arg0: i32) -> (i32, i32) {
    %c0_i32 = arith.constant 0 : i32
    %c0_i32_0 = arith.constant 0 : i32
    %c0_i32_1 = arith.constant 0 : i32
    return %c0_i32, %c0_i32_0 : i32, i32
  }
  func.func @transform_13(%arg0: i32) -> (i32, i32) {
    %c0_i32 = arith.constant 0 : i32
    %c0_i32_0 = arith.constant 0 : i32
    %c0_i32_1 = arith.constant 0 : i32
    return %c0_i32, %c0_i32_0 : i32, i32
  }
  func.func @transform_14(%arg0: i32) -> (i32, i32) {
    %c0_i32 = arith.constant 0 : i32
    %c0_i32_0 = arith.constant 0 : i32
    %c0_i32_1 = arith.constant 0 : i32
    return %c0_i32, %c0_i32_0 : i32, i32
  }
  func.func @transform_15(%arg0: i32) -> (i32, i32) {
    %c0_i32 = arith.constant 0 : i32
    %c0_i32_0 = arith.constant 0 : i32
    %c0_i32_1 = arith.constant 0 : i32
    return %c0_i32, %c0_i32_0 : i32, i32
  }
  func.func @transform_16(%arg0: i32) -> (i32, i32, i32) {
    %c0_i32 = arith.constant 0 : i32
    %c0_i32_0 = arith.constant 0 : i32
    %c0_i32_1 = arith.constant 0 : i32
    return %arg0, %c0_i32, %c0_i32_0 : i32, i32, i32
  }
}

</mosaic_0001>

<llo_original>
// kernel: _lambda_.1
$region0: #{_lambda_.1}
  #allocation0 [shape = 'u32[]', space=smem, size = 0x4, offset = 0x4, fixed_abs, tag = 'smem constant byte address 0x4 - core index']
  #allocation1 [shape = 'u32[144,128]{1,0:T(1,128)}', space=vmem, size = 0x12000, scoped, tag = 'internal scratch']
  #allocation2 [shape = 'f32[8,1536]{1,0:T(8,128)}', space=vmem, size = 0xc000, scoped, tag = 'scratch operand']
  #allocation3 [shape = 'f32[8,1536]{1,0:T(8,128)}', space=vmem, size = 0xc000, scoped, tag = 'scratch operand']
  #allocation4 [shape = 'f32[16,1536]{1,0:T(8,128)}', space=vmem, size = 0x18000, scoped, tag = 'scratch operand']
  #allocation5 [shape = 'f32[16,1024]{1,0:T(8,128)}', space=vmem, size = 0x10000, scoped, tag = 'scratch operand']
  %s0 = inlined_call_operand.vmem [shape: f32[2,1,1280], index: 0, kind: input, shape index: {}]
  %s1 = inlined_call_operand.vmem [shape: f32[8,25], index: 1, kind: input, shape index: {}]
  %s2 = inlined_call_operand.hbm [shape: f32[8,1], index: 2, kind: input, shape index: {}]
  %s3 = inlined_call_operand.hbm [shape: f32[8,72], index: 3, kind: input, shape index: {}]
  %s4 = inlined_call_operand.hbm [shape: f32[8,1], index: 4, kind: input, shape index: {}]
  %s5 = inlined_call_operand.hbm [shape: f32[8,72], index: 5, kind: input, shape index: {}]
  %s6 = inlined_call_operand.hbm [shape: f32[8,1], index: 6, kind: input, shape index: {}]
  %s7 = inlined_call_operand.hbm [shape: f32[16,200], index: 7, kind: input, shape index: {}]
  %s8 = inlined_call_operand.hbm [shape: f32[16,1], index: 8, kind: input, shape index: {}]
  %s9 = inlined_call_operand.vmem [shape: f32[120,400], index: 9, kind: input, shape index: {}]
  %s10 = inlined_call_operand.hbm [shape: f32[120,1], index: 10, kind: input, shape index: {}]
  %s11 = inlined_call_operand.hbm [shape: f32[84,120], index: 11, kind: input, shape index: {}]
  %s12 = inlined_call_operand.hbm [shape: f32[84,1], index: 12, kind: input, shape index: {}]
  %s13 = inlined_call_operand.hbm [shape: f32[10,84], index: 13, kind: input, shape index: {}]
  %s14 = inlined_call_operand.vmem [shape: f32[10,1], index: 14, kind: input, shape index: {}]
  %s15 = inlined_call_operand.vmem [shape: f32[1,1024], index: 15, kind: input, shape index: {}]
  %s16 = inlined_call_operand.vmem [shape: f32[2,10,1], index: 16, kind: output, shape index: {}]
  %s17 = sld [smem:[#allocation0]]
  $region141: #{_lambda_.1} parent=0
    _
  %s19 = ssub.s32 1, %s17
  %s20 = scalar_select 0, %s19, %s17
  $region1: #{_lambda_.1} parent=0
    #allocation6 [shape = 'u8[4096]{0}', space=vmem, size = 0x1000, scoped, tag = 'input window, operand 2, single buffered']
    #allocation7 [shape = 's32[2]{0}', space=sflag, size = 0x8, scoped, tag = 'scoped memory for _lambda_.1']
    #allocation8 [shape = 'u8[4096]{0}', space=vmem, size = 0x1000, scoped, tag = 'input window, operand 3, single buffered']
    #allocation9 [shape = 's32[1]{0}', space=sflag, size = 0x4, scoped, tag = 'scoped memory for _lambda_.1']
    #allocation10 [shape = 'u8[4096]{0}', space=vmem, size = 0x1000, scoped, tag = 'input window, operand 4, single buffered']
    #allocation11 [shape = 'u8[4096]{0}', space=vmem, size = 0x1000, scoped, tag = 'input window, operand 5, single buffered']
    #allocation12 [shape = 's32[1]{0}', space=sflag, size = 0x4, scoped, tag = 'scoped memory for _lambda_.1']
    #allocation13 [shape = 'u8[4096]{0}', space=vmem, size = 0x1000, scoped, tag = 'input window, operand 6, single buffered']
    #allocation14 [shape = 'u8[16384]{0}', space=vmem, size = 0x4000, scoped, tag = 'input window, operand 7, single buffered']
    #allocation15 [shape = 's32[1]{0}', space=sflag, size = 0x4, scoped, tag = 'scoped memory for _lambda_.1']
    #allocation16 [shape = 'u8[8192]{0}', space=vmem, size = 0x2000, scoped, tag = 'input window, operand 8, single buffered']
    #allocation17 [shape = 'u8[61440]{0}', space=vmem, size = 0xf000, scoped, tag = 'input window, operand 10, single buffered']
    #allocation18 [shape = 's32[1]{0}', space=sflag, size = 0x4, scoped, tag = 'scoped memory for _lambda_.1']
    #allocation19 [shape = 'u8[45056]{0}', space=vmem, size = 0xb000, scoped, tag = 'input window, operand 11, single buffered']
    #allocation20 [shape = 'u8[45056]{0}', space=vmem, size = 0xb000, scoped, tag = 'input window, operand 12, single buffered']
    #allocation21 [shape = 's32[1]{0}', space=sflag, size = 0x4, scoped, tag = 'scoped memory for _lambda_.1']
    #allocation22 [shape = 'u8[8192]{0}', space=vmem, size = 0x2000, scoped, tag = 'input window, operand 13, single buffered']
    %21 = vsyncpa [#allocation7], 0
    %22 = vsyncpa [#allocation9], 0
    %23 = vsyncpa [#allocation12], 0
    %24 = vsyncpa [#allocation15], 0
    %25 = vsyncpa [#allocation18], 0
    %26 = vsyncpa [#allocation21], 0
    loop: start=0, step=1, limit=4
    $region2: #{_lambda_.1} parent=1 // loop_pre_header
      _
    $region3: #{_lambda_.1} parent=1 // loop_header
      %s28 = sphi 0, %s32
      %p29 = scmp.ge.s32.totalorder %s28, 4
      %s38 = sphi 0, %s40
      %s41 = sphi 0, %s38
      %s42 = sphi 0, %s41
      %s58 = sphi 0, %s42
      %s62 = sphi 0, %s62
      %s64 = sphi 0, %s62
      %s65 = sphi 0, %s64
      %s79 = sphi 0, %s65
      %s83 = sphi 0, %s83
      %s85 = sphi 0, %s83
      %s86 = sphi 0, %s85
      %s100 = sphi 0, %s86
      %s104 = sphi 0, %s104
      %s106 = sphi 0, %s104
      %s107 = sphi 0, %s106
      %s121 = sphi 0, %s107
      %s125 = sphi 0, %s125
      %s127 = sphi 0, %s125
      %s128 = sphi 0, %s127
      %s142 = sphi 0, %s128
      %s146 = sphi 0, %s146
      %s148 = sphi 0, %s146
      %s149 = sphi 0, %s148
      %s163 = sphi 0, %s149
      %s167 = sphi 0, %s167
      %s169 = sphi 0, %s167
      %s170 = sphi 0, %s169
      %s184 = sphi 0, %s170
      %s188 = sphi 0, %s188
      %s190 = sphi 0, %s188
      %s191 = sphi 0, %s190
      %s205 = sphi 0, %s191
      %s209 = sphi 0, %s209
      %s211 = sphi 0, %s209
      %s212 = sphi 0, %s211
      %s226 = sphi 0, %s212
      %s230 = sphi 0, %s230
      %s232 = sphi 0, %s230
      %s233 = sphi 0, %s232
      %s247 = sphi 0, %s233
      %s251 = sphi 0, %s251
      %s253 = sphi 0, %s251
      %s254 = sphi 0, %s253
      %s268 = sphi 0, %s254
      %s272 = sphi 0, %s272
      %s274 = sphi 0, %s272
      %s275 = sphi 0, %s274
      %s289 = sphi 0, %s275
      %s293 = sphi 0, %s293
      %s295 = sphi 0, %s293
      %s296 = sphi 0, %s295
      %s310 = sphi 0, %s296
      %s314 = sphi 0, %s314
      %s316 = sphi 0, %s314
      %s317 = sphi 0, %s316
      %s331 = sphi 0, %s317
      %s335 = sphi 0, %s335
      %s337 = sphi 0, %s335
      %s338 = sphi 0, %s337
      %s352 = sphi 0, %s338
      %s356 = sphi 0, %s356
      %s358 = sphi 0, %s356
      %s359 = sphi 0, %s358
      %s373 = sphi 0, %s359
      %s379 = sphi 0, %s381
      %s382 = sphi 0, %s379
      %s383 = sphi 0, %s382
      %s399 = sphi 0, %s383
    $region4: #{_lambda_.1} parent=1 // loop_header_branch
      %31 = sbr.rel (%p29) target = $region8
    $region5: #{_lambda_.1} parent=1 // loop_body
      %s33 = ssub.s32 %s28, 1
      %s34 = ssub.s32 %s28, 2
      %s35 = sadd.s32 %s28, 1
      %s36 = ssub.s32 %s28, %s35
      %p37 = scmp.eq.s32.totalorder %s36, 0
      %s39 = sadd.s32 %s38, 1
      %s40 = scalar_select %p37, %s38, %s39
      %p43 = pneg %p37
      %p44 = scmp.eq.s32.totalorder %s28, 1
      %p45 = por %p43, %p44
      %p46 = scmp.ne.s32.totalorder %s38, %s41
      %p47 = scmp.eq.s32.totalorder %s28, 0
      %p48 = por %p46, %p47
      %p49 = scmp.ne.s32.totalorder %s38, %s41
      %p50 = scmp.eq.s32.totalorder %s33, 1
      %p51 = por %p49, %p50
      %p52 = scmp.ne.s32.totalorder %s41, %s42
      %p53 = scmp.eq.s32.totalorder %s33, 0
      %p54 = por %p52, %p53
      %p55 = scmp.ne.s32.totalorder %s41, %s42
      %p56 = scmp.eq.s32.totalorder %s34, 1
      %p57 = por %p55, %p56
      %p59 = scmp.ne.s32.totalorder %s42, %s58
      %p60 = scmp.eq.s32.totalorder %s34, 0
      %p61 = por %p59, %p60
      %s63 = sadd.s32 %s62, 1
      %p66 = scmp.eq.s32.totalorder %s28, 1
      %p67 = scmp.ne.s32.totalorder %s62, %s64
      %p68 = scmp.eq.s32.totalorder %s28, 0
      %p69 = por %p67, %p68
      %p70 = scmp.ne.s32.totalorder %s62, %s64
      %p71 = scmp.eq.s32.totalorder %s33, 1
      %p72 = por %p70, %p71
      %p73 = scmp.ne.s32.totalorder %s64, %s65
      %p74 = scmp.eq.s32.totalorder %s33, 0
      %p75 = por %p73, %p74
      %p76 = scmp.ne.s32.totalorder %s64, %s65
      %p77 = scmp.eq.s32.totalorder %s34, 1
      %p78 = por %p76, %p77
      %p80 = scmp.ne.s32.totalorder %s65, %s79
      %p81 = scmp.eq.s32.totalorder %s34, 0
      %p82 = por %p80, %p81
      %s84 = sadd.s32 %s83, 1
      %p87 = scmp.eq.s32.totalorder %s28, 1
      %p88 = scmp.ne.s32.totalorder %s83, %s85
      %p89 = scmp.eq.s32.totalorder %s28, 0
      %p90 = por %p88, %p89
      %p91 = scmp.ne.s32.totalorder %s83, %s85
      %p92 = scmp.eq.s32.totalorder %s33, 1
      %p93 = por %p91, %p92
      %p94 = scmp.ne.s32.totalorder %s85, %s86
      %p95 = scmp.eq.s32.totalorder %s33, 0
      %p96 = por %p94, %p95
      %p97 = scmp.ne.s32.totalorder %s85, %s86
      %p98 = scmp.eq.s32.totalorder %s34, 1
      %p99 = por %p97, %p98
      %p101 = scmp.ne.s32.totalorder %s86, %s100
      %p102 = scmp.eq.s32.totalorder %s34, 0
      %p103 = por %p101, %p102
      %s105 = sadd.s32 %s104, 1
      %p108 = scmp.eq.s32.totalorder %s28, 1
      %p109 = scmp.ne.s32.totalorder %s104, %s106
      %p110 = scmp.eq.s32.totalorder %s28, 0
      %p111 = por %p109, %p110
      %p112 = scmp.ne.s32.totalorder %s104, %s106
      %p113 = scmp.eq.s32.totalorder %s33, 1
      %p114 = por %p112, %p113
      %p115 = scmp.ne.s32.totalorder %s106, %s107
      %p116 = scmp.eq.s32.totalorder %s33, 0
      %p117 = por %p115, %p116
      %p118 = scmp.ne.s32.totalorder %s106, %s107
      %p119 = scmp.eq.s32.totalorder %s34, 1
      %p120 = por %p118, %p119
      %p122 = scmp.ne.s32.totalorder %s107, %s121
      %p123 = scmp.eq.s32.totalorder %s34, 0
      %p124 = por %p122, %p123
      %s126 = sadd.s32 %s125, 1
      %p129 = scmp.eq.s32.totalorder %s28, 1
      %p130 = scmp.ne.s32.totalorder %s125, %s127
      %p131 = scmp.eq.s32.totalorder %s28, 0
      %p132 = por %p130, %p131
      %p133 = scmp.ne.s32.totalorder %s125, %s127
      %p134 = scmp.eq.s32.totalorder %s33, 1
      %p135 = por %p133, %p134
      %p136 = scmp.ne.s32.totalorder %s127, %s128
      %p137 = scmp.eq.s32.totalorder %s33, 0
      %p138 = por %p136, %p137
      %p139 = scmp.ne.s32.totalorder %s127, %s128
      %p140 = scmp.eq.s32.totalorder %s34, 1
      %p141 = por %p139, %p140
      %p143 = scmp.ne.s32.totalorder %s128, %s142
      %p144 = scmp.eq.s32.totalorder %s34, 0
      %p145 = por %p143, %p144
      %s147 = sadd.s32 %s146, 1
      %p150 = scmp.eq.s32.totalorder %s28, 1
      %p151 = scmp.ne.s32.totalorder %s146, %s148
      %p152 = scmp.eq.s32.totalorder %s28, 0
      %p153 = por %p151, %p152
      %p154 = scmp.ne.s32.totalorder %s146, %s148
      %p155 = scmp.eq.s32.totalorder %s33, 1
      %p156 = por %p154, %p155
      %p157 = scmp.ne.s32.totalorder %s148, %s149
      %p158 = scmp.eq.s32.totalorder %s33, 0
      %p159 = por %p157, %p158
      %p160 = scmp.ne.s32.totalorder %s148, %s149
      %p161 = scmp.eq.s32.totalorder %s34, 1
      %p162 = por %p160, %p161
      %p164 = scmp.ne.s32.totalorder %s149, %s163
      %p165 = scmp.eq.s32.totalorder %s34, 0
      %p166 = por %p164, %p165
      %s168 = sadd.s32 %s167, 1
      %p171 = scmp.eq.s32.totalorder %s28, 1
      %p172 = scmp.ne.s32.totalorder %s167, %s169
      %p173 = scmp.eq.s32.totalorder %s28, 0
      %p174 = por %p172, %p173
      %p175 = scmp.ne.s32.totalorder %s167, %s169
      %p176 = scmp.eq.s32.totalorder %s33, 1
      %p177 = por %p175, %p176
      %p178 = scmp.ne.s32.totalorder %s169, %s170
      %p179 = scmp.eq.s32.totalorder %s33, 0
      %p180 = por %p178, %p179
      %p181 = scmp.ne.s32.totalorder %s169, %s170
      %p182 = scmp.eq.s32.totalorder %s34, 1
      %p183 = por %p181, %p182
      %p185 = scmp.ne.s32.totalorder %s170, %s184
      %p186 = scmp.eq.s32.totalorder %s34, 0
      %p187 = por %p185, %p186
      %s189 = sadd.s32 %s188, 1
      %p192 = scmp.eq.s32.totalorder %s28, 1
      %p193 = scmp.ne.s32.totalorder %s188, %s190
      %p194 = scmp.eq.s32.totalorder %s28, 0
      %p195 = por %p193, %p194
      %p196 = scmp.ne.s32.totalorder %s188, %s190
      %p197 = scmp.eq.s32.totalorder %s33, 1
      %p198 = por %p196, %p197
      %p199 = scmp.ne.s32.totalorder %s190, %s191
      %p200 = scmp.eq.s32.totalorder %s33, 0
      %p201 = por %p199, %p200
      %p202 = scmp.ne.s32.totalorder %s190, %s191
      %p203 = scmp.eq.s32.totalorder %s34, 1
      %p204 = por %p202, %p203
      %p206 = scmp.ne.s32.totalorder %s191, %s205
      %p207 = scmp.eq.s32.totalorder %s34, 0
      %p208 = por %p206, %p207
      %s210 = sadd.s32 %s209, 1
      %p213 = scmp.eq.s32.totalorder %s28, 1
      %p214 = scmp.ne.s32.totalorder %s209, %s211
      %p215 = scmp.eq.s32.totalorder %s28, 0
      %p216 = por %p214, %p215
      %p217 = scmp.ne.s32.totalorder %s209, %s211
      %p218 = scmp.eq.s32.totalorder %s33, 1
      %p219 = por %p217, %p218
      %p220 = scmp.ne.s32.totalorder %s211, %s212
      %p221 = scmp.eq.s32.totalorder %s33, 0
      %p222 = por %p220, %p221
      %p223 = scmp.ne.s32.totalorder %s211, %s212
      %p224 = scmp.eq.s32.totalorder %s34, 1
      %p225 = por %p223, %p224
      %p227 = scmp.ne.s32.totalorder %s212, %s226
      %p228 = scmp.eq.s32.totalorder %s34, 0
      %p229 = por %p227, %p228
      %s231 = sadd.s32 %s230, 1
      %p234 = scmp.eq.s32.totalorder %s28, 1
      %p235 = scmp.ne.s32.totalorder %s230, %s232
      %p236 = scmp.eq.s32.totalorder %s28, 0
      %p237 = por %p235, %p236
      %p238 = scmp.ne.s32.totalorder %s230, %s232
      %p239 = scmp.eq.s32.totalorder %s33, 1
      %p240 = por %p238, %p239
      %p241 = scmp.ne.s32.totalorder %s232, %s233
      %p242 = scmp.eq.s32.totalorder %s33, 0
      %p243 = por %p241, %p242
      %p244 = scmp.ne.s32.totalorder %s232, %s233
      %p245 = scmp.eq.s32.totalorder %s34, 1
      %p246 = por %p244, %p245
      %p248 = scmp.ne.s32.totalorder %s233, %s247
      %p249 = scmp.eq.s32.totalorder %s34, 0
      %p250 = por %p248, %p249
      %s252 = sadd.s32 %s251, 1
      %p255 = scmp.eq.s32.totalorder %s28, 1
      %p256 = scmp.ne.s32.totalorder %s251, %s253
      %p257 = scmp.eq.s32.totalorder %s28, 0
      %p258 = por %p256, %p257
      %p259 = scmp.ne.s32.totalorder %s251, %s253
      %p260 = scmp.eq.s32.totalorder %s33, 1
      %p261 = por %p259, %p260
      %p262 = scmp.ne.s32.totalorder %s253, %s254
      %p263 = scmp.eq.s32.totalorder %s33, 0
      %p264 = por %p262, %p263
      %p265 = scmp.ne.s32.totalorder %s253, %s254
      %p266 = scmp.eq.s32.totalorder %s34, 1
      %p267 = por %p265, %p266
      %p269 = scmp.ne.s32.totalorder %s254, %s268
      %p270 = scmp.eq.s32.totalorder %s34, 0
      %p271 = por %p269, %p270
      %s273 = sadd.s32 %s272, 1
      %p276 = scmp.eq.s32.totalorder %s28, 1
      %p277 = scmp.ne.s32.totalorder %s272, %s274
      %p278 = scmp.eq.s32.totalorder %s28, 0
      %p279 = por %p277, %p278
      %p280 = scmp.ne.s32.totalorder %s272, %s274
      %p281 = scmp.eq.s32.totalorder %s33, 1
      %p282 = por %p280, %p281
      %p283 = scmp.ne.s32.totalorder %s274, %s275
      %p284 = scmp.eq.s32.totalorder %s33, 0
      %p285 = por %p283, %p284
      %p286 = scmp.ne.s32.totalorder %s274, %s275
      %p287 = scmp.eq.s32.totalorder %s34, 1
      %p288 = por %p286, %p287
      %p290 = scmp.ne.s32.totalorder %s275, %s289
      %p291 = scmp.eq.s32.totalorder %s34, 0
      %p292 = por %p290, %p291
      %s294 = sadd.s32 %s293, 1
      %p297 = scmp.eq.s32.totalorder %s28, 1
      %p298 = scmp.ne.s32.totalorder %s293, %s295
      %p299 = scmp.eq.s32.totalorder %s28, 0
      %p300 = por %p298, %p299
      %p301 = scmp.ne.s32.totalorder %s293, %s295
      %p302 = scmp.eq.s32.totalorder %s33, 1
      %p303 = por %p301, %p302
      %p304 = scmp.ne.s32.totalorder %s295, %s296
      %p305 = scmp.eq.s32.totalorder %s33, 0
      %p306 = por %p304, %p305
      %p307 = scmp.ne.s32.totalorder %s295, %s296
      %p308 = scmp.eq.s32.totalorder %s34, 1
      %p309 = por %p307, %p308
      %p311 = scmp.ne.s32.totalorder %s296, %s310
      %p312 = scmp.eq.s32.totalorder %s34, 0
      %p313 = por %p311, %p312
      %s315 = sadd.s32 %s314, 1
      %p318 = scmp.eq.s32.totalorder %s28, 1
      %p319 = scmp.ne.s32.totalorder %s314, %s316
      %p320 = scmp.eq.s32.totalorder %s28, 0
      %p321 = por %p319, %p320
      %p322 = scmp.ne.s32.totalorder %s314, %s316
      %p323 = scmp.eq.s32.totalorder %s33, 1
      %p324 = por %p322, %p323
      %p325 = scmp.ne.s32.totalorder %s316, %s317
      %p326 = scmp.eq.s32.totalorder %s33, 0
      %p327 = por %p325, %p326
      %p328 = scmp.ne.s32.totalorder %s316, %s317
      %p329 = scmp.eq.s32.totalorder %s34, 1
      %p330 = por %p328, %p329
      %p332 = scmp.ne.s32.totalorder %s317, %s331
      %p333 = scmp.eq.s32.totalorder %s34, 0
      %p334 = por %p332, %p333
      %s336 = sadd.s32 %s335, 1
      %p339 = scmp.eq.s32.totalorder %s28, 1
      %p340 = scmp.ne.s32.totalorder %s335, %s337
      %p341 = scmp.eq.s32.totalorder %s28, 0
      %p342 = por %p340, %p341
      %p343 = scmp.ne.s32.totalorder %s335, %s337
      %p344 = scmp.eq.s32.totalorder %s33, 1
      %p345 = por %p343, %p344
      %p346 = scmp.ne.s32.totalorder %s337, %s338
      %p347 = scmp.eq.s32.totalorder %s33, 0
      %p348 = por %p346, %p347
      %p349 = scmp.ne.s32.totalorder %s337, %s338
      %p350 = scmp.eq.s32.totalorder %s34, 1
      %p351 = por %p349, %p350
      %p353 = scmp.ne.s32.totalorder %s338, %s352
      %p354 = scmp.eq.s32.totalorder %s34, 0
      %p355 = por %p353, %p354
      %s357 = sadd.s32 %s356, 1
      %p360 = scmp.eq.s32.totalorder %s28, 1
      %p361 = scmp.ne.s32.totalorder %s356, %s358
      %p362 = scmp.eq.s32.totalorder %s28, 0
      %p363 = por %p361, %p362
      %p364 = scmp.ne.s32.totalorder %s356, %s358
      %p365 = scmp.eq.s32.totalorder %s33, 1
      %p366 = por %p364, %p365
      %p367 = scmp.ne.s32.totalorder %s358, %s359
      %p368 = scmp.eq.s32.totalorder %s33, 0
      %p369 = por %p367, %p368
      %p370 = scmp.ne.s32.totalorder %s358, %s359
      %p371 = scmp.eq.s32.totalorder %s34, 1
      %p372 = por %p370, %p371
      %p374 = scmp.ne.s32.totalorder %s359, %s373
      %p375 = scmp.eq.s32.totalorder %s34, 0
      %p376 = por %p374, %p375
      %s377 = ssub.s32 %s28, %s35
      %p378 = scmp.eq.s32.totalorder %s377, 0
      %s380 = sadd.s32 %s379, 1
      %s381 = scalar_select %p378, %s379, %s380
      %p384 = pneg %p378
      %p385 = scmp.eq.s32.totalorder %s28, 1
      %p386 = por %p384, %p385
      %p387 = scmp.ne.s32.totalorder %s379, %s382
      %p388 = scmp.eq.s32.totalorder %s28, 0
      %p389 = por %p387, %p388
      %p390 = scmp.ne.s32.totalorder %s379, %s382
      %p391 = scmp.eq.s32.totalorder %s33, 1
      %p392 = por %p390, %p391
      %p393 = scmp.ne.s32.totalorder %s382, %s383
      %p394 = scmp.eq.s32.totalorder %s33, 0
      %p395 = por %p393, %p394
      %p396 = scmp.ne.s32.totalorder %s382, %s383
      %p397 = scmp.eq.s32.totalorder %s34, 1
      %p398 = por %p396, %p397
      %p400 = scmp.ne.s32.totalorder %s383, %s399
      %p401 = scmp.eq.s32.totalorder %s34, 0
      %p402 = por %p400, %p401
      %p403 = scmp.le.s32.totalorder 1, %s28
      %p404 = scmp.lt.s32.totalorder %s28, 3
      %p405 = pnand %p403, %p404
      %p406 = pneg %p405
      // Predicated region
      $region9: #{_lambda_.1} parent=5 // pred_check
        _
      $region10: #{_lambda_.1} parent=5 // pred_check_branch
        %408 = sbr.rel (%p405) target = $region12
      $region11: #{_lambda_.1} parent=5 // pred_region
        %s409 = ssub.s32 %s28, 1
        // Predicated region
        $region13: #{_lambda_.1} parent=11 // pred_check
          %p410 = pneg %p75
        $region14: #{_lambda_.1} parent=11 // pred_check_branch
          %412 = sbr.rel (%p410) target = $region16
        $region15: #{_lambda_.1} parent=11 // pred_region
          _
        $region16: #{_lambda_.1} parent=11 // pred_fallthru
          _
        // Predicated region
        $region17: #{_lambda_.1} parent=11 // pred_check
          %p413 = pneg %p96
        $region18: #{_lambda_.1} parent=11 // pred_check_branch
          %415 = sbr.rel (%p413) target = $region20
        $region19: #{_lambda_.1} parent=11 // pred_region
          %s417 = ssub.s32 128, 128
          %418 = vsyncadd [#allocation7], %s417
          %s420 = sshll.u32 [#allocation6], 4
          %s421 = int_to_ptr.vmem [resolvable:$true] %s420
          %423 = dma.hbm_to_vmem [thread:$0]  %s2, 128, %s421, [#allocation7]
        $region20: #{_lambda_.1} parent=11 // pred_fallthru
          _
        // Predicated region
        $region21: #{_lambda_.1} parent=11 // pred_check
          %p424 = pneg %p117
        $region22: #{_lambda_.1} parent=11 // pred_check_branch
          %426 = sbr.rel (%p424) target = $region24
        $region23: #{_lambda_.1} parent=11 // pred_region
          %s428 = ssub.s32 128, 128
          %429 = vsyncadd [#allocation9], %s428
          %s431 = sshll.u32 [#allocation8], 4
          %s432 = int_to_ptr.vmem [resolvable:$true] %s431
          %434 = dma.hbm_to_vmem [thread:$0]  %s3, 128, %s432, [#allocation9]
        $region24: #{_lambda_.1} parent=11 // pred_fallthru
          _
        // Predicated region
        $region25: #{_lambda_.1} parent=11 // pred_check
          %p435 = pneg %p138
        $region26: #{_lambda_.1} parent=11 // pred_check_branch
          %437 = sbr.rel (%p435) target = $region28
        $region27: #{_lambda_.1} parent=11 // pred_region
          %s439 = ssub.s32 128, 128
          %440 = vsyncadd [#allocation9], %s439
          %s442 = sshll.u32 [#allocation10], 4
          %s443 = int_to_ptr.vmem [resolvable:$true] %s442
          %445 = dma.hbm_to_vmem [thread:$0]  %s4, 128, %s443, [#allocation9]
        $region28: #{_lambda_.1} parent=11 // pred_fallthru
          _
        // Predicated region
        $region29: #{_lambda_.1} parent=11 // pred_check
          %p446 = pneg %p159
        $region30: #{_lambda_.1} parent=11 // pred_check_branch
          %448 = sbr.rel (%p446) target = $region32
        $region31: #{_lambda_.1} parent=11 // pred_region
          %s450 = ssub.s32 128, 128
          %451 = vsyncadd [#allocation12], %s450
          %s453 = sshll.u32 [#allocation11], 4
          %s454 = int_to_ptr.vmem [resolvable:$true] %s453
          %456 = dma.hbm_to_vmem [thread:$0]  %s5, 128, %s454, [#allocation12]
        $region32: #{_lambda_.1} parent=11 // pred_fallthru
          _
        // Predicated region
        $region33: #{_lambda_.1} parent=11 // pred_check
          %p457 = pneg %p180
        $region34: #{_lambda_.1} parent=11 // pred_check_branch
          %459 = sbr.rel (%p457) target = $region36
        $region35: #{_lambda_.1} parent=11 // pred_region
          %s461 = ssub.s32 128, 128
          %462 = vsyncadd [#allocation12], %s461
          %s464 = sshll.u32 [#allocation13], 4
          %s465 = int_to_ptr.vmem [resolvable:$true] %s464
          %467 = dma.hbm_to_vmem [thread:$0]  %s6, 128, %s465, [#allocation12]
        $region36: #{_lambda_.1} parent=11 // pred_fallthru
          _
        // Predicated region
        $region37: #{_lambda_.1} parent=11 // pred_check
          %p468 = pneg %p201
        $region38: #{_lambda_.1} parent=11 // pred_check_branch
          %470 = sbr.rel (%p468) target = $region40
        $region39: #{_lambda_.1} parent=11 // pred_region
          %s472 = ssub.s32 512, 512
          %473 = vsyncadd [#allocation15], %s472
          %s474 = sshll.u32 [#allocation14], 4
          %s475 = int_to_ptr.vmem [resolvable:$true] %s474
          %480 = dma.hbm_to_vmem [thread:$0]  %s7, 512, %s475, [#allocation15], 256, 256, 16
        $region40: #{_lambda_.1} parent=11 // pred_fallthru
          _
        // Predicated region
        $region41: #{_lambda_.1} parent=11 // pred_check
          %p481 = pneg %p222
        $region42: #{_lambda_.1} parent=11 // pred_check_branch
          %483 = sbr.rel (%p481) target = $region44
        $region43: #{_lambda_.1} parent=11 // pred_region
          %s485 = ssub.s32 256, 256
          %486 = vsyncadd [#allocation15], %s485
          %s487 = sshll.u32 [#allocation16], 4
          %s488 = int_to_ptr.vmem [resolvable:$true] %s487
          %493 = dma.hbm_to_vmem [thread:$0]  %s8, 256, %s488, [#allocation15], 128, 128, 8
        $region44: #{_lambda_.1} parent=11 // pred_fallthru
          _
        // Predicated region
        $region45: #{_lambda_.1} parent=11 // pred_check
          %p494 = pneg %p243
        $region46: #{_lambda_.1} parent=11 // pred_check_branch
          %496 = sbr.rel (%p494) target = $region48
        $region47: #{_lambda_.1} parent=11 // pred_region
          _
        $region48: #{_lambda_.1} parent=11 // pred_fallthru
          _
        // Predicated region
        $region49: #{_lambda_.1} parent=11 // pred_check
          %p497 = pneg %p264
        $region50: #{_lambda_.1} parent=11 // pred_check_branch
          %499 = sbr.rel (%p497) target = $region52
        $region51: #{_lambda_.1} parent=11 // pred_region
          %s501 = ssub.s32 1920, 1920
          %502 = vsyncadd [#allocation18], %s501
          %s503 = sshll.u32 [#allocation17], 4
          %s504 = int_to_ptr.vmem [resolvable:$true] %s503
          %509 = dma.hbm_to_vmem [thread:$0]  %s10, 1920, %s504, [#allocation18], 128, 128, 8
        $region52: #{_lambda_.1} parent=11 // pred_fallthru
          _
        // Predicated region
        $region53: #{_lambda_.1} parent=11 // pred_check
          %p510 = pneg %p285
        $region54: #{_lambda_.1} parent=11 // pred_check_branch
          %512 = sbr.rel (%p510) target = $region56
        $region55: #{_lambda_.1} parent=11 // pred_region
          %s514 = ssub.s32 1408, 1408
          %515 = vsyncadd [#allocation18], %s514
          %s516 = sshll.u32 [#allocation19], 4
          %s517 = int_to_ptr.vmem [resolvable:$true] %s516
          %522 = dma.hbm_to_vmem [thread:$0]  %s11, 1408, %s517, [#allocation18], 128, 128, 8
        $region56: #{_lambda_.1} parent=11 // pred_fallthru
          _
        // Predicated region
        $region57: #{_lambda_.1} parent=11 // pred_check
          %p523 = pneg %p306
        $region58: #{_lambda_.1} parent=11 // pred_check_branch
          %525 = sbr.rel (%p523) target = $region60
        $region59: #{_lambda_.1} parent=11 // pred_region
          %s527 = ssub.s32 1408, 1408
          %528 = vsyncadd [#allocation21], %s527
          %s529 = sshll.u32 [#allocation20], 4
          %s530 = int_to_ptr.vmem [resolvable:$true] %s529
          %535 = dma.hbm_to_vmem [thread:$0]  %s12, 1408, %s530, [#allocation21], 128, 128, 8
        $region60: #{_lambda_.1} parent=11 // pred_fallthru
          _
        // Predicated region
        $region61: #{_lambda_.1} parent=11 // pred_check
          %p536 = pneg %p327
        $region62: #{_lambda_.1} parent=11 // pred_check_branch
          %538 = sbr.rel (%p536) target = $region64
        $region63: #{_lambda_.1} parent=11 // pred_region
          %s540 = ssub.s32 256, 256
          %541 = vsyncadd [#allocation21], %s540
          %s542 = sshll.u32 [#allocation22], 4
          %s543 = int_to_ptr.vmem [resolvable:$true] %s542
          %548 = dma.hbm_to_vmem [thread:$0]  %s13, 256, %s543, [#allocation21], 128, 128, 8
        $region64: #{_lambda_.1} parent=11 // pred_fallthru
          _
        // Predicated region
        $region65: #{_lambda_.1} parent=11 // pred_check
          %p549 = pneg %p348
        $region66: #{_lambda_.1} parent=11 // pred_check_branch
          %551 = sbr.rel (%p549) target = $region68
        $region67: #{_lambda_.1} parent=11 // pred_region
          _
        $region68: #{_lambda_.1} parent=11 // pred_fallthru
          _
        // Predicated region
        $region69: #{_lambda_.1} parent=11 // pred_check
          %p552 = pneg %p369
        $region70: #{_lambda_.1} parent=11 // pred_check_branch
          %554 = sbr.rel (%p552) target = $region72
        $region71: #{_lambda_.1} parent=11 // pred_region
          _
        $region72: #{_lambda_.1} parent=11 // pred_fallthru
          _
      $region12: #{_lambda_.1} parent=5 // pred_fallthru
        _
      %p555 = scmp.lt.s32.totalorder %s28, 2
      // Predicated region
      $region73: #{_lambda_.1} parent=5 // pred_check
        %p556 = pneg %p555
      $region74: #{_lambda_.1} parent=5 // pred_check_branch
        %558 = sbr.rel (%p556) target = $region76
      $region75: #{_lambda_.1} parent=5 // pred_region
        // Predicated region
        $region77: #{_lambda_.1} parent=75 // pred_check
          %p559 = pneg %p48
        $region78: #{_lambda_.1} parent=75 // pred_check_branch
          %561 = sbr.rel (%p559) target = $region80
        $region79: #{_lambda_.1} parent=75 // pred_region
          %p562 = scmp.lt.s32.totalorder %s28, 1
          %s563 = scalar_select %p562, %s28, 1
          %s564 = smul.addr %s563, 10
          %s565 = scalar_lea.vmem %s0, %s564
        $region80: #{_lambda_.1} parent=75 // pred_fallthru
          _
      $region76: #{_lambda_.1} parent=5 // pred_fallthru
        _
      %p566 = scmp.le.s32.totalorder 1, %s28
      %p567 = scmp.lt.s32.totalorder %s28, 3
      %p568 = pnand %p566, %p567
      %p569 = pneg %p568
      // Predicated region
      $region81: #{_lambda_.1} parent=5 // pred_check
        _
      $region82: #{_lambda_.1} parent=5 // pred_check_branch
        %571 = sbr.rel (%p568) target = $region84
      $region83: #{_lambda_.1} parent=5 // pred_region
        %s572 = ssub.s32 %s28, 1
        // Predicated region
        $region85: #{_lambda_.1} parent=83 // pred_check
          %p573 = pneg %p96
        $region86: #{_lambda_.1} parent=83 // pred_check_branch
          %575 = sbr.rel (%p573) target = $region88
        $region87: #{_lambda_.1} parent=83 // pred_region
          %576 = dma.done [#allocation7], 128
        $region88: #{_lambda_.1} parent=83 // pred_fallthru
          _
        // Predicated region
        $region89: #{_lambda_.1} parent=83 // pred_check
          %p577 = pneg %p117
        $region90: #{_lambda_.1} parent=83 // pred_check_branch
          %579 = sbr.rel (%p577) target = $region92
        $region91: #{_lambda_.1} parent=83 // pred_region
          %580 = dma.done [#allocation9], 128
        $region92: #{_lambda_.1} parent=83 // pred_fallthru
          _
        // Predicated region
        $region93: #{_lambda_.1} parent=83 // pred_check
          %p581 = pneg %p138
        $region94: #{_lambda_.1} parent=83 // pred_check_branch
          %583 = sbr.rel (%p581) target = $region96
        $region95: #{_lambda_.1} parent=83 // pred_region
          %584 = dma.done [#allocation9], 128
        $region96: #{_lambda_.1} parent=83 // pred_fallthru
          _
        // Predicated region
        $region97: #{_lambda_.1} parent=83 // pred_check
          %p585 = pneg %p159
        $region98: #{_lambda_.1} parent=83 // pred_check_branch
          %587 = sbr.rel (%p585) target = $region100
        $region99: #{_lambda_.1} parent=83 // pred_region
          %588 = dma.done [#allocation12], 128
        $region100: #{_lambda_.1} parent=83 // pred_fallthru
          _
        // Predicated region
        $region101: #{_lambda_.1} parent=83 // pred_check
          %p589 = pneg %p180
        $region102: #{_lambda_.1} parent=83 // pred_check_branch
          %591 = sbr.rel (%p589) target = $region104
        $region103: #{_lambda_.1} parent=83 // pred_region
          %592 = dma.done [#allocation12], 128
        $region104: #{_lambda_.1} parent=83 // pred_fallthru
          _
        // Predicated region
        $region105: #{_lambda_.1} parent=83 // pred_check
          %p593 = pneg %p201
        $region106: #{_lambda_.1} parent=83 // pred_check_branch
          %595 = sbr.rel (%p593) target = $region108
        $region107: #{_lambda_.1} parent=83 // pred_region
          %596 = dma.done [#allocation15], 512
        $region108: #{_lambda_.1} parent=83 // pred_fallthru
          _
        // Predicated region
        $region109: #{_lambda_.1} parent=83 // pred_check
          %p597 = pneg %p222
        $region110: #{_lambda_.1} parent=83 // pred_check_branch
          %599 = sbr.rel (%p597) target = $region112
        $region111: #{_lambda_.1} parent=83 // pred_region
          %600 = dma.done [#allocation15], 256
        $region112: #{_lambda_.1} parent=83 // pred_fallthru
          _
        // Predicated region
        $region113: #{_lambda_.1} parent=83 // pred_check
          %p601 = pneg %p264
        $region114: #{_lambda_.1} parent=83 // pred_check_branch
          %603 = sbr.rel (%p601) target = $region116
        $region115: #{_lambda_.1} parent=83 // pred_region
          %604 = dma.done [#allocation18], 1920
        $region116: #{_lambda_.1} parent=83 // pred_fallthru
          _
        // Predicated region
        $region117: #{_lambda_.1} parent=83 // pred_check
          %p605 = pneg %p285
        $region118: #{_lambda_.1} parent=83 // pred_check_branch
          %607 = sbr.rel (%p605) target = $region120
        $region119: #{_lambda_.1} parent=83 // pred_region
          %608 = dma.done [#allocation18], 1408
        $region120: #{_lambda_.1} parent=83 // pred_fallthru
          _
        // Predicated region
        $region121: #{_lambda_.1} parent=83 // pred_check
          %p609 = pneg %p306
        $region122: #{_lambda_.1} parent=83 // pred_check_branch
          %611 = sbr.rel (%p609) target = $region124
        $region123: #{_lambda_.1} parent=83 // pred_region
          %612 = dma.done [#allocation21], 1408
        $region124: #{_lambda_.1} parent=83 // pred_fallthru
          _
        // Predicated region
        $region125: #{_lambda_.1} parent=83 // pred_check
          %p613 = pneg %p327
        $region126: #{_lambda_.1} parent=83 // pred_check_branch
          %615 = sbr.rel (%p613) target = $region128
        $region127: #{_lambda_.1} parent=83 // pred_region
          %616 = dma.done [#allocation21], 256
        $region128: #{_lambda_.1} parent=83 // pred_fallthru
          _
        %p617 = scmp.lt.s32.totalorder %s33, 1
        %s618 = scalar_select %p617, %s33, 1
        %s619 = smul.addr %s618, 10
        %s620 = scalar_lea.vmem %s0, %s619
        %p621 = pneg %p54
        %p622 = pneg %p51
        %p623 = pneg %p75
        %p624 = pneg %p72
        %p625 = pneg %p96
        %p626 = pneg %p93
        %p627 = pneg %p117
        %p628 = pneg %p114
        %p629 = pneg %p138
        %p630 = pneg %p135
        %p631 = pneg %p159
        %p632 = pneg %p156
        %p633 = pneg %p180
        %p634 = pneg %p177
        %p635 = pneg %p201
        %p636 = pneg %p198
        %p637 = pneg %p222
        %p638 = pneg %p219
        %p639 = pneg %p243
        %p640 = pneg %p240
        %p641 = pneg %p264
        %p642 = pneg %p261
        %p643 = pneg %p285
        %p644 = pneg %p282
        %p645 = pneg %p306
        %p646 = pneg %p303
        %p647 = pneg %p327
        %p648 = pneg %p324
        %p649 = pneg %p348
        %p650 = pneg %p345
        %p651 = pneg %p369
        %p652 = pneg %p366
        %p653 = pneg %p395
        %p654 = pneg %p392
        %p655 = scmp.lt.s32.totalorder %s33, 1
        %s656 = scalar_select %p655, %s33, 1
        %s657 = smul.addr %s656, 2
        %s658 = smul.addr %s657, 8
        %s659 = scalar_lea.vmem %s16, %s658
        %p660 = scmp.lt.s32.totalorder %s33, 1
        %s661 = scalar_select %p660, %s33, 1
        %s662 = smul.addr %s661, 10
        %s663 = scalar_lea.vmem %s0, %s662
        %p664 = scmp.lt.s32.totalorder %s33, 1
        %s665 = scalar_select %p664, %s33, 1
        %s666 = smul.addr %s665, 2
        %s667 = smul.addr %s666, 8
        %s668 = scalar_lea.vmem %s16, %s667
        %669 = vst [vmem:[#allocation2] sm:$0xff] 0.0
        %670 = vst [vmem:[#allocation2 + $0x8] sm:$0xff] 0.0
        %671 = vst [vmem:[#allocation2 + $0x10] sm:$0xff] 0.0
        %672 = vst [vmem:[#allocation2 + $0x18] sm:$0xff] 0.0
        %673 = vst [vmem:[#allocation2 + $0x20] sm:$0xff] 0.0
        %674 = vst [vmem:[#allocation2 + $0x28] sm:$0xff] 0.0
        %675 = vst [vmem:[#allocation2 + $0x30] sm:$0xff] 0.0
        %676 = vst [vmem:[#allocation2 + $0x38] sm:$0xff] 0.0
        %677 = vst [vmem:[#allocation2 + $0x40] sm:$0xff] 0.0
        %678 = vst [vmem:[#allocation2 + $0x48] sm:$0xff] 0.0
        %679 = vst [vmem:[#allocation2 + $0x50] sm:$0xff] 0.0
        %680 = vst [vmem:[#allocation2 + $0x58] sm:$0xff] 0.0
        %681 = vst [vmem:[#allocation3] sm:$0xff] 0.0
        %682 = vst [vmem:[#allocation3 + $0x8] sm:$0xff] 0.0
        %683 = vst [vmem:[#allocation3 + $0x10] sm:$0xff] 0.0
        %684 = vst [vmem:[#allocation3 + $0x18] sm:$0xff] 0.0
        %685 = vst [vmem:[#allocation3 + $0x20] sm:$0xff] 0.0
        %686 = vst [vmem:[#allocation3 + $0x28] sm:$0xff] 0.0
        %687 = vst [vmem:[#allocation3 + $0x30] sm:$0xff] 0.0
        %688 = vst [vmem:[#allocation3 + $0x38] sm:$0xff] 0.0
        %689 = vst [vmem:[#allocation3 + $0x40] sm:$0xff] 0.0
        %690 = vst [vmem:[#allocation3 + $0x48] sm:$0xff] 0.0
        %691 = vst [vmem:[#allocation3 + $0x50] sm:$0xff] 0.0
        %692 = vst [vmem:[#allocation3 + $0x58] sm:$0xff] 0.0
        %693 = vst [vmem:[#allocation4] sm:$0xff] 0.0
        %694 = vst [vmem:[#allocation4 + $0x8] sm:$0xff] 0.0
        %695 = vst [vmem:[#allocation4 + $0x10] sm:$0xff] 0.0
        %696 = vst [vmem:[#allocation4 + $0x18] sm:$0xff] 0.0
        %697 = vst [vmem:[#allocation4 + $0x20] sm:$0xff] 0.0
        %698 = vst [vmem:[#allocation4 + $0x28] sm:$0xff] 0.0
        %699 = vst [vmem:[#allocation4 + $0x30] sm:$0xff] 0.0
        %700 = vst [vmem:[#allocation4 + $0x38] sm:$0xff] 0.0
        %701 = vst [vmem:[#allocation4 + $0x40] sm:$0xff] 0.0
        %702 = vst [vmem:[#allocation4 + $0x48] sm:$0xff] 0.0
        %703 = vst [vmem:[#allocation4 + $0x50] sm:$0xff] 0.0
        %704 = vst [vmem:[#allocation4 + $0x58] sm:$0xff] 0.0
        %705 = vst [vmem:[#allocation4 + $0x60] sm:$0xff] 0.0
        %706 = vst [vmem:[#allocation4 + $0x68] sm:$0xff] 0.0
        %707 = vst [vmem:[#allocation4 + $0x70] sm:$0xff] 0.0
        %708 = vst [vmem:[#allocation4 + $0x78] sm:$0xff] 0.0
        %709 = vst [vmem:[#allocation4 + $0x80] sm:$0xff] 0.0
        %710 = vst [vmem:[#allocation4 + $0x88] sm:$0xff] 0.0
        %711 = vst [vmem:[#allocation4 + $0x90] sm:$0xff] 0.0
        %712 = vst [vmem:[#allocation4 + $0x98] sm:$0xff] 0.0
        %713 = vst [vmem:[#allocation4 + $0xa0] sm:$0xff] 0.0
        %714 = vst [vmem:[#allocation4 + $0xa8] sm:$0xff] 0.0
        %715 = vst [vmem:[#allocation4 + $0xb0] sm:$0xff] 0.0
        %716 = vst [vmem:[#allocation4 + $0xb8] sm:$0xff] 0.0
        %717 = vst [vmem:[#allocation5] sm:$0xff] 0.0
        %718 = vst [vmem:[#allocation5 + $0x8] sm:$0xff] 0.0
        %719 = vst [vmem:[#allocation5 + $0x10] sm:$0xff] 0.0
        %720 = vst [vmem:[#allocation5 + $0x18] sm:$0xff] 0.0
        %721 = vst [vmem:[#allocation5 + $0x20] sm:$0xff] 0.0
        %722 = vst [vmem:[#allocation5 + $0x28] sm:$0xff] 0.0
        %723 = vst [vmem:[#allocation5 + $0x30] sm:$0xff] 0.0
        %724 = vst [vmem:[#allocation5 + $0x38] sm:$0xff] 0.0
        %725 = vst [vmem:[#allocation5 + $0x40] sm:$0xff] 0.0
        %726 = vst [vmem:[#allocation5 + $0x48] sm:$0xff] 0.0
        %727 = vst [vmem:[#allocation5 + $0x50] sm:$0xff] 0.0
        %728 = vst [vmem:[#allocation5 + $0x58] sm:$0xff] 0.0
        %729 = vst [vmem:[#allocation5 + $0x60] sm:$0xff] 0.0
        %730 = vst [vmem:[#allocation5 + $0x68] sm:$0xff] 0.0
        %731 = vst [vmem:[#allocation5 + $0x70] sm:$0xff] 0.0
        %732 = vst [vmem:[#allocation5 + $0x78] sm:$0xff] 0.0
        %v733 = vld [vmem:[%s15] sm:$0xff]
        %v734 = vld [vmem:[%s1] sm:$0xff]
        %v735 = vld [vmem:[%s663] sm:$0xff]
        %v737 = vlaneseq
        %v738 = vshrl.u32 %v737, 7
        %v739 = vsub.s32 0, %v738
        %v740 = vrot.slane %v735, %v739
        %v741 = vlaneseq
        %v742 = vshrl.u32 %v741, 7
        %v743 = vsub.s32 1, %v742
        %v744 = vrot.slane %v735, %v743
        %v745 = vlaneseq
        %v746 = vshrl.u32 %v745, 7
        %v747 = vsub.s32 2, %v746
        %v748 = vrot.slane %v735, %v747
        %v749 = vlaneseq
        %v750 = vshrl.u32 %v749, 7
        %v751 = vsub.s32 3, %v750
        %v752 = vrot.slane %v735, %v751
        %v753 = vlaneseq
        %v754 = vshrl.u32 %v753, 7
        %v755 = vsub.s32 4, %v754
        %v756 = vrot.slane %v735, %v755
        %v757 = vlaneseq
        %v758 = vshrl.u32 %v757, 7
        %v759 = vsub.s32 5, %v758
        %v760 = vrot.slane %v735, %v759
        %v761 = vlaneseq
        %v762 = vshrl.u32 %v761, 7
        %v763 = vsub.s32 6, %v762
        %v764 = vrot.slane %v735, %v763
        %v765 = vlaneseq
        %v766 = vshrl.u32 %v765, 7
        %v767 = vsub.s32 7, %v766
        %v768 = vrot.slane %v735, %v767
        %778 = vset.pattern.permute.xlu0 0
        %779 = vperm.xlu0 %778, %v734
        %v780 = vpop.permute.xlu0 %779
        %v782 = vmul.f32 %v740, %v780
        %v783 = vmul.f32 %v744, %v780
        %v784 = vmul.f32 %v748, %v780
        %v785 = vmul.f32 %v752, %v780
        %v786 = vmul.f32 %v756, %v780
        %v787 = vmul.f32 %v760, %v780
        %v788 = vmul.f32 %v764, %v780
        %v789 = vmul.f32 %v768, %v780
        %v790 = vadd.f32 %v782, 0.0
        %v791 = vadd.f32 %v783, 0.0
        %v792 = vadd.f32 %v784, 0.0
        %v793 = vadd.f32 %v785, 0.0
        %v794 = vadd.f32 %v786, 0.0
        %v795 = vadd.f32 %v787, 0.0
        %v796 = vadd.f32 %v788, 0.0
        %v797 = vadd.f32 %v789, 0.0
        %v798 = vld [vmem:[%s663] sm:$0xff]
        %v799 = vld [vmem:[%s663 + $0x8] sm:$0x1]
        %v802 = vlaneseq
        %v803 = vshrl.u32 %v802, 7
        %v804 = vsub.s32 0, %v803
        %v805 = vrot.slane %v798, %v804
        %v806 = vlaneseq
        %v807 = vshrl.u32 %v806, 7
        %v808 = vsub.s32 1, %v807
        %v809 = vrot.slane %v798, %v808
        %v810 = vlaneseq
        %v811 = vshrl.u32 %v810, 7
        %v812 = vsub.s32 2, %v811
        %v813 = vrot.slane %v798, %v812
        %v814 = vlaneseq
        %v815 = vshrl.u32 %v814, 7
        %v816 = vsub.s32 3, %v815
        %v817 = vrot.slane %v798, %v816
        %v818 = vlaneseq
        %v819 = vshrl.u32 %v818, 7
        %v820 = vsub.s32 4, %v819
        %v821 = vrot.slane %v798, %v820
        %v822 = vlaneseq
        %v823 = vshrl.u32 %v822, 7
        %v824 = vsub.s32 5, %v823
        %v825 = vrot.slane %v798, %v824
        %v826 = vlaneseq
        %v827 = vshrl.u32 %v826, 7
        %v828 = vsub.s32 6, %v827
        %v829 = vrot.slane %v798, %v828
        %v830 = vlaneseq
        %v831 = vshrl.u32 %v830, 7
        %v832 = vsub.s32 7, %v831
        %v833 = vrot.slane %v798, %v832
        %v834 = vlaneseq
        %v835 = vshrl.u32 %v834, 7
        %v836 = vsub.s32 0, %v835
        %v837 = vrot.slane %v799, %v836
        %847 = vset.pattern.permute.xlu0 1
        %848 = vperm.xlu0 %847, %v734
        %v849 = vpop.permute.xlu0 %848
        %v851 = vmul.f32 %v805, %v849
        %v852 = vmul.f32 %v809, %v849
        %v853 = vmul.f32 %v813, %v849
        %v854 = vmul.f32 %v817, %v849
        %v855 = vmul.f32 %v821, %v849
        %v856 = vmul.f32 %v825, %v849
        %v857 = vmul.f32 %v829, %v849
        %v858 = vmul.f32 %v833, %v849
        %v859 = vmul.f32 %v837, %v849
        %869 = vrot.lane.b32.xlu0 %v851, 127
        %v870 = vpop.permute.xlu0 %869
        %871 = vrot.lane.b32.xlu0 %v852, 127
        %v872 = vpop.permute.xlu0 %871
        %873 = vrot.lane.b32.xlu0 %v853, 127
        %v874 = vpop.permute.xlu0 %873
        %875 = vrot.lane.b32.xlu0 %v854, 127
        %v876 = vpop.permute.xlu0 %875
        %877 = vrot.lane.b32.xlu0 %v855, 127
        %v878 = vpop.permute.xlu0 %877
        %879 = vrot.lane.b32.xlu0 %v856, 127
        %v880 = vpop.permute.xlu0 %879
        %881 = vrot.lane.b32.xlu0 %v857, 127
        %v882 = vpop.permute.xlu0 %881
        %883 = vrot.lane.b32.xlu0 %v858, 127
        %v884 = vpop.permute.xlu0 %883
        %885 = vrot.lane.b32.xlu0 %v859, 127
        %v886 = vpop.permute.xlu0 %885
        %vm887 = vcmask 1039360
        %v888 = vsel %vm887, %v870, %v872
        %v889 = vsel %vm887, %v872, %v874
        %v890 = vsel %vm887, %v874, %v876
        %v891 = vsel %vm887, %v876, %v878
        %v892 = vsel %vm887, %v878, %v880
        %v893 = vsel %vm887, %v880, %v882
        %v894 = vsel %vm887, %v882, %v884
        %v895 = vsel %vm887, %v884, %v886
        %v904 = vadd.f32 %v790, %v888
        %v905 = vadd.f32 %v791, %v889
        %v906 = vadd.f32 %v792, %v890
        %v907 = vadd.f32 %v793, %v891
        %v908 = vadd.f32 %v794, %v892
        %v909 = vadd.f32 %v795, %v893
        %v910 = vadd.f32 %v796, %v894
        %v911 = vadd.f32 %v797, %v895
        %912 = vset.pattern.permute.xlu0 2
        %913 = vperm.xlu0 %912, %v734
        %v914 = vpop.permute.xlu0 %913
        %v916 = vmul.f32 %v805, %v914
        %v917 = vmul.f32 %v809, %v914
        %v918 = vmul.f32 %v813, %v914
        %v919 = vmul.f32 %v817, %v914
        %v920 = vmul.f32 %v821, %v914
        %v921 = vmul.f32 %v825, %v914
        %v922 = vmul.f32 %v829, %v914
        %v923 = vmul.f32 %v833, %v914
        %v924 = vmul.f32 %v837, %v914
        %934 = vrot.lane.b32.xlu0 %v916, 126
        %v935 = vpop.permute.xlu0 %934
        %936 = vrot.lane.b32.xlu0 %v917, 126
        %v937 = vpop.permute.xlu0 %936
        %938 = vrot.lane.b32.xlu0 %v918, 126
        %v939 = vpop.permute.xlu0 %938
        %940 = vrot.lane.b32.xlu0 %v919, 126
        %v941 = vpop.permute.xlu0 %940
        %942 = vrot.lane.b32.xlu0 %v920, 126
        %v943 = vpop.permute.xlu0 %942
        %944 = vrot.lane.b32.xlu0 %v921, 126
        %v945 = vpop.permute.xlu0 %944
        %946 = vrot.lane.b32.xlu0 %v922, 126
        %v947 = vpop.permute.xlu0 %946
        %948 = vrot.lane.b32.xlu0 %v923, 126
        %v949 = vpop.permute.xlu0 %948
        %950 = vrot.lane.b32.xlu0 %v924, 126
        %v951 = vpop.permute.xlu0 %950
        %vm952 = vcmask 1031168
        %v953 = vsel %vm952, %v935, %v937
        %v954 = vsel %vm952, %v937, %v939
        %v955 = vsel %vm952, %v939, %v941
        %v956 = vsel %vm952, %v941, %v943
        %v957 = vsel %vm952, %v943, %v945
        %v958 = vsel %vm952, %v945, %v947
        %v959 = vsel %vm952, %v947, %v949
        %v960 = vsel %vm952, %v949, %v951
        %v969 = vadd.f32 %v904, %v953
        %v970 = vadd.f32 %v905, %v954
        %v971 = vadd.f32 %v906, %v955
        %v972 = vadd.f32 %v907, %v956
        %v973 = vadd.f32 %v908, %v957
        %v974 = vadd.f32 %v909, %v958
        %v975 = vadd.f32 %v910, %v959
        %v976 = vadd.f32 %v911, %v960
        %977 = vset.pattern.permute.xlu0 3
        %978 = vperm.xlu0 %977, %v734
        %v979 = vpop.permute.xlu0 %978
        %v981 = vmul.f32 %v805, %v979
        %v982 = vmul.f32 %v809, %v979
        %v983 = vmul.f32 %v813, %v979
        %v984 = vmul.f32 %v817, %v979
        %v985 = vmul.f32 %v821, %v979
        %v986 = vmul.f32 %v825, %v979
        %v987 = vmul.f32 %v829, %v979
        %v988 = vmul.f32 %v833, %v979
        %v989 = vmul.f32 %v837, %v979
        %999 = vrot.lane.b32.xlu0 %v981, 125
        %v1000 = vpop.permute.xlu0 %999
        %1001 = vrot.lane.b32.xlu0 %v982, 125
        %v1002 = vpop.permute.xlu0 %1001
        %1003 = vrot.lane.b32.xlu0 %v983, 125
        %v1004 = vpop.permute.xlu0 %1003
        %1005 = vrot.lane.b32.xlu0 %v984, 125
        %v1006 = vpop.permute.xlu0 %1005
        %1007 = vrot.lane.b32.xlu0 %v985, 125
        %v1008 = vpop.permute.xlu0 %1007
        %1009 = vrot.lane.b32.xlu0 %v986, 125
        %v1010 = vpop.permute.xlu0 %1009
        %1011 = vrot.lane.b32.xlu0 %v987, 125
        %v1012 = vpop.permute.xlu0 %1011
        %1013 = vrot.lane.b32.xlu0 %v988, 125
        %v1014 = vpop.permute.xlu0 %1013
        %1015 = vrot.lane.b32.xlu0 %v989, 125
        %v1016 = vpop.permute.xlu0 %1015
        %vm1017 = vcmask 1022976
        %v1018 = vsel %vm1017, %v1000, %v1002
        %v1019 = vsel %vm1017, %v1002, %v1004
        %v1020 = vsel %vm1017, %v1004, %v1006
        %v1021 = vsel %vm1017, %v1006, %v1008
        %v1022 = vsel %vm1017, %v1008, %v1010
        %v1023 = vsel %vm1017, %v1010, %v1012
        %v1024 = vsel %vm1017, %v1012, %v1014
        %v1025 = vsel %vm1017, %v1014, %v1016
        %v1034 = vadd.f32 %v969, %v1018
        %v1035 = vadd.f32 %v970, %v1019
        %v1036 = vadd.f32 %v971, %v1020
        %v1037 = vadd.f32 %v972, %v1021
        %v1038 = vadd.f32 %v973, %v1022
        %v1039 = vadd.f32 %v974, %v1023
        %v1040 = vadd.f32 %v975, %v1024
        %v1041 = vadd.f32 %v976, %v1025
        %1042 = vset.pattern.permute.xlu0 4
        %1043 = vperm.xlu0 %1042, %v734
        %v1044 = vpop.permute.xlu0 %1043
        %v1046 = vmul.f32 %v805, %v1044
        %v1047 = vmul.f32 %v809, %v1044
        %v1048 = vmul.f32 %v813, %v1044
        %v1049 = vmul.f32 %v817, %v1044
        %v1050 = vmul.f32 %v821, %v1044
        %v1051 = vmul.f32 %v825, %v1044
        %v1052 = vmul.f32 %v829, %v1044
        %v1053 = vmul.f32 %v833, %v1044
        %v1054 = vmul.f32 %v837, %v1044
        %1064 = vrot.lane.b32.xlu0 %v1046, 124
        %v1065 = vpop.permute.xlu0 %1064
        %1066 = vrot.lane.b32.xlu0 %v1047, 124
        %v1067 = vpop.permute.xlu0 %1066
        %1068 = vrot.lane.b32.xlu0 %v1048, 124
        %v1069 = vpop.permute.xlu0 %1068
        %1070 = vrot.lane.b32.xlu0 %v1049, 124
        %v1071 = vpop.permute.xlu0 %1070
        %1072 = vrot.lane.b32.xlu0 %v1050, 124
        %v1073 = vpop.permute.xlu0 %1072
        %1074 = vrot.lane.b32.xlu0 %v1051, 124
        %v1075 = vpop.permute.xlu0 %1074
        %1076 = vrot.lane.b32.xlu0 %v1052, 124
        %v1077 = vpop.permute.xlu0 %1076
        %1078 = vrot.lane.b32.xlu0 %v1053, 124
        %v1079 = vpop.permute.xlu0 %1078
        %1080 = vrot.lane.b32.xlu0 %v1054, 124
        %v1081 = vpop.permute.xlu0 %1080
        %vm1082 = vcmask 1014784
        %v1083 = vsel %vm1082, %v1065, %v1067
        %v1084 = vsel %vm1082, %v1067, %v1069
        %v1085 = vsel %vm1082, %v1069, %v1071
        %v1086 = vsel %vm1082, %v1071, %v1073
        %v1087 = vsel %vm1082, %v1073, %v1075
        %v1088 = vsel %vm1082, %v1075, %v1077
        %v1089 = vsel %vm1082, %v1077, %v1079
        %v1090 = vsel %vm1082, %v1079, %v1081
        %v1099 = vadd.f32 %v1034, %v1083
        %v1100 = vadd.f32 %v1035, %v1084
        %v1101 = vadd.f32 %v1036, %v1085
        %v1102 = vadd.f32 %v1037, %v1086
        %v1103 = vadd.f32 %v1038, %v1087
        %v1104 = vadd.f32 %v1039, %v1088
        %v1105 = vadd.f32 %v1040, %v1089
        %v1106 = vadd.f32 %v1041, %v1090
        %1107 = vset.pattern.permute.xlu0 5
        %1108 = vperm.xlu0 %1107, %v734
        %v1109 = vpop.permute.xlu0 %1108
        %v1111 = vmul.f32 %v805, %v1109
        %v1112 = vmul.f32 %v809, %v1109
        %v1113 = vmul.f32 %v813, %v1109
        %v1114 = vmul.f32 %v817, %v1109
        %v1115 = vmul.f32 %v821, %v1109
        %v1116 = vmul.f32 %v825, %v1109
        %v1117 = vmul.f32 %v829, %v1109
        %v1118 = vmul.f32 %v833, %v1109
        %v1119 = vmul.f32 %v837, %v1109
        %1129 = vrot.lane.b32.xlu0 %v1111, 96
        %v1130 = vpop.permute.xlu0 %1129
        %1131 = vrot.lane.b32.xlu0 %v1112, 96
        %v1132 = vpop.permute.xlu0 %1131
        %1133 = vrot.lane.b32.xlu0 %v1113, 96
        %v1134 = vpop.permute.xlu0 %1133
        %1135 = vrot.lane.b32.xlu0 %v1114, 96
        %v1136 = vpop.permute.xlu0 %1135
        %1137 = vrot.lane.b32.xlu0 %v1115, 96
        %v1138 = vpop.permute.xlu0 %1137
        %1139 = vrot.lane.b32.xlu0 %v1116, 96
        %v1140 = vpop.permute.xlu0 %1139
        %1141 = vrot.lane.b32.xlu0 %v1117, 96
        %v1142 = vpop.permute.xlu0 %1141
        %1143 = vrot.lane.b32.xlu0 %v1118, 96
        %v1144 = vpop.permute.xlu0 %1143
        %1145 = vrot.lane.b32.xlu0 %v1119, 96
        %v1146 = vpop.permute.xlu0 %1145
        %vm1147 = vcmask 785408
        %v1148 = vsel %vm1147, %v1130, %v1132
        %v1149 = vsel %vm1147, %v1132, %v1134
        %v1150 = vsel %vm1147, %v1134, %v1136
        %v1151 = vsel %vm1147, %v1136, %v1138
        %v1152 = vsel %vm1147, %v1138, %v1140
        %v1153 = vsel %vm1147, %v1140, %v1142
        %v1154 = vsel %vm1147, %v1142, %v1144
        %v1155 = vsel %vm1147, %v1144, %v1146
        %v1164 = vadd.f32 %v1099, %v1148
        %v1165 = vadd.f32 %v1100, %v1149
        %v1166 = vadd.f32 %v1101, %v1150
        %v1167 = vadd.f32 %v1102, %v1151
        %v1168 = vadd.f32 %v1103, %v1152
        %v1169 = vadd.f32 %v1104, %v1153
        %v1170 = vadd.f32 %v1105, %v1154
        %v1171 = vadd.f32 %v1106, %v1155
        %1172 = vset.pattern.permute.xlu0 6
        %1173 = vperm.xlu0 %1172, %v734
        %v1174 = vpop.permute.xlu0 %1173
        %v1176 = vmul.f32 %v805, %v1174
        %v1177 = vmul.f32 %v809, %v1174
        %v1178 = vmul.f32 %v813, %v1174
        %v1179 = vmul.f32 %v817, %v1174
        %v1180 = vmul.f32 %v821, %v1174
        %v1181 = vmul.f32 %v825, %v1174
        %v1182 = vmul.f32 %v829, %v1174
        %v1183 = vmul.f32 %v833, %v1174
        %v1184 = vmul.f32 %v837, %v1174
        %1194 = vrot.lane.b32.xlu0 %v1176, 95
        %v1195 = vpop.permute.xlu0 %1194
        %1196 = vrot.lane.b32.xlu0 %v1177, 95
        %v1197 = vpop.permute.xlu0 %1196
        %1198 = vrot.lane.b32.xlu0 %v1178, 95
        %v1199 = vpop.permute.xlu0 %1198
        %1200 = vrot.lane.b32.xlu0 %v1179, 95
        %v1201 = vpop.permute.xlu0 %1200
        %1202 = vrot.lane.b32.xlu0 %v1180, 95
        %v1203 = vpop.permute.xlu0 %1202
        %1204 = vrot.lane.b32.xlu0 %v1181, 95
        %v1205 = vpop.permute.xlu0 %1204
        %1206 = vrot.lane.b32.xlu0 %v1182, 95
        %v1207 = vpop.permute.xlu0 %1206
        %1208 = vrot.lane.b32.xlu0 %v1183, 95
        %v1209 = vpop.permute.xlu0 %1208
        %1210 = vrot.lane.b32.xlu0 %v1184, 95
        %v1211 = vpop.permute.xlu0 %1210
        %vm1212 = vcmask 777216
        %v1213 = vsel %vm1212, %v1195, %v1197
        %v1214 = vsel %vm1212, %v1197, %v1199
        %v1215 = vsel %vm1212, %v1199, %v1201
        %v1216 = vsel %vm1212, %v1201, %v1203
        %v1217 = vsel %vm1212, %v1203, %v1205
        %v1218 = vsel %vm1212, %v1205, %v1207
        %v1219 = vsel %vm1212, %v1207, %v1209
        %v1220 = vsel %vm1212, %v1209, %v1211
        %v1229 = vadd.f32 %v1164, %v1213
        %v1230 = vadd.f32 %v1165, %v1214
        %v1231 = vadd.f32 %v1166, %v1215
        %v1232 = vadd.f32 %v1167, %v1216
        %v1233 = vadd.f32 %v1168, %v1217
        %v1234 = vadd.f32 %v1169, %v1218
        %v1235 = vadd.f32 %v1170, %v1219
        %v1236 = vadd.f32 %v1171, %v1220
        %1237 = vset.pattern.permute.xlu0 7
        %1238 = vperm.xlu0 %1237, %v734
        %v1239 = vpop.permute.xlu0 %1238
        %v1241 = vmul.f32 %v805, %v1239
        %v1242 = vmul.f32 %v809, %v1239
        %v1243 = vmul.f32 %v813, %v1239
        %v1244 = vmul.f32 %v817, %v1239
        %v1245 = vmul.f32 %v821, %v1239
        %v1246 = vmul.f32 %v825, %v1239
        %v1247 = vmul.f32 %v829, %v1239
        %v1248 = vmul.f32 %v833, %v1239
        %v1249 = vmul.f32 %v837, %v1239
        %1259 = vrot.lane.b32.xlu0 %v1241, 94
        %v1260 = vpop.permute.xlu0 %1259
        %1261 = vrot.lane.b32.xlu0 %v1242, 94
        %v1262 = vpop.permute.xlu0 %1261
        %1263 = vrot.lane.b32.xlu0 %v1243, 94
        %v1264 = vpop.permute.xlu0 %1263
        %1265 = vrot.lane.b32.xlu0 %v1244, 94
        %v1266 = vpop.permute.xlu0 %1265
        %1267 = vrot.lane.b32.xlu0 %v1245, 94
        %v1268 = vpop.permute.xlu0 %1267
        %1269 = vrot.lane.b32.xlu0 %v1246, 94
        %v1270 = vpop.permute.xlu0 %1269
        %1271 = vrot.lane.b32.xlu0 %v1247, 94
        %v1272 = vpop.permute.xlu0 %1271
        %1273 = vrot.lane.b32.xlu0 %v1248, 94
        %v1274 = vpop.permute.xlu0 %1273
        %1275 = vrot.lane.b32.xlu0 %v1249, 94
        %v1276 = vpop.permute.xlu0 %1275
        %vm1277 = vcmask 769024
        %v1278 = vsel %vm1277, %v1260, %v1262
        %v1279 = vsel %vm1277, %v1262, %v1264
        %v1280 = vsel %vm1277, %v1264, %v1266
        %v1281 = vsel %vm1277, %v1266, %v1268
        %v1282 = vsel %vm1277, %v1268, %v1270
        %v1283 = vsel %vm1277, %v1270, %v1272
        %v1284 = vsel %vm1277, %v1272, %v1274
        %v1285 = vsel %vm1277, %v1274, %v1276
        %v1294 = vadd.f32 %v1229, %v1278
        %v1295 = vadd.f32 %v1230, %v1279
        %v1296 = vadd.f32 %v1231, %v1280
        %v1297 = vadd.f32 %v1232, %v1281
        %v1298 = vadd.f32 %v1233, %v1282
        %v1299 = vadd.f32 %v1234, %v1283
        %v1300 = vadd.f32 %v1235, %v1284
        %v1301 = vadd.f32 %v1236, %v1285
        %1302 = vset.pattern.permute.xlu0 8
        %1303 = vperm.xlu0 %1302, %v734
        %v1304 = vpop.permute.xlu0 %1303
        %v1306 = vmul.f32 %v805, %v1304
        %v1307 = vmul.f32 %v809, %v1304
        %v1308 = vmul.f32 %v813, %v1304
        %v1309 = vmul.f32 %v817, %v1304
        %v1310 = vmul.f32 %v821, %v1304
        %v1311 = vmul.f32 %v825, %v1304
        %v1312 = vmul.f32 %v829, %v1304
        %v1313 = vmul.f32 %v833, %v1304
        %v1314 = vmul.f32 %v837, %v1304
        %1324 = vrot.lane.b32.xlu0 %v1306, 93
        %v1325 = vpop.permute.xlu0 %1324
        %1326 = vrot.lane.b32.xlu0 %v1307, 93
        %v1327 = vpop.permute.xlu0 %1326
        %1328 = vrot.lane.b32.xlu0 %v1308, 93
        %v1329 = vpop.permute.xlu0 %1328
        %1330 = vrot.lane.b32.xlu0 %v1309, 93
        %v1331 = vpop.permute.xlu0 %1330
        %1332 = vrot.lane.b32.xlu0 %v1310, 93
        %v1333 = vpop.permute.xlu0 %1332
        %1334 = vrot.lane.b32.xlu0 %v1311, 93
        %v1335 = vpop.permute.xlu0 %1334
        %1336 = vrot.lane.b32.xlu0 %v1312, 93
        %v1337 = vpop.permute.xlu0 %1336
        %1338 = vrot.lane.b32.xlu0 %v1313, 93
        %v1339 = vpop.permute.xlu0 %1338
        %1340 = vrot.lane.b32.xlu0 %v1314, 93
        %v1341 = vpop.permute.xlu0 %1340
        %vm1342 = vcmask 760832
        %v1343 = vsel %vm1342, %v1325, %v1327
        %v1344 = vsel %vm1342, %v1327, %v1329
        %v1345 = vsel %vm1342, %v1329, %v1331
        %v1346 = vsel %vm1342, %v1331, %v1333
        %v1347 = vsel %vm1342, %v1333, %v1335
        %v1348 = vsel %vm1342, %v1335, %v1337
        %v1349 = vsel %vm1342, %v1337, %v1339
        %v1350 = vsel %vm1342, %v1339, %v1341
        %v1359 = vadd.f32 %v1294, %v1343
        %v1360 = vadd.f32 %v1295, %v1344
        %v1361 = vadd.f32 %v1296, %v1345
        %v1362 = vadd.f32 %v1297, %v1346
        %v1363 = vadd.f32 %v1298, %v1347
        %v1364 = vadd.f32 %v1299, %v1348
        %v1365 = vadd.f32 %v1300, %v1349
        %v1366 = vadd.f32 %v1301, %v1350
        %1367 = vset.pattern.permute.xlu0 9
        %1368 = vperm.xlu0 %1367, %v734
        %v1369 = vpop.permute.xlu0 %1368
        %v1371 = vmul.f32 %v805, %v1369
        %v1372 = vmul.f32 %v809, %v1369
        %v1373 = vmul.f32 %v813, %v1369
        %v1374 = vmul.f32 %v817, %v1369
        %v1375 = vmul.f32 %v821, %v1369
        %v1376 = vmul.f32 %v825, %v1369
        %v1377 = vmul.f32 %v829, %v1369
        %v1378 = vmul.f32 %v833, %v1369
        %v1379 = vmul.f32 %v837, %v1369
        %1389 = vrot.lane.b32.xlu0 %v1371, 92
        %v1390 = vpop.permute.xlu0 %1389
        %1391 = vrot.lane.b32.xlu0 %v1372, 92
        %v1392 = vpop.permute.xlu0 %1391
        %1393 = vrot.lane.b32.xlu0 %v1373, 92
        %v1394 = vpop.permute.xlu0 %1393
        %1395 = vrot.lane.b32.xlu0 %v1374, 92
        %v1396 = vpop.permute.xlu0 %1395
        %1397 = vrot.lane.b32.xlu0 %v1375, 92
        %v1398 = vpop.permute.xlu0 %1397
        %1399 = vrot.lane.b32.xlu0 %v1376, 92
        %v1400 = vpop.permute.xlu0 %1399
        %1401 = vrot.lane.b32.xlu0 %v1377, 92
        %v1402 = vpop.permute.xlu0 %1401
        %1403 = vrot.lane.b32.xlu0 %v1378, 92
        %v1404 = vpop.permute.xlu0 %1403
        %1405 = vrot.lane.b32.xlu0 %v1379, 92
        %v1406 = vpop.permute.xlu0 %1405
        %vm1407 = vcmask 752640
        %v1408 = vsel %vm1407, %v1390, %v1392
        %v1409 = vsel %vm1407, %v1392, %v1394
        %v1410 = vsel %vm1407, %v1394, %v1396
        %v1411 = vsel %vm1407, %v1396, %v1398
        %v1412 = vsel %vm1407, %v1398, %v1400
        %v1413 = vsel %vm1407, %v1400, %v1402
        %v1414 = vsel %vm1407, %v1402, %v1404
        %v1415 = vsel %vm1407, %v1404, %v1406
        %v1424 = vadd.f32 %v1359, %v1408
        %v1425 = vadd.f32 %v1360, %v1409
        %v1426 = vadd.f32 %v1361, %v1410
        %v1427 = vadd.f32 %v1362, %v1411
        %v1428 = vadd.f32 %v1363, %v1412
        %v1429 = vadd.f32 %v1364, %v1413
        %v1430 = vadd.f32 %v1365, %v1414
        %v1431 = vadd.f32 %v1366, %v1415
        %1432 = vset.pattern.permute.xlu0 10
        %1433 = vperm.xlu0 %1432, %v734
        %v1434 = vpop.permute.xlu0 %1433
        %v1436 = vmul.f32 %v805, %v1434
        %v1437 = vmul.f32 %v809, %v1434
        %v1438 = vmul.f32 %v813, %v1434
        %v1439 = vmul.f32 %v817, %v1434
        %v1440 = vmul.f32 %v821, %v1434
        %v1441 = vmul.f32 %v825, %v1434
        %v1442 = vmul.f32 %v829, %v1434
        %v1443 = vmul.f32 %v833, %v1434
        %v1444 = vmul.f32 %v837, %v1434
        %1454 = vrot.lane.b32.xlu0 %v1436, 64
        %v1455 = vpop.permute.xlu0 %1454
        %1456 = vrot.lane.b32.xlu0 %v1437, 64
        %v1457 = vpop.permute.xlu0 %1456
        %1458 = vrot.lane.b32.xlu0 %v1438, 64
        %v1459 = vpop.permute.xlu0 %1458
        %1460 = vrot.lane.b32.xlu0 %v1439, 64
        %v1461 = vpop.permute.xlu0 %1460
        %1462 = vrot.lane.b32.xlu0 %v1440, 64
        %v1463 = vpop.permute.xlu0 %1462
        %1464 = vrot.lane.b32.xlu0 %v1441, 64
        %v1465 = vpop.permute.xlu0 %1464
        %1466 = vrot.lane.b32.xlu0 %v1442, 64
        %v1467 = vpop.permute.xlu0 %1466
        %1468 = vrot.lane.b32.xlu0 %v1443, 64
        %v1469 = vpop.permute.xlu0 %1468
        %1470 = vrot.lane.b32.xlu0 %v1444, 64
        %v1471 = vpop.permute.xlu0 %1470
        %vm1472 = vcmask 523264
        %v1473 = vsel %vm1472, %v1455, %v1457
        %v1474 = vsel %vm1472, %v1457, %v1459
        %v1475 = vsel %vm1472, %v1459, %v1461
        %v1476 = vsel %vm1472, %v1461, %v1463
        %v1477 = vsel %vm1472, %v1463, %v1465
        %v1478 = vsel %vm1472, %v1465, %v1467
        %v1479 = vsel %vm1472, %v1467, %v1469
        %v1480 = vsel %vm1472, %v1469, %v1471
        %v1489 = vadd.f32 %v1424, %v1473
        %v1490 = vadd.f32 %v1425, %v1474
        %v1491 = vadd.f32 %v1426, %v1475
        %v1492 = vadd.f32 %v1427, %v1476
        %v1493 = vadd.f32 %v1428, %v1477
        %v1494 = vadd.f32 %v1429, %v1478
        %v1495 = vadd.f32 %v1430, %v1479
        %v1496 = vadd.f32 %v1431, %v1480
        %1497 = vset.pattern.permute.xlu0 11
        %1498 = vperm.xlu0 %1497, %v734
        %v1499 = vpop.permute.xlu0 %1498
        %v1501 = vmul.f32 %v805, %v1499
        %v1502 = vmul.f32 %v809, %v1499
        %v1503 = vmul.f32 %v813, %v1499
        %v1504 = vmul.f32 %v817, %v1499
        %v1505 = vmul.f32 %v821, %v1499
        %v1506 = vmul.f32 %v825, %v1499
        %v1507 = vmul.f32 %v829, %v1499
        %v1508 = vmul.f32 %v833, %v1499
        %v1509 = vmul.f32 %v837, %v1499
        %1519 = vrot.lane.b32.xlu0 %v1501, 63
        %v1520 = vpop.permute.xlu0 %1519
        %1521 = vrot.lane.b32.xlu0 %v1502, 63
        %v1522 = vpop.permute.xlu0 %1521
        %1523 = vrot.lane.b32.xlu0 %v1503, 63
        %v1524 = vpop.permute.xlu0 %1523
        %1525 = vrot.lane.b32.xlu0 %v1504, 63
        %v1526 = vpop.permute.xlu0 %1525
        %1527 = vrot.lane.b32.xlu0 %v1505, 63
        %v1528 = vpop.permute.xlu0 %1527
        %1529 = vrot.lane.b32.xlu0 %v1506, 63
        %v1530 = vpop.permute.xlu0 %1529
        %1531 = vrot.lane.b32.xlu0 %v1507, 63
        %v1532 = vpop.permute.xlu0 %1531
        %1533 = vrot.lane.b32.xlu0 %v1508, 63
        %v1534 = vpop.permute.xlu0 %1533
        %1535 = vrot.lane.b32.xlu0 %v1509, 63
        %v1536 = vpop.permute.xlu0 %1535
        %vm1537 = vcmask 515072
        %v1538 = vsel %vm1537, %v1520, %v1522
        %v1539 = vsel %vm1537, %v1522, %v1524
        %v1540 = vsel %vm1537, %v1524, %v1526
        %v1541 = vsel %vm1537, %v1526, %v1528
        %v1542 = vsel %vm1537, %v1528, %v1530
        %v1543 = vsel %vm1537, %v1530, %v1532
        %v1544 = vsel %vm1537, %v1532, %v1534
        %v1545 = vsel %vm1537, %v1534, %v1536
        %v1554 = vadd.f32 %v1489, %v1538
        %v1555 = vadd.f32 %v1490, %v1539
        %v1556 = vadd.f32 %v1491, %v1540
        %v1557 = vadd.f32 %v1492, %v1541
        %v1558 = vadd.f32 %v1493, %v1542
        %v1559 = vadd.f32 %v1494, %v1543
        %v1560 = vadd.f32 %v1495, %v1544
        %v1561 = vadd.f32 %v1496, %v1545
        %1562 = vset.pattern.permute.xlu0 12
        %1563 = vperm.xlu0 %1562, %v734
        %v1564 = vpop.permute.xlu0 %1563
        %v1566 = vmul.f32 %v805, %v1564
        %v1567 = vmul.f32 %v809, %v1564
        %v1568 = vmul.f32 %v813, %v1564
        %v1569 = vmul.f32 %v817, %v1564
        %v1570 = vmul.f32 %v821, %v1564
        %v1571 = vmul.f32 %v825, %v1564
        %v1572 = vmul.f32 %v829, %v1564
        %v1573 = vmul.f32 %v833, %v1564
        %v1574 = vmul.f32 %v837, %v1564
        %1584 = vrot.lane.b32.xlu0 %v1566, 62
        %v1585 = vpop.permute.xlu0 %1584
        %1586 = vrot.lane.b32.xlu0 %v1567, 62
        %v1587 = vpop.permute.xlu0 %1586
        %1588 = vrot.lane.b32.xlu0 %v1568, 62
        %v1589 = vpop.permute.xlu0 %1588
        %1590 = vrot.lane.b32.xlu0 %v1569, 62
        %v1591 = vpop.permute.xlu0 %1590
        %1592 = vrot.lane.b32.xlu0 %v1570, 62
        %v1593 = vpop.permute.xlu0 %1592
        %1594 = vrot.lane.b32.xlu0 %v1571, 62
        %v1595 = vpop.permute.xlu0 %1594
        %1596 = vrot.lane.b32.xlu0 %v1572, 62
        %v1597 = vpop.permute.xlu0 %1596
        %1598 = vrot.lane.b32.xlu0 %v1573, 62
        %v1599 = vpop.permute.xlu0 %1598
        %1600 = vrot.lane.b32.xlu0 %v1574, 62
        %v1601 = vpop.permute.xlu0 %1600
        %vm1602 = vcmask 506880
        %v1603 = vsel %vm1602, %v1585, %v1587
        %v1604 = vsel %vm1602, %v1587, %v1589
        %v1605 = vsel %vm1602, %v1589, %v1591
        %v1606 = vsel %vm1602, %v1591, %v1593
        %v1607 = vsel %vm1602, %v1593, %v1595
        %v1608 = vsel %vm1602, %v1595, %v1597
        %v1609 = vsel %vm1602, %v1597, %v1599
        %v1610 = vsel %vm1602, %v1599, %v1601
        %v1619 = vadd.f32 %v1554, %v1603
        %v1620 = vadd.f32 %v1555, %v1604
        %v1621 = vadd.f32 %v1556, %v1605
        %v1622 = vadd.f32 %v1557, %v1606
        %v1623 = vadd.f32 %v1558, %v1607
        %v1624 = vadd.f32 %v1559, %v1608
        %v1625 = vadd.f32 %v1560, %v1609
        %v1626 = vadd.f32 %v1561, %v1610
        %1627 = vset.pattern.permute.xlu0 13
        %1628 = vperm.xlu0 %1627, %v734
        %v1629 = vpop.permute.xlu0 %1628
        %v1631 = vmul.f32 %v805, %v1629
        %v1632 = vmul.f32 %v809, %v1629
        %v1633 = vmul.f32 %v813, %v1629
        %v1634 = vmul.f32 %v817, %v1629
        %v1635 = vmul.f32 %v821, %v1629
        %v1636 = vmul.f32 %v825, %v1629
        %v1637 = vmul.f32 %v829, %v1629
        %v1638 = vmul.f32 %v833, %v1629
        %v1639 = vmul.f32 %v837, %v1629
        %1649 = vrot.lane.b32.xlu0 %v1631, 61
        %v1650 = vpop.permute.xlu0 %1649
        %1651 = vrot.lane.b32.xlu0 %v1632, 61
        %v1652 = vpop.permute.xlu0 %1651
        %1653 = vrot.lane.b32.xlu0 %v1633, 61
        %v1654 = vpop.permute.xlu0 %1653
        %1655 = vrot.lane.b32.xlu0 %v1634, 61
        %v1656 = vpop.permute.xlu0 %1655
        %1657 = vrot.lane.b32.xlu0 %v1635, 61
        %v1658 = vpop.permute.xlu0 %1657
        %1659 = vrot.lane.b32.xlu0 %v1636, 61
        %v1660 = vpop.permute.xlu0 %1659
        %1661 = vrot.lane.b32.xlu0 %v1637, 61
        %v1662 = vpop.permute.xlu0 %1661
        %1663 = vrot.lane.b32.xlu0 %v1638, 61
        %v1664 = vpop.permute.xlu0 %1663
        %1665 = vrot.lane.b32.xlu0 %v1639, 61
        %v1666 = vpop.permute.xlu0 %1665
        %vm1667 = vcmask 498688
        %v1668 = vsel %vm1667, %v1650, %v1652
        %v1669 = vsel %vm1667, %v1652, %v1654
        %v1670 = vsel %vm1667, %v1654, %v1656
        %v1671 = vsel %vm1667, %v1656, %v1658
        %v1672 = vsel %vm1667, %v1658, %v1660
        %v1673 = vsel %vm1667, %v1660, %v1662
        %v1674 = vsel %vm1667, %v1662, %v1664
        %v1675 = vsel %vm1667, %v1664, %v1666
        %v1684 = vadd.f32 %v1619, %v1668
        %v1685 = vadd.f32 %v1620, %v1669
        %v1686 = vadd.f32 %v1621, %v1670
        %v1687 = vadd.f32 %v1622, %v1671
        %v1688 = vadd.f32 %v1623, %v1672
        %v1689 = vadd.f32 %v1624, %v1673
        %v1690 = vadd.f32 %v1625, %v1674
        %v1691 = vadd.f32 %v1626, %v1675
        %1692 = vset.pattern.permute.xlu0 14
        %1693 = vperm.xlu0 %1692, %v734
        %v1694 = vpop.permute.xlu0 %1693
        %v1696 = vmul.f32 %v805, %v1694
        %v1697 = vmul.f32 %v809, %v1694
        %v1698 = vmul.f32 %v813, %v1694
        %v1699 = vmul.f32 %v817, %v1694
        %v1700 = vmul.f32 %v821, %v1694
        %v1701 = vmul.f32 %v825, %v1694
        %v1702 = vmul.f32 %v829, %v1694
        %v1703 = vmul.f32 %v833, %v1694
        %v1704 = vmul.f32 %v837, %v1694
        %1714 = vrot.lane.b32.xlu0 %v1696, 60
        %v1715 = vpop.permute.xlu0 %1714
        %1716 = vrot.lane.b32.xlu0 %v1697, 60
        %v1717 = vpop.permute.xlu0 %1716
        %1718 = vrot.lane.b32.xlu0 %v1698, 60
        %v1719 = vpop.permute.xlu0 %1718
        %1720 = vrot.lane.b32.xlu0 %v1699, 60
        %v1721 = vpop.permute.xlu0 %1720
        %1722 = vrot.lane.b32.xlu0 %v1700, 60
        %v1723 = vpop.permute.xlu0 %1722
        %1724 = vrot.lane.b32.xlu0 %v1701, 60
        %v1725 = vpop.permute.xlu0 %1724
        %1726 = vrot.lane.b32.xlu0 %v1702, 60
        %v1727 = vpop.permute.xlu0 %1726
        %1728 = vrot.lane.b32.xlu0 %v1703, 60
        %v1729 = vpop.permute.xlu0 %1728
        %1730 = vrot.lane.b32.xlu0 %v1704, 60
        %v1731 = vpop.permute.xlu0 %1730
        %vm1732 = vcmask 490496
        %v1733 = vsel %vm1732, %v1715, %v1717
        %v1734 = vsel %vm1732, %v1717, %v1719
        %v1735 = vsel %vm1732, %v1719, %v1721
        %v1736 = vsel %vm1732, %v1721, %v1723
        %v1737 = vsel %vm1732, %v1723, %v1725
        %v1738 = vsel %vm1732, %v1725, %v1727
        %v1739 = vsel %vm1732, %v1727, %v1729
        %v1740 = vsel %vm1732, %v1729, %v1731
        %v1749 = vadd.f32 %v1684, %v1733
        %v1750 = vadd.f32 %v1685, %v1734
        %v1751 = vadd.f32 %v1686, %v1735
        %v1752 = vadd.f32 %v1687, %v1736
        %v1753 = vadd.f32 %v1688, %v1737
        %v1754 = vadd.f32 %v1689, %v1738
        %v1755 = vadd.f32 %v1690, %v1739
        %v1756 = vadd.f32 %v1691, %v1740
        %1757 = vset.pattern.permute.xlu0 15
        %1758 = vperm.xlu0 %1757, %v734
        %v1759 = vpop.permute.xlu0 %1758
        %v1761 = vmul.f32 %v805, %v1759
        %v1762 = vmul.f32 %v809, %v1759
        %v1763 = vmul.f32 %v813, %v1759
        %v1764 = vmul.f32 %v817, %v1759
        %v1765 = vmul.f32 %v821, %v1759
        %v1766 = vmul.f32 %v825, %v1759
        %v1767 = vmul.f32 %v829, %v1759
        %v1768 = vmul.f32 %v833, %v1759
        %v1769 = vmul.f32 %v837, %v1759
        %1779 = vrot.lane.b32.xlu0 %v1761, 32
        %v1780 = vpop.permute.xlu0 %1779
        %1781 = vrot.lane.b32.xlu0 %v1762, 32
        %v1782 = vpop.permute.xlu0 %1781
        %1783 = vrot.lane.b32.xlu0 %v1763, 32
        %v1784 = vpop.permute.xlu0 %1783
        %1785 = vrot.lane.b32.xlu0 %v1764, 32
        %v1786 = vpop.permute.xlu0 %1785
        %1787 = vrot.lane.b32.xlu0 %v1765, 32
        %v1788 = vpop.permute.xlu0 %1787
        %1789 = vrot.lane.b32.xlu0 %v1766, 32
        %v1790 = vpop.permute.xlu0 %1789
        %1791 = vrot.lane.b32.xlu0 %v1767, 32
        %v1792 = vpop.permute.xlu0 %1791
        %1793 = vrot.lane.b32.xlu0 %v1768, 32
        %v1794 = vpop.permute.xlu0 %1793
        %1795 = vrot.lane.b32.xlu0 %v1769, 32
        %v1796 = vpop.permute.xlu0 %1795
        %vm1797 = vcmask 261120
        %v1798 = vsel %vm1797, %v1780, %v1782
        %v1799 = vsel %vm1797, %v1782, %v1784
        %v1800 = vsel %vm1797, %v1784, %v1786
        %v1801 = vsel %vm1797, %v1786, %v1788
        %v1802 = vsel %vm1797, %v1788, %v1790
        %v1803 = vsel %vm1797, %v1790, %v1792
        %v1804 = vsel %vm1797, %v1792, %v1794
        %v1805 = vsel %vm1797, %v1794, %v1796
        %v1814 = vadd.f32 %v1749, %v1798
        %v1815 = vadd.f32 %v1750, %v1799
        %v1816 = vadd.f32 %v1751, %v1800
        %v1817 = vadd.f32 %v1752, %v1801
        %v1818 = vadd.f32 %v1753, %v1802
        %v1819 = vadd.f32 %v1754, %v1803
        %v1820 = vadd.f32 %v1755, %v1804
        %v1821 = vadd.f32 %v1756, %v1805
        %1822 = vset.pattern.permute.xlu0 16
        %1823 = vperm.xlu0 %1822, %v734
        %v1824 = vpop.permute.xlu0 %1823
        %v1826 = vmul.f32 %v805, %v1824
        %v1827 = vmul.f32 %v809, %v1824
        %v1828 = vmul.f32 %v813, %v1824
        %v1829 = vmul.f32 %v817, %v1824
        %v1830 = vmul.f32 %v821, %v1824
        %v1831 = vmul.f32 %v825, %v1824
        %v1832 = vmul.f32 %v829, %v1824
        %v1833 = vmul.f32 %v833, %v1824
        %v1834 = vmul.f32 %v837, %v1824
        %1844 = vrot.lane.b32.xlu0 %v1826, 31
        %v1845 = vpop.permute.xlu0 %1844
        %1846 = vrot.lane.b32.xlu0 %v1827, 31
        %v1847 = vpop.permute.xlu0 %1846
        %1848 = vrot.lane.b32.xlu0 %v1828, 31
        %v1849 = vpop.permute.xlu0 %1848
        %1850 = vrot.lane.b32.xlu0 %v1829, 31
        %v1851 = vpop.permute.xlu0 %1850
        %1852 = vrot.lane.b32.xlu0 %v1830, 31
        %v1853 = vpop.permute.xlu0 %1852
        %1854 = vrot.lane.b32.xlu0 %v1831, 31
        %v1855 = vpop.permute.xlu0 %1854
        %1856 = vrot.lane.b32.xlu0 %v1832, 31
        %v1857 = vpop.permute.xlu0 %1856
        %1858 = vrot.lane.b32.xlu0 %v1833, 31
        %v1859 = vpop.permute.xlu0 %1858
        %1860 = vrot.lane.b32.xlu0 %v1834, 31
        %v1861 = vpop.permute.xlu0 %1860
        %vm1862 = vcmask 252928
        %v1863 = vsel %vm1862, %v1845, %v1847
        %v1864 = vsel %vm1862, %v1847, %v1849
        %v1865 = vsel %vm1862, %v1849, %v1851
        %v1866 = vsel %vm1862, %v1851, %v1853
        %v1867 = vsel %vm1862, %v1853, %v1855
        %v1868 = vsel %vm1862, %v1855, %v1857
        %v1869 = vsel %vm1862, %v1857, %v1859
        %v1870 = vsel %vm1862, %v1859, %v1861
        %v1879 = vadd.f32 %v1814, %v1863
        %v1880 = vadd.f32 %v1815, %v1864
        %v1881 = vadd.f32 %v1816, %v1865
        %v1882 = vadd.f32 %v1817, %v1866
        %v1883 = vadd.f32 %v1818, %v1867
        %v1884 = vadd.f32 %v1819, %v1868
        %v1885 = vadd.f32 %v1820, %v1869
        %v1886 = vadd.f32 %v1821, %v1870
        %1887 = vset.pattern.permute.xlu0 17
        %1888 = vperm.xlu0 %1887, %v734
        %v1889 = vpop.permute.xlu0 %1888
        %v1891 = vmul.f32 %v805, %v1889
        %v1892 = vmul.f32 %v809, %v1889
        %v1893 = vmul.f32 %v813, %v1889
        %v1894 = vmul.f32 %v817, %v1889
        %v1895 = vmul.f32 %v821, %v1889
        %v1896 = vmul.f32 %v825, %v1889
        %v1897 = vmul.f32 %v829, %v1889
        %v1898 = vmul.f32 %v833, %v1889
        %v1899 = vmul.f32 %v837, %v1889
        %1909 = vrot.lane.b32.xlu0 %v1891, 30
        %v1910 = vpop.permute.xlu0 %1909
        %1911 = vrot.lane.b32.xlu0 %v1892, 30
        %v1912 = vpop.permute.xlu0 %1911
        %1913 = vrot.lane.b32.xlu0 %v1893, 30
        %v1914 = vpop.permute.xlu0 %1913
        %1915 = vrot.lane.b32.xlu0 %v1894, 30
        %v1916 = vpop.permute.xlu0 %1915
        %1917 = vrot.lane.b32.xlu0 %v1895, 30
        %v1918 = vpop.permute.xlu0 %1917
        %1919 = vrot.lane.b32.xlu0 %v1896, 30
        %v1920 = vpop.permute.xlu0 %1919
        %1921 = vrot.lane.b32.xlu0 %v1897, 30
        %v1922 = vpop.permute.xlu0 %1921
        %1923 = vrot.lane.b32.xlu0 %v1898, 30
        %v1924 = vpop.permute.xlu0 %1923
        %1925 = vrot.lane.b32.xlu0 %v1899, 30
        %v1926 = vpop.permute.xlu0 %1925
        %vm1927 = vcmask 244736
        %v1928 = vsel %vm1927, %v1910, %v1912
        %v1929 = vsel %vm1927, %v1912, %v1914
        %v1930 = vsel %vm1927, %v1914, %v1916
        %v1931 = vsel %vm1927, %v1916, %v1918
        %v1932 = vsel %vm1927, %v1918, %v1920
        %v1933 = vsel %vm1927, %v1920, %v1922
        %v1934 = vsel %vm1927, %v1922, %v1924
        %v1935 = vsel %vm1927, %v1924, %v1926
        %v1944 = vadd.f32 %v1879, %v1928
        %v1945 = vadd.f32 %v1880, %v1929
        %v1946 = vadd.f32 %v1881, %v1930
        %v1947 = vadd.f32 %v1882, %v1931
        %v1948 = vadd.f32 %v1883, %v1932
        %v1949 = vadd.f32 %v1884, %v1933
        %v1950 = vadd.f32 %v1885, %v1934
        %v1951 = vadd.f32 %v1886, %v1935
        %1952 = vset.pattern.permute.xlu0 18
        %1953 = vperm.xlu0 %1952, %v734
        %v1954 = vpop.permute.xlu0 %1953
        %v1956 = vmul.f32 %v805, %v1954
        %v1957 = vmul.f32 %v809, %v1954
        %v1958 = vmul.f32 %v813, %v1954
        %v1959 = vmul.f32 %v817, %v1954
        %v1960 = vmul.f32 %v821, %v1954
        %v1961 = vmul.f32 %v825, %v1954
        %v1962 = vmul.f32 %v829, %v1954
        %v1963 = vmul.f32 %v833, %v1954
        %v1964 = vmul.f32 %v837, %v1954
        %1974 = vrot.lane.b32.xlu0 %v1956, 29
        %v1975 = vpop.permute.xlu0 %1974
        %1976 = vrot.lane.b32.xlu0 %v1957, 29
        %v1977 = vpop.permute.xlu0 %1976
        %1978 = vrot.lane.b32.xlu0 %v1958, 29
        %v1979 = vpop.permute.xlu0 %1978
        %1980 = vrot.lane.b32.xlu0 %v1959, 29
        %v1981 = vpop.permute.xlu0 %1980
        %1982 = vrot.lane.b32.xlu0 %v1960, 29
        %v1983 = vpop.permute.xlu0 %1982
        %1984 = vrot.lane.b32.xlu0 %v1961, 29
        %v1985 = vpop.permute.xlu0 %1984
        %1986 = vrot.lane.b32.xlu0 %v1962, 29
        %v1987 = vpop.permute.xlu0 %1986
        %1988 = vrot.lane.b32.xlu0 %v1963, 29
        %v1989 = vpop.permute.xlu0 %1988
        %1990 = vrot.lane.b32.xlu0 %v1964, 29
        %v1991 = vpop.permute.xlu0 %1990
        %vm1992 = vcmask 236544
        %v1993 = vsel %vm1992, %v1975, %v1977
        %v1994 = vsel %vm1992, %v1977, %v1979
        %v1995 = vsel %vm1992, %v1979, %v1981
        %v1996 = vsel %vm1992, %v1981, %v1983
        %v1997 = vsel %vm1992, %v1983, %v1985
        %v1998 = vsel %vm1992, %v1985, %v1987
        %v1999 = vsel %vm1992, %v1987, %v1989
        %v2000 = vsel %vm1992, %v1989, %v1991
        %v2009 = vadd.f32 %v1944, %v1993
        %v2010 = vadd.f32 %v1945, %v1994
        %v2011 = vadd.f32 %v1946, %v1995
        %v2012 = vadd.f32 %v1947, %v1996
        %v2013 = vadd.f32 %v1948, %v1997
        %v2014 = vadd.f32 %v1949, %v1998
        %v2015 = vadd.f32 %v1950, %v1999
        %v2016 = vadd.f32 %v1951, %v2000
        %2017 = vset.pattern.permute.xlu0 19
        %2018 = vperm.xlu0 %2017, %v734
        %v2019 = vpop.permute.xlu0 %2018
        %v2021 = vmul.f32 %v805, %v2019
        %v2022 = vmul.f32 %v809, %v2019
        %v2023 = vmul.f32 %v813, %v2019
        %v2024 = vmul.f32 %v817, %v2019
        %v2025 = vmul.f32 %v821, %v2019
        %v2026 = vmul.f32 %v825, %v2019
        %v2027 = vmul.f32 %v829, %v2019
        %v2028 = vmul.f32 %v833, %v2019
        %v2029 = vmul.f32 %v837, %v2019
        %2039 = vrot.lane.b32.xlu0 %v2021, 28
        %v2040 = vpop.permute.xlu0 %2039
        %2041 = vrot.lane.b32.xlu0 %v2022, 28
        %v2042 = vpop.permute.xlu0 %2041
        %2043 = vrot.lane.b32.xlu0 %v2023, 28
        %v2044 = vpop.permute.xlu0 %2043
        %2045 = vrot.lane.b32.xlu0 %v2024, 28
        %v2046 = vpop.permute.xlu0 %2045
        %2047 = vrot.lane.b32.xlu0 %v2025, 28
        %v2048 = vpop.permute.xlu0 %2047
        %2049 = vrot.lane.b32.xlu0 %v2026, 28
        %v2050 = vpop.permute.xlu0 %2049
        %2051 = vrot.lane.b32.xlu0 %v2027, 28
        %v2052 = vpop.permute.xlu0 %2051
        %2053 = vrot.lane.b32.xlu0 %v2028, 28
        %v2054 = vpop.permute.xlu0 %2053
        %2055 = vrot.lane.b32.xlu0 %v2029, 28
        %v2056 = vpop.permute.xlu0 %2055
        %vm2057 = vcmask 228352
        %v2058 = vsel %vm2057, %v2040, %v2042
        %v2059 = vsel %vm2057, %v2042, %v2044
        %v2060 = vsel %vm2057, %v2044, %v2046
        %v2061 = vsel %vm2057, %v2046, %v2048
        %v2062 = vsel %vm2057, %v2048, %v2050
        %v2063 = vsel %vm2057, %v2050, %v2052
        %v2064 = vsel %vm2057, %v2052, %v2054
        %v2065 = vsel %vm2057, %v2054, %v2056
        %v2074 = vadd.f32 %v2009, %v2058
        %v2075 = vadd.f32 %v2010, %v2059
        %v2076 = vadd.f32 %v2011, %v2060
        %v2077 = vadd.f32 %v2012, %v2061
        %v2078 = vadd.f32 %v2013, %v2062
        %v2079 = vadd.f32 %v2014, %v2063
        %v2080 = vadd.f32 %v2015, %v2064
        %v2081 = vadd.f32 %v2016, %v2065
        %v2082 = vld [vmem:[%s663 + $0x1] sm:$0xff]
        %v2084 = vlaneseq
        %v2085 = vshrl.u32 %v2084, 7
        %v2086 = vsub.s32 0, %v2085
        %v2087 = vrot.slane %v2082, %v2086
        %v2088 = vlaneseq
        %v2089 = vshrl.u32 %v2088, 7
        %v2090 = vsub.s32 1, %v2089
        %v2091 = vrot.slane %v2082, %v2090
        %v2092 = vlaneseq
        %v2093 = vshrl.u32 %v2092, 7
        %v2094 = vsub.s32 2, %v2093
        %v2095 = vrot.slane %v2082, %v2094
        %v2096 = vlaneseq
        %v2097 = vshrl.u32 %v2096, 7
        %v2098 = vsub.s32 3, %v2097
        %v2099 = vrot.slane %v2082, %v2098
        %v2100 = vlaneseq
        %v2101 = vshrl.u32 %v2100, 7
        %v2102 = vsub.s32 4, %v2101
        %v2103 = vrot.slane %v2082, %v2102
        %v2104 = vlaneseq
        %v2105 = vshrl.u32 %v2104, 7
        %v2106 = vsub.s32 5, %v2105
        %v2107 = vrot.slane %v2082, %v2106
        %v2108 = vlaneseq
        %v2109 = vshrl.u32 %v2108, 7
        %v2110 = vsub.s32 6, %v2109
        %v2111 = vrot.slane %v2082, %v2110
        %v2112 = vlaneseq
        %v2113 = vshrl.u32 %v2112, 7
        %v2114 = vsub.s32 7, %v2113
        %v2115 = vrot.slane %v2082, %v2114
        %2124 = vset.pattern.permute.xlu0 20
        %2125 = vperm.xlu0 %2124, %v734
        %v2126 = vpop.permute.xlu0 %2125
        %v2128 = vmul.f32 %v2087, %v2126
        %v2129 = vmul.f32 %v2091, %v2126
        %v2130 = vmul.f32 %v2095, %v2126
        %v2131 = vmul.f32 %v2099, %v2126
        %v2132 = vmul.f32 %v2103, %v2126
        %v2133 = vmul.f32 %v2107, %v2126
        %v2134 = vmul.f32 %v2111, %v2126
        %v2135 = vmul.f32 %v2115, %v2126
        %v2136 = vadd.f32 %v2074, %v2128
        %v2137 = vadd.f32 %v2075, %v2129
        %v2138 = vadd.f32 %v2076, %v2130
        %v2139 = vadd.f32 %v2077, %v2131
        %v2140 = vadd.f32 %v2078, %v2132
        %v2141 = vadd.f32 %v2079, %v2133
        %v2142 = vadd.f32 %v2080, %v2134
        %v2143 = vadd.f32 %v2081, %v2135
        %v2144 = vld [vmem:[%s663 + $0x1] sm:$0xff]
        %v2145 = vld [vmem:[%s663 + $0x9] sm:$0x1]
        %v2148 = vlaneseq
        %v2149 = vshrl.u32 %v2148, 7
        %v2150 = vsub.s32 0, %v2149
        %v2151 = vrot.slane %v2144, %v2150
        %v2152 = vlaneseq
        %v2153 = vshrl.u32 %v2152, 7
        %v2154 = vsub.s32 1, %v2153
        %v2155 = vrot.slane %v2144, %v2154
        %v2156 = vlaneseq
        %v2157 = vshrl.u32 %v2156, 7
        %v2158 = vsub.s32 2, %v2157
        %v2159 = vrot.slane %v2144, %v2158
        %v2160 = vlaneseq
        %v2161 = vshrl.u32 %v2160, 7
        %v2162 = vsub.s32 3, %v2161
        %v2163 = vrot.slane %v2144, %v2162
        %v2164 = vlaneseq
        %v2165 = vshrl.u32 %v2164, 7
        %v2166 = vsub.s32 4, %v2165
        %v2167 = vrot.slane %v2144, %v2166
        %v2168 = vlaneseq
        %v2169 = vshrl.u32 %v2168, 7
        %v2170 = vsub.s32 5, %v2169
        %v2171 = vrot.slane %v2144, %v2170
        %v2172 = vlaneseq
        %v2173 = vshrl.u32 %v2172, 7
        %v2174 = vsub.s32 6, %v2173
        %v2175 = vrot.slane %v2144, %v2174
        %v2176 = vlaneseq
        %v2177 = vshrl.u32 %v2176, 7
        %v2178 = vsub.s32 7, %v2177
        %v2179 = vrot.slane %v2144, %v2178
        %v2180 = vlaneseq
        %v2181 = vshrl.u32 %v2180, 7
        %v2182 = vsub.s32 0, %v2181
        %v2183 = vrot.slane %v2145, %v2182
        %2193 = vset.pattern.permute.xlu0 21
        %2194 = vperm.xlu0 %2193, %v734
        %v2195 = vpop.permute.xlu0 %2194
        %v2197 = vmul.f32 %v2151, %v2195
        %v2198 = vmul.f32 %v2155, %v2195
        %v2199 = vmul.f32 %v2159, %v2195
        %v2200 = vmul.f32 %v2163, %v2195
        %v2201 = vmul.f32 %v2167, %v2195
        %v2202 = vmul.f32 %v2171, %v2195
        %v2203 = vmul.f32 %v2175, %v2195
        %v2204 = vmul.f32 %v2179, %v2195
        %v2205 = vmul.f32 %v2183, %v2195
        %2215 = vrot.lane.b32.xlu0 %v2197, 127
        %v2216 = vpop.permute.xlu0 %2215
        %2217 = vrot.lane.b32.xlu0 %v2198, 127
        %v2218 = vpop.permute.xlu0 %2217
        %2219 = vrot.lane.b32.xlu0 %v2199, 127
        %v2220 = vpop.permute.xlu0 %2219
        %2221 = vrot.lane.b32.xlu0 %v2200, 127
        %v2222 = vpop.permute.xlu0 %2221
        %2223 = vrot.lane.b32.xlu0 %v2201, 127
        %v2224 = vpop.permute.xlu0 %2223
        %2225 = vrot.lane.b32.xlu0 %v2202, 127
        %v2226 = vpop.permute.xlu0 %2225
        %2227 = vrot.lane.b32.xlu0 %v2203, 127
        %v2228 = vpop.permute.xlu0 %2227
        %2229 = vrot.lane.b32.xlu0 %v2204, 127
        %v2230 = vpop.permute.xlu0 %2229
        %2231 = vrot.lane.b32.xlu0 %v2205, 127
        %v2232 = vpop.permute.xlu0 %2231
        %v2233 = vsel %vm887, %v2216, %v2218
        %v2234 = vsel %vm887, %v2218, %v2220
        %v2235 = vsel %vm887, %v2220, %v2222
        %v2236 = vsel %vm887, %v2222, %v2224
        %v2237 = vsel %vm887, %v2224, %v2226
        %v2238 = vsel %vm887, %v2226, %v2228
        %v2239 = vsel %vm887, %v2228, %v2230
        %v2240 = vsel %vm887, %v2230, %v2232
        %v2249 = vadd.f32 %v2136, %v2233
        %v2250 = vadd.f32 %v2137, %v2234
        %v2251 = vadd.f32 %v2138, %v2235
        %v2252 = vadd.f32 %v2139, %v2236
        %v2253 = vadd.f32 %v2140, %v2237
        %v2254 = vadd.f32 %v2141, %v2238
        %v2255 = vadd.f32 %v2142, %v2239
        %v2256 = vadd.f32 %v2143, %v2240
        %2257 = vset.pattern.permute.xlu0 22
        %2258 = vperm.xlu0 %2257, %v734
        %v2259 = vpop.permute.xlu0 %2258
        %v2261 = vmul.f32 %v2151, %v2259
        %v2262 = vmul.f32 %v2155, %v2259
        %v2263 = vmul.f32 %v2159, %v2259
        %v2264 = vmul.f32 %v2163, %v2259
        %v2265 = vmul.f32 %v2167, %v2259
        %v2266 = vmul.f32 %v2171, %v2259
        %v2267 = vmul.f32 %v2175, %v2259
        %v2268 = vmul.f32 %v2179, %v2259
        %v2269 = vmul.f32 %v2183, %v2259
        %2279 = vrot.lane.b32.xlu0 %v2261, 126
        %v2280 = vpop.permute.xlu0 %2279
        %2281 = vrot.lane.b32.xlu0 %v2262, 126
        %v2282 = vpop.permute.xlu0 %2281
        %2283 = vrot.lane.b32.xlu0 %v2263, 126
        %v2284 = vpop.permute.xlu0 %2283
        %2285 = vrot.lane.b32.xlu0 %v2264, 126
        %v2286 = vpop.permute.xlu0 %2285
        %2287 = vrot.lane.b32.xlu0 %v2265, 126
        %v2288 = vpop.permute.xlu0 %2287
        %2289 = vrot.lane.b32.xlu0 %v2266, 126
        %v2290 = vpop.permute.xlu0 %2289
        %2291 = vrot.lane.b32.xlu0 %v2267, 126
        %v2292 = vpop.permute.xlu0 %2291
        %2293 = vrot.lane.b32.xlu0 %v2268, 126
        %v2294 = vpop.permute.xlu0 %2293
        %2295 = vrot.lane.b32.xlu0 %v2269, 126
        %v2296 = vpop.permute.xlu0 %2295
        %v2297 = vsel %vm952, %v2280, %v2282
        %v2298 = vsel %vm952, %v2282, %v2284
        %v2299 = vsel %vm952, %v2284, %v2286
        %v2300 = vsel %vm952, %v2286, %v2288
        %v2301 = vsel %vm952, %v2288, %v2290
        %v2302 = vsel %vm952, %v2290, %v2292
        %v2303 = vsel %vm952, %v2292, %v2294
        %v2304 = vsel %vm952, %v2294, %v2296
        %v2313 = vadd.f32 %v2249, %v2297
        %v2314 = vadd.f32 %v2250, %v2298
        %v2315 = vadd.f32 %v2251, %v2299
        %v2316 = vadd.f32 %v2252, %v2300
        %v2317 = vadd.f32 %v2253, %v2301
        %v2318 = vadd.f32 %v2254, %v2302
        %v2319 = vadd.f32 %v2255, %v2303
        %v2320 = vadd.f32 %v2256, %v2304
        %2321 = vset.pattern.permute.xlu0 23
        %2322 = vperm.xlu0 %2321, %v734
        %v2323 = vpop.permute.xlu0 %2322
        %v2325 = vmul.f32 %v2151, %v2323
        %v2326 = vmul.f32 %v2155, %v2323
        %v2327 = vmul.f32 %v2159, %v2323
        %v2328 = vmul.f32 %v2163, %v2323
        %v2329 = vmul.f32 %v2167, %v2323
        %v2330 = vmul.f32 %v2171, %v2323
        %v2331 = vmul.f32 %v2175, %v2323
        %v2332 = vmul.f32 %v2179, %v2323
        %v2333 = vmul.f32 %v2183, %v2323
        %2343 = vrot.lane.b32.xlu0 %v2325, 125
        %v2344 = vpop.permute.xlu0 %2343
        %2345 = vrot.lane.b32.xlu0 %v2326, 125
        %v2346 = vpop.permute.xlu0 %2345
        %2347 = vrot.lane.b32.xlu0 %v2327, 125
        %v2348 = vpop.permute.xlu0 %2347
        %2349 = vrot.lane.b32.xlu0 %v2328, 125
        %v2350 = vpop.permute.xlu0 %2349
        %2351 = vrot.lane.b32.xlu0 %v2329, 125
        %v2352 = vpop.permute.xlu0 %2351
        %2353 = vrot.lane.b32.xlu0 %v2330, 125
        %v2354 = vpop.permute.xlu0 %2353
        %2355 = vrot.lane.b32.xlu0 %v2331, 125
        %v2356 = vpop.permute.xlu0 %2355
        %2357 = vrot.lane.b32.xlu0 %v2332, 125
        %v2358 = vpop.permute.xlu0 %2357
        %2359 = vrot.lane.b32.xlu0 %v2333, 125
        %v2360 = vpop.permute.xlu0 %2359
        %v2361 = vsel %vm1017, %v2344, %v2346
        %v2362 = vsel %vm1017, %v2346, %v2348
        %v2363 = vsel %vm1017, %v2348, %v2350
        %v2364 = vsel %vm1017, %v2350, %v2352
        %v2365 = vsel %vm1017, %v2352, %v2354
        %v2366 = vsel %vm1017, %v2354, %v2356
        %v2367 = vsel %vm1017, %v2356, %v2358
        %v2368 = vsel %vm1017, %v2358, %v2360
        %v2377 = vadd.f32 %v2313, %v2361
        %v2378 = vadd.f32 %v2314, %v2362
        %v2379 = vadd.f32 %v2315, %v2363
        %v2380 = vadd.f32 %v2316, %v2364
        %v2381 = vadd.f32 %v2317, %v2365
        %v2382 = vadd.f32 %v2318, %v2366
        %v2383 = vadd.f32 %v2319, %v2367
        %v2384 = vadd.f32 %v2320, %v2368
        %2385 = vset.pattern.permute.xlu0 24
        %2386 = vperm.xlu0 %2385, %v734
        %v2387 = vpop.permute.xlu0 %2386
        %v2389 = vmul.f32 %v2151, %v2387
        %v2390 = vmul.f32 %v2155, %v2387
        %v2391 = vmul.f32 %v2159, %v2387
        %v2392 = vmul.f32 %v2163, %v2387
        %v2393 = vmul.f32 %v2167, %v2387
        %v2394 = vmul.f32 %v2171, %v2387
        %v2395 = vmul.f32 %v2175, %v2387
        %v2396 = vmul.f32 %v2179, %v2387
        %v2397 = vmul.f32 %v2183, %v2387
        %2407 = vrot.lane.b32.xlu0 %v2389, 124
        %v2408 = vpop.permute.xlu0 %2407
        %2409 = vrot.lane.b32.xlu0 %v2390, 124
        %v2410 = vpop.permute.xlu0 %2409
        %2411 = vrot.lane.b32.xlu0 %v2391, 124
        %v2412 = vpop.permute.xlu0 %2411
        %2413 = vrot.lane.b32.xlu0 %v2392, 124
        %v2414 = vpop.permute.xlu0 %2413
        %2415 = vrot.lane.b32.xlu0 %v2393, 124
        %v2416 = vpop.permute.xlu0 %2415
        %2417 = vrot.lane.b32.xlu0 %v2394, 124
        %v2418 = vpop.permute.xlu0 %2417
        %2419 = vrot.lane.b32.xlu0 %v2395, 124
        %v2420 = vpop.permute.xlu0 %2419
        %2421 = vrot.lane.b32.xlu0 %v2396, 124
        %v2422 = vpop.permute.xlu0 %2421
        %2423 = vrot.lane.b32.xlu0 %v2397, 124
        %v2424 = vpop.permute.xlu0 %2423
        %v2425 = vsel %vm1082, %v2408, %v2410
        %v2426 = vsel %vm1082, %v2410, %v2412
        %v2427 = vsel %vm1082, %v2412, %v2414
        %v2428 = vsel %vm1082, %v2414, %v2416
        %v2429 = vsel %vm1082, %v2416, %v2418
        %v2430 = vsel %vm1082, %v2418, %v2420
        %v2431 = vsel %vm1082, %v2420, %v2422
        %v2432 = vsel %vm1082, %v2422, %v2424
        %v2441 = vadd.f32 %v2377, %v2425
        %v2442 = vadd.f32 %v2378, %v2426
        %v2443 = vadd.f32 %v2379, %v2427
        %v2444 = vadd.f32 %v2380, %v2428
        %v2445 = vadd.f32 %v2381, %v2429
        %v2446 = vadd.f32 %v2382, %v2430
        %v2447 = vadd.f32 %v2383, %v2431
        %v2448 = vadd.f32 %v2384, %v2432
        %v2449 = vld [vmem:[#allocation6] sm:$0xff]
        %2451 = vset.pattern.permute.xlu0 0
        %2452 = vperm.xlu0 %2451, %v2449
        %v2453 = vpop.permute.xlu0 %2452
        %v2455 = vadd.f32 %v2441, %v2453
        %v2456 = vadd.f32 %v2442, %v2453
        %v2457 = vadd.f32 %v2443, %v2453
        %v2458 = vadd.f32 %v2444, %v2453
        %v2459 = vadd.f32 %v2445, %v2453
        %v2460 = vadd.f32 %v2446, %v2453
        %v2461 = vadd.f32 %v2447, %v2453
        %v2462 = vadd.f32 %v2448, %v2453
        %v2463 = vmax.f32 %v2455, 0.0
        %v2464 = vmax.f32 %v2456, 0.0
        %v2465 = vmax.f32 %v2457, 0.0
        %v2466 = vmax.f32 %v2458, 0.0
        %v2467 = vmax.f32 %v2459, 0.0
        %v2468 = vmax.f32 %v2460, 0.0
        %v2469 = vmax.f32 %v2461, 0.0
        %v2470 = vmax.f32 %v2462, 0.0
        %2471 = vst [vmem:[#allocation3 + $0x8] sm:$0xff] %v2463
        %2472 = vst [vmem:[#allocation3 + $0x10] sm:$0xff] %v2464
        %2473 = vst [vmem:[#allocation3 + $0x18] sm:$0xff] %v2465
        %2474 = vst [vmem:[#allocation3 + $0x20] sm:$0xff] %v2466
        %2475 = vst [vmem:[#allocation3 + $0x28] sm:$0xff] %v2467
        %2476 = vst [vmem:[#allocation3 + $0x30] sm:$0xff] %v2468
        %2477 = vst [vmem:[#allocation3 + $0x38] sm:$0xff] %v2469
        %2478 = vst [vmem:[#allocation3 + $0x40] sm:$0xff] %v2470
        %v2479 = vld [vmem:[#allocation3 + $0x8] sm:$0xff]
        %v2480 = vld [vmem:[#allocation3 + $0x10] sm:$0xff]
        %v2481 = vld [vmem:[#allocation3 + $0x18] sm:$0xff]
        %v2482 = vld [vmem:[#allocation3 + $0x20] sm:$0xff]
        %v2483 = vld [vmem:[#allocation3 + $0x28] sm:$0xff]
        %v2484 = vld [vmem:[#allocation3 + $0x30] sm:$0xff]
        %v2485 = vld [vmem:[#allocation3 + $0x38] sm:$0xff]
        %v2486 = vld [vmem:[#allocation3 + $0x40] sm:$0xff]
        %v2487 = vld [vmem:[#allocation3 + $0x48] sm:$0xff]
        %2497 = vrot.lane.b32.xlu0 %v2479, 127
        %v2498 = vpop.permute.xlu0 %2497
        %2499 = vrot.lane.b32.xlu0 %v2480, 127
        %v2500 = vpop.permute.xlu0 %2499
        %2501 = vrot.lane.b32.xlu0 %v2481, 127
        %v2502 = vpop.permute.xlu0 %2501
        %2503 = vrot.lane.b32.xlu0 %v2482, 127
        %v2504 = vpop.permute.xlu0 %2503
        %2505 = vrot.lane.b32.xlu0 %v2483, 127
        %v2506 = vpop.permute.xlu0 %2505
        %2507 = vrot.lane.b32.xlu0 %v2484, 127
        %v2508 = vpop.permute.xlu0 %2507
        %2509 = vrot.lane.b32.xlu0 %v2485, 127
        %v2510 = vpop.permute.xlu0 %2509
        %2511 = vrot.lane.b32.xlu0 %v2486, 127
        %v2512 = vpop.permute.xlu0 %2511
        %2513 = vrot.lane.b32.xlu0 %v2487, 127
        %v2514 = vpop.permute.xlu0 %2513
        %v2515 = vsel %vm887, %v2498, %v2500
        %v2516 = vsel %vm887, %v2500, %v2502
        %v2517 = vsel %vm887, %v2502, %v2504
        %v2518 = vsel %vm887, %v2504, %v2506
        %v2519 = vsel %vm887, %v2506, %v2508
        %v2520 = vsel %vm887, %v2508, %v2510
        %v2521 = vsel %vm887, %v2510, %v2512
        %v2522 = vsel %vm887, %v2512, %v2514
        %v2531 = vmax.f32 %v2479, %v2515
        %v2532 = vmax.f32 %v2480, %v2516
        %v2533 = vmax.f32 %v2481, %v2517
        %v2534 = vmax.f32 %v2482, %v2518
        %v2535 = vmax.f32 %v2483, %v2519
        %v2536 = vmax.f32 %v2484, %v2520
        %v2537 = vmax.f32 %v2485, %v2521
        %v2538 = vmax.f32 %v2486, %v2522
        %v2540 = vmax.f32 %v2487, %v2514
        %2550 = vrot.lane.b32.xlu0 %v2531, 96
        %v2551 = vpop.permute.xlu0 %2550
        %2552 = vrot.lane.b32.xlu0 %v2532, 96
        %v2553 = vpop.permute.xlu0 %2552
        %2554 = vrot.lane.b32.xlu0 %v2533, 96
        %v2555 = vpop.permute.xlu0 %2554
        %2556 = vrot.lane.b32.xlu0 %v2534, 96
        %v2557 = vpop.permute.xlu0 %2556
        %2558 = vrot.lane.b32.xlu0 %v2535, 96
        %v2559 = vpop.permute.xlu0 %2558
        %2560 = vrot.lane.b32.xlu0 %v2536, 96
        %v2561 = vpop.permute.xlu0 %2560
        %2562 = vrot.lane.b32.xlu0 %v2537, 96
        %v2563 = vpop.permute.xlu0 %2562
        %2564 = vrot.lane.b32.xlu0 %v2538, 96
        %v2565 = vpop.permute.xlu0 %2564
        %2566 = vrot.lane.b32.xlu0 %v2540, 96
        %v2567 = vpop.permute.xlu0 %2566
        %v2568 = vsel %vm1147, %v2551, %v2553
        %v2569 = vsel %vm1147, %v2553, %v2555
        %v2570 = vsel %vm1147, %v2555, %v2557
        %v2571 = vsel %vm1147, %v2557, %v2559
        %v2572 = vsel %vm1147, %v2559, %v2561
        %v2573 = vsel %vm1147, %v2561, %v2563
        %v2574 = vsel %vm1147, %v2563, %v2565
        %v2575 = vsel %vm1147, %v2565, %v2567
        %v2584 = vmax.f32 %v2531, %v2568
        %v2585 = vmax.f32 %v2532, %v2569
        %v2586 = vmax.f32 %v2533, %v2570
        %v2587 = vmax.f32 %v2534, %v2571
        %v2588 = vmax.f32 %v2535, %v2572
        %v2589 = vmax.f32 %v2536, %v2573
        %v2590 = vmax.f32 %v2537, %v2574
        %v2591 = vmax.f32 %v2538, %v2575
        %v2593 = vlaneseq
        %v2594 = vshrl.u32 %v2593, 7
        %v2595 = vsub.s32 0, %v2594
        %v2596 = vrot.slane %v733, %v2595
        %v2597 = vlaneseq
        %v2598 = vshrl.u32 %v2597, 7
        %v2599 = vsub.s32 1, %v2598
        %v2600 = vrot.slane %v733, %v2599
        %v2601 = vlaneseq
        %v2602 = vshrl.u32 %v2601, 7
        %v2603 = vsub.s32 2, %v2602
        %v2604 = vrot.slane %v733, %v2603
        %v2605 = vlaneseq
        %v2606 = vshrl.u32 %v2605, 7
        %v2607 = vsub.s32 3, %v2606
        %v2608 = vrot.slane %v733, %v2607
        %v2609 = vlaneseq
        %v2610 = vshrl.u32 %v2609, 7
        %v2611 = vsub.s32 4, %v2610
        %v2612 = vrot.slane %v733, %v2611
        %v2613 = vlaneseq
        %v2614 = vshrl.u32 %v2613, 7
        %v2615 = vsub.s32 5, %v2614
        %v2616 = vrot.slane %v733, %v2615
        %v2617 = vlaneseq
        %v2618 = vshrl.u32 %v2617, 7
        %v2619 = vsub.s32 6, %v2618
        %v2620 = vrot.slane %v733, %v2619
        %v2621 = vlaneseq
        %v2622 = vshrl.u32 %v2621, 7
        %v2623 = vsub.s32 7, %v2622
        %v2624 = vrot.slane %v733, %v2623
        %v2633 = vmul.f32 %v2584, %v2596
        %v2634 = vmul.f32 %v2585, %v2600
        %v2635 = vmul.f32 %v2586, %v2604
        %v2636 = vmul.f32 %v2587, %v2608
        %v2637 = vmul.f32 %v2588, %v2612
        %v2638 = vmul.f32 %v2589, %v2616
        %v2639 = vmul.f32 %v2590, %v2620
        %v2640 = vmul.f32 %v2591, %v2624
        %2641 = vst [vmem:[#allocation2 + $0x8] sm:$0xff] %v2633
        %2642 = vst [vmem:[#allocation2 + $0x10] sm:$0xff] %v2634
        %2643 = vst [vmem:[#allocation2 + $0x18] sm:$0xff] %v2635
        %2644 = vst [vmem:[#allocation2 + $0x20] sm:$0xff] %v2636
        %2645 = vst [vmem:[#allocation2 + $0x28] sm:$0xff] %v2637
        %2646 = vst [vmem:[#allocation2 + $0x30] sm:$0xff] %v2638
        %2647 = vst [vmem:[#allocation2 + $0x38] sm:$0xff] %v2639
        %2648 = vst [vmem:[#allocation2 + $0x40] sm:$0xff] %v2640
        %v2649 = vld [vmem:[#allocation8] sm:$0xff]
        %v2650 = vld [vmem:[#allocation10] sm:$0xff]
        %v2651 = vld [vmem:[#allocation2] sm:$0xff]
        %v2652 = vld [vmem:[#allocation2 + $0x8] sm:$0xff]
        %v2653 = vld [vmem:[#allocation2 + $0x10] sm:$0xff]
        %v2654 = vld [vmem:[#allocation2 + $0x18] sm:$0xff]
        %v2655 = vld [vmem:[#allocation2 + $0x20] sm:$0xff]
        %v2656 = vld [vmem:[#allocation2 + $0x28] sm:$0xff]
        %v2657 = vld [vmem:[#allocation2 + $0x30] sm:$0xff]
        %v2658 = vld [vmem:[#allocation2 + $0x38] sm:$0xff]
        %v2659 = vld [vmem:[#allocation2 + $0x40] sm:$0xff]
        %v2660 = vld [vmem:[#allocation2 + $0x48] sm:$0xff]
        %2670 = vrot.lane.b32.xlu0 %v2651, 126
        %v2671 = vpop.permute.xlu0 %2670
        %2672 = vrot.lane.b32.xlu0 %v2652, 126
        %v2673 = vpop.permute.xlu0 %2672
        %2674 = vrot.lane.b32.xlu0 %v2653, 126
        %v2675 = vpop.permute.xlu0 %2674
        %2676 = vrot.lane.b32.xlu0 %v2654, 126
        %v2677 = vpop.permute.xlu0 %2676
        %2678 = vrot.lane.b32.xlu0 %v2655, 126
        %v2679 = vpop.permute.xlu0 %2678
        %2680 = vrot.lane.b32.xlu0 %v2656, 126
        %v2681 = vpop.permute.xlu0 %2680
        %2682 = vrot.lane.b32.xlu0 %v2657, 126
        %v2683 = vpop.permute.xlu0 %2682
        %2684 = vrot.lane.b32.xlu0 %v2658, 126
        %v2685 = vpop.permute.xlu0 %2684
        %2686 = vrot.lane.b32.xlu0 %v2659, 126
        %v2687 = vpop.permute.xlu0 %2686
        %v2688 = vsel %vm952, %v2671, %v2673
        %v2689 = vsel %vm952, %v2673, %v2675
        %v2690 = vsel %vm952, %v2675, %v2677
        %v2691 = vsel %vm952, %v2677, %v2679
        %v2692 = vsel %vm952, %v2679, %v2681
        %v2693 = vsel %vm952, %v2681, %v2683
        %v2694 = vsel %vm952, %v2683, %v2685
        %v2695 = vsel %vm952, %v2685, %v2687
        %2696 = vrot.lane.b32.xlu0 %v2651, 124
        %v2697 = vpop.permute.xlu0 %2696
        %2698 = vrot.lane.b32.xlu0 %v2652, 124
        %v2699 = vpop.permute.xlu0 %2698
        %2700 = vrot.lane.b32.xlu0 %v2653, 124
        %v2701 = vpop.permute.xlu0 %2700
        %2702 = vrot.lane.b32.xlu0 %v2654, 124
        %v2703 = vpop.permute.xlu0 %2702
        %2704 = vrot.lane.b32.xlu0 %v2655, 124
        %v2705 = vpop.permute.xlu0 %2704
        %2706 = vrot.lane.b32.xlu0 %v2656, 124
        %v2707 = vpop.permute.xlu0 %2706
        %2708 = vrot.lane.b32.xlu0 %v2657, 124
        %v2709 = vpop.permute.xlu0 %2708
        %2710 = vrot.lane.b32.xlu0 %v2658, 124
        %v2711 = vpop.permute.xlu0 %2710
        %2712 = vrot.lane.b32.xlu0 %v2659, 124
        %v2713 = vpop.permute.xlu0 %2712
        %v2714 = vsel %vm1082, %v2697, %v2699
        %v2715 = vsel %vm1082, %v2699, %v2701
        %v2716 = vsel %vm1082, %v2701, %v2703
        %v2717 = vsel %vm1082, %v2703, %v2705
        %v2718 = vsel %vm1082, %v2705, %v2707
        %v2719 = vsel %vm1082, %v2707, %v2709
        %v2720 = vsel %vm1082, %v2709, %v2711
        %v2721 = vsel %vm1082, %v2711, %v2713
        %2722 = vrot.lane.b32.xlu0 %v2651, 64
        %v2723 = vpop.permute.xlu0 %2722
        %2724 = vrot.lane.b32.xlu0 %v2652, 64
        %v2725 = vpop.permute.xlu0 %2724
        %2726 = vrot.lane.b32.xlu0 %v2653, 64
        %v2727 = vpop.permute.xlu0 %2726
        %2728 = vrot.lane.b32.xlu0 %v2654, 64
        %v2729 = vpop.permute.xlu0 %2728
        %2730 = vrot.lane.b32.xlu0 %v2655, 64
        %v2731 = vpop.permute.xlu0 %2730
        %2732 = vrot.lane.b32.xlu0 %v2656, 64
        %v2733 = vpop.permute.xlu0 %2732
        %2734 = vrot.lane.b32.xlu0 %v2657, 64
        %v2735 = vpop.permute.xlu0 %2734
        %2736 = vrot.lane.b32.xlu0 %v2658, 64
        %v2737 = vpop.permute.xlu0 %2736
        %2738 = vrot.lane.b32.xlu0 %v2659, 64
        %v2739 = vpop.permute.xlu0 %2738
        %v2740 = vsel %vm1472, %v2723, %v2725
        %v2741 = vsel %vm1472, %v2725, %v2727
        %v2742 = vsel %vm1472, %v2727, %v2729
        %v2743 = vsel %vm1472, %v2729, %v2731
        %v2744 = vsel %vm1472, %v2731, %v2733
        %v2745 = vsel %vm1472, %v2733, %v2735
        %v2746 = vsel %vm1472, %v2735, %v2737
        %v2747 = vsel %vm1472, %v2737, %v2739
        %2748 = vrot.lane.b32.xlu0 %v2652, 62
        %v2749 = vpop.permute.xlu0 %2748
        %2750 = vrot.lane.b32.xlu0 %v2653, 62
        %v2751 = vpop.permute.xlu0 %2750
        %2752 = vrot.lane.b32.xlu0 %v2654, 62
        %v2753 = vpop.permute.xlu0 %2752
        %2754 = vrot.lane.b32.xlu0 %v2655, 62
        %v2755 = vpop.permute.xlu0 %2754
        %2756 = vrot.lane.b32.xlu0 %v2656, 62
        %v2757 = vpop.permute.xlu0 %2756
        %2758 = vrot.lane.b32.xlu0 %v2657, 62
        %v2759 = vpop.permute.xlu0 %2758
        %2760 = vrot.lane.b32.xlu0 %v2658, 62
        %v2761 = vpop.permute.xlu0 %2760
        %2762 = vrot.lane.b32.xlu0 %v2659, 62
        %v2763 = vpop.permute.xlu0 %2762
        %v2764 = vsel %vm1602, %v2749, %v2751
        %v2765 = vsel %vm1602, %v2751, %v2753
        %v2766 = vsel %vm1602, %v2753, %v2755
        %v2767 = vsel %vm1602, %v2755, %v2757
        %v2768 = vsel %vm1602, %v2757, %v2759
        %v2769 = vsel %vm1602, %v2759, %v2761
        %v2770 = vsel %vm1602, %v2761, %v2763
        %2772 = vrot.lane.b32.xlu0 %v2652, 60
        %v2773 = vpop.permute.xlu0 %2772
        %2774 = vrot.lane.b32.xlu0 %v2653, 60
        %v2775 = vpop.permute.xlu0 %2774
        %2776 = vrot.lane.b32.xlu0 %v2654, 60
        %v2777 = vpop.permute.xlu0 %2776
        %2778 = vrot.lane.b32.xlu0 %v2655, 60
        %v2779 = vpop.permute.xlu0 %2778
        %2780 = vrot.lane.b32.xlu0 %v2656, 60
        %v2781 = vpop.permute.xlu0 %2780
        %2782 = vrot.lane.b32.xlu0 %v2657, 60
        %v2783 = vpop.permute.xlu0 %2782
        %2784 = vrot.lane.b32.xlu0 %v2658, 60
        %v2785 = vpop.permute.xlu0 %2784
        %2786 = vrot.lane.b32.xlu0 %v2659, 60
        %v2787 = vpop.permute.xlu0 %2786
        %2788 = vrot.lane.b32.xlu0 %v2660, 60
        %v2789 = vpop.permute.xlu0 %2788
        %v2790 = vsel %vm1732, %v2773, %v2775
        %v2791 = vsel %vm1732, %v2775, %v2777
        %v2792 = vsel %vm1732, %v2777, %v2779
        %v2793 = vsel %vm1732, %v2779, %v2781
        %v2794 = vsel %vm1732, %v2781, %v2783
        %v2795 = vsel %vm1732, %v2783, %v2785
        %v2796 = vsel %vm1732, %v2785, %v2787
        %v2797 = vsel %vm1732, %v2787, %v2789
        %2798 = vrot.lane.b32.xlu0 %v2660, 126
        %v2799 = vpop.permute.xlu0 %2798
        %v2800 = vsel %vm952, %v2687, %v2799
        %2801 = vrot.lane.b32.xlu0 %v2660, 124
        %v2802 = vpop.permute.xlu0 %2801
        %v2803 = vsel %vm1082, %v2713, %v2802
        %2805 = vset.pattern.permute.xlu0 0
        %2806 = vperm.xlu0 %2805, %v2650
        %v2807 = vpop.permute.xlu0 %2806
        %2809 = vrot.lane.b32.xlu0 %v2651, 66
        %v2810 = vpop.permute.xlu0 %2809
        %2811 = vrot.lane.b32.xlu0 %v2652, 66
        %v2812 = vpop.permute.xlu0 %2811
        %2813 = vrot.lane.b32.xlu0 %v2653, 66
        %v2814 = vpop.permute.xlu0 %2813
        %2815 = vrot.lane.b32.xlu0 %v2654, 66
        %v2816 = vpop.permute.xlu0 %2815
        %2817 = vrot.lane.b32.xlu0 %v2655, 66
        %v2818 = vpop.permute.xlu0 %2817
        %2819 = vrot.lane.b32.xlu0 %v2656, 66
        %v2820 = vpop.permute.xlu0 %2819
        %2821 = vrot.lane.b32.xlu0 %v2657, 66
        %v2822 = vpop.permute.xlu0 %2821
        %2823 = vrot.lane.b32.xlu0 %v2658, 66
        %v2824 = vpop.permute.xlu0 %2823
        %2825 = vrot.lane.b32.xlu0 %v2659, 66
        %v2826 = vpop.permute.xlu0 %2825
        %2827 = vrot.lane.b32.xlu0 %v2688, 66
        %v2828 = vpop.permute.xlu0 %2827
        %2829 = vrot.lane.b32.xlu0 %v2689, 66
        %v2830 = vpop.permute.xlu0 %2829
        %2831 = vrot.lane.b32.xlu0 %v2690, 66
        %v2832 = vpop.permute.xlu0 %2831
        %2833 = vrot.lane.b32.xlu0 %v2691, 66
        %v2834 = vpop.permute.xlu0 %2833
        %2835 = vrot.lane.b32.xlu0 %v2692, 66
        %v2836 = vpop.permute.xlu0 %2835
        %2837 = vrot.lane.b32.xlu0 %v2693, 66
        %v2838 = vpop.permute.xlu0 %2837
        %2839 = vrot.lane.b32.xlu0 %v2694, 66
        %v2840 = vpop.permute.xlu0 %2839
        %2841 = vrot.lane.b32.xlu0 %v2695, 66
        %v2842 = vpop.permute.xlu0 %2841
        %2843 = vrot.lane.b32.xlu0 %v2687, 66
        %v2844 = vpop.permute.xlu0 %2843
        %2845 = vrot.lane.b32.xlu0 %v2714, 66
        %v2846 = vpop.permute.xlu0 %2845
        %2847 = vrot.lane.b32.xlu0 %v2715, 66
        %v2848 = vpop.permute.xlu0 %2847
        %2849 = vrot.lane.b32.xlu0 %v2716, 66
        %v2850 = vpop.permute.xlu0 %2849
        %2851 = vrot.lane.b32.xlu0 %v2717, 66
        %v2852 = vpop.permute.xlu0 %2851
        %2853 = vrot.lane.b32.xlu0 %v2718, 66
        %v2854 = vpop.permute.xlu0 %2853
        %2855 = vrot.lane.b32.xlu0 %v2719, 66
        %v2856 = vpop.permute.xlu0 %2855
        %2857 = vrot.lane.b32.xlu0 %v2720, 66
        %v2858 = vpop.permute.xlu0 %2857
        %2859 = vrot.lane.b32.xlu0 %v2721, 66
        %v2860 = vpop.permute.xlu0 %2859
        %2861 = vrot.lane.b32.xlu0 %v2713, 66
        %v2862 = vpop.permute.xlu0 %2861
        %2863 = vrot.lane.b32.xlu0 %v2740, 66
        %v2864 = vpop.permute.xlu0 %2863
        %2865 = vrot.lane.b32.xlu0 %v2741, 66
        %v2866 = vpop.permute.xlu0 %2865
        %2867 = vrot.lane.b32.xlu0 %v2742, 66
        %v2868 = vpop.permute.xlu0 %2867
        %2869 = vrot.lane.b32.xlu0 %v2743, 66
        %v2870 = vpop.permute.xlu0 %2869
        %2871 = vrot.lane.b32.xlu0 %v2744, 66
        %v2872 = vpop.permute.xlu0 %2871
        %2873 = vrot.lane.b32.xlu0 %v2745, 66
        %v2874 = vpop.permute.xlu0 %2873
        %2875 = vrot.lane.b32.xlu0 %v2746, 66
        %v2876 = vpop.permute.xlu0 %2875
        %2877 = vrot.lane.b32.xlu0 %v2747, 66
        %v2878 = vpop.permute.xlu0 %2877
        %2879 = vrot.lane.b32.xlu0 %v2739, 66
        %v2880 = vpop.permute.xlu0 %2879
        %2881 = vrot.lane.b32.xlu0 %v2749, 66
        %v2882 = vpop.permute.xlu0 %2881
        %2883 = vrot.lane.b32.xlu0 %v2764, 66
        %v2884 = vpop.permute.xlu0 %2883
        %2885 = vrot.lane.b32.xlu0 %v2765, 66
        %v2886 = vpop.permute.xlu0 %2885
        %2887 = vrot.lane.b32.xlu0 %v2766, 66
        %v2888 = vpop.permute.xlu0 %2887
        %2889 = vrot.lane.b32.xlu0 %v2767, 66
        %v2890 = vpop.permute.xlu0 %2889
        %2891 = vrot.lane.b32.xlu0 %v2768, 66
        %v2892 = vpop.permute.xlu0 %2891
        %2893 = vrot.lane.b32.xlu0 %v2769, 66
        %v2894 = vpop.permute.xlu0 %2893
        %2895 = vrot.lane.b32.xlu0 %v2770, 66
        %v2896 = vpop.permute.xlu0 %2895
        %2897 = vrot.lane.b32.xlu0 %v2763, 66
        %v2898 = vpop.permute.xlu0 %2897
        %2899 = vrot.lane.b32.xlu0 %v2773, 66
        %v2900 = vpop.permute.xlu0 %2899
        %2901 = vrot.lane.b32.xlu0 %v2790, 66
        %v2902 = vpop.permute.xlu0 %2901
        %2903 = vrot.lane.b32.xlu0 %v2791, 66
        %v2904 = vpop.permute.xlu0 %2903
        %2905 = vrot.lane.b32.xlu0 %v2792, 66
        %v2906 = vpop.permute.xlu0 %2905
        %2907 = vrot.lane.b32.xlu0 %v2793, 66
        %v2908 = vpop.permute.xlu0 %2907
        %2909 = vrot.lane.b32.xlu0 %v2794, 66
        %v2910 = vpop.permute.xlu0 %2909
        %2911 = vrot.lane.b32.xlu0 %v2795, 66
        %v2912 = vpop.permute.xlu0 %2911
        %2913 = vrot.lane.b32.xlu0 %v2796, 66
        %v2914 = vpop.permute.xlu0 %2913
        %2915 = vrot.lane.b32.xlu0 %v2797, 66
        %v2916 = vpop.permute.xlu0 %2915
        %2917 = vrot.lane.b32.xlu0 %v2660, 66
        %v2918 = vpop.permute.xlu0 %2917
        %2919 = vrot.lane.b32.xlu0 %v2800, 66
        %v2920 = vpop.permute.xlu0 %2919
        %2921 = vrot.lane.b32.xlu0 %v2799, 66
        %v2922 = vpop.permute.xlu0 %2921
        %2923 = vrot.lane.b32.xlu0 %v2803, 66
        %v2924 = vpop.permute.xlu0 %2923
        %2925 = vrot.lane.b32.xlu0 %v2802, 66
        %v2926 = vpop.permute.xlu0 %2925
        %vm2927 = vcmask 539648
        %v2928 = vsel %vm2927, %v2810, %v2812
        %v2929 = vsel %vm2927, %v2812, %v2814
        %v2930 = vsel %vm2927, %v2814, %v2816
        %v2931 = vsel %vm2927, %v2816, %v2818
        %v2932 = vsel %vm2927, %v2818, %v2820
        %v2933 = vsel %vm2927, %v2820, %v2822
        %v2934 = vsel %vm2927, %v2822, %v2824
        %v2935 = vsel %vm2927, %v2824, %v2826
        %v2936 = vsel %vm2927, %v2828, %v2830
        %v2937 = vsel %vm2927, %v2830, %v2832
        %v2938 = vsel %vm2927, %v2832, %v2834
        %v2939 = vsel %vm2927, %v2834, %v2836
        %v2940 = vsel %vm2927, %v2836, %v2838
        %v2941 = vsel %vm2927, %v2838, %v2840
        %v2942 = vsel %vm2927, %v2840, %v2842
        %v2943 = vsel %vm2927, %v2842, %v2844
        %v2944 = vsel %vm2927, %v2846, %v2848
        %v2945 = vsel %vm2927, %v2848, %v2850
        %v2946 = vsel %vm2927, %v2850, %v2852
        %v2947 = vsel %vm2927, %v2852, %v2854
        %v2948 = vsel %vm2927, %v2854, %v2856
        %v2949 = vsel %vm2927, %v2856, %v2858
        %v2950 = vsel %vm2927, %v2858, %v2860
        %v2951 = vsel %vm2927, %v2860, %v2862
        %v2952 = vsel %vm2927, %v2864, %v2866
        %v2953 = vsel %vm2927, %v2866, %v2868
        %v2954 = vsel %vm2927, %v2868, %v2870
        %v2955 = vsel %vm2927, %v2870, %v2872
        %v2956 = vsel %vm2927, %v2872, %v2874
        %v2957 = vsel %vm2927, %v2874, %v2876
        %v2958 = vsel %vm2927, %v2876, %v2878
        %v2959 = vsel %vm2927, %v2878, %v2880
        %v2960 = vsel %vm2927, %v2882, %v2884
        %v2961 = vsel %vm2927, %v2884, %v2886
        %v2962 = vsel %vm2927, %v2886, %v2888
        %v2963 = vsel %vm2927, %v2888, %v2890
        %v2964 = vsel %vm2927, %v2890, %v2892
        %v2965 = vsel %vm2927, %v2892, %v2894
        %v2966 = vsel %vm2927, %v2894, %v2896
        %v2967 = vsel %vm2927, %v2896, %v2898
        %v2968 = vsel %vm2927, %v2900, %v2902
        %v2969 = vsel %vm2927, %v2902, %v2904
        %v2970 = vsel %vm2927, %v2904, %v2906
        %v2971 = vsel %vm2927, %v2906, %v2908
        %v2972 = vsel %vm2927, %v2908, %v2910
        %v2973 = vsel %vm2927, %v2910, %v2912
        %v2974 = vsel %vm2927, %v2912, %v2914
        %v2975 = vsel %vm2927, %v2914, %v2916
        %v2976 = vsel %vm2927, %v2826, %v2918
        %v2977 = vsel %vm2927, %v2842, %v2920
        %v2978 = vsel %vm2927, %v2920, %v2922
        %v2979 = vsel %vm2927, %v2860, %v2924
        %v2980 = vsel %vm2927, %v2924, %v2926
        %vm3034 = vcmask 588800
        %v3036 = vsel %vm3034, %v2649, 0
        %3038 = vmatprep.subr.mxu0 0.0
        %3039 = vmatpush1.msra.mxu0 0.0
        %3040 = vmatprep.subr.mxu0 0.0
        %3041 = vmatpush1.msra.mxu0 0.0
        %3042 = vmatprep.subr.mxu0 0.0
        %3043 = vmatpush1.msra.mxu0 0.0
        %3044 = vmatprep.subr.mxu0 0.0
        %3045 = vmatpush1.msra.mxu0 0.0
        %3046 = vmatprep.subr.mxu0 0.0
        %3047 = vmatpush1.msra.mxu0 0.0
        %3048 = vmatprep.subr.mxu0 0.0
        %3049 = vmatpush1.msra.mxu0 0.0
        %3050 = vmatprep.subr.mxu0 0.0
        %3051 = vmatpush1.msra.mxu0 0.0
        %3052 = vmatprep.subr.mxu0 %v2946
        %3053 = vmatpush1.msra.mxu0 %v2945
        %3054 = vmatprep.subr.mxu0 %v2938
        %3055 = vmatpush1.msra.mxu0 %v2937
        %3056 = vmatprep.subr.mxu0 %v2930
        %3057 = vmatpush1.msra.mxu0 %v2929
        %3058 = vmatprep.subr.mxu0 %v2969
        %3059 = vmatpush1.msra.mxu0 %v2968
        %3060 = vmatprep.subr.mxu0 %v2961
        %3061 = vmatpush1.msra.mxu0 %v2960
        %3062 = vmatprep.subr.mxu0 %v2953
        %3063 = vmatpush1.msra.mxu0 %v2952
        %3064 = vmatprep.subr.mxu0 %v2945
        %3065 = vmatpush1.msra.mxu0 %v2944
        %3066 = vmatprep.subr.mxu0 %v2937
        %3067 = vmatpush1.msra.mxu0 %v2936
        %3068 = vmatprep.subr.mxu0 %v2929
        %3069 = vmatpush1.msra.mxu0 %v2928
        %3070 = vmatprep.subr.mxu0 0.0
        %3071 = vmatpush2.msra.mxu0 0.0
        %3072 = vmatprep.subr.mxu0 0.0
        %3073 = vmatpush2.msra.mxu0 0.0
        %3074 = vmatprep.subr.mxu0 0.0
        %3075 = vmatpush2.msra.mxu0 0.0
        %3076 = vmatprep.subr.mxu0 0.0
        %3077 = vmatpush2.msra.mxu0 0.0
        %3078 = vmatprep.subr.mxu0 0.0
        %3079 = vmatpush2.msra.mxu0 0.0
        %3080 = vmatprep.subr.mxu0 0.0
        %3081 = vmatpush2.msra.mxu0 0.0
        %3082 = vmatprep.subr.mxu0 0.0
        %3083 = vmatpush2.msra.mxu0 0.0
        %3084 = vmatprep.subr.mxu0 0.0
        %3085 = vmatpush2.msra.mxu0 0.0
        %3086 = vmatprep.subr.mxu0 0.0
        %3087 = vmatpush2.msra.mxu0 0.0
        %3088 = vmatprep.subr.mxu0 0.0
        %3089 = vmatpush2.msra.mxu0 0.0
        %3090 = vmatprep.subr.mxu0 0.0
        %3091 = vmatpush2.msra.mxu0 0.0
        %3092 = vmatprep.subr.mxu0 0.0
        %3093 = vmatpush2.msra.mxu0 0.0
        %3094 = vmatprep.subr.mxu0 0.0
        %3095 = vmatpush2.msra.mxu0 0.0
        %3096 = vmatprep.subr.mxu0 0.0
        %3097 = vmatpush2.msra.mxu0 0.0
        %3098 = vmatprep.subr.mxu0 0.0
        %3099 = vmatpush2.msra.mxu0 0.0
        %3100 = vmatprep.subr.mxu0 0.0
        %3101 = vmatpush2.msra.mxu0 0.0
        %3102 = vmatprep.mubr.f32.mxu0 0.0
        %3103 = vmatmul.mubr.f32.gmra.mxu0 %v3036
        %v3104 = vpop.f32.mrf.mxu0
        %v3105 = vadd.f32 %v2807, %v3104
        %v3106 = vpop.f32.mrf.mxu0
        %v3107 = vadd.f32 %v2807, %v3106
        %3108 = vdwg.mxu0
        %3109 = vmatprep.subr.mxu0 0.0
        %3110 = vmatpush1.msra.mxu0 0.0
        %3111 = vmatprep.subr.mxu0 0.0
        %3112 = vmatpush1.msra.mxu0 0.0
        %3113 = vmatprep.subr.mxu0 0.0
        %3114 = vmatpush1.msra.mxu0 0.0
        %3115 = vmatprep.subr.mxu0 0.0
        %3116 = vmatpush1.msra.mxu0 0.0
        %3117 = vmatprep.subr.mxu0 0.0
        %3118 = vmatpush1.msra.mxu0 0.0
        %3119 = vmatprep.subr.mxu0 0.0
        %3120 = vmatpush1.msra.mxu0 0.0
        %3121 = vmatprep.subr.mxu0 0.0
        %3122 = vmatpush1.msra.mxu0 0.0
        %3123 = vmatprep.subr.mxu0 %v2948
        %3124 = vmatpush1.msra.mxu0 %v2947
        %3125 = vmatprep.subr.mxu0 %v2940
        %3126 = vmatpush1.msra.mxu0 %v2939
        %3127 = vmatprep.subr.mxu0 %v2932
        %3128 = vmatpush1.msra.mxu0 %v2931
        %3129 = vmatprep.subr.mxu0 %v2971
        %3130 = vmatpush1.msra.mxu0 %v2970
        %3131 = vmatprep.subr.mxu0 %v2963
        %3132 = vmatpush1.msra.mxu0 %v2962
        %3133 = vmatprep.subr.mxu0 %v2955
        %3134 = vmatpush1.msra.mxu0 %v2954
        %3135 = vmatprep.subr.mxu0 %v2947
        %3136 = vmatpush1.msra.mxu0 %v2946
        %3137 = vmatprep.subr.mxu0 %v2939
        %3138 = vmatpush1.msra.mxu0 %v2938
        %3139 = vmatprep.subr.mxu0 %v2931
        %3140 = vmatpush1.msra.mxu0 %v2930
        %3141 = vmatprep.subr.mxu0 0.0
        %3142 = vmatpush2.msra.mxu0 0.0
        %3143 = vmatprep.subr.mxu0 0.0
        %3144 = vmatpush2.msra.mxu0 0.0
        %3145 = vmatprep.subr.mxu0 0.0
        %3146 = vmatpush2.msra.mxu0 0.0
        %3147 = vmatprep.subr.mxu0 0.0
        %3148 = vmatpush2.msra.mxu0 0.0
        %3149 = vmatprep.subr.mxu0 0.0
        %3150 = vmatpush2.msra.mxu0 0.0
        %3151 = vmatprep.subr.mxu0 0.0
        %3152 = vmatpush2.msra.mxu0 0.0
        %3153 = vmatprep.subr.mxu0 0.0
        %3154 = vmatpush2.msra.mxu0 0.0
        %3155 = vmatprep.subr.mxu0 0.0
        %3156 = vmatpush2.msra.mxu0 0.0
        %3157 = vmatprep.subr.mxu0 0.0
        %3158 = vmatpush2.msra.mxu0 0.0
        %3159 = vmatprep.subr.mxu0 0.0
        %3160 = vmatpush2.msra.mxu0 0.0
        %3161 = vmatprep.subr.mxu0 0.0
        %3162 = vmatpush2.msra.mxu0 0.0
        %3163 = vmatprep.subr.mxu0 0.0
        %3164 = vmatpush2.msra.mxu0 0.0
        %3165 = vmatprep.subr.mxu0 0.0
        %3166 = vmatpush2.msra.mxu0 0.0
        %3167 = vmatprep.subr.mxu0 0.0
        %3168 = vmatpush2.msra.mxu0 0.0
        %3169 = vmatprep.subr.mxu0 0.0
        %3170 = vmatpush2.msra.mxu0 0.0
        %3171 = vmatprep.subr.mxu0 0.0
        %3172 = vmatpush2.msra.mxu0 0.0
        %3173 = vmatprep.mubr.f32.mxu0 0.0
        %3174 = vmatmul.mubr.f32.gmra.mxu0 %v3036
        %v3175 = vpop.f32.mrf.mxu0
        %v3176 = vadd.f32 %v2807, %v3175
        %v3177 = vpop.f32.mrf.mxu0
        %v3178 = vadd.f32 %v2807, %v3177
        %3179 = vdwg.mxu0
        %3180 = vmatprep.subr.mxu0 0.0
        %3181 = vmatpush1.msra.mxu0 0.0
        %3182 = vmatprep.subr.mxu0 0.0
        %3183 = vmatpush1.msra.mxu0 0.0
        %3184 = vmatprep.subr.mxu0 0.0
        %3185 = vmatpush1.msra.mxu0 0.0
        %3186 = vmatprep.subr.mxu0 0.0
        %3187 = vmatpush1.msra.mxu0 0.0
        %3188 = vmatprep.subr.mxu0 0.0
        %3189 = vmatpush1.msra.mxu0 0.0
        %3190 = vmatprep.subr.mxu0 0.0
        %3191 = vmatpush1.msra.mxu0 0.0
        %3192 = vmatprep.subr.mxu0 0.0
        %3193 = vmatpush1.msra.mxu0 0.0
        %3194 = vmatprep.subr.mxu0 %v2950
        %3195 = vmatpush1.msra.mxu0 %v2949
        %3196 = vmatprep.subr.mxu0 %v2942
        %3197 = vmatpush1.msra.mxu0 %v2941
        %3198 = vmatprep.subr.mxu0 %v2934
        %3199 = vmatpush1.msra.mxu0 %v2933
        %3200 = vmatprep.subr.mxu0 %v2973
        %3201 = vmatpush1.msra.mxu0 %v2972
        %3202 = vmatprep.subr.mxu0 %v2965
        %3203 = vmatpush1.msra.mxu0 %v2964
        %3204 = vmatprep.subr.mxu0 %v2957
        %3205 = vmatpush1.msra.mxu0 %v2956
        %3206 = vmatprep.subr.mxu0 %v2949
        %3207 = vmatpush1.msra.mxu0 %v2948
        %3208 = vmatprep.subr.mxu0 %v2941
        %3209 = vmatpush1.msra.mxu0 %v2940
        %3210 = vmatprep.subr.mxu0 %v2933
        %3211 = vmatpush1.msra.mxu0 %v2932
        %3212 = vmatprep.subr.mxu0 0.0
        %3213 = vmatpush2.msra.mxu0 0.0
        %3214 = vmatprep.subr.mxu0 0.0
        %3215 = vmatpush2.msra.mxu0 0.0
        %3216 = vmatprep.subr.mxu0 0.0
        %3217 = vmatpush2.msra.mxu0 0.0
        %3218 = vmatprep.subr.mxu0 0.0
        %3219 = vmatpush2.msra.mxu0 0.0
        %3220 = vmatprep.subr.mxu0 0.0
        %3221 = vmatpush2.msra.mxu0 0.0
        %3222 = vmatprep.subr.mxu0 0.0
        %3223 = vmatpush2.msra.mxu0 0.0
        %3224 = vmatprep.subr.mxu0 0.0
        %3225 = vmatpush2.msra.mxu0 0.0
        %3226 = vmatprep.subr.mxu0 0.0
        %3227 = vmatpush2.msra.mxu0 0.0
        %3228 = vmatprep.subr.mxu0 0.0
        %3229 = vmatpush2.msra.mxu0 0.0
        %3230 = vmatprep.subr.mxu0 0.0
        %3231 = vmatpush2.msra.mxu0 0.0
        %3232 = vmatprep.subr.mxu0 0.0
        %3233 = vmatpush2.msra.mxu0 0.0
        %3234 = vmatprep.subr.mxu0 0.0
        %3235 = vmatpush2.msra.mxu0 0.0
        %3236 = vmatprep.subr.mxu0 0.0
        %3237 = vmatpush2.msra.mxu0 0.0
        %3238 = vmatprep.subr.mxu0 0.0
        %3239 = vmatpush2.msra.mxu0 0.0
        %3240 = vmatprep.subr.mxu0 0.0
        %3241 = vmatpush2.msra.mxu0 0.0
        %3242 = vmatprep.subr.mxu0 0.0
        %3243 = vmatpush2.msra.mxu0 0.0
        %3244 = vmatprep.mubr.f32.mxu0 0.0
        %3245 = vmatmul.mubr.f32.gmra.mxu0 %v3036
        %v3246 = vpop.f32.mrf.mxu0
        %v3247 = vadd.f32 %v2807, %v3246
        %v3248 = vpop.f32.mrf.mxu0
        %v3249 = vadd.f32 %v2807, %v3248
        %3250 = vdwg.mxu0
        %3251 = vmatprep.subr.mxu0 0.0
        %3252 = vmatpush1.msra.mxu0 0.0
        %3253 = vmatprep.subr.mxu0 0.0
        %3254 = vmatpush1.msra.mxu0 0.0
        %3255 = vmatprep.subr.mxu0 0.0
        %3256 = vmatpush1.msra.mxu0 0.0
        %3257 = vmatprep.subr.mxu0 0.0
        %3258 = vmatpush1.msra.mxu0 0.0
        %3259 = vmatprep.subr.mxu0 0.0
        %3260 = vmatpush1.msra.mxu0 0.0
        %3261 = vmatprep.subr.mxu0 0.0
        %3262 = vmatpush1.msra.mxu0 0.0
        %3263 = vmatprep.subr.mxu0 0.0
        %3264 = vmatpush1.msra.mxu0 0.0
        %3265 = vmatprep.subr.mxu0 %v2980
        %3266 = vmatpush1.msra.mxu0 %v2979
        %3267 = vmatprep.subr.mxu0 %v2978
        %3268 = vmatpush1.msra.mxu0 %v2977
        %3269 = vmatprep.subr.mxu0 %v2976
        %3270 = vmatpush1.msra.mxu0 %v2935
        %3271 = vmatprep.subr.mxu0 %v2975
        %3272 = vmatpush1.msra.mxu0 %v2974
        %3273 = vmatprep.subr.mxu0 %v2967
        %3274 = vmatpush1.msra.mxu0 %v2966
        %3275 = vmatprep.subr.mxu0 %v2959
        %3276 = vmatpush1.msra.mxu0 %v2958
        %3277 = vmatprep.subr.mxu0 %v2951
        %3278 = vmatpush1.msra.mxu0 %v2950
        %3279 = vmatprep.subr.mxu0 %v2943
        %3280 = vmatpush1.msra.mxu0 %v2942
        %3281 = vmatprep.subr.mxu0 %v2935
        %3282 = vmatpush1.msra.mxu0 %v2934
        %3283 = vmatprep.subr.mxu0 0.0
        %3284 = vmatpush2.msra.mxu0 0.0
        %3285 = vmatprep.subr.mxu0 0.0
        %3286 = vmatpush2.msra.mxu0 0.0
        %3287 = vmatprep.subr.mxu0 0.0
        %3288 = vmatpush2.msra.mxu0 0.0
        %3289 = vmatprep.subr.mxu0 0.0
        %3290 = vmatpush2.msra.mxu0 0.0
        %3291 = vmatprep.subr.mxu0 0.0
        %3292 = vmatpush2.msra.mxu0 0.0
        %3293 = vmatprep.subr.mxu0 0.0
        %3294 = vmatpush2.msra.mxu0 0.0
        %3295 = vmatprep.subr.mxu0 0.0
        %3296 = vmatpush2.msra.mxu0 0.0
        %3297 = vmatprep.subr.mxu0 0.0
        %3298 = vmatpush2.msra.mxu0 0.0
        %3299 = vmatprep.subr.mxu0 0.0
        %3300 = vmatpush2.msra.mxu0 0.0
        %3301 = vmatprep.subr.mxu0 0.0
        %3302 = vmatpush2.msra.mxu0 0.0
        %3303 = vmatprep.subr.mxu0 0.0
        %3304 = vmatpush2.msra.mxu0 0.0
        %3305 = vmatprep.subr.mxu0 0.0
        %3306 = vmatpush2.msra.mxu0 0.0
        %3307 = vmatprep.subr.mxu0 0.0
        %3308 = vmatpush2.msra.mxu0 0.0
        %3309 = vmatprep.subr.mxu0 0.0
        %3310 = vmatpush2.msra.mxu0 0.0
        %3311 = vmatprep.subr.mxu0 0.0
        %3312 = vmatpush2.msra.mxu0 0.0
        %3313 = vmatprep.subr.mxu0 0.0
        %3314 = vmatpush2.msra.mxu0 0.0
        %3315 = vmatprep.mubr.f32.mxu0 0.0
        %3316 = vmatmul.mubr.f32.gmra.mxu0 %v3036
        %v3317 = vpop.f32.mrf.mxu0
        %v3318 = vadd.f32 %v2807, %v3317
        %v3319 = vpop.f32.mrf.mxu0
        %v3320 = vadd.f32 %v2807, %v3319
        %3321 = vdwg.mxu0
        %v3322 = vmax.f32 %v3105, 0.0
        %v3323 = vmax.f32 %v3107, 0.0
        %v3324 = vmax.f32 %v3176, 0.0
        %v3325 = vmax.f32 %v3178, 0.0
        %v3326 = vmax.f32 %v3247, 0.0
        %v3327 = vmax.f32 %v3249, 0.0
        %v3328 = vmax.f32 %v3318, 0.0
        %v3329 = vmax.f32 %v3320, 0.0
        %v3330 = vmul.f32 %v3322, %v2596
        %v3331 = vmul.f32 %v3323, %v2600
        %v3332 = vmul.f32 %v3324, %v2604
        %v3333 = vmul.f32 %v3325, %v2608
        %v3334 = vmul.f32 %v3326, %v2612
        %v3335 = vmul.f32 %v3327, %v2616
        %v3336 = vmul.f32 %v3328, %v2620
        %v3337 = vmul.f32 %v3329, %v2624
        %3338 = vst [vmem:[#allocation3 + $0x8] sm:$0xff] %v3330
        %3339 = vst [vmem:[#allocation3 + $0x10] sm:$0xff] %v3331
        %3340 = vst [vmem:[#allocation3 + $0x18] sm:$0xff] %v3332
        %3341 = vst [vmem:[#allocation3 + $0x20] sm:$0xff] %v3333
        %3342 = vst [vmem:[#allocation3 + $0x28] sm:$0xff] %v3334
        %3343 = vst [vmem:[#allocation3 + $0x30] sm:$0xff] %v3335
        %3344 = vst [vmem:[#allocation3 + $0x38] sm:$0xff] %v3336
        %3345 = vst [vmem:[#allocation3 + $0x40] sm:$0xff] %v3337
        %v3346 = vld [vmem:[#allocation2 + $0x8] sm:$0xff]
        %v3347 = vld [vmem:[#allocation2 + $0x10] sm:$0xff]
        %v3348 = vld [vmem:[#allocation2 + $0x18] sm:$0xff]
        %v3349 = vld [vmem:[#allocation2 + $0x20] sm:$0xff]
        %v3350 = vld [vmem:[#allocation2 + $0x28] sm:$0xff]
        %v3351 = vld [vmem:[#allocation2 + $0x30] sm:$0xff]
        %v3352 = vld [vmem:[#allocation2 + $0x38] sm:$0xff]
        %v3353 = vld [vmem:[#allocation2 + $0x40] sm:$0xff]
        %v3354 = vld [vmem:[#allocation11] sm:$0xff]
        %v3355 = vld [vmem:[#allocation13] sm:$0xff]
        %v3356 = vld [vmem:[#allocation3] sm:$0xff]
        %v3357 = vld [vmem:[#allocation3 + $0x8] sm:$0xff]
        %v3358 = vld [vmem:[#allocation3 + $0x10] sm:$0xff]
        %v3359 = vld [vmem:[#allocation3 + $0x18] sm:$0xff]
        %v3360 = vld [vmem:[#allocation3 + $0x20] sm:$0xff]
        %v3361 = vld [vmem:[#allocation3 + $0x28] sm:$0xff]
        %v3362 = vld [vmem:[#allocation3 + $0x30] sm:$0xff]
        %v3363 = vld [vmem:[#allocation3 + $0x38] sm:$0xff]
        %v3364 = vld [vmem:[#allocation3 + $0x40] sm:$0xff]
        %v3365 = vld [vmem:[#allocation3 + $0x48] sm:$0xff]
        %3375 = vrot.lane.b32.xlu0 %v3356, 126
        %v3376 = vpop.permute.xlu0 %3375
        %3377 = vrot.lane.b32.xlu0 %v3357, 126
        %v3378 = vpop.permute.xlu0 %3377
        %3379 = vrot.lane.b32.xlu0 %v3358, 126
        %v3380 = vpop.permute.xlu0 %3379
        %3381 = vrot.lane.b32.xlu0 %v3359, 126
        %v3382 = vpop.permute.xlu0 %3381
        %3383 = vrot.lane.b32.xlu0 %v3360, 126
        %v3384 = vpop.permute.xlu0 %3383
        %3385 = vrot.lane.b32.xlu0 %v3361, 126
        %v3386 = vpop.permute.xlu0 %3385
        %3387 = vrot.lane.b32.xlu0 %v3362, 126
        %v3388 = vpop.permute.xlu0 %3387
        %3389 = vrot.lane.b32.xlu0 %v3363, 126
        %v3390 = vpop.permute.xlu0 %3389
        %3391 = vrot.lane.b32.xlu0 %v3364, 126
        %v3392 = vpop.permute.xlu0 %3391
        %v3393 = vsel %vm952, %v3376, %v3378
        %v3394 = vsel %vm952, %v3378, %v3380
        %v3395 = vsel %vm952, %v3380, %v3382
        %v3396 = vsel %vm952, %v3382, %v3384
        %v3397 = vsel %vm952, %v3384, %v3386
        %v3398 = vsel %vm952, %v3386, %v3388
        %v3399 = vsel %vm952, %v3388, %v3390
        %v3400 = vsel %vm952, %v3390, %v3392
        %3401 = vrot.lane.b32.xlu0 %v3356, 124
        %v3402 = vpop.permute.xlu0 %3401
        %3403 = vrot.lane.b32.xlu0 %v3357, 124
        %v3404 = vpop.permute.xlu0 %3403
        %3405 = vrot.lane.b32.xlu0 %v3358, 124
        %v3406 = vpop.permute.xlu0 %3405
        %3407 = vrot.lane.b32.xlu0 %v3359, 124
        %v3408 = vpop.permute.xlu0 %3407
        %3409 = vrot.lane.b32.xlu0 %v3360, 124
        %v3410 = vpop.permute.xlu0 %3409
        %3411 = vrot.lane.b32.xlu0 %v3361, 124
        %v3412 = vpop.permute.xlu0 %3411
        %3413 = vrot.lane.b32.xlu0 %v3362, 124
        %v3414 = vpop.permute.xlu0 %3413
        %3415 = vrot.lane.b32.xlu0 %v3363, 124
        %v3416 = vpop.permute.xlu0 %3415
        %3417 = vrot.lane.b32.xlu0 %v3364, 124
        %v3418 = vpop.permute.xlu0 %3417
        %v3419 = vsel %vm1082, %v3402, %v3404
        %v3420 = vsel %vm1082, %v3404, %v3406
        %v3421 = vsel %vm1082, %v3406, %v3408
        %v3422 = vsel %vm1082, %v3408, %v3410
        %v3423 = vsel %vm1082, %v3410, %v3412
        %v3424 = vsel %vm1082, %v3412, %v3414
        %v3425 = vsel %vm1082, %v3414, %v3416
        %v3426 = vsel %vm1082, %v3416, %v3418
        %3427 = vrot.lane.b32.xlu0 %v3356, 64
        %v3428 = vpop.permute.xlu0 %3427
        %3429 = vrot.lane.b32.xlu0 %v3357, 64
        %v3430 = vpop.permute.xlu0 %3429
        %3431 = vrot.lane.b32.xlu0 %v3358, 64
        %v3432 = vpop.permute.xlu0 %3431
        %3433 = vrot.lane.b32.xlu0 %v3359, 64
        %v3434 = vpop.permute.xlu0 %3433
        %3435 = vrot.lane.b32.xlu0 %v3360, 64
        %v3436 = vpop.permute.xlu0 %3435
        %3437 = vrot.lane.b32.xlu0 %v3361, 64
        %v3438 = vpop.permute.xlu0 %3437
        %3439 = vrot.lane.b32.xlu0 %v3362, 64
        %v3440 = vpop.permute.xlu0 %3439
        %3441 = vrot.lane.b32.xlu0 %v3363, 64
        %v3442 = vpop.permute.xlu0 %3441
        %3443 = vrot.lane.b32.xlu0 %v3364, 64
        %v3444 = vpop.permute.xlu0 %3443
        %v3445 = vsel %vm1472, %v3428, %v3430
        %v3446 = vsel %vm1472, %v3430, %v3432
        %v3447 = vsel %vm1472, %v3432, %v3434
        %v3448 = vsel %vm1472, %v3434, %v3436
        %v3449 = vsel %vm1472, %v3436, %v3438
        %v3450 = vsel %vm1472, %v3438, %v3440
        %v3451 = vsel %vm1472, %v3440, %v3442
        %v3452 = vsel %vm1472, %v3442, %v3444
        %3453 = vrot.lane.b32.xlu0 %v3357, 62
        %v3454 = vpop.permute.xlu0 %3453
        %3455 = vrot.lane.b32.xlu0 %v3358, 62
        %v3456 = vpop.permute.xlu0 %3455
        %3457 = vrot.lane.b32.xlu0 %v3359, 62
        %v3458 = vpop.permute.xlu0 %3457
        %3459 = vrot.lane.b32.xlu0 %v3360, 62
        %v3460 = vpop.permute.xlu0 %3459
        %3461 = vrot.lane.b32.xlu0 %v3361, 62
        %v3462 = vpop.permute.xlu0 %3461
        %3463 = vrot.lane.b32.xlu0 %v3362, 62
        %v3464 = vpop.permute.xlu0 %3463
        %3465 = vrot.lane.b32.xlu0 %v3363, 62
        %v3466 = vpop.permute.xlu0 %3465
        %3467 = vrot.lane.b32.xlu0 %v3364, 62
        %v3468 = vpop.permute.xlu0 %3467
        %v3469 = vsel %vm1602, %v3454, %v3456
        %v3470 = vsel %vm1602, %v3456, %v3458
        %v3471 = vsel %vm1602, %v3458, %v3460
        %v3472 = vsel %vm1602, %v3460, %v3462
        %v3473 = vsel %vm1602, %v3462, %v3464
        %v3474 = vsel %vm1602, %v3464, %v3466
        %v3475 = vsel %vm1602, %v3466, %v3468
        %3477 = vrot.lane.b32.xlu0 %v3357, 60
        %v3478 = vpop.permute.xlu0 %3477
        %3479 = vrot.lane.b32.xlu0 %v3358, 60
        %v3480 = vpop.permute.xlu0 %3479
        %3481 = vrot.lane.b32.xlu0 %v3359, 60
        %v3482 = vpop.permute.xlu0 %3481
        %3483 = vrot.lane.b32.xlu0 %v3360, 60
        %v3484 = vpop.permute.xlu0 %3483
        %3485 = vrot.lane.b32.xlu0 %v3361, 60
        %v3486 = vpop.permute.xlu0 %3485
        %3487 = vrot.lane.b32.xlu0 %v3362, 60
        %v3488 = vpop.permute.xlu0 %3487
        %3489 = vrot.lane.b32.xlu0 %v3363, 60
        %v3490 = vpop.permute.xlu0 %3489
        %3491 = vrot.lane.b32.xlu0 %v3364, 60
        %v3492 = vpop.permute.xlu0 %3491
        %3493 = vrot.lane.b32.xlu0 %v3365, 60
        %v3494 = vpop.permute.xlu0 %3493
        %v3495 = vsel %vm1732, %v3478, %v3480
        %v3496 = vsel %vm1732, %v3480, %v3482
        %v3497 = vsel %vm1732, %v3482, %v3484
        %v3498 = vsel %vm1732, %v3484, %v3486
        %v3499 = vsel %vm1732, %v3486, %v3488
        %v3500 = vsel %vm1732, %v3488, %v3490
        %v3501 = vsel %vm1732, %v3490, %v3492
        %v3502 = vsel %vm1732, %v3492, %v3494
        %3503 = vrot.lane.b32.xlu0 %v3365, 126
        %v3504 = vpop.permute.xlu0 %3503
        %v3505 = vsel %vm952, %v3392, %v3504
        %3506 = vrot.lane.b32.xlu0 %v3365, 124
        %v3507 = vpop.permute.xlu0 %3506
        %v3508 = vsel %vm1082, %v3418, %v3507
        %3510 = vset.pattern.permute.xlu0 0
        %3511 = vperm.xlu0 %3510, %v3355
        %v3512 = vpop.permute.xlu0 %3511
        %3514 = vrot.lane.b32.xlu0 %v3356, 66
        %v3515 = vpop.permute.xlu0 %3514
        %3516 = vrot.lane.b32.xlu0 %v3357, 66
        %v3517 = vpop.permute.xlu0 %3516
        %3518 = vrot.lane.b32.xlu0 %v3358, 66
        %v3519 = vpop.permute.xlu0 %3518
        %3520 = vrot.lane.b32.xlu0 %v3359, 66
        %v3521 = vpop.permute.xlu0 %3520
        %3522 = vrot.lane.b32.xlu0 %v3360, 66
        %v3523 = vpop.permute.xlu0 %3522
        %3524 = vrot.lane.b32.xlu0 %v3361, 66
        %v3525 = vpop.permute.xlu0 %3524
        %3526 = vrot.lane.b32.xlu0 %v3362, 66
        %v3527 = vpop.permute.xlu0 %3526
        %3528 = vrot.lane.b32.xlu0 %v3363, 66
        %v3529 = vpop.permute.xlu0 %3528
        %3530 = vrot.lane.b32.xlu0 %v3364, 66
        %v3531 = vpop.permute.xlu0 %3530
        %3532 = vrot.lane.b32.xlu0 %v3393, 66
        %v3533 = vpop.permute.xlu0 %3532
        %3534 = vrot.lane.b32.xlu0 %v3394, 66
        %v3535 = vpop.permute.xlu0 %3534
        %3536 = vrot.lane.b32.xlu0 %v3395, 66
        %v3537 = vpop.permute.xlu0 %3536
        %3538 = vrot.lane.b32.xlu0 %v3396, 66
        %v3539 = vpop.permute.xlu0 %3538
        %3540 = vrot.lane.b32.xlu0 %v3397, 66
        %v3541 = vpop.permute.xlu0 %3540
        %3542 = vrot.lane.b32.xlu0 %v3398, 66
        %v3543 = vpop.permute.xlu0 %3542
        %3544 = vrot.lane.b32.xlu0 %v3399, 66
        %v3545 = vpop.permute.xlu0 %3544
        %3546 = vrot.lane.b32.xlu0 %v3400, 66
        %v3547 = vpop.permute.xlu0 %3546
        %3548 = vrot.lane.b32.xlu0 %v3392, 66
        %v3549 = vpop.permute.xlu0 %3548
        %3550 = vrot.lane.b32.xlu0 %v3419, 66
        %v3551 = vpop.permute.xlu0 %3550
        %3552 = vrot.lane.b32.xlu0 %v3420, 66
        %v3553 = vpop.permute.xlu0 %3552
        %3554 = vrot.lane.b32.xlu0 %v3421, 66
        %v3555 = vpop.permute.xlu0 %3554
        %3556 = vrot.lane.b32.xlu0 %v3422, 66
        %v3557 = vpop.permute.xlu0 %3556
        %3558 = vrot.lane.b32.xlu0 %v3423, 66
        %v3559 = vpop.permute.xlu0 %3558
        %3560 = vrot.lane.b32.xlu0 %v3424, 66
        %v3561 = vpop.permute.xlu0 %3560
        %3562 = vrot.lane.b32.xlu0 %v3425, 66
        %v3563 = vpop.permute.xlu0 %3562
        %3564 = vrot.lane.b32.xlu0 %v3426, 66
        %v3565 = vpop.permute.xlu0 %3564
        %3566 = vrot.lane.b32.xlu0 %v3418, 66
        %v3567 = vpop.permute.xlu0 %3566
        %3568 = vrot.lane.b32.xlu0 %v3445, 66
        %v3569 = vpop.permute.xlu0 %3568
        %3570 = vrot.lane.b32.xlu0 %v3446, 66
        %v3571 = vpop.permute.xlu0 %3570
        %3572 = vrot.lane.b32.xlu0 %v3447, 66
        %v3573 = vpop.permute.xlu0 %3572
        %3574 = vrot.lane.b32.xlu0 %v3448, 66
        %v3575 = vpop.permute.xlu0 %3574
        %3576 = vrot.lane.b32.xlu0 %v3449, 66
        %v3577 = vpop.permute.xlu0 %3576
        %3578 = vrot.lane.b32.xlu0 %v3450, 66
        %v3579 = vpop.permute.xlu0 %3578
        %3580 = vrot.lane.b32.xlu0 %v3451, 66
        %v3581 = vpop.permute.xlu0 %3580
        %3582 = vrot.lane.b32.xlu0 %v3452, 66
        %v3583 = vpop.permute.xlu0 %3582
        %3584 = vrot.lane.b32.xlu0 %v3444, 66
        %v3585 = vpop.permute.xlu0 %3584
        %3586 = vrot.lane.b32.xlu0 %v3454, 66
        %v3587 = vpop.permute.xlu0 %3586
        %3588 = vrot.lane.b32.xlu0 %v3469, 66
        %v3589 = vpop.permute.xlu0 %3588
        %3590 = vrot.lane.b32.xlu0 %v3470, 66
        %v3591 = vpop.permute.xlu0 %3590
        %3592 = vrot.lane.b32.xlu0 %v3471, 66
        %v3593 = vpop.permute.xlu0 %3592
        %3594 = vrot.lane.b32.xlu0 %v3472, 66
        %v3595 = vpop.permute.xlu0 %3594
        %3596 = vrot.lane.b32.xlu0 %v3473, 66
        %v3597 = vpop.permute.xlu0 %3596
        %3598 = vrot.lane.b32.xlu0 %v3474, 66
        %v3599 = vpop.permute.xlu0 %3598
        %3600 = vrot.lane.b32.xlu0 %v3475, 66
        %v3601 = vpop.permute.xlu0 %3600
        %3602 = vrot.lane.b32.xlu0 %v3468, 66
        %v3603 = vpop.permute.xlu0 %3602
        %3604 = vrot.lane.b32.xlu0 %v3478, 66
        %v3605 = vpop.permute.xlu0 %3604
        %3606 = vrot.lane.b32.xlu0 %v3495, 66
        %v3607 = vpop.permute.xlu0 %3606
        %3608 = vrot.lane.b32.xlu0 %v3496, 66
        %v3609 = vpop.permute.xlu0 %3608
        %3610 = vrot.lane.b32.xlu0 %v3497, 66
        %v3611 = vpop.permute.xlu0 %3610
        %3612 = vrot.lane.b32.xlu0 %v3498, 66
        %v3613 = vpop.permute.xlu0 %3612
        %3614 = vrot.lane.b32.xlu0 %v3499, 66
        %v3615 = vpop.permute.xlu0 %3614
        %3616 = vrot.lane.b32.xlu0 %v3500, 66
        %v3617 = vpop.permute.xlu0 %3616
        %3618 = vrot.lane.b32.xlu0 %v3501, 66
        %v3619 = vpop.permute.xlu0 %3618
        %3620 = vrot.lane.b32.xlu0 %v3502, 66
        %v3621 = vpop.permute.xlu0 %3620
        %3622 = vrot.lane.b32.xlu0 %v3365, 66
        %v3623 = vpop.permute.xlu0 %3622
        %3624 = vrot.lane.b32.xlu0 %v3505, 66
        %v3625 = vpop.permute.xlu0 %3624
        %3626 = vrot.lane.b32.xlu0 %v3504, 66
        %v3627 = vpop.permute.xlu0 %3626
        %3628 = vrot.lane.b32.xlu0 %v3508, 66
        %v3629 = vpop.permute.xlu0 %3628
        %3630 = vrot.lane.b32.xlu0 %v3507, 66
        %v3631 = vpop.permute.xlu0 %3630
        %v3632 = vsel %vm2927, %v3515, %v3517
        %v3633 = vsel %vm2927, %v3517, %v3519
        %v3634 = vsel %vm2927, %v3519, %v3521
        %v3635 = vsel %vm2927, %v3521, %v3523
        %v3636 = vsel %vm2927, %v3523, %v3525
        %v3637 = vsel %vm2927, %v3525, %v3527
        %v3638 = vsel %vm2927, %v3527, %v3529
        %v3639 = vsel %vm2927, %v3529, %v3531
        %v3640 = vsel %vm2927, %v3533, %v3535
        %v3641 = vsel %vm2927, %v3535, %v3537
        %v3642 = vsel %vm2927, %v3537, %v3539
        %v3643 = vsel %vm2927, %v3539, %v3541
        %v3644 = vsel %vm2927, %v3541, %v3543
        %v3645 = vsel %vm2927, %v3543, %v3545
        %v3646 = vsel %vm2927, %v3545, %v3547
        %v3647 = vsel %vm2927, %v3547, %v3549
        %v3648 = vsel %vm2927, %v3551, %v3553
        %v3649 = vsel %vm2927, %v3553, %v3555
        %v3650 = vsel %vm2927, %v3555, %v3557
        %v3651 = vsel %vm2927, %v3557, %v3559
        %v3652 = vsel %vm2927, %v3559, %v3561
        %v3653 = vsel %vm2927, %v3561, %v3563
        %v3654 = vsel %vm2927, %v3563, %v3565
        %v3655 = vsel %vm2927, %v3565, %v3567
        %v3656 = vsel %vm2927, %v3569, %v3571
        %v3657 = vsel %vm2927, %v3571, %v3573
        %v3658 = vsel %vm2927, %v3573, %v3575
        %v3659 = vsel %vm2927, %v3575, %v3577
        %v3660 = vsel %vm2927, %v3577, %v3579
        %v3661 = vsel %vm2927, %v3579, %v3581
        %v3662 = vsel %vm2927, %v3581, %v3583
        %v3663 = vsel %vm2927, %v3583, %v3585
        %v3664 = vsel %vm2927, %v3587, %v3589
        %v3665 = vsel %vm2927, %v3589, %v3591
        %v3666 = vsel %vm2927, %v3591, %v3593
        %v3667 = vsel %vm2927, %v3593, %v3595
        %v3668 = vsel %vm2927, %v3595, %v3597
        %v3669 = vsel %vm2927, %v3597, %v3599
        %v3670 = vsel %vm2927, %v3599, %v3601
        %v3671 = vsel %vm2927, %v3601, %v3603
        %v3672 = vsel %vm2927, %v3605, %v3607
        %v3673 = vsel %vm2927, %v3607, %v3609
        %v3674 = vsel %vm2927, %v3609, %v3611
        %v3675 = vsel %vm2927, %v3611, %v3613
        %v3676 = vsel %vm2927, %v3613, %v3615
        %v3677 = vsel %vm2927, %v3615, %v3617
        %v3678 = vsel %vm2927, %v3617, %v3619
        %v3679 = vsel %vm2927, %v3619, %v3621
        %v3680 = vsel %vm2927, %v3531, %v3623
        %v3681 = vsel %vm2927, %v3547, %v3625
        %v3682 = vsel %vm2927, %v3625, %v3627
        %v3683 = vsel %vm2927, %v3565, %v3629
        %v3684 = vsel %vm2927, %v3629, %v3631
        %v3739 = vsel %vm3034, %v3354, 0
        %3741 = vmatprep.subr.mxu0 0.0
        %3742 = vmatpush1.msra.mxu0 0.0
        %3743 = vmatprep.subr.mxu0 0.0
        %3744 = vmatpush1.msra.mxu0 0.0
        %3745 = vmatprep.subr.mxu0 0.0
        %3746 = vmatpush1.msra.mxu0 0.0
        %3747 = vmatprep.subr.mxu0 0.0
        %3748 = vmatpush1.msra.mxu0 0.0
        %3749 = vmatprep.subr.mxu0 0.0
        %3750 = vmatpush1.msra.mxu0 0.0
        %3751 = vmatprep.subr.mxu0 0.0
        %3752 = vmatpush1.msra.mxu0 0.0
        %3753 = vmatprep.subr.mxu0 0.0
        %3754 = vmatpush1.msra.mxu0 0.0
        %3755 = vmatprep.subr.mxu0 %v3650
        %3756 = vmatpush1.msra.mxu0 %v3649
        %3757 = vmatprep.subr.mxu0 %v3642
        %3758 = vmatpush1.msra.mxu0 %v3641
        %3759 = vmatprep.subr.mxu0 %v3634
        %3760 = vmatpush1.msra.mxu0 %v3633
        %3761 = vmatprep.subr.mxu0 %v3673
        %3762 = vmatpush1.msra.mxu0 %v3672
        %3763 = vmatprep.subr.mxu0 %v3665
        %3764 = vmatpush1.msra.mxu0 %v3664
        %3765 = vmatprep.subr.mxu0 %v3657
        %3766 = vmatpush1.msra.mxu0 %v3656
        %3767 = vmatprep.subr.mxu0 %v3649
        %3768 = vmatpush1.msra.mxu0 %v3648
        %3769 = vmatprep.subr.mxu0 %v3641
        %3770 = vmatpush1.msra.mxu0 %v3640
        %3771 = vmatprep.subr.mxu0 %v3633
        %3772 = vmatpush1.msra.mxu0 %v3632
        %3773 = vmatprep.subr.mxu0 0.0
        %3774 = vmatpush2.msra.mxu0 0.0
        %3775 = vmatprep.subr.mxu0 0.0
        %3776 = vmatpush2.msra.mxu0 0.0
        %3777 = vmatprep.subr.mxu0 0.0
        %3778 = vmatpush2.msra.mxu0 0.0
        %3779 = vmatprep.subr.mxu0 0.0
        %3780 = vmatpush2.msra.mxu0 0.0
        %3781 = vmatprep.subr.mxu0 0.0
        %3782 = vmatpush2.msra.mxu0 0.0
        %3783 = vmatprep.subr.mxu0 0.0
        %3784 = vmatpush2.msra.mxu0 0.0
        %3785 = vmatprep.subr.mxu0 0.0
        %3786 = vmatpush2.msra.mxu0 0.0
        %3787 = vmatprep.subr.mxu0 0.0
        %3788 = vmatpush2.msra.mxu0 0.0
        %3789 = vmatprep.subr.mxu0 0.0
        %3790 = vmatpush2.msra.mxu0 0.0
        %3791 = vmatprep.subr.mxu0 0.0
        %3792 = vmatpush2.msra.mxu0 0.0
        %3793 = vmatprep.subr.mxu0 0.0
        %3794 = vmatpush2.msra.mxu0 0.0
        %3795 = vmatprep.subr.mxu0 0.0
        %3796 = vmatpush2.msra.mxu0 0.0
        %3797 = vmatprep.subr.mxu0 0.0
        %3798 = vmatpush2.msra.mxu0 0.0
        %3799 = vmatprep.subr.mxu0 0.0
        %3800 = vmatpush2.msra.mxu0 0.0
        %3801 = vmatprep.subr.mxu0 0.0
        %3802 = vmatpush2.msra.mxu0 0.0
        %3803 = vmatprep.subr.mxu0 0.0
        %3804 = vmatpush2.msra.mxu0 0.0
        %3805 = vmatprep.mubr.f32.mxu0 0.0
        %3806 = vmatmul.mubr.f32.gmra.mxu0 %v3739
        %v3807 = vpop.f32.mrf.mxu0
        %v3808 = vadd.f32 %v3512, %v3807
        %v3809 = vpop.f32.mrf.mxu0
        %v3810 = vadd.f32 %v3512, %v3809
        %3811 = vdwg.mxu0
        %3812 = vmatprep.subr.mxu0 0.0
        %3813 = vmatpush1.msra.mxu0 0.0
        %3814 = vmatprep.subr.mxu0 0.0
        %3815 = vmatpush1.msra.mxu0 0.0
        %3816 = vmatprep.subr.mxu0 0.0
        %3817 = vmatpush1.msra.mxu0 0.0
        %3818 = vmatprep.subr.mxu0 0.0
        %3819 = vmatpush1.msra.mxu0 0.0
        %3820 = vmatprep.subr.mxu0 0.0
        %3821 = vmatpush1.msra.mxu0 0.0
        %3822 = vmatprep.subr.mxu0 0.0
        %3823 = vmatpush1.msra.mxu0 0.0
        %3824 = vmatprep.subr.mxu0 0.0
        %3825 = vmatpush1.msra.mxu0 0.0
        %3826 = vmatprep.subr.mxu0 %v3652
        %3827 = vmatpush1.msra.mxu0 %v3651
        %3828 = vmatprep.subr.mxu0 %v3644
        %3829 = vmatpush1.msra.mxu0 %v3643
        %3830 = vmatprep.subr.mxu0 %v3636
        %3831 = vmatpush1.msra.mxu0 %v3635
        %3832 = vmatprep.subr.mxu0 %v3675
        %3833 = vmatpush1.msra.mxu0 %v3674
        %3834 = vmatprep.subr.mxu0 %v3667
        %3835 = vmatpush1.msra.mxu0 %v3666
        %3836 = vmatprep.subr.mxu0 %v3659
        %3837 = vmatpush1.msra.mxu0 %v3658
        %3838 = vmatprep.subr.mxu0 %v3651
        %3839 = vmatpush1.msra.mxu0 %v3650
        %3840 = vmatprep.subr.mxu0 %v3643
        %3841 = vmatpush1.msra.mxu0 %v3642
        %3842 = vmatprep.subr.mxu0 %v3635
        %3843 = vmatpush1.msra.mxu0 %v3634
        %3844 = vmatprep.subr.mxu0 0.0
        %3845 = vmatpush2.msra.mxu0 0.0
        %3846 = vmatprep.subr.mxu0 0.0
        %3847 = vmatpush2.msra.mxu0 0.0
        %3848 = vmatprep.subr.mxu0 0.0
        %3849 = vmatpush2.msra.mxu0 0.0
        %3850 = vmatprep.subr.mxu0 0.0
        %3851 = vmatpush2.msra.mxu0 0.0
        %3852 = vmatprep.subr.mxu0 0.0
        %3853 = vmatpush2.msra.mxu0 0.0
        %3854 = vmatprep.subr.mxu0 0.0
        %3855 = vmatpush2.msra.mxu0 0.0
        %3856 = vmatprep.subr.mxu0 0.0
        %3857 = vmatpush2.msra.mxu0 0.0
        %3858 = vmatprep.subr.mxu0 0.0
        %3859 = vmatpush2.msra.mxu0 0.0
        %3860 = vmatprep.subr.mxu0 0.0
        %3861 = vmatpush2.msra.mxu0 0.0
        %3862 = vmatprep.subr.mxu0 0.0
        %3863 = vmatpush2.msra.mxu0 0.0
        %3864 = vmatprep.subr.mxu0 0.0
        %3865 = vmatpush2.msra.mxu0 0.0
        %3866 = vmatprep.subr.mxu0 0.0
        %3867 = vmatpush2.msra.mxu0 0.0
        %3868 = vmatprep.subr.mxu0 0.0
        %3869 = vmatpush2.msra.mxu0 0.0
        %3870 = vmatprep.subr.mxu0 0.0
        %3871 = vmatpush2.msra.mxu0 0.0
        %3872 = vmatprep.subr.mxu0 0.0
        %3873 = vmatpush2.msra.mxu0 0.0
        %3874 = vmatprep.subr.mxu0 0.0
        %3875 = vmatpush2.msra.mxu0 0.0
        %3876 = vmatprep.mubr.f32.mxu0 0.0
        %3877 = vmatmul.mubr.f32.gmra.mxu0 %v3739
        %v3878 = vpop.f32.mrf.mxu0
        %v3879 = vadd.f32 %v3512, %v3878
        %v3880 = vpop.f32.mrf.mxu0
        %v3881 = vadd.f32 %v3512, %v3880
        %3882 = vdwg.mxu0
        %3883 = vmatprep.subr.mxu0 0.0
        %3884 = vmatpush1.msra.mxu0 0.0
        %3885 = vmatprep.subr.mxu0 0.0
        %3886 = vmatpush1.msra.mxu0 0.0
        %3887 = vmatprep.subr.mxu0 0.0
        %3888 = vmatpush1.msra.mxu0 0.0
        %3889 = vmatprep.subr.mxu0 0.0
        %3890 = vmatpush1.msra.mxu0 0.0
        %3891 = vmatprep.subr.mxu0 0.0
        %3892 = vmatpush1.msra.mxu0 0.0
        %3893 = vmatprep.subr.mxu0 0.0
        %3894 = vmatpush1.msra.mxu0 0.0
        %3895 = vmatprep.subr.mxu0 0.0
        %3896 = vmatpush1.msra.mxu0 0.0
        %3897 = vmatprep.subr.mxu0 %v3654
        %3898 = vmatpush1.msra.mxu0 %v3653
        %3899 = vmatprep.subr.mxu0 %v3646
        %3900 = vmatpush1.msra.mxu0 %v3645
        %3901 = vmatprep.subr.mxu0 %v3638
        %3902 = vmatpush1.msra.mxu0 %v3637
        %3903 = vmatprep.subr.mxu0 %v3677
        %3904 = vmatpush1.msra.mxu0 %v3676
        %3905 = vmatprep.subr.mxu0 %v3669
        %3906 = vmatpush1.msra.mxu0 %v3668
        %3907 = vmatprep.subr.mxu0 %v3661
        %3908 = vmatpush1.msra.mxu0 %v3660
        %3909 = vmatprep.subr.mxu0 %v3653
        %3910 = vmatpush1.msra.mxu0 %v3652
        %3911 = vmatprep.subr.mxu0 %v3645
        %3912 = vmatpush1.msra.mxu0 %v3644
        %3913 = vmatprep.subr.mxu0 %v3637
        %3914 = vmatpush1.msra.mxu0 %v3636
        %3915 = vmatprep.subr.mxu0 0.0
        %3916 = vmatpush2.msra.mxu0 0.0
        %3917 = vmatprep.subr.mxu0 0.0
        %3918 = vmatpush2.msra.mxu0 0.0
        %3919 = vmatprep.subr.mxu0 0.0
        %3920 = vmatpush2.msra.mxu0 0.0
        %3921 = vmatprep.subr.mxu0 0.0
        %3922 = vmatpush2.msra.mxu0 0.0
        %3923 = vmatprep.subr.mxu0 0.0
        %3924 = vmatpush2.msra.mxu0 0.0
        %3925 = vmatprep.subr.mxu0 0.0
        %3926 = vmatpush2.msra.mxu0 0.0
        %3927 = vmatprep.subr.mxu0 0.0
        %3928 = vmatpush2.msra.mxu0 0.0
        %3929 = vmatprep.subr.mxu0 0.0
        %3930 = vmatpush2.msra.mxu0 0.0
        %3931 = vmatprep.subr.mxu0 0.0
        %3932 = vmatpush2.msra.mxu0 0.0
        %3933 = vmatprep.subr.mxu0 0.0
        %3934 = vmatpush2.msra.mxu0 0.0
        %3935 = vmatprep.subr.mxu0 0.0
        %3936 = vmatpush2.msra.mxu0 0.0
        %3937 = vmatprep.subr.mxu0 0.0
        %3938 = vmatpush2.msra.mxu0 0.0
        %3939 = vmatprep.subr.mxu0 0.0
        %3940 = vmatpush2.msra.mxu0 0.0
        %3941 = vmatprep.subr.mxu0 0.0
        %3942 = vmatpush2.msra.mxu0 0.0
        %3943 = vmatprep.subr.mxu0 0.0
        %3944 = vmatpush2.msra.mxu0 0.0
        %3945 = vmatprep.subr.mxu0 0.0
        %3946 = vmatpush2.msra.mxu0 0.0
        %3947 = vmatprep.mubr.f32.mxu0 0.0
        %3948 = vmatmul.mubr.f32.gmra.mxu0 %v3739
        %v3949 = vpop.f32.mrf.mxu0
        %v3950 = vadd.f32 %v3512, %v3949
        %v3951 = vpop.f32.mrf.mxu0
        %v3952 = vadd.f32 %v3512, %v3951
        %3953 = vdwg.mxu0
        %3954 = vmatprep.subr.mxu0 0.0
        %3955 = vmatpush1.msra.mxu0 0.0
        %3956 = vmatprep.subr.mxu0 0.0
        %3957 = vmatpush1.msra.mxu0 0.0
        %3958 = vmatprep.subr.mxu0 0.0
        %3959 = vmatpush1.msra.mxu0 0.0
        %3960 = vmatprep.subr.mxu0 0.0
        %3961 = vmatpush1.msra.mxu0 0.0
        %3962 = vmatprep.subr.mxu0 0.0
        %3963 = vmatpush1.msra.mxu0 0.0
        %3964 = vmatprep.subr.mxu0 0.0
        %3965 = vmatpush1.msra.mxu0 0.0
        %3966 = vmatprep.subr.mxu0 0.0
        %3967 = vmatpush1.msra.mxu0 0.0
        %3968 = vmatprep.subr.mxu0 %v3684
        %3969 = vmatpush1.msra.mxu0 %v3683
        %3970 = vmatprep.subr.mxu0 %v3682
        %3971 = vmatpush1.msra.mxu0 %v3681
        %3972 = vmatprep.subr.mxu0 %v3680
        %3973 = vmatpush1.msra.mxu0 %v3639
        %3974 = vmatprep.subr.mxu0 %v3679
        %3975 = vmatpush1.msra.mxu0 %v3678
        %3976 = vmatprep.subr.mxu0 %v3671
        %3977 = vmatpush1.msra.mxu0 %v3670
        %3978 = vmatprep.subr.mxu0 %v3663
        %3979 = vmatpush1.msra.mxu0 %v3662
        %3980 = vmatprep.subr.mxu0 %v3655
        %3981 = vmatpush1.msra.mxu0 %v3654
        %3982 = vmatprep.subr.mxu0 %v3647
        %3983 = vmatpush1.msra.mxu0 %v3646
        %3984 = vmatprep.subr.mxu0 %v3639
        %3985 = vmatpush1.msra.mxu0 %v3638
        %3986 = vmatprep.subr.mxu0 0.0
        %3987 = vmatpush2.msra.mxu0 0.0
        %3988 = vmatprep.subr.mxu0 0.0
        %3989 = vmatpush2.msra.mxu0 0.0
        %3990 = vmatprep.subr.mxu0 0.0
        %3991 = vmatpush2.msra.mxu0 0.0
        %3992 = vmatprep.subr.mxu0 0.0
        %3993 = vmatpush2.msra.mxu0 0.0
        %3994 = vmatprep.subr.mxu0 0.0
        %3995 = vmatpush2.msra.mxu0 0.0
        %3996 = vmatprep.subr.mxu0 0.0
        %3997 = vmatpush2.msra.mxu0 0.0
        %3998 = vmatprep.subr.mxu0 0.0
        %3999 = vmatpush2.msra.mxu0 0.0
        %4000 = vmatprep.subr.mxu0 0.0
        %4001 = vmatpush2.msra.mxu0 0.0
        %4002 = vmatprep.subr.mxu0 0.0
        %4003 = vmatpush2.msra.mxu0 0.0
        %4004 = vmatprep.subr.mxu0 0.0
        %4005 = vmatpush2.msra.mxu0 0.0
        %4006 = vmatprep.subr.mxu0 0.0
        %4007 = vmatpush2.msra.mxu0 0.0
        %4008 = vmatprep.subr.mxu0 0.0
        %4009 = vmatpush2.msra.mxu0 0.0
        %4010 = vmatprep.subr.mxu0 0.0
        %4011 = vmatpush2.msra.mxu0 0.0
        %4012 = vmatprep.subr.mxu0 0.0
        %4013 = vmatpush2.msra.mxu0 0.0
        %4014 = vmatprep.subr.mxu0 0.0
        %4015 = vmatpush2.msra.mxu0 0.0
        %4016 = vmatprep.subr.mxu0 0.0
        %4017 = vmatpush2.msra.mxu0 0.0
        %4018 = vmatprep.mubr.f32.mxu0 0.0
        %4019 = vmatmul.mubr.f32.gmra.mxu0 %v3739
        %v4020 = vpop.f32.mrf.mxu0
        %v4021 = vadd.f32 %v3512, %v4020
        %v4022 = vpop.f32.mrf.mxu0
        %v4023 = vadd.f32 %v3512, %v4022
        %4024 = vdwg.mxu0
        %v4025 = vadd.f32 %v3808, %v3346
        %v4026 = vadd.f32 %v3810, %v3347
        %v4027 = vadd.f32 %v3879, %v3348
        %v4028 = vadd.f32 %v3881, %v3349
        %v4029 = vadd.f32 %v3950, %v3350
        %v4030 = vadd.f32 %v3952, %v3351
        %v4031 = vadd.f32 %v4021, %v3352
        %v4032 = vadd.f32 %v4023, %v3353
        %v4033 = vmax.f32 %v4025, 0.0
        %v4034 = vmax.f32 %v4026, 0.0
        %v4035 = vmax.f32 %v4027, 0.0
        %v4036 = vmax.f32 %v4028, 0.0
        %v4037 = vmax.f32 %v4029, 0.0
        %v4038 = vmax.f32 %v4030, 0.0
        %v4039 = vmax.f32 %v4031, 0.0
        %v4040 = vmax.f32 %v4032, 0.0
        %4041 = vst [vmem:[#allocation2 + $0x8] sm:$0xff] %v4033
        %4042 = vst [vmem:[#allocation2 + $0x10] sm:$0xff] %v4034
        %4043 = vst [vmem:[#allocation2 + $0x18] sm:$0xff] %v4035
        %4044 = vst [vmem:[#allocation2 + $0x20] sm:$0xff] %v4036
        %4045 = vst [vmem:[#allocation2 + $0x28] sm:$0xff] %v4037
        %4046 = vst [vmem:[#allocation2 + $0x30] sm:$0xff] %v4038
        %4047 = vst [vmem:[#allocation2 + $0x38] sm:$0xff] %v4039
        %4048 = vst [vmem:[#allocation2 + $0x40] sm:$0xff] %v4040
        %v4049 = vld [vmem:[#allocation2 + $0x8] sm:$0xff]
        %v4050 = vld [vmem:[#allocation2 + $0x10] sm:$0xff]
        %v4051 = vld [vmem:[#allocation2 + $0x18] sm:$0xff]
        %v4052 = vld [vmem:[#allocation2 + $0x20] sm:$0xff]
        %v4053 = vld [vmem:[#allocation2 + $0x28] sm:$0xff]
        %v4054 = vld [vmem:[#allocation2 + $0x30] sm:$0xff]
        %v4055 = vld [vmem:[#allocation2 + $0x38] sm:$0xff]
        %v4056 = vld [vmem:[#allocation2 + $0x40] sm:$0xff]
        %v4057 = vld [vmem:[#allocation2 + $0x48] sm:$0xff]
        %v4058 = vld [vmem:[#allocation2 + $0x50] sm:$0xff]
        %v4059 = vld [vmem:[#allocation2 + $0x18] sm:$0xff]
        %v4060 = vld [vmem:[#allocation2 + $0x20] sm:$0xff]
        %v4061 = vld [vmem:[#allocation2 + $0x28] sm:$0xff]
        %v4062 = vld [vmem:[#allocation2 + $0x30] sm:$0xff]
        %v4063 = vld [vmem:[#allocation2 + $0x38] sm:$0xff]
        %v4064 = vld [vmem:[#allocation2 + $0x40] sm:$0xff]
        %v4065 = vld [vmem:[#allocation2 + $0x48] sm:$0xff]
        %v4066 = vld [vmem:[#allocation2 + $0x50] sm:$0xff]
        %v4067 = vld [vmem:[#allocation2 + $0x58] sm:$0xff]
        %4077 = vrot.lane.b32.xlu0 %v4049, 126
        %v4078 = vpop.permute.xlu0 %4077
        %4079 = vrot.lane.b32.xlu0 %v4050, 126
        %v4080 = vpop.permute.xlu0 %4079
        %4081 = vrot.lane.b32.xlu0 %v4051, 126
        %v4082 = vpop.permute.xlu0 %4081
        %4083 = vrot.lane.b32.xlu0 %v4052, 126
        %v4084 = vpop.permute.xlu0 %4083
        %4085 = vrot.lane.b32.xlu0 %v4053, 126
        %v4086 = vpop.permute.xlu0 %4085
        %4087 = vrot.lane.b32.xlu0 %v4054, 126
        %v4088 = vpop.permute.xlu0 %4087
        %4089 = vrot.lane.b32.xlu0 %v4055, 126
        %v4090 = vpop.permute.xlu0 %4089
        %4091 = vrot.lane.b32.xlu0 %v4056, 126
        %v4092 = vpop.permute.xlu0 %4091
        %4093 = vrot.lane.b32.xlu0 %v4057, 126
        %v4094 = vpop.permute.xlu0 %4093
        %v4095 = vsel %vm952, %v4078, %v4080
        %v4096 = vsel %vm952, %v4080, %v4082
        %v4097 = vsel %vm952, %v4082, %v4084
        %v4098 = vsel %vm952, %v4084, %v4086
        %v4099 = vsel %vm952, %v4086, %v4088
        %v4100 = vsel %vm952, %v4088, %v4090
        %v4101 = vsel %vm952, %v4090, %v4092
        %v4102 = vsel %vm952, %v4092, %v4094
        %4111 = vrot.lane.b32.xlu0 %v4049, 124
        %v4112 = vpop.permute.xlu0 %4111
        %4113 = vrot.lane.b32.xlu0 %v4050, 124
        %v4114 = vpop.permute.xlu0 %4113
        %4115 = vrot.lane.b32.xlu0 %v4051, 124
        %v4116 = vpop.permute.xlu0 %4115
        %4117 = vrot.lane.b32.xlu0 %v4052, 124
        %v4118 = vpop.permute.xlu0 %4117
        %4119 = vrot.lane.b32.xlu0 %v4053, 124
        %v4120 = vpop.permute.xlu0 %4119
        %4121 = vrot.lane.b32.xlu0 %v4054, 124
        %v4122 = vpop.permute.xlu0 %4121
        %4123 = vrot.lane.b32.xlu0 %v4055, 124
        %v4124 = vpop.permute.xlu0 %4123
        %4125 = vrot.lane.b32.xlu0 %v4056, 124
        %v4126 = vpop.permute.xlu0 %4125
        %4127 = vrot.lane.b32.xlu0 %v4057, 124
        %v4128 = vpop.permute.xlu0 %4127
        %v4129 = vsel %vm1082, %v4112, %v4114
        %v4130 = vsel %vm1082, %v4114, %v4116
        %v4131 = vsel %vm1082, %v4116, %v4118
        %v4132 = vsel %vm1082, %v4118, %v4120
        %v4133 = vsel %vm1082, %v4120, %v4122
        %v4134 = vsel %vm1082, %v4122, %v4124
        %v4135 = vsel %vm1082, %v4124, %v4126
        %v4136 = vsel %vm1082, %v4126, %v4128
        %4145 = vrot.lane.b32.xlu0 %v4049, 122
        %v4146 = vpop.permute.xlu0 %4145
        %4147 = vrot.lane.b32.xlu0 %v4050, 122
        %v4148 = vpop.permute.xlu0 %4147
        %4149 = vrot.lane.b32.xlu0 %v4051, 122
        %v4150 = vpop.permute.xlu0 %4149
        %4151 = vrot.lane.b32.xlu0 %v4052, 122
        %v4152 = vpop.permute.xlu0 %4151
        %4153 = vrot.lane.b32.xlu0 %v4053, 122
        %v4154 = vpop.permute.xlu0 %4153
        %4155 = vrot.lane.b32.xlu0 %v4054, 122
        %v4156 = vpop.permute.xlu0 %4155
        %4157 = vrot.lane.b32.xlu0 %v4055, 122
        %v4158 = vpop.permute.xlu0 %4157
        %4159 = vrot.lane.b32.xlu0 %v4056, 122
        %v4160 = vpop.permute.xlu0 %4159
        %4161 = vrot.lane.b32.xlu0 %v4057, 122
        %v4162 = vpop.permute.xlu0 %4161
        %vm4163 = vcmask 998400
        %v4164 = vsel %vm4163, %v4146, %v4148
        %v4165 = vsel %vm4163, %v4148, %v4150
        %v4166 = vsel %vm4163, %v4150, %v4152
        %v4167 = vsel %vm4163, %v4152, %v4154
        %v4168 = vsel %vm4163, %v4154, %v4156
        %v4169 = vsel %vm4163, %v4156, %v4158
        %v4170 = vsel %vm4163, %v4158, %v4160
        %v4171 = vsel %vm4163, %v4160, %v4162
        %4180 = vrot.lane.b32.xlu0 %v4049, 120
        %v4181 = vpop.permute.xlu0 %4180
        %4182 = vrot.lane.b32.xlu0 %v4050, 120
        %v4183 = vpop.permute.xlu0 %4182
        %4184 = vrot.lane.b32.xlu0 %v4051, 120
        %v4185 = vpop.permute.xlu0 %4184
        %4186 = vrot.lane.b32.xlu0 %v4052, 120
        %v4187 = vpop.permute.xlu0 %4186
        %4188 = vrot.lane.b32.xlu0 %v4053, 120
        %v4189 = vpop.permute.xlu0 %4188
        %4190 = vrot.lane.b32.xlu0 %v4054, 120
        %v4191 = vpop.permute.xlu0 %4190
        %4192 = vrot.lane.b32.xlu0 %v4055, 120
        %v4193 = vpop.permute.xlu0 %4192
        %4194 = vrot.lane.b32.xlu0 %v4056, 120
        %v4195 = vpop.permute.xlu0 %4194
        %4196 = vrot.lane.b32.xlu0 %v4057, 120
        %v4197 = vpop.permute.xlu0 %4196
        %vm4198 = vcmask 982016
        %v4199 = vsel %vm4198, %v4181, %v4183
        %v4200 = vsel %vm4198, %v4183, %v4185
        %v4201 = vsel %vm4198, %v4185, %v4187
        %v4202 = vsel %vm4198, %v4187, %v4189
        %v4203 = vsel %vm4198, %v4189, %v4191
        %v4204 = vsel %vm4198, %v4191, %v4193
        %v4205 = vsel %vm4198, %v4193, %v4195
        %v4206 = vsel %vm4198, %v4195, %v4197
        %4215 = vrot.lane.b32.xlu0 %v4049, 64
        %v4216 = vpop.permute.xlu0 %4215
        %4217 = vrot.lane.b32.xlu0 %v4050, 64
        %v4218 = vpop.permute.xlu0 %4217
        %4219 = vrot.lane.b32.xlu0 %v4051, 64
        %v4220 = vpop.permute.xlu0 %4219
        %4221 = vrot.lane.b32.xlu0 %v4052, 64
        %v4222 = vpop.permute.xlu0 %4221
        %4223 = vrot.lane.b32.xlu0 %v4053, 64
        %v4224 = vpop.permute.xlu0 %4223
        %4225 = vrot.lane.b32.xlu0 %v4054, 64
        %v4226 = vpop.permute.xlu0 %4225
        %4227 = vrot.lane.b32.xlu0 %v4055, 64
        %v4228 = vpop.permute.xlu0 %4227
        %4229 = vrot.lane.b32.xlu0 %v4056, 64
        %v4230 = vpop.permute.xlu0 %4229
        %4231 = vrot.lane.b32.xlu0 %v4057, 64
        %v4232 = vpop.permute.xlu0 %4231
        %v4233 = vsel %vm1472, %v4216, %v4218
        %v4234 = vsel %vm1472, %v4218, %v4220
        %v4235 = vsel %vm1472, %v4220, %v4222
        %v4236 = vsel %vm1472, %v4222, %v4224
        %v4237 = vsel %vm1472, %v4224, %v4226
        %v4238 = vsel %vm1472, %v4226, %v4228
        %v4239 = vsel %vm1472, %v4228, %v4230
        %v4240 = vsel %vm1472, %v4230, %v4232
        %4249 = vrot.lane.b32.xlu0 %v4049, 62
        %v4250 = vpop.permute.xlu0 %4249
        %4251 = vrot.lane.b32.xlu0 %v4050, 62
        %v4252 = vpop.permute.xlu0 %4251
        %4253 = vrot.lane.b32.xlu0 %v4051, 62
        %v4254 = vpop.permute.xlu0 %4253
        %4255 = vrot.lane.b32.xlu0 %v4052, 62
        %v4256 = vpop.permute.xlu0 %4255
        %4257 = vrot.lane.b32.xlu0 %v4053, 62
        %v4258 = vpop.permute.xlu0 %4257
        %4259 = vrot.lane.b32.xlu0 %v4054, 62
        %v4260 = vpop.permute.xlu0 %4259
        %4261 = vrot.lane.b32.xlu0 %v4055, 62
        %v4262 = vpop.permute.xlu0 %4261
        %4263 = vrot.lane.b32.xlu0 %v4056, 62
        %v4264 = vpop.permute.xlu0 %4263
        %4265 = vrot.lane.b32.xlu0 %v4057, 62
        %v4266 = vpop.permute.xlu0 %4265
        %v4267 = vsel %vm1602, %v4250, %v4252
        %v4268 = vsel %vm1602, %v4252, %v4254
        %v4269 = vsel %vm1602, %v4254, %v4256
        %v4270 = vsel %vm1602, %v4256, %v4258
        %v4271 = vsel %vm1602, %v4258, %v4260
        %v4272 = vsel %vm1602, %v4260, %v4262
        %v4273 = vsel %vm1602, %v4262, %v4264
        %v4274 = vsel %vm1602, %v4264, %v4266
        %4283 = vrot.lane.b32.xlu0 %v4049, 60
        %v4284 = vpop.permute.xlu0 %4283
        %4285 = vrot.lane.b32.xlu0 %v4050, 60
        %v4286 = vpop.permute.xlu0 %4285
        %4287 = vrot.lane.b32.xlu0 %v4051, 60
        %v4288 = vpop.permute.xlu0 %4287
        %4289 = vrot.lane.b32.xlu0 %v4052, 60
        %v4290 = vpop.permute.xlu0 %4289
        %4291 = vrot.lane.b32.xlu0 %v4053, 60
        %v4292 = vpop.permute.xlu0 %4291
        %4293 = vrot.lane.b32.xlu0 %v4054, 60
        %v4294 = vpop.permute.xlu0 %4293
        %4295 = vrot.lane.b32.xlu0 %v4055, 60
        %v4296 = vpop.permute.xlu0 %4295
        %4297 = vrot.lane.b32.xlu0 %v4056, 60
        %v4298 = vpop.permute.xlu0 %4297
        %4299 = vrot.lane.b32.xlu0 %v4057, 60
        %v4300 = vpop.permute.xlu0 %4299
        %v4301 = vsel %vm1732, %v4284, %v4286
        %v4302 = vsel %vm1732, %v4286, %v4288
        %v4303 = vsel %vm1732, %v4288, %v4290
        %v4304 = vsel %vm1732, %v4290, %v4292
        %v4305 = vsel %vm1732, %v4292, %v4294
        %v4306 = vsel %vm1732, %v4294, %v4296
        %v4307 = vsel %vm1732, %v4296, %v4298
        %v4308 = vsel %vm1732, %v4298, %v4300
        %4317 = vrot.lane.b32.xlu0 %v4049, 58
        %v4318 = vpop.permute.xlu0 %4317
        %4319 = vrot.lane.b32.xlu0 %v4050, 58
        %v4320 = vpop.permute.xlu0 %4319
        %4321 = vrot.lane.b32.xlu0 %v4051, 58
        %v4322 = vpop.permute.xlu0 %4321
        %4323 = vrot.lane.b32.xlu0 %v4052, 58
        %v4324 = vpop.permute.xlu0 %4323
        %4325 = vrot.lane.b32.xlu0 %v4053, 58
        %v4326 = vpop.permute.xlu0 %4325
        %4327 = vrot.lane.b32.xlu0 %v4054, 58
        %v4328 = vpop.permute.xlu0 %4327
        %4329 = vrot.lane.b32.xlu0 %v4055, 58
        %v4330 = vpop.permute.xlu0 %4329
        %4331 = vrot.lane.b32.xlu0 %v4056, 58
        %v4332 = vpop.permute.xlu0 %4331
        %4333 = vrot.lane.b32.xlu0 %v4057, 58
        %v4334 = vpop.permute.xlu0 %4333
        %vm4335 = vcmask 474112
        %v4336 = vsel %vm4335, %v4318, %v4320
        %v4337 = vsel %vm4335, %v4320, %v4322
        %v4338 = vsel %vm4335, %v4322, %v4324
        %v4339 = vsel %vm4335, %v4324, %v4326
        %v4340 = vsel %vm4335, %v4326, %v4328
        %v4341 = vsel %vm4335, %v4328, %v4330
        %v4342 = vsel %vm4335, %v4330, %v4332
        %v4343 = vsel %vm4335, %v4332, %v4334
        %4352 = vrot.lane.b32.xlu0 %v4049, 56
        %v4353 = vpop.permute.xlu0 %4352
        %4354 = vrot.lane.b32.xlu0 %v4050, 56
        %v4355 = vpop.permute.xlu0 %4354
        %4356 = vrot.lane.b32.xlu0 %v4051, 56
        %v4357 = vpop.permute.xlu0 %4356
        %4358 = vrot.lane.b32.xlu0 %v4052, 56
        %v4359 = vpop.permute.xlu0 %4358
        %4360 = vrot.lane.b32.xlu0 %v4053, 56
        %v4361 = vpop.permute.xlu0 %4360
        %4362 = vrot.lane.b32.xlu0 %v4054, 56
        %v4363 = vpop.permute.xlu0 %4362
        %4364 = vrot.lane.b32.xlu0 %v4055, 56
        %v4365 = vpop.permute.xlu0 %4364
        %4366 = vrot.lane.b32.xlu0 %v4056, 56
        %v4367 = vpop.permute.xlu0 %4366
        %4368 = vrot.lane.b32.xlu0 %v4057, 56
        %v4369 = vpop.permute.xlu0 %4368
        %vm4370 = vcmask 457728
        %v4371 = vsel %vm4370, %v4353, %v4355
        %v4372 = vsel %vm4370, %v4355, %v4357
        %v4373 = vsel %vm4370, %v4357, %v4359
        %v4374 = vsel %vm4370, %v4359, %v4361
        %v4375 = vsel %vm4370, %v4361, %v4363
        %v4376 = vsel %vm4370, %v4363, %v4365
        %v4377 = vsel %vm4370, %v4365, %v4367
        %v4378 = vsel %vm4370, %v4367, %v4369
        %4388 = vrot.lane.b32.xlu0 %v4058, 126
        %v4389 = vpop.permute.xlu0 %4388
        %v4390 = vsel %vm952, %v4094, %v4389
        %4392 = vrot.lane.b32.xlu0 %v4058, 124
        %v4393 = vpop.permute.xlu0 %4392
        %v4394 = vsel %vm1082, %v4128, %v4393
        %4396 = vrot.lane.b32.xlu0 %v4058, 122
        %v4397 = vpop.permute.xlu0 %4396
        %v4398 = vsel %vm4163, %v4162, %v4397
        %4400 = vrot.lane.b32.xlu0 %v4058, 120
        %v4401 = vpop.permute.xlu0 %4400
        %v4402 = vsel %vm4198, %v4197, %v4401
        %4404 = vrot.lane.b32.xlu0 %v4058, 64
        %v4405 = vpop.permute.xlu0 %4404
        %v4406 = vsel %vm1472, %v4232, %v4405
        %4408 = vrot.lane.b32.xlu0 %v4051, 66
        %v4409 = vpop.permute.xlu0 %4408
        %4410 = vrot.lane.b32.xlu0 %v4052, 66
        %v4411 = vpop.permute.xlu0 %4410
        %4412 = vrot.lane.b32.xlu0 %v4053, 66
        %v4413 = vpop.permute.xlu0 %4412
        %4414 = vrot.lane.b32.xlu0 %v4054, 66
        %v4415 = vpop.permute.xlu0 %4414
        %4416 = vrot.lane.b32.xlu0 %v4055, 66
        %v4417 = vpop.permute.xlu0 %4416
        %4418 = vrot.lane.b32.xlu0 %v4056, 66
        %v4419 = vpop.permute.xlu0 %4418
        %4420 = vrot.lane.b32.xlu0 %v4057, 66
        %v4421 = vpop.permute.xlu0 %4420
        %4422 = vrot.lane.b32.xlu0 %v4058, 66
        %v4423 = vpop.permute.xlu0 %4422
        %v4424 = vsel %vm2927, %v4409, %v4411
        %v4425 = vsel %vm2927, %v4411, %v4413
        %v4426 = vsel %vm2927, %v4413, %v4415
        %v4427 = vsel %vm2927, %v4415, %v4417
        %v4428 = vsel %vm2927, %v4417, %v4419
        %v4429 = vsel %vm2927, %v4419, %v4421
        %v4430 = vsel %vm2927, %v4421, %v4423
        %4440 = vrot.lane.b32.xlu0 %v4059, 64
        %v4441 = vpop.permute.xlu0 %4440
        %4442 = vrot.lane.b32.xlu0 %v4060, 64
        %v4443 = vpop.permute.xlu0 %4442
        %4444 = vrot.lane.b32.xlu0 %v4061, 64
        %v4445 = vpop.permute.xlu0 %4444
        %4446 = vrot.lane.b32.xlu0 %v4062, 64
        %v4447 = vpop.permute.xlu0 %4446
        %4448 = vrot.lane.b32.xlu0 %v4063, 64
        %v4449 = vpop.permute.xlu0 %4448
        %4450 = vrot.lane.b32.xlu0 %v4064, 64
        %v4451 = vpop.permute.xlu0 %4450
        %4452 = vrot.lane.b32.xlu0 %v4065, 64
        %v4453 = vpop.permute.xlu0 %4452
        %4454 = vrot.lane.b32.xlu0 %v4066, 64
        %v4455 = vpop.permute.xlu0 %4454
        %4456 = vrot.lane.b32.xlu0 %v4067, 64
        %v4457 = vpop.permute.xlu0 %4456
        %v4458 = vsel %vm1472, %v4441, %v4443
        %v4459 = vsel %vm1472, %v4443, %v4445
        %v4460 = vsel %vm1472, %v4445, %v4447
        %v4461 = vsel %vm1472, %v4447, %v4449
        %v4462 = vsel %vm1472, %v4449, %v4451
        %v4463 = vsel %vm1472, %v4451, %v4453
        %v4464 = vsel %vm1472, %v4453, %v4455
        %v4465 = vsel %vm1472, %v4455, %v4457
        %4466 = vrot.lane.b32.xlu0 %v4059, 62
        %v4467 = vpop.permute.xlu0 %4466
        %4468 = vrot.lane.b32.xlu0 %v4060, 62
        %v4469 = vpop.permute.xlu0 %4468
        %4470 = vrot.lane.b32.xlu0 %v4061, 62
        %v4471 = vpop.permute.xlu0 %4470
        %4472 = vrot.lane.b32.xlu0 %v4062, 62
        %v4473 = vpop.permute.xlu0 %4472
        %4474 = vrot.lane.b32.xlu0 %v4063, 62
        %v4475 = vpop.permute.xlu0 %4474
        %4476 = vrot.lane.b32.xlu0 %v4064, 62
        %v4477 = vpop.permute.xlu0 %4476
        %4478 = vrot.lane.b32.xlu0 %v4065, 62
        %v4479 = vpop.permute.xlu0 %4478
        %4480 = vrot.lane.b32.xlu0 %v4066, 62
        %v4481 = vpop.permute.xlu0 %4480
        %4482 = vrot.lane.b32.xlu0 %v4067, 62
        %v4483 = vpop.permute.xlu0 %4482
        %v4484 = vsel %vm1602, %v4467, %v4469
        %v4485 = vsel %vm1602, %v4469, %v4471
        %v4486 = vsel %vm1602, %v4471, %v4473
        %v4487 = vsel %vm1602, %v4473, %v4475
        %v4488 = vsel %vm1602, %v4475, %v4477
        %v4489 = vsel %vm1602, %v4477, %v4479
        %v4490 = vsel %vm1602, %v4479, %v4481
        %v4491 = vsel %vm1602, %v4481, %v4483
        %4492 = vrot.lane.b32.xlu0 %v4059, 60
        %v4493 = vpop.permute.xlu0 %4492
        %4494 = vrot.lane.b32.xlu0 %v4060, 60
        %v4495 = vpop.permute.xlu0 %4494
        %4496 = vrot.lane.b32.xlu0 %v4061, 60
        %v4497 = vpop.permute.xlu0 %4496
        %4498 = vrot.lane.b32.xlu0 %v4062, 60
        %v4499 = vpop.permute.xlu0 %4498
        %4500 = vrot.lane.b32.xlu0 %v4063, 60
        %v4501 = vpop.permute.xlu0 %4500
        %4502 = vrot.lane.b32.xlu0 %v4064, 60
        %v4503 = vpop.permute.xlu0 %4502
        %4504 = vrot.lane.b32.xlu0 %v4065, 60
        %v4505 = vpop.permute.xlu0 %4504
        %4506 = vrot.lane.b32.xlu0 %v4066, 60
        %v4507 = vpop.permute.xlu0 %4506
        %4508 = vrot.lane.b32.xlu0 %v4067, 60
        %v4509 = vpop.permute.xlu0 %4508
        %v4510 = vsel %vm1732, %v4493, %v4495
        %v4511 = vsel %vm1732, %v4495, %v4497
        %v4512 = vsel %vm1732, %v4497, %v4499
        %v4513 = vsel %vm1732, %v4499, %v4501
        %v4514 = vsel %vm1732, %v4501, %v4503
        %v4515 = vsel %vm1732, %v4503, %v4505
        %v4516 = vsel %vm1732, %v4505, %v4507
        %v4517 = vsel %vm1732, %v4507, %v4509
        %4518 = vrot.lane.b32.xlu0 %v4059, 58
        %v4519 = vpop.permute.xlu0 %4518
        %4520 = vrot.lane.b32.xlu0 %v4060, 58
        %v4521 = vpop.permute.xlu0 %4520
        %4522 = vrot.lane.b32.xlu0 %v4061, 58
        %v4523 = vpop.permute.xlu0 %4522
        %4524 = vrot.lane.b32.xlu0 %v4062, 58
        %v4525 = vpop.permute.xlu0 %4524
        %4526 = vrot.lane.b32.xlu0 %v4063, 58
        %v4527 = vpop.permute.xlu0 %4526
        %4528 = vrot.lane.b32.xlu0 %v4064, 58
        %v4529 = vpop.permute.xlu0 %4528
        %4530 = vrot.lane.b32.xlu0 %v4065, 58
        %v4531 = vpop.permute.xlu0 %4530
        %4532 = vrot.lane.b32.xlu0 %v4066, 58
        %v4533 = vpop.permute.xlu0 %4532
        %4534 = vrot.lane.b32.xlu0 %v4067, 58
        %v4535 = vpop.permute.xlu0 %4534
        %v4536 = vsel %vm4335, %v4519, %v4521
        %v4537 = vsel %vm4335, %v4521, %v4523
        %v4538 = vsel %vm4335, %v4523, %v4525
        %v4539 = vsel %vm4335, %v4525, %v4527
        %v4540 = vsel %vm4335, %v4527, %v4529
        %v4541 = vsel %vm4335, %v4529, %v4531
        %v4542 = vsel %vm4335, %v4531, %v4533
        %v4543 = vsel %vm4335, %v4533, %v4535
        %4544 = vrot.lane.b32.xlu0 %v4058, 62
        %v4545 = vpop.permute.xlu0 %4544
        %4546 = vrot.lane.b32.xlu0 %v4096, 62
        %v4547 = vpop.permute.xlu0 %4546
        %4548 = vrot.lane.b32.xlu0 %v4097, 62
        %v4549 = vpop.permute.xlu0 %4548
        %4550 = vrot.lane.b32.xlu0 %v4098, 62
        %v4551 = vpop.permute.xlu0 %4550
        %4552 = vrot.lane.b32.xlu0 %v4099, 62
        %v4553 = vpop.permute.xlu0 %4552
        %4554 = vrot.lane.b32.xlu0 %v4100, 62
        %v4555 = vpop.permute.xlu0 %4554
        %4556 = vrot.lane.b32.xlu0 %v4101, 62
        %v4557 = vpop.permute.xlu0 %4556
        %4558 = vrot.lane.b32.xlu0 %v4102, 62
        %v4559 = vpop.permute.xlu0 %4558
        %4560 = vrot.lane.b32.xlu0 %v4390, 62
        %v4561 = vpop.permute.xlu0 %4560
        %4562 = vrot.lane.b32.xlu0 %v4389, 62
        %v4563 = vpop.permute.xlu0 %4562
        %4564 = vrot.lane.b32.xlu0 %v4130, 62
        %v4565 = vpop.permute.xlu0 %4564
        %4566 = vrot.lane.b32.xlu0 %v4131, 62
        %v4567 = vpop.permute.xlu0 %4566
        %4568 = vrot.lane.b32.xlu0 %v4132, 62
        %v4569 = vpop.permute.xlu0 %4568
        %4570 = vrot.lane.b32.xlu0 %v4133, 62
        %v4571 = vpop.permute.xlu0 %4570
        %4572 = vrot.lane.b32.xlu0 %v4134, 62
        %v4573 = vpop.permute.xlu0 %4572
        %4574 = vrot.lane.b32.xlu0 %v4135, 62
        %v4575 = vpop.permute.xlu0 %4574
        %4576 = vrot.lane.b32.xlu0 %v4136, 62
        %v4577 = vpop.permute.xlu0 %4576
        %4578 = vrot.lane.b32.xlu0 %v4394, 62
        %v4579 = vpop.permute.xlu0 %4578
        %4580 = vrot.lane.b32.xlu0 %v4393, 62
        %v4581 = vpop.permute.xlu0 %4580
        %4582 = vrot.lane.b32.xlu0 %v4165, 62
        %v4583 = vpop.permute.xlu0 %4582
        %4584 = vrot.lane.b32.xlu0 %v4166, 62
        %v4585 = vpop.permute.xlu0 %4584
        %4586 = vrot.lane.b32.xlu0 %v4167, 62
        %v4587 = vpop.permute.xlu0 %4586
        %4588 = vrot.lane.b32.xlu0 %v4168, 62
        %v4589 = vpop.permute.xlu0 %4588
        %4590 = vrot.lane.b32.xlu0 %v4169, 62
        %v4591 = vpop.permute.xlu0 %4590
        %4592 = vrot.lane.b32.xlu0 %v4170, 62
        %v4593 = vpop.permute.xlu0 %4592
        %4594 = vrot.lane.b32.xlu0 %v4171, 62
        %v4595 = vpop.permute.xlu0 %4594
        %4596 = vrot.lane.b32.xlu0 %v4398, 62
        %v4597 = vpop.permute.xlu0 %4596
        %4598 = vrot.lane.b32.xlu0 %v4397, 62
        %v4599 = vpop.permute.xlu0 %4598
        %4600 = vrot.lane.b32.xlu0 %v4409, 62
        %v4601 = vpop.permute.xlu0 %4600
        %4602 = vrot.lane.b32.xlu0 %v4424, 62
        %v4603 = vpop.permute.xlu0 %4602
        %4604 = vrot.lane.b32.xlu0 %v4425, 62
        %v4605 = vpop.permute.xlu0 %4604
        %4606 = vrot.lane.b32.xlu0 %v4426, 62
        %v4607 = vpop.permute.xlu0 %4606
        %4608 = vrot.lane.b32.xlu0 %v4427, 62
        %v4609 = vpop.permute.xlu0 %4608
        %4610 = vrot.lane.b32.xlu0 %v4428, 62
        %v4611 = vpop.permute.xlu0 %4610
        %4612 = vrot.lane.b32.xlu0 %v4429, 62
        %v4613 = vpop.permute.xlu0 %4612
        %4614 = vrot.lane.b32.xlu0 %v4430, 62
        %v4615 = vpop.permute.xlu0 %4614
        %4616 = vrot.lane.b32.xlu0 %v4423, 62
        %v4617 = vpop.permute.xlu0 %4616
        %4618 = vrot.lane.b32.xlu0 %v4441, 62
        %v4619 = vpop.permute.xlu0 %4618
        %4620 = vrot.lane.b32.xlu0 %v4458, 62
        %v4621 = vpop.permute.xlu0 %4620
        %4622 = vrot.lane.b32.xlu0 %v4459, 62
        %v4623 = vpop.permute.xlu0 %4622
        %4624 = vrot.lane.b32.xlu0 %v4460, 62
        %v4625 = vpop.permute.xlu0 %4624
        %4626 = vrot.lane.b32.xlu0 %v4461, 62
        %v4627 = vpop.permute.xlu0 %4626
        %4628 = vrot.lane.b32.xlu0 %v4462, 62
        %v4629 = vpop.permute.xlu0 %4628
        %4630 = vrot.lane.b32.xlu0 %v4463, 62
        %v4631 = vpop.permute.xlu0 %4630
        %4632 = vrot.lane.b32.xlu0 %v4464, 62
        %v4633 = vpop.permute.xlu0 %4632
        %4634 = vrot.lane.b32.xlu0 %v4465, 62
        %v4635 = vpop.permute.xlu0 %4634
        %4636 = vrot.lane.b32.xlu0 %v4467, 62
        %v4637 = vpop.permute.xlu0 %4636
        %4638 = vrot.lane.b32.xlu0 %v4484, 62
        %v4639 = vpop.permute.xlu0 %4638
        %4640 = vrot.lane.b32.xlu0 %v4485, 62
        %v4641 = vpop.permute.xlu0 %4640
        %4642 = vrot.lane.b32.xlu0 %v4486, 62
        %v4643 = vpop.permute.xlu0 %4642
        %4644 = vrot.lane.b32.xlu0 %v4487, 62
        %v4645 = vpop.permute.xlu0 %4644
        %4646 = vrot.lane.b32.xlu0 %v4488, 62
        %v4647 = vpop.permute.xlu0 %4646
        %4648 = vrot.lane.b32.xlu0 %v4489, 62
        %v4649 = vpop.permute.xlu0 %4648
        %4650 = vrot.lane.b32.xlu0 %v4490, 62
        %v4651 = vpop.permute.xlu0 %4650
        %4652 = vrot.lane.b32.xlu0 %v4491, 62
        %v4653 = vpop.permute.xlu0 %4652
        %4654 = vrot.lane.b32.xlu0 %v4493, 62
        %v4655 = vpop.permute.xlu0 %4654
        %4656 = vrot.lane.b32.xlu0 %v4510, 62
        %v4657 = vpop.permute.xlu0 %4656
        %4658 = vrot.lane.b32.xlu0 %v4511, 62
        %v4659 = vpop.permute.xlu0 %4658
        %4660 = vrot.lane.b32.xlu0 %v4512, 62
        %v4661 = vpop.permute.xlu0 %4660
        %4662 = vrot.lane.b32.xlu0 %v4513, 62
        %v4663 = vpop.permute.xlu0 %4662
        %4664 = vrot.lane.b32.xlu0 %v4514, 62
        %v4665 = vpop.permute.xlu0 %4664
        %4666 = vrot.lane.b32.xlu0 %v4515, 62
        %v4667 = vpop.permute.xlu0 %4666
        %4668 = vrot.lane.b32.xlu0 %v4516, 62
        %v4669 = vpop.permute.xlu0 %4668
        %4670 = vrot.lane.b32.xlu0 %v4517, 62
        %v4671 = vpop.permute.xlu0 %4670
        %4672 = vrot.lane.b32.xlu0 %v4519, 62
        %v4673 = vpop.permute.xlu0 %4672
        %4674 = vrot.lane.b32.xlu0 %v4536, 62
        %v4675 = vpop.permute.xlu0 %4674
        %4676 = vrot.lane.b32.xlu0 %v4537, 62
        %v4677 = vpop.permute.xlu0 %4676
        %4678 = vrot.lane.b32.xlu0 %v4538, 62
        %v4679 = vpop.permute.xlu0 %4678
        %4680 = vrot.lane.b32.xlu0 %v4539, 62
        %v4681 = vpop.permute.xlu0 %4680
        %4682 = vrot.lane.b32.xlu0 %v4540, 62
        %v4683 = vpop.permute.xlu0 %4682
        %4684 = vrot.lane.b32.xlu0 %v4541, 62
        %v4685 = vpop.permute.xlu0 %4684
        %4686 = vrot.lane.b32.xlu0 %v4542, 62
        %v4687 = vpop.permute.xlu0 %4686
        %4688 = vrot.lane.b32.xlu0 %v4543, 62
        %v4689 = vpop.permute.xlu0 %4688
        %v4690 = vsel %vm1602, %v4266, %v4545
        %v4691 = vsel %vm1602, %v4547, %v4549
        %v4692 = vsel %vm1602, %v4549, %v4551
        %v4693 = vsel %vm1602, %v4551, %v4553
        %v4694 = vsel %vm1602, %v4553, %v4555
        %v4695 = vsel %vm1602, %v4555, %v4557
        %v4696 = vsel %vm1602, %v4557, %v4559
        %v4697 = vsel %vm1602, %v4559, %v4561
        %v4698 = vsel %vm1602, %v4561, %v4563
        %v4699 = vsel %vm1602, %v4565, %v4567
        %v4700 = vsel %vm1602, %v4567, %v4569
        %v4701 = vsel %vm1602, %v4569, %v4571
        %v4702 = vsel %vm1602, %v4571, %v4573
        %v4703 = vsel %vm1602, %v4573, %v4575
        %v4704 = vsel %vm1602, %v4575, %v4577
        %v4705 = vsel %vm1602, %v4577, %v4579
        %v4706 = vsel %vm1602, %v4579, %v4581
        %v4707 = vsel %vm1602, %v4583, %v4585
        %v4708 = vsel %vm1602, %v4585, %v4587
        %v4709 = vsel %vm1602, %v4587, %v4589
        %v4710 = vsel %vm1602, %v4589, %v4591
        %v4711 = vsel %vm1602, %v4591, %v4593
        %v4712 = vsel %vm1602, %v4593, %v4595
        %v4713 = vsel %vm1602, %v4595, %v4597
        %v4714 = vsel %vm1602, %v4597, %v4599
        %v4715 = vsel %vm1602, %v4601, %v4603
        %v4716 = vsel %vm1602, %v4603, %v4605
        %v4717 = vsel %vm1602, %v4605, %v4607
        %v4718 = vsel %vm1602, %v4607, %v4609
        %v4719 = vsel %vm1602, %v4609, %v4611
        %v4720 = vsel %vm1602, %v4611, %v4613
        %v4721 = vsel %vm1602, %v4613, %v4615
        %v4722 = vsel %vm1602, %v4615, %v4617
        %v4723 = vsel %vm1602, %v4619, %v4621
        %v4724 = vsel %vm1602, %v4621, %v4623
        %v4725 = vsel %vm1602, %v4623, %v4625
        %v4726 = vsel %vm1602, %v4625, %v4627
        %v4727 = vsel %vm1602, %v4627, %v4629
        %v4728 = vsel %vm1602, %v4629, %v4631
        %v4729 = vsel %vm1602, %v4631, %v4633
        %v4730 = vsel %vm1602, %v4633, %v4635
        %v4731 = vsel %vm1602, %v4637, %v4639
        %v4732 = vsel %vm1602, %v4639, %v4641
        %v4733 = vsel %vm1602, %v4641, %v4643
        %v4734 = vsel %vm1602, %v4643, %v4645
        %v4735 = vsel %vm1602, %v4645, %v4647
        %v4736 = vsel %vm1602, %v4647, %v4649
        %v4737 = vsel %vm1602, %v4649, %v4651
        %v4738 = vsel %vm1602, %v4651, %v4653
        %v4739 = vsel %vm1602, %v4655, %v4657
        %v4740 = vsel %vm1602, %v4657, %v4659
        %v4741 = vsel %vm1602, %v4659, %v4661
        %v4742 = vsel %vm1602, %v4661, %v4663
        %v4743 = vsel %vm1602, %v4663, %v4665
        %v4744 = vsel %vm1602, %v4665, %v4667
        %v4745 = vsel %vm1602, %v4667, %v4669
        %v4746 = vsel %vm1602, %v4669, %v4671
        %v4747 = vsel %vm1602, %v4673, %v4675
        %v4748 = vsel %vm1602, %v4675, %v4677
        %v4749 = vsel %vm1602, %v4677, %v4679
        %v4750 = vsel %vm1602, %v4679, %v4681
        %v4751 = vsel %vm1602, %v4681, %v4683
        %v4752 = vsel %vm1602, %v4683, %v4685
        %v4753 = vsel %vm1602, %v4685, %v4687
        %v4754 = vsel %vm1602, %v4687, %v4689
        %v4820 = vld [vmem:[#allocation14] sm:$0xff]
        %v4821 = vld [vmem:[#allocation14 + $0x8] sm:$0xff]
        %v4822 = vld [vmem:[#allocation14 + $0x10] sm:$0xff]
        %v4823 = vld [vmem:[#allocation14 + $0x18] sm:$0xff]
        %v4824 = vld [vmem:[#allocation16] sm:$0xff]
        %v4825 = vld [vmem:[#allocation16 + $0x8] sm:$0xff]
        %4827 = vset.pattern.permute.xlu0 0
        %4828 = vperm.xlu0 %4827, %v4824
        %v4829 = vpop.permute.xlu0 %4828
        %4832 = vset.pattern.permute.xlu0 0
        %4833 = vperm.xlu0 %4832, %v4825
        %v4834 = vpop.permute.xlu0 %4833
        %v4837 = vsel %vm3034, %v4821, 0
        %v4840 = vsel %vm3034, %v4823, 0
        %4842 = vmatprep.subr.mxu0 %v4235
        %4843 = vmatpush1.msra.mxu0 %v4234
        %4844 = vmatprep.subr.mxu0 %v4201
        %4845 = vmatpush1.msra.mxu0 %v4200
        %4846 = vmatprep.subr.mxu0 %v4166
        %4847 = vmatpush1.msra.mxu0 %v4165
        %4848 = vmatprep.subr.mxu0 %v4131
        %4849 = vmatpush1.msra.mxu0 %v4130
        %4850 = vmatprep.subr.mxu0 %v4097
        %4851 = vmatpush1.msra.mxu0 %v4096
        %4852 = vmatprep.subr.mxu0 %v4051
        %4853 = vmatpush1.msra.mxu0 %v4050
        %4854 = vmatprep.subr.mxu0 %v4372
        %4855 = vmatpush1.msra.mxu0 %v4371
        %4856 = vmatprep.subr.mxu0 %v4337
        %4857 = vmatpush1.msra.mxu0 %v4336
        %4858 = vmatprep.subr.mxu0 %v4302
        %4859 = vmatpush1.msra.mxu0 %v4301
        %4860 = vmatprep.subr.mxu0 %v4268
        %4861 = vmatpush1.msra.mxu0 %v4267
        %4862 = vmatprep.subr.mxu0 %v4234
        %4863 = vmatpush1.msra.mxu0 %v4233
        %4864 = vmatprep.subr.mxu0 %v4200
        %4865 = vmatpush1.msra.mxu0 %v4199
        %4866 = vmatprep.subr.mxu0 %v4165
        %4867 = vmatpush1.msra.mxu0 %v4164
        %4868 = vmatprep.subr.mxu0 %v4130
        %4869 = vmatpush1.msra.mxu0 %v4129
        %4870 = vmatprep.subr.mxu0 %v4096
        %4871 = vmatpush1.msra.mxu0 %v4095
        %4872 = vmatprep.subr.mxu0 %v4050
        %4873 = vmatpush1.msra.mxu0 %v4049
        %4874 = vmatprep.subr.mxu0 0.0
        %4875 = vmatpush2.msra.mxu0 0.0
        %4876 = vmatprep.subr.mxu0 0.0
        %4877 = vmatpush2.msra.mxu0 0.0
        %4878 = vmatprep.subr.mxu0 0.0
        %4879 = vmatpush2.msra.mxu0 0.0
        %4880 = vmatprep.subr.mxu0 0.0
        %4881 = vmatpush2.msra.mxu0 0.0
        %4882 = vmatprep.subr.mxu0 0.0
        %4883 = vmatpush2.msra.mxu0 0.0
        %4884 = vmatprep.subr.mxu0 0.0
        %4885 = vmatpush2.msra.mxu0 0.0
        %4886 = vmatprep.subr.mxu0 0.0
        %4887 = vmatpush2.msra.mxu0 0.0
        %4888 = vmatprep.subr.mxu0 %v4748
        %4889 = vmatpush2.msra.mxu0 %v4747
        %4890 = vmatprep.subr.mxu0 %v4740
        %4891 = vmatpush2.msra.mxu0 %v4739
        %4892 = vmatprep.subr.mxu0 %v4732
        %4893 = vmatpush2.msra.mxu0 %v4731
        %4894 = vmatprep.subr.mxu0 %v4724
        %4895 = vmatpush2.msra.mxu0 %v4723
        %4896 = vmatprep.subr.mxu0 %v4716
        %4897 = vmatpush2.msra.mxu0 %v4715
        %4898 = vmatprep.subr.mxu0 %v4708
        %4899 = vmatpush2.msra.mxu0 %v4707
        %4900 = vmatprep.subr.mxu0 %v4700
        %4901 = vmatpush2.msra.mxu0 %v4699
        %4902 = vmatprep.subr.mxu0 %v4692
        %4903 = vmatpush2.msra.mxu0 %v4691
        %4904 = vmatprep.subr.mxu0 %v4269
        %4905 = vmatpush2.msra.mxu0 %v4268
        %4906 = vmatprep.mubr.f32.mxu0 %v4837
        %4907 = vmatmul.mubr.f32.gmra.mxu0 %v4820
        %v4908 = vpop.f32.mrf.mxu0
        %v4909 = vadd.f32 %v4829, %v4908
        %v4910 = vpop.f32.mrf.mxu0
        %v4911 = vadd.f32 %v4829, %v4910
        %4912 = vmatprep.mubr.f32.mxu0 %v4840
        %4913 = vmatmul.mubr.f32.gmra.mxu0 %v4822
        %v4914 = vpop.f32.mrf.mxu0
        %v4915 = vadd.f32 %v4834, %v4914
        %v4916 = vpop.f32.mrf.mxu0
        %v4917 = vadd.f32 %v4834, %v4916
        %4918 = vdwg.mxu0
        %4919 = vmatprep.subr.mxu0 %v4237
        %4920 = vmatpush1.msra.mxu0 %v4236
        %4921 = vmatprep.subr.mxu0 %v4203
        %4922 = vmatpush1.msra.mxu0 %v4202
        %4923 = vmatprep.subr.mxu0 %v4168
        %4924 = vmatpush1.msra.mxu0 %v4167
        %4925 = vmatprep.subr.mxu0 %v4133
        %4926 = vmatpush1.msra.mxu0 %v4132
        %4927 = vmatprep.subr.mxu0 %v4099
        %4928 = vmatpush1.msra.mxu0 %v4098
        %4929 = vmatprep.subr.mxu0 %v4053
        %4930 = vmatpush1.msra.mxu0 %v4052
        %4931 = vmatprep.subr.mxu0 %v4374
        %4932 = vmatpush1.msra.mxu0 %v4373
        %4933 = vmatprep.subr.mxu0 %v4339
        %4934 = vmatpush1.msra.mxu0 %v4338
        %4935 = vmatprep.subr.mxu0 %v4304
        %4936 = vmatpush1.msra.mxu0 %v4303
        %4937 = vmatprep.subr.mxu0 %v4270
        %4938 = vmatpush1.msra.mxu0 %v4269
        %4939 = vmatprep.subr.mxu0 %v4236
        %4940 = vmatpush1.msra.mxu0 %v4235
        %4941 = vmatprep.subr.mxu0 %v4202
        %4942 = vmatpush1.msra.mxu0 %v4201
        %4943 = vmatprep.subr.mxu0 %v4167
        %4944 = vmatpush1.msra.mxu0 %v4166
        %4945 = vmatprep.subr.mxu0 %v4132
        %4946 = vmatpush1.msra.mxu0 %v4131
        %4947 = vmatprep.subr.mxu0 %v4098
        %4948 = vmatpush1.msra.mxu0 %v4097
        %4949 = vmatprep.subr.mxu0 %v4052
        %4950 = vmatpush1.msra.mxu0 %v4051
        %4951 = vmatprep.subr.mxu0 0.0
        %4952 = vmatpush2.msra.mxu0 0.0
        %4953 = vmatprep.subr.mxu0 0.0
        %4954 = vmatpush2.msra.mxu0 0.0
        %4955 = vmatprep.subr.mxu0 0.0
        %4956 = vmatpush2.msra.mxu0 0.0
        %4957 = vmatprep.subr.mxu0 0.0
        %4958 = vmatpush2.msra.mxu0 0.0
        %4959 = vmatprep.subr.mxu0 0.0
        %4960 = vmatpush2.msra.mxu0 0.0
        %4961 = vmatprep.subr.mxu0 0.0
        %4962 = vmatpush2.msra.mxu0 0.0
        %4963 = vmatprep.subr.mxu0 0.0
        %4964 = vmatpush2.msra.mxu0 0.0
        %4965 = vmatprep.subr.mxu0 %v4750
        %4966 = vmatpush2.msra.mxu0 %v4749
        %4967 = vmatprep.subr.mxu0 %v4742
        %4968 = vmatpush2.msra.mxu0 %v4741
        %4969 = vmatprep.subr.mxu0 %v4734
        %4970 = vmatpush2.msra.mxu0 %v4733
        %4971 = vmatprep.subr.mxu0 %v4726
        %4972 = vmatpush2.msra.mxu0 %v4725
        %4973 = vmatprep.subr.mxu0 %v4718
        %4974 = vmatpush2.msra.mxu0 %v4717
        %4975 = vmatprep.subr.mxu0 %v4710
        %4976 = vmatpush2.msra.mxu0 %v4709
        %4977 = vmatprep.subr.mxu0 %v4702
        %4978 = vmatpush2.msra.mxu0 %v4701
        %4979 = vmatprep.subr.mxu0 %v4694
        %4980 = vmatpush2.msra.mxu0 %v4693
        %4981 = vmatprep.subr.mxu0 %v4271
        %4982 = vmatpush2.msra.mxu0 %v4270
        %4983 = vmatprep.mubr.f32.mxu0 %v4837
        %4984 = vmatmul.mubr.f32.gmra.mxu0 %v4820
        %v4985 = vpop.f32.mrf.mxu0
        %v4986 = vadd.f32 %v4829, %v4985
        %v4987 = vpop.f32.mrf.mxu0
        %v4988 = vadd.f32 %v4829, %v4987
        %4989 = vmatprep.mubr.f32.mxu0 %v4840
        %4990 = vmatmul.mubr.f32.gmra.mxu0 %v4822
        %v4991 = vpop.f32.mrf.mxu0
        %v4992 = vadd.f32 %v4834, %v4991
        %v4993 = vpop.f32.mrf.mxu0
        %v4994 = vadd.f32 %v4834, %v4993
        %4995 = vdwg.mxu0
        %4996 = vmatprep.subr.mxu0 %v4239
        %4997 = vmatpush1.msra.mxu0 %v4238
        %4998 = vmatprep.subr.mxu0 %v4205
        %4999 = vmatpush1.msra.mxu0 %v4204
        %5000 = vmatprep.subr.mxu0 %v4170
        %5001 = vmatpush1.msra.mxu0 %v4169
        %5002 = vmatprep.subr.mxu0 %v4135
        %5003 = vmatpush1.msra.mxu0 %v4134
        %5004 = vmatprep.subr.mxu0 %v4101
        %5005 = vmatpush1.msra.mxu0 %v4100
        %5006 = vmatprep.subr.mxu0 %v4055
        %5007 = vmatpush1.msra.mxu0 %v4054
        %5008 = vmatprep.subr.mxu0 %v4376
        %5009 = vmatpush1.msra.mxu0 %v4375
        %5010 = vmatprep.subr.mxu0 %v4341
        %5011 = vmatpush1.msra.mxu0 %v4340
        %5012 = vmatprep.subr.mxu0 %v4306
        %5013 = vmatpush1.msra.mxu0 %v4305
        %5014 = vmatprep.subr.mxu0 %v4272
        %5015 = vmatpush1.msra.mxu0 %v4271
        %5016 = vmatprep.subr.mxu0 %v4238
        %5017 = vmatpush1.msra.mxu0 %v4237
        %5018 = vmatprep.subr.mxu0 %v4204
        %5019 = vmatpush1.msra.mxu0 %v4203
        %5020 = vmatprep.subr.mxu0 %v4169
        %5021 = vmatpush1.msra.mxu0 %v4168
        %5022 = vmatprep.subr.mxu0 %v4134
        %5023 = vmatpush1.msra.mxu0 %v4133
        %5024 = vmatprep.subr.mxu0 %v4100
        %5025 = vmatpush1.msra.mxu0 %v4099
        %5026 = vmatprep.subr.mxu0 %v4054
        %5027 = vmatpush1.msra.mxu0 %v4053
        %5028 = vmatprep.subr.mxu0 0.0
        %5029 = vmatpush2.msra.mxu0 0.0
        %5030 = vmatprep.subr.mxu0 0.0
        %5031 = vmatpush2.msra.mxu0 0.0
        %5032 = vmatprep.subr.mxu0 0.0
        %5033 = vmatpush2.msra.mxu0 0.0
        %5034 = vmatprep.subr.mxu0 0.0
        %5035 = vmatpush2.msra.mxu0 0.0
        %5036 = vmatprep.subr.mxu0 0.0
        %5037 = vmatpush2.msra.mxu0 0.0
        %5038 = vmatprep.subr.mxu0 0.0
        %5039 = vmatpush2.msra.mxu0 0.0
        %5040 = vmatprep.subr.mxu0 0.0
        %5041 = vmatpush2.msra.mxu0 0.0
        %5042 = vmatprep.subr.mxu0 %v4752
        %5043 = vmatpush2.msra.mxu0 %v4751
        %5044 = vmatprep.subr.mxu0 %v4744
        %5045 = vmatpush2.msra.mxu0 %v4743
        %5046 = vmatprep.subr.mxu0 %v4736
        %5047 = vmatpush2.msra.mxu0 %v4735
        %5048 = vmatprep.subr.mxu0 %v4728
        %5049 = vmatpush2.msra.mxu0 %v4727
        %5050 = vmatprep.subr.mxu0 %v4720
        %5051 = vmatpush2.msra.mxu0 %v4719
        %5052 = vmatprep.subr.mxu0 %v4712
        %5053 = vmatpush2.msra.mxu0 %v4711
        %5054 = vmatprep.subr.mxu0 %v4704
        %5055 = vmatpush2.msra.mxu0 %v4703
        %5056 = vmatprep.subr.mxu0 %v4696
        %5057 = vmatpush2.msra.mxu0 %v4695
        %5058 = vmatprep.subr.mxu0 %v4273
        %5059 = vmatpush2.msra.mxu0 %v4272
        %5060 = vmatprep.mubr.f32.mxu0 %v4837
        %5061 = vmatmul.mubr.f32.gmra.mxu0 %v4820
        %v5062 = vpop.f32.mrf.mxu0
        %v5063 = vadd.f32 %v4829, %v5062
        %v5064 = vpop.f32.mrf.mxu0
        %v5065 = vadd.f32 %v4829, %v5064
        %5066 = vmatprep.mubr.f32.mxu0 %v4840
        %5067 = vmatmul.mubr.f32.gmra.mxu0 %v4822
        %v5068 = vpop.f32.mrf.mxu0
        %v5069 = vadd.f32 %v4834, %v5068
        %v5070 = vpop.f32.mrf.mxu0
        %v5071 = vadd.f32 %v4834, %v5070
        %5072 = vdwg.mxu0
        %5073 = vmatprep.subr.mxu0 %v4406
        %5074 = vmatpush1.msra.mxu0 %v4240
        %5075 = vmatprep.subr.mxu0 %v4402
        %5076 = vmatpush1.msra.mxu0 %v4206
        %5077 = vmatprep.subr.mxu0 %v4398
        %5078 = vmatpush1.msra.mxu0 %v4171
        %5079 = vmatprep.subr.mxu0 %v4394
        %5080 = vmatpush1.msra.mxu0 %v4136
        %5081 = vmatprep.subr.mxu0 %v4390
        %5082 = vmatpush1.msra.mxu0 %v4102
        %5083 = vmatprep.subr.mxu0 %v4057
        %5084 = vmatpush1.msra.mxu0 %v4056
        %5085 = vmatprep.subr.mxu0 %v4378
        %5086 = vmatpush1.msra.mxu0 %v4377
        %5087 = vmatprep.subr.mxu0 %v4343
        %5088 = vmatpush1.msra.mxu0 %v4342
        %5089 = vmatprep.subr.mxu0 %v4308
        %5090 = vmatpush1.msra.mxu0 %v4307
        %5091 = vmatprep.subr.mxu0 %v4274
        %5092 = vmatpush1.msra.mxu0 %v4273
        %5093 = vmatprep.subr.mxu0 %v4240
        %5094 = vmatpush1.msra.mxu0 %v4239
        %5095 = vmatprep.subr.mxu0 %v4206
        %5096 = vmatpush1.msra.mxu0 %v4205
        %5097 = vmatprep.subr.mxu0 %v4171
        %5098 = vmatpush1.msra.mxu0 %v4170
        %5099 = vmatprep.subr.mxu0 %v4136
        %5100 = vmatpush1.msra.mxu0 %v4135
        %5101 = vmatprep.subr.mxu0 %v4102
        %5102 = vmatpush1.msra.mxu0 %v4101
        %5103 = vmatprep.subr.mxu0 %v4056
        %5104 = vmatpush1.msra.mxu0 %v4055
        %5105 = vmatprep.subr.mxu0 0.0
        %5106 = vmatpush2.msra.mxu0 0.0
        %5107 = vmatprep.subr.mxu0 0.0
        %5108 = vmatpush2.msra.mxu0 0.0
        %5109 = vmatprep.subr.mxu0 0.0
        %5110 = vmatpush2.msra.mxu0 0.0
        %5111 = vmatprep.subr.mxu0 0.0
        %5112 = vmatpush2.msra.mxu0 0.0
        %5113 = vmatprep.subr.mxu0 0.0
        %5114 = vmatpush2.msra.mxu0 0.0
        %5115 = vmatprep.subr.mxu0 0.0
        %5116 = vmatpush2.msra.mxu0 0.0
        %5117 = vmatprep.subr.mxu0 0.0
        %5118 = vmatpush2.msra.mxu0 0.0
        %5119 = vmatprep.subr.mxu0 %v4754
        %5120 = vmatpush2.msra.mxu0 %v4753
        %5121 = vmatprep.subr.mxu0 %v4746
        %5122 = vmatpush2.msra.mxu0 %v4745
        %5123 = vmatprep.subr.mxu0 %v4738
        %5124 = vmatpush2.msra.mxu0 %v4737
        %5125 = vmatprep.subr.mxu0 %v4730
        %5126 = vmatpush2.msra.mxu0 %v4729
        %5127 = vmatprep.subr.mxu0 %v4722
        %5128 = vmatpush2.msra.mxu0 %v4721
        %5129 = vmatprep.subr.mxu0 %v4714
        %5130 = vmatpush2.msra.mxu0 %v4713
        %5131 = vmatprep.subr.mxu0 %v4706
        %5132 = vmatpush2.msra.mxu0 %v4705
        %5133 = vmatprep.subr.mxu0 %v4698
        %5134 = vmatpush2.msra.mxu0 %v4697
        %5135 = vmatprep.subr.mxu0 %v4690
        %5136 = vmatpush2.msra.mxu0 %v4274
        %5137 = vmatprep.mubr.f32.mxu0 %v4837
        %5138 = vmatmul.mubr.f32.gmra.mxu0 %v4820
        %v5139 = vpop.f32.mrf.mxu0
        %v5140 = vadd.f32 %v4829, %v5139
        %v5141 = vpop.f32.mrf.mxu0
        %v5142 = vadd.f32 %v4829, %v5141
        %5143 = vmatprep.mubr.f32.mxu0 %v4840
        %5144 = vmatmul.mubr.f32.gmra.mxu0 %v4822
        %v5145 = vpop.f32.mrf.mxu0
        %v5146 = vadd.f32 %v4834, %v5145
        %v5147 = vpop.f32.mrf.mxu0
        %v5148 = vadd.f32 %v4834, %v5147
        %5149 = vdwg.mxu0
        %v5150 = vmax.f32 %v4909, 0.0
        %v5151 = vmax.f32 %v4911, 0.0
        %v5152 = vmax.f32 %v4986, 0.0
        %v5153 = vmax.f32 %v4988, 0.0
        %v5154 = vmax.f32 %v5063, 0.0
        %v5155 = vmax.f32 %v5065, 0.0
        %v5156 = vmax.f32 %v5140, 0.0
        %v5157 = vmax.f32 %v5142, 0.0
        %v5158 = vmax.f32 %v4915, 0.0
        %v5159 = vmax.f32 %v4917, 0.0
        %v5160 = vmax.f32 %v4992, 0.0
        %v5161 = vmax.f32 %v4994, 0.0
        %v5162 = vmax.f32 %v5069, 0.0
        %v5163 = vmax.f32 %v5071, 0.0
        %v5164 = vmax.f32 %v5146, 0.0
        %v5165 = vmax.f32 %v5148, 0.0
        %5166 = vst [vmem:[#allocation4 + $0x8] sm:$0xff] %v5150
        %5167 = vst [vmem:[#allocation4 + $0x10] sm:$0xff] %v5151
        %5168 = vst [vmem:[#allocation4 + $0x18] sm:$0xff] %v5152
        %5169 = vst [vmem:[#allocation4 + $0x20] sm:$0xff] %v5153
        %5170 = vst [vmem:[#allocation4 + $0x28] sm:$0xff] %v5154
        %5171 = vst [vmem:[#allocation4 + $0x30] sm:$0xff] %v5155
        %5172 = vst [vmem:[#allocation4 + $0x38] sm:$0xff] %v5156
        %5173 = vst [vmem:[#allocation4 + $0x40] sm:$0xff] %v5157
        %5174 = vst [vmem:[#allocation4 + $0x68] sm:$0xff] %v5158
        %5175 = vst [vmem:[#allocation4 + $0x70] sm:$0xff] %v5159
        %5176 = vst [vmem:[#allocation4 + $0x78] sm:$0xff] %v5160
        %5177 = vst [vmem:[#allocation4 + $0x80] sm:$0xff] %v5161
        %5178 = vst [vmem:[#allocation4 + $0x88] sm:$0xff] %v5162
        %5179 = vst [vmem:[#allocation4 + $0x90] sm:$0xff] %v5163
        %5180 = vst [vmem:[#allocation4 + $0x98] sm:$0xff] %v5164
        %5181 = vst [vmem:[#allocation4 + $0xa0] sm:$0xff] %v5165
        %v5182 = vld [vmem:[#allocation4 + $0x8] sm:$0xff]
        %v5183 = vld [vmem:[#allocation4 + $0x10] sm:$0xff]
        %v5184 = vld [vmem:[#allocation4 + $0x18] sm:$0xff]
        %v5185 = vld [vmem:[#allocation4 + $0x20] sm:$0xff]
        %v5186 = vld [vmem:[#allocation4 + $0x28] sm:$0xff]
        %v5187 = vld [vmem:[#allocation4 + $0x30] sm:$0xff]
        %v5188 = vld [vmem:[#allocation4 + $0x38] sm:$0xff]
        %v5189 = vld [vmem:[#allocation4 + $0x68] sm:$0xff]
        %v5190 = vld [vmem:[#allocation4 + $0x70] sm:$0xff]
        %v5191 = vld [vmem:[#allocation4 + $0x78] sm:$0xff]
        %v5192 = vld [vmem:[#allocation4 + $0x80] sm:$0xff]
        %v5193 = vld [vmem:[#allocation4 + $0x88] sm:$0xff]
        %v5194 = vld [vmem:[#allocation4 + $0x90] sm:$0xff]
        %v5195 = vld [vmem:[#allocation4 + $0x98] sm:$0xff]
        %v5196 = vld [vmem:[#allocation4 + $0x40] sm:$0xff]
        %v5197 = vld [vmem:[#allocation4 + $0xa0] sm:$0xff]
        %5214 = vrot.lane.b32.xlu0 %v5182, 126
        %v5215 = vpop.permute.xlu0 %5214
        %5216 = vrot.lane.b32.xlu0 %v5183, 126
        %v5217 = vpop.permute.xlu0 %5216
        %5218 = vrot.lane.b32.xlu0 %v5184, 126
        %v5219 = vpop.permute.xlu0 %5218
        %5220 = vrot.lane.b32.xlu0 %v5185, 126
        %v5221 = vpop.permute.xlu0 %5220
        %5222 = vrot.lane.b32.xlu0 %v5186, 126
        %v5223 = vpop.permute.xlu0 %5222
        %5224 = vrot.lane.b32.xlu0 %v5187, 126
        %v5225 = vpop.permute.xlu0 %5224
        %5226 = vrot.lane.b32.xlu0 %v5188, 126
        %v5227 = vpop.permute.xlu0 %5226
        %5228 = vrot.lane.b32.xlu0 %v5196, 126
        %v5229 = vpop.permute.xlu0 %5228
        %5230 = vrot.lane.b32.xlu0 %v5189, 126
        %v5231 = vpop.permute.xlu0 %5230
        %5232 = vrot.lane.b32.xlu0 %v5190, 126
        %v5233 = vpop.permute.xlu0 %5232
        %5234 = vrot.lane.b32.xlu0 %v5191, 126
        %v5235 = vpop.permute.xlu0 %5234
        %5236 = vrot.lane.b32.xlu0 %v5192, 126
        %v5237 = vpop.permute.xlu0 %5236
        %5238 = vrot.lane.b32.xlu0 %v5193, 126
        %v5239 = vpop.permute.xlu0 %5238
        %5240 = vrot.lane.b32.xlu0 %v5194, 126
        %v5241 = vpop.permute.xlu0 %5240
        %5242 = vrot.lane.b32.xlu0 %v5195, 126
        %v5243 = vpop.permute.xlu0 %5242
        %5244 = vrot.lane.b32.xlu0 %v5197, 126
        %v5245 = vpop.permute.xlu0 %5244
        %v5246 = vsel %vm952, %v5215, %v5217
        %v5247 = vsel %vm952, %v5217, %v5219
        %v5248 = vsel %vm952, %v5219, %v5221
        %v5249 = vsel %vm952, %v5221, %v5223
        %v5250 = vsel %vm952, %v5223, %v5225
        %v5251 = vsel %vm952, %v5225, %v5227
        %v5252 = vsel %vm952, %v5227, %v5229
        %v5253 = vsel %vm952, %v5231, %v5233
        %v5254 = vsel %vm952, %v5233, %v5235
        %v5255 = vsel %vm952, %v5235, %v5237
        %v5256 = vsel %vm952, %v5237, %v5239
        %v5257 = vsel %vm952, %v5239, %v5241
        %v5258 = vsel %vm952, %v5241, %v5243
        %v5259 = vsel %vm952, %v5243, %v5245
        %v5274 = vmax.f32 %v5182, %v5246
        %v5275 = vmax.f32 %v5183, %v5247
        %v5276 = vmax.f32 %v5184, %v5248
        %v5277 = vmax.f32 %v5185, %v5249
        %v5278 = vmax.f32 %v5186, %v5250
        %v5279 = vmax.f32 %v5187, %v5251
        %v5280 = vmax.f32 %v5188, %v5252
        %v5281 = vmax.f32 %v5189, %v5253
        %v5282 = vmax.f32 %v5190, %v5254
        %v5283 = vmax.f32 %v5191, %v5255
        %v5284 = vmax.f32 %v5192, %v5256
        %v5285 = vmax.f32 %v5193, %v5257
        %v5286 = vmax.f32 %v5194, %v5258
        %v5287 = vmax.f32 %v5195, %v5259
        %v5288 = vld [vmem:[#allocation4 + $0x48] sm:$0xff]
        %v5289 = vld [vmem:[#allocation4 + $0xa8] sm:$0xff]
        %5292 = vrot.lane.b32.xlu0 %v5288, 126
        %v5293 = vpop.permute.xlu0 %5292
        %5294 = vrot.lane.b32.xlu0 %v5289, 126
        %v5295 = vpop.permute.xlu0 %5294
        %v5296 = vsel %vm952, %v5229, %v5293
        %v5297 = vsel %vm952, %v5245, %v5295
        %v5300 = vmax.f32 %v5196, %v5296
        %v5301 = vmax.f32 %v5197, %v5297
        %5318 = vrot.lane.b32.xlu0 %v5274, 64
        %v5319 = vpop.permute.xlu0 %5318
        %5320 = vrot.lane.b32.xlu0 %v5275, 64
        %v5321 = vpop.permute.xlu0 %5320
        %5322 = vrot.lane.b32.xlu0 %v5276, 64
        %v5323 = vpop.permute.xlu0 %5322
        %5324 = vrot.lane.b32.xlu0 %v5277, 64
        %v5325 = vpop.permute.xlu0 %5324
        %5326 = vrot.lane.b32.xlu0 %v5278, 64
        %v5327 = vpop.permute.xlu0 %5326
        %5328 = vrot.lane.b32.xlu0 %v5279, 64
        %v5329 = vpop.permute.xlu0 %5328
        %5330 = vrot.lane.b32.xlu0 %v5280, 64
        %v5331 = vpop.permute.xlu0 %5330
        %5332 = vrot.lane.b32.xlu0 %v5300, 64
        %v5333 = vpop.permute.xlu0 %5332
        %5334 = vrot.lane.b32.xlu0 %v5281, 64
        %v5335 = vpop.permute.xlu0 %5334
        %5336 = vrot.lane.b32.xlu0 %v5282, 64
        %v5337 = vpop.permute.xlu0 %5336
        %5338 = vrot.lane.b32.xlu0 %v5283, 64
        %v5339 = vpop.permute.xlu0 %5338
        %5340 = vrot.lane.b32.xlu0 %v5284, 64
        %v5341 = vpop.permute.xlu0 %5340
        %5342 = vrot.lane.b32.xlu0 %v5285, 64
        %v5343 = vpop.permute.xlu0 %5342
        %5344 = vrot.lane.b32.xlu0 %v5286, 64
        %v5345 = vpop.permute.xlu0 %5344
        %5346 = vrot.lane.b32.xlu0 %v5287, 64
        %v5347 = vpop.permute.xlu0 %5346
        %5348 = vrot.lane.b32.xlu0 %v5301, 64
        %v5349 = vpop.permute.xlu0 %5348
        %v5350 = vsel %vm1472, %v5319, %v5321
        %v5351 = vsel %vm1472, %v5321, %v5323
        %v5352 = vsel %vm1472, %v5323, %v5325
        %v5353 = vsel %vm1472, %v5325, %v5327
        %v5354 = vsel %vm1472, %v5327, %v5329
        %v5355 = vsel %vm1472, %v5329, %v5331
        %v5356 = vsel %vm1472, %v5331, %v5333
        %v5357 = vsel %vm1472, %v5335, %v5337
        %v5358 = vsel %vm1472, %v5337, %v5339
        %v5359 = vsel %vm1472, %v5339, %v5341
        %v5360 = vsel %vm1472, %v5341, %v5343
        %v5361 = vsel %vm1472, %v5343, %v5345
        %v5362 = vsel %vm1472, %v5345, %v5347
        %v5363 = vsel %vm1472, %v5347, %v5349
        %v5378 = vmax.f32 %v5274, %v5350
        %v5379 = vmax.f32 %v5275, %v5351
        %v5380 = vmax.f32 %v5276, %v5352
        %v5381 = vmax.f32 %v5277, %v5353
        %v5382 = vmax.f32 %v5278, %v5354
        %v5383 = vmax.f32 %v5279, %v5355
        %v5384 = vmax.f32 %v5280, %v5356
        %v5385 = vmax.f32 %v5281, %v5357
        %v5386 = vmax.f32 %v5282, %v5358
        %v5387 = vmax.f32 %v5283, %v5359
        %v5388 = vmax.f32 %v5284, %v5360
        %v5389 = vmax.f32 %v5285, %v5361
        %v5390 = vmax.f32 %v5286, %v5362
        %v5391 = vmax.f32 %v5287, %v5363
        %5392 = vst [vmem:[#allocation5 + $0x8] sm:$0xff] %v5378
        %5393 = vst [vmem:[#allocation5 + $0x10] sm:$0xff] %v5379
        %5394 = vst [vmem:[#allocation5 + $0x18] sm:$0xff] %v5380
        %5395 = vst [vmem:[#allocation5 + $0x20] sm:$0xff] %v5381
        %5396 = vst [vmem:[#allocation5 + $0x28] sm:$0xff] %v5382
        %5397 = vst [vmem:[#allocation5 + $0x30] sm:$0xff] %v5383
        %5398 = vst [vmem:[#allocation5 + $0x38] sm:$0xff] %v5384
        %5399 = vst [vmem:[#allocation5 + $0x48] sm:$0xff] %v5385
        %5400 = vst [vmem:[#allocation5 + $0x50] sm:$0xff] %v5386
        %5401 = vst [vmem:[#allocation5 + $0x58] sm:$0xff] %v5387
        %5402 = vst [vmem:[#allocation5 + $0x60] sm:$0xff] %v5388
        %5403 = vst [vmem:[#allocation5 + $0x68] sm:$0xff] %v5389
        %5404 = vst [vmem:[#allocation5 + $0x70] sm:$0xff] %v5390
        %5405 = vst [vmem:[#allocation5 + $0x78] sm:$0xff] %v5391
        %v5406 = vld [vmem:[#allocation5 + $0x8] sm:$0xff]
        %v5407 = vld [vmem:[#allocation5 + $0x48] sm:$0xff]
        %v5408 = vld [vmem:[#allocation5 + $0x10] sm:$0xff]
        %v5409 = vld [vmem:[#allocation5 + $0x50] sm:$0xff]
        %v5410 = vld [vmem:[#allocation5 + $0x18] sm:$0xff]
        %v5411 = vld [vmem:[#allocation5 + $0x58] sm:$0xff]
        %v5412 = vld [vmem:[#allocation5 + $0x20] sm:$0xff]
        %v5413 = vld [vmem:[#allocation5 + $0x60] sm:$0xff]
        %v5414 = vld [vmem:[#allocation5 + $0x28] sm:$0xff]
        %v5415 = vld [vmem:[#allocation5 + $0x68] sm:$0xff]
        %v5416 = vld [vmem:[#allocation5 + $0x30] sm:$0xff]
        %v5417 = vld [vmem:[#allocation5 + $0x70] sm:$0xff]
        %5422 = vrot.lane.b32.xlu0 %v5406, 124
        %v5423 = vpop.permute.xlu0 %5422
        %5424 = vrot.lane.b32.xlu0 %v5408, 124
        %v5425 = vpop.permute.xlu0 %5424
        %5426 = vrot.lane.b32.xlu0 %v5407, 124
        %v5427 = vpop.permute.xlu0 %5426
        %5428 = vrot.lane.b32.xlu0 %v5409, 124
        %v5429 = vpop.permute.xlu0 %5428
        %v5430 = vsel %vm1082, %v5423, %v5425
        %v5431 = vsel %vm1082, %v5427, %v5429
        %5434 = vrot.lane.b32.xlu0 %v5406, 120
        %v5435 = vpop.permute.xlu0 %5434
        %5436 = vrot.lane.b32.xlu0 %v5408, 120
        %v5437 = vpop.permute.xlu0 %5436
        %5438 = vrot.lane.b32.xlu0 %v5407, 120
        %v5439 = vpop.permute.xlu0 %5438
        %5440 = vrot.lane.b32.xlu0 %v5409, 120
        %v5441 = vpop.permute.xlu0 %5440
        %v5442 = vsel %vm4198, %v5435, %v5437
        %v5443 = vsel %vm4198, %v5439, %v5441
        %5446 = vrot.lane.b32.xlu0 %v5406, 116
        %v5447 = vpop.permute.xlu0 %5446
        %5448 = vrot.lane.b32.xlu0 %v5408, 116
        %v5449 = vpop.permute.xlu0 %5448
        %5450 = vrot.lane.b32.xlu0 %v5407, 116
        %v5451 = vpop.permute.xlu0 %5450
        %5452 = vrot.lane.b32.xlu0 %v5409, 116
        %v5453 = vpop.permute.xlu0 %5452
        %vm5454 = vcmask 949248
        %v5455 = vsel %vm5454, %v5447, %v5449
        %v5456 = vsel %vm5454, %v5451, %v5453
        %5459 = vrot.lane.b32.xlu0 %v5406, 112
        %v5460 = vpop.permute.xlu0 %5459
        %5461 = vrot.lane.b32.xlu0 %v5408, 112
        %v5462 = vpop.permute.xlu0 %5461
        %5463 = vrot.lane.b32.xlu0 %v5407, 112
        %v5464 = vpop.permute.xlu0 %5463
        %5465 = vrot.lane.b32.xlu0 %v5409, 112
        %v5466 = vpop.permute.xlu0 %5465
        %vm5467 = vcmask 916480
        %v5468 = vsel %vm5467, %v5460, %v5462
        %v5469 = vsel %vm5467, %v5464, %v5466
        %5474 = vrot.lane.b32.xlu0 %v5410, 124
        %v5475 = vpop.permute.xlu0 %5474
        %5476 = vrot.lane.b32.xlu0 %v5411, 124
        %v5477 = vpop.permute.xlu0 %5476
        %v5478 = vsel %vm1082, %v5425, %v5475
        %v5479 = vsel %vm1082, %v5429, %v5477
        %5482 = vrot.lane.b32.xlu0 %v5410, 120
        %v5483 = vpop.permute.xlu0 %5482
        %5484 = vrot.lane.b32.xlu0 %v5411, 120
        %v5485 = vpop.permute.xlu0 %5484
        %v5486 = vsel %vm4198, %v5437, %v5483
        %v5487 = vsel %vm4198, %v5441, %v5485
        %5490 = vrot.lane.b32.xlu0 %v5410, 116
        %v5491 = vpop.permute.xlu0 %5490
        %5492 = vrot.lane.b32.xlu0 %v5411, 116
        %v5493 = vpop.permute.xlu0 %5492
        %v5494 = vsel %vm5454, %v5449, %v5491
        %v5495 = vsel %vm5454, %v5453, %v5493
        %5498 = vrot.lane.b32.xlu0 %v5410, 112
        %v5499 = vpop.permute.xlu0 %5498
        %5500 = vrot.lane.b32.xlu0 %v5411, 112
        %v5501 = vpop.permute.xlu0 %5500
        %v5502 = vsel %vm5467, %v5462, %v5499
        %v5503 = vsel %vm5467, %v5466, %v5501
        %5508 = vrot.lane.b32.xlu0 %v5412, 124
        %v5509 = vpop.permute.xlu0 %5508
        %5510 = vrot.lane.b32.xlu0 %v5413, 124
        %v5511 = vpop.permute.xlu0 %5510
        %v5512 = vsel %vm1082, %v5475, %v5509
        %v5513 = vsel %vm1082, %v5477, %v5511
        %5516 = vrot.lane.b32.xlu0 %v5412, 120
        %v5517 = vpop.permute.xlu0 %5516
        %5518 = vrot.lane.b32.xlu0 %v5413, 120
        %v5519 = vpop.permute.xlu0 %5518
        %v5520 = vsel %vm4198, %v5483, %v5517
        %v5521 = vsel %vm4198, %v5485, %v5519
        %5524 = vrot.lane.b32.xlu0 %v5412, 116
        %v5525 = vpop.permute.xlu0 %5524
        %5526 = vrot.lane.b32.xlu0 %v5413, 116
        %v5527 = vpop.permute.xlu0 %5526
        %v5528 = vsel %vm5454, %v5491, %v5525
        %v5529 = vsel %vm5454, %v5493, %v5527
        %5532 = vrot.lane.b32.xlu0 %v5412, 112
        %v5533 = vpop.permute.xlu0 %5532
        %5534 = vrot.lane.b32.xlu0 %v5413, 112
        %v5535 = vpop.permute.xlu0 %5534
        %v5536 = vsel %vm5467, %v5499, %v5533
        %v5537 = vsel %vm5467, %v5501, %v5535
        %5542 = vrot.lane.b32.xlu0 %v5414, 124
        %v5543 = vpop.permute.xlu0 %5542
        %5544 = vrot.lane.b32.xlu0 %v5415, 124
        %v5545 = vpop.permute.xlu0 %5544
        %v5546 = vsel %vm1082, %v5509, %v5543
        %v5547 = vsel %vm1082, %v5511, %v5545
        %5548 = vrot.lane.b32.xlu0 %v5414, 120
        %v5549 = vpop.permute.xlu0 %5548
        %5550 = vrot.lane.b32.xlu0 %v5415, 120
        %v5551 = vpop.permute.xlu0 %5550
        %v5552 = vsel %vm4198, %v5517, %v5549
        %v5553 = vsel %vm4198, %v5519, %v5551
        %5554 = vrot.lane.b32.xlu0 %v5414, 116
        %v5555 = vpop.permute.xlu0 %5554
        %5556 = vrot.lane.b32.xlu0 %v5415, 116
        %v5557 = vpop.permute.xlu0 %5556
        %v5558 = vsel %vm5454, %v5525, %v5555
        %v5559 = vsel %vm5454, %v5527, %v5557
        %5560 = vrot.lane.b32.xlu0 %v5414, 4
        %v5561 = vpop.permute.xlu0 %5560
        %5562 = vrot.lane.b32.xlu0 %v5415, 4
        %v5563 = vpop.permute.xlu0 %5562
        %5566 = vrot.lane.b32.xlu0 %v5416, 124
        %v5567 = vpop.permute.xlu0 %5566
        %5568 = vrot.lane.b32.xlu0 %v5417, 124
        %v5569 = vpop.permute.xlu0 %5568
        %v5570 = vsel %vm1082, %v5543, %v5567
        %v5571 = vsel %vm1082, %v5545, %v5569
        %5572 = vrot.lane.b32.xlu0 %v5416, 120
        %v5573 = vpop.permute.xlu0 %5572
        %5574 = vrot.lane.b32.xlu0 %v5417, 120
        %v5575 = vpop.permute.xlu0 %5574
        %v5576 = vsel %vm4198, %v5549, %v5573
        %v5577 = vsel %vm4198, %v5551, %v5575
        %5578 = vrot.lane.b32.xlu0 %v5416, 116
        %v5579 = vpop.permute.xlu0 %5578
        %5580 = vrot.lane.b32.xlu0 %v5417, 116
        %v5581 = vpop.permute.xlu0 %5580
        %v5582 = vsel %vm5454, %v5555, %v5579
        %v5583 = vsel %vm5454, %v5557, %v5581
        %5584 = vrot.lane.b32.xlu0 %v5546, 124
        %v5585 = vpop.permute.xlu0 %5584
        %5586 = vrot.lane.b32.xlu0 %v5543, 124
        %v5587 = vpop.permute.xlu0 %5586
        %5588 = vrot.lane.b32.xlu0 %v5547, 124
        %v5589 = vpop.permute.xlu0 %5588
        %5590 = vrot.lane.b32.xlu0 %v5545, 124
        %v5591 = vpop.permute.xlu0 %5590
        %5592 = vrot.lane.b32.xlu0 %v5552, 124
        %v5593 = vpop.permute.xlu0 %5592
        %5594 = vrot.lane.b32.xlu0 %v5549, 124
        %v5595 = vpop.permute.xlu0 %5594
        %5596 = vrot.lane.b32.xlu0 %v5553, 124
        %v5597 = vpop.permute.xlu0 %5596
        %5598 = vrot.lane.b32.xlu0 %v5551, 124
        %v5599 = vpop.permute.xlu0 %5598
        %5600 = vrot.lane.b32.xlu0 %v5558, 124
        %v5601 = vpop.permute.xlu0 %5600
        %5602 = vrot.lane.b32.xlu0 %v5555, 124
        %v5603 = vpop.permute.xlu0 %5602
        %5604 = vrot.lane.b32.xlu0 %v5559, 124
        %v5605 = vpop.permute.xlu0 %5604
        %5606 = vrot.lane.b32.xlu0 %v5557, 124
        %v5607 = vpop.permute.xlu0 %5606
        %5608 = vrot.lane.b32.xlu0 %v5561, 124
        %v5609 = vpop.permute.xlu0 %5608
        %5610 = vrot.lane.b32.xlu0 %v5563, 124
        %v5611 = vpop.permute.xlu0 %5610
        %5612 = vrot.lane.b32.xlu0 %v5570, 124
        %v5613 = vpop.permute.xlu0 %5612
        %5614 = vrot.lane.b32.xlu0 %v5567, 124
        %v5615 = vpop.permute.xlu0 %5614
        %5616 = vrot.lane.b32.xlu0 %v5571, 124
        %v5617 = vpop.permute.xlu0 %5616
        %5618 = vrot.lane.b32.xlu0 %v5569, 124
        %v5619 = vpop.permute.xlu0 %5618
        %5620 = vrot.lane.b32.xlu0 %v5576, 124
        %v5621 = vpop.permute.xlu0 %5620
        %5622 = vrot.lane.b32.xlu0 %v5573, 124
        %v5623 = vpop.permute.xlu0 %5622
        %5624 = vrot.lane.b32.xlu0 %v5577, 124
        %v5625 = vpop.permute.xlu0 %5624
        %5626 = vrot.lane.b32.xlu0 %v5575, 124
        %v5627 = vpop.permute.xlu0 %5626
        %5628 = vrot.lane.b32.xlu0 %v5582, 124
        %v5629 = vpop.permute.xlu0 %5628
        %5630 = vrot.lane.b32.xlu0 %v5579, 124
        %v5631 = vpop.permute.xlu0 %5630
        %5632 = vrot.lane.b32.xlu0 %v5583, 124
        %v5633 = vpop.permute.xlu0 %5632
        %5634 = vrot.lane.b32.xlu0 %v5581, 124
        %v5635 = vpop.permute.xlu0 %5634
        %v5636 = vsel %vm1082, %v5585, %v5587
        %v5637 = vsel %vm1082, %v5589, %v5591
        %v5638 = vsel %vm1082, %v5593, %v5595
        %v5639 = vsel %vm1082, %v5597, %v5599
        %v5640 = vsel %vm1082, %v5601, %v5603
        %v5641 = vsel %vm1082, %v5605, %v5607
        %v5642 = vsel %vm1082, %v5613, %v5615
        %v5643 = vsel %vm1082, %v5617, %v5619
        %v5644 = vsel %vm1082, %v5621, %v5623
        %v5645 = vsel %vm1082, %v5625, %v5627
        %v5646 = vsel %vm1082, %v5629, %v5631
        %v5647 = vsel %vm1082, %v5633, %v5635
        %v5666 = vld [vmem:[%s9] sm:$0xff]
        %v5667 = vld [vmem:[%s9 + $0x8] sm:$0xff]
        %v5668 = vld [vmem:[%s9 + $0x10] sm:$0xff]
        %v5669 = vld [vmem:[%s9 + $0x18] sm:$0xff]
        %v5670 = vld [vmem:[%s9 + $0x20] sm:$0xff]
        %v5671 = vld [vmem:[%s9 + $0x28] sm:$0xff]
        %v5672 = vld [vmem:[%s9 + $0x30] sm:$0xff]
        %v5673 = vld [vmem:[%s9 + $0x38] sm:$0xff]
        %v5674 = vld [vmem:[%s9 + $0x40] sm:$0xff]
        %v5675 = vld [vmem:[%s9 + $0x48] sm:$0xff]
        %v5676 = vld [vmem:[%s9 + $0x50] sm:$0xff]
        %v5677 = vld [vmem:[%s9 + $0x58] sm:$0xff]
        %v5678 = vld [vmem:[%s9 + $0x60] sm:$0xff]
        %v5679 = vld [vmem:[%s9 + $0x68] sm:$0xff]
        %v5680 = vld [vmem:[%s9 + $0x70] sm:$0xff]
        %v5681 = vld [vmem:[%s9 + $0x78] sm:$0xff]
        %v5682 = vld [vmem:[%s9 + $0x80] sm:$0xff]
        %v5683 = vld [vmem:[%s9 + $0x88] sm:$0xff]
        %v5684 = vld [vmem:[%s9 + $0x90] sm:$0xff]
        %v5685 = vld [vmem:[%s9 + $0x98] sm:$0xff]
        %v5686 = vld [vmem:[%s9 + $0xa0] sm:$0xff]
        %v5687 = vld [vmem:[%s9 + $0xa8] sm:$0xff]
        %v5688 = vld [vmem:[%s9 + $0xb0] sm:$0xff]
        %v5689 = vld [vmem:[%s9 + $0xb8] sm:$0xff]
        %v5690 = vld [vmem:[%s9 + $0xc0] sm:$0xff]
        %v5691 = vld [vmem:[%s9 + $0xc8] sm:$0xff]
        %v5692 = vld [vmem:[%s9 + $0xd0] sm:$0xff]
        %v5693 = vld [vmem:[%s9 + $0xd8] sm:$0xff]
        %v5694 = vld [vmem:[%s9 + $0xe0] sm:$0xff]
        %v5695 = vld [vmem:[%s9 + $0xe8] sm:$0xff]
        %v5696 = vld [vmem:[%s9 + $0xf0] sm:$0xff]
        %v5697 = vld [vmem:[%s9 + $0xf8] sm:$0xff]
        %v5698 = vld [vmem:[%s9 + $0x100] sm:$0xff]
        %v5699 = vld [vmem:[%s9 + $0x108] sm:$0xff]
        %v5700 = vld [vmem:[%s9 + $0x110] sm:$0xff]
        %v5701 = vld [vmem:[%s9 + $0x118] sm:$0xff]
        %v5702 = vld [vmem:[%s9 + $0x120] sm:$0xff]
        %v5703 = vld [vmem:[%s9 + $0x128] sm:$0xff]
        %v5704 = vld [vmem:[%s9 + $0x130] sm:$0xff]
        %v5705 = vld [vmem:[%s9 + $0x138] sm:$0xff]
        %v5706 = vld [vmem:[%s9 + $0x140] sm:$0xff]
        %v5707 = vld [vmem:[%s9 + $0x148] sm:$0xff]
        %v5708 = vld [vmem:[%s9 + $0x150] sm:$0xff]
        %v5709 = vld [vmem:[%s9 + $0x158] sm:$0xff]
        %v5710 = vld [vmem:[%s9 + $0x160] sm:$0xff]
        %v5711 = vld [vmem:[%s9 + $0x168] sm:$0xff]
        %v5712 = vld [vmem:[%s9 + $0x170] sm:$0xff]
        %v5713 = vld [vmem:[%s9 + $0x178] sm:$0xff]
        %v5714 = vld [vmem:[%s9 + $0x180] sm:$0xff]
        %v5715 = vld [vmem:[%s9 + $0x188] sm:$0xff]
        %v5716 = vld [vmem:[%s9 + $0x190] sm:$0xff]
        %v5717 = vld [vmem:[%s9 + $0x198] sm:$0xff]
        %v5718 = vld [vmem:[%s9 + $0x1a0] sm:$0xff]
        %v5719 = vld [vmem:[%s9 + $0x1a8] sm:$0xff]
        %v5720 = vld [vmem:[%s9 + $0x1b0] sm:$0xff]
        %v5721 = vld [vmem:[%s9 + $0x1b8] sm:$0xff]
        %v5722 = vld [vmem:[%s9 + $0x1c0] sm:$0xff]
        %v5723 = vld [vmem:[%s9 + $0x1c8] sm:$0xff]
        %v5724 = vld [vmem:[%s9 + $0x1d0] sm:$0xff]
        %v5725 = vld [vmem:[%s9 + $0x1d8] sm:$0xff]
        %v5726 = vld [vmem:[#allocation17] sm:$0xff]
        %v5727 = vld [vmem:[#allocation17 + $0x8] sm:$0xff]
        %v5728 = vld [vmem:[#allocation17 + $0x10] sm:$0xff]
        %v5729 = vld [vmem:[#allocation17 + $0x18] sm:$0xff]
        %v5730 = vld [vmem:[#allocation17 + $0x20] sm:$0xff]
        %v5731 = vld [vmem:[#allocation17 + $0x28] sm:$0xff]
        %v5732 = vld [vmem:[#allocation17 + $0x30] sm:$0xff]
        %v5733 = vld [vmem:[#allocation17 + $0x38] sm:$0xff]
        %v5734 = vld [vmem:[#allocation17 + $0x40] sm:$0xff]
        %v5735 = vld [vmem:[#allocation17 + $0x48] sm:$0xff]
        %v5736 = vld [vmem:[#allocation17 + $0x50] sm:$0xff]
        %v5737 = vld [vmem:[#allocation17 + $0x58] sm:$0xff]
        %v5738 = vld [vmem:[#allocation17 + $0x60] sm:$0xff]
        %v5739 = vld [vmem:[#allocation17 + $0x68] sm:$0xff]
        %v5740 = vld [vmem:[#allocation17 + $0x70] sm:$0xff]
        %5742 = vset.pattern.permute.xlu0 0
        %5743 = vperm.xlu0 %5742, %v5726
        %v5744 = vpop.permute.xlu0 %5743
        %5747 = vset.pattern.permute.xlu0 0
        %5748 = vperm.xlu0 %5747, %v5727
        %v5749 = vpop.permute.xlu0 %5748
        %5752 = vset.pattern.permute.xlu0 0
        %5753 = vperm.xlu0 %5752, %v5728
        %v5754 = vpop.permute.xlu0 %5753
        %5757 = vset.pattern.permute.xlu0 0
        %5758 = vperm.xlu0 %5757, %v5729
        %v5759 = vpop.permute.xlu0 %5758
        %5762 = vset.pattern.permute.xlu0 0
        %5763 = vperm.xlu0 %5762, %v5730
        %v5764 = vpop.permute.xlu0 %5763
        %5767 = vset.pattern.permute.xlu0 0
        %5768 = vperm.xlu0 %5767, %v5731
        %v5769 = vpop.permute.xlu0 %5768
        %5772 = vset.pattern.permute.xlu0 0
        %5773 = vperm.xlu0 %5772, %v5732
        %v5774 = vpop.permute.xlu0 %5773
        %5777 = vset.pattern.permute.xlu0 0
        %5778 = vperm.xlu0 %5777, %v5733
        %v5779 = vpop.permute.xlu0 %5778
        %5782 = vset.pattern.permute.xlu0 0
        %5783 = vperm.xlu0 %5782, %v5734
        %v5784 = vpop.permute.xlu0 %5783
        %5787 = vset.pattern.permute.xlu0 0
        %5788 = vperm.xlu0 %5787, %v5735
        %v5789 = vpop.permute.xlu0 %5788
        %5792 = vset.pattern.permute.xlu0 0
        %5793 = vperm.xlu0 %5792, %v5736
        %v5794 = vpop.permute.xlu0 %5793
        %5797 = vset.pattern.permute.xlu0 0
        %5798 = vperm.xlu0 %5797, %v5737
        %v5799 = vpop.permute.xlu0 %5798
        %5802 = vset.pattern.permute.xlu0 0
        %5803 = vperm.xlu0 %5802, %v5738
        %v5804 = vpop.permute.xlu0 %5803
        %5807 = vset.pattern.permute.xlu0 0
        %5808 = vperm.xlu0 %5807, %v5739
        %v5809 = vpop.permute.xlu0 %5808
        %5812 = vset.pattern.permute.xlu0 0
        %5813 = vperm.xlu0 %5812, %v5740
        %v5814 = vpop.permute.xlu0 %5813
        %vm5816 = vcmask 130048
        %v5818 = vsel %vm5816, %v5669, 0
        %v5821 = vsel %vm5816, %v5673, 0
        %v5824 = vsel %vm5816, %v5677, 0
        %v5827 = vsel %vm5816, %v5681, 0
        %v5830 = vsel %vm5816, %v5685, 0
        %v5833 = vsel %vm5816, %v5689, 0
        %v5836 = vsel %vm5816, %v5693, 0
        %v5839 = vsel %vm5816, %v5697, 0
        %v5842 = vsel %vm5816, %v5701, 0
        %v5845 = vsel %vm5816, %v5705, 0
        %v5848 = vsel %vm5816, %v5709, 0
        %v5851 = vsel %vm5816, %v5713, 0
        %v5854 = vsel %vm5816, %v5717, 0
        %v5857 = vsel %vm5816, %v5721, 0
        %v5860 = vsel %vm5816, %v5725, 0
        %5862 = vmatprep.subr.mxu0 0.0
        %5863 = vmatpush1.msra.mxu0 %v5487
        %5864 = vmatprep.subr.mxu0 0.0
        %5865 = vmatpush1.msra.mxu0 %v5486
        %5866 = vmatprep.subr.mxu0 0.0
        %5867 = vmatpush1.msra.mxu0 %v5479
        %5868 = vmatprep.subr.mxu0 0.0
        %5869 = vmatpush1.msra.mxu0 %v5478
        %5870 = vmatprep.subr.mxu0 0.0
        %5871 = vmatpush1.msra.mxu0 %v5409
        %5872 = vmatprep.subr.mxu0 0.0
        %5873 = vmatpush1.msra.mxu0 %v5408
        %5874 = vmatprep.subr.mxu0 0.0
        %5875 = vmatpush1.msra.mxu0 %v5469
        %5876 = vmatprep.subr.mxu0 0.0
        %5877 = vmatpush1.msra.mxu0 %v5468
        %5878 = vmatprep.subr.mxu0 0.0
        %5879 = vmatpush1.msra.mxu0 %v5456
        %5880 = vmatprep.subr.mxu0 0.0
        %5881 = vmatpush1.msra.mxu0 %v5455
        %5882 = vmatprep.subr.mxu0 0.0
        %5883 = vmatpush1.msra.mxu0 %v5443
        %5884 = vmatprep.subr.mxu0 0.0
        %5885 = vmatpush1.msra.mxu0 %v5442
        %5886 = vmatprep.subr.mxu0 0.0
        %5887 = vmatpush1.msra.mxu0 %v5431
        %5888 = vmatprep.subr.mxu0 0.0
        %5889 = vmatpush1.msra.mxu0 %v5430
        %5890 = vmatprep.subr.mxu0 0.0
        %5891 = vmatpush1.msra.mxu0 %v5407
        %5892 = vmatprep.subr.mxu0 0.0
        %5893 = vmatpush1.msra.mxu0 %v5406
        %5894 = vmatprep.subr.mxu0 0.0
        %5895 = vmatpush2.msra.mxu0 %v5413
        %5896 = vmatprep.subr.mxu0 0.0
        %5897 = vmatpush2.msra.mxu0 %v5412
        %5898 = vmatprep.subr.mxu0 0.0
        %5899 = vmatpush2.msra.mxu0 %v5537
        %5900 = vmatprep.subr.mxu0 0.0
        %5901 = vmatpush2.msra.mxu0 %v5536
        %5902 = vmatprep.subr.mxu0 0.0
        %5903 = vmatpush2.msra.mxu0 %v5529
        %5904 = vmatprep.subr.mxu0 0.0
        %5905 = vmatpush2.msra.mxu0 %v5528
        %5906 = vmatprep.subr.mxu0 0.0
        %5907 = vmatpush2.msra.mxu0 %v5521
        %5908 = vmatprep.subr.mxu0 0.0
        %5909 = vmatpush2.msra.mxu0 %v5520
        %5910 = vmatprep.subr.mxu0 0.0
        %5911 = vmatpush2.msra.mxu0 %v5513
        %5912 = vmatprep.subr.mxu0 0.0
        %5913 = vmatpush2.msra.mxu0 %v5512
        %5914 = vmatprep.subr.mxu0 0.0
        %5915 = vmatpush2.msra.mxu0 %v5411
        %5916 = vmatprep.subr.mxu0 0.0
        %5917 = vmatpush2.msra.mxu0 %v5410
        %5918 = vmatprep.subr.mxu0 0.0
        %5919 = vmatpush2.msra.mxu0 %v5503
        %5920 = vmatprep.subr.mxu0 0.0
        %5921 = vmatpush2.msra.mxu0 %v5502
        %5922 = vmatprep.subr.mxu0 0.0
        %5923 = vmatpush2.msra.mxu0 %v5495
        %5924 = vmatprep.subr.mxu0 0.0
        %5925 = vmatpush2.msra.mxu0 %v5494
        %5926 = vmatprep.mubr.f32.mxu0 %v5667
        %5927 = vmatmul.mubr.f32.gmra.mxu0 %v5666
        %v5928 = vpop.f32.mrf.mxu0
        %v5929 = vadd.f32 %v5744, %v5928
        %v5930 = vpop.f32.mrf.mxu0
        %5931 = vmatprep.mubr.f32.mxu0 %v5671
        %5932 = vmatmul.mubr.f32.gmra.mxu0 %v5670
        %v5933 = vpop.f32.mrf.mxu0
        %v5934 = vadd.f32 %v5749, %v5933
        %v5935 = vpop.f32.mrf.mxu0
        %5936 = vmatprep.mubr.f32.mxu0 %v5675
        %5937 = vmatmul.mubr.f32.gmra.mxu0 %v5674
        %v5938 = vpop.f32.mrf.mxu0
        %v5939 = vadd.f32 %v5754, %v5938
        %v5940 = vpop.f32.mrf.mxu0
        %5941 = vmatprep.mubr.f32.mxu0 %v5679
        %5942 = vmatmul.mubr.f32.gmra.mxu0 %v5678
        %v5943 = vpop.f32.mrf.mxu0
        %v5944 = vadd.f32 %v5759, %v5943
        %v5945 = vpop.f32.mrf.mxu0
        %5946 = vmatprep.mubr.f32.mxu0 %v5683
        %5947 = vmatmul.mubr.f32.gmra.mxu0 %v5682
        %v5948 = vpop.f32.mrf.mxu0
        %v5949 = vadd.f32 %v5764, %v5948
        %v5950 = vpop.f32.mrf.mxu0
        %5951 = vmatprep.mubr.f32.mxu0 %v5687
        %5952 = vmatmul.mubr.f32.gmra.mxu0 %v5686
        %v5953 = vpop.f32.mrf.mxu0
        %v5954 = vadd.f32 %v5769, %v5953
        %v5955 = vpop.f32.mrf.mxu0
        %5956 = vmatprep.mubr.f32.mxu0 %v5691
        %5957 = vmatmul.mubr.f32.gmra.mxu0 %v5690
        %v5958 = vpop.f32.mrf.mxu0
        %v5959 = vadd.f32 %v5774, %v5958
        %v5960 = vpop.f32.mrf.mxu0
        %5961 = vmatprep.mubr.f32.mxu0 %v5695
        %5962 = vmatmul.mubr.f32.gmra.mxu0 %v5694
        %v5963 = vpop.f32.mrf.mxu0
        %v5964 = vadd.f32 %v5779, %v5963
        %v5965 = vpop.f32.mrf.mxu0
        %5966 = vmatprep.mubr.f32.mxu0 %v5699
        %5967 = vmatmul.mubr.f32.gmra.mxu0 %v5698
        %v5968 = vpop.f32.mrf.mxu0
        %v5969 = vadd.f32 %v5784, %v5968
        %v5970 = vpop.f32.mrf.mxu0
        %5971 = vmatprep.mubr.f32.mxu0 %v5703
        %5972 = vmatmul.mubr.f32.gmra.mxu0 %v5702
        %v5973 = vpop.f32.mrf.mxu0
        %v5974 = vadd.f32 %v5789, %v5973
        %v5975 = vpop.f32.mrf.mxu0
        %5976 = vmatprep.mubr.f32.mxu0 %v5707
        %5977 = vmatmul.mubr.f32.gmra.mxu0 %v5706
        %v5978 = vpop.f32.mrf.mxu0
        %v5979 = vadd.f32 %v5794, %v5978
        %v5980 = vpop.f32.mrf.mxu0
        %5981 = vmatprep.mubr.f32.mxu0 %v5711
        %5982 = vmatmul.mubr.f32.gmra.mxu0 %v5710
        %v5983 = vpop.f32.mrf.mxu0
        %v5984 = vadd.f32 %v5799, %v5983
        %v5985 = vpop.f32.mrf.mxu0
        %5986 = vmatprep.mubr.f32.mxu0 %v5715
        %5987 = vmatmul.mubr.f32.gmra.mxu0 %v5714
        %v5988 = vpop.f32.mrf.mxu0
        %v5989 = vadd.f32 %v5804, %v5988
        %v5990 = vpop.f32.mrf.mxu0
        %5991 = vmatprep.mubr.f32.mxu0 %v5719
        %5992 = vmatmul.mubr.f32.gmra.mxu0 %v5718
        %v5993 = vpop.f32.mrf.mxu0
        %v5994 = vadd.f32 %v5809, %v5993
        %v5995 = vpop.f32.mrf.mxu0
        %5996 = vmatprep.mubr.f32.mxu0 %v5723
        %5997 = vmatmul.mubr.f32.gmra.mxu0 %v5722
        %v5998 = vpop.f32.mrf.mxu0
        %v5999 = vadd.f32 %v5814, %v5998
        %v6000 = vpop.f32.mrf.mxu0
        %6001 = vdwg.mxu0
        %6002 = vmatprep.subr.mxu0 0.0
        %6003 = vmatpush1.msra.mxu0 %v5645
        %6004 = vmatprep.subr.mxu0 0.0
        %6005 = vmatpush1.msra.mxu0 %v5644
        %6006 = vmatprep.subr.mxu0 0.0
        %6007 = vmatpush1.msra.mxu0 %v5643
        %6008 = vmatprep.subr.mxu0 0.0
        %6009 = vmatpush1.msra.mxu0 %v5642
        %6010 = vmatprep.subr.mxu0 0.0
        %6011 = vmatpush1.msra.mxu0 %v5571
        %6012 = vmatprep.subr.mxu0 0.0
        %6013 = vmatpush1.msra.mxu0 %v5570
        %6014 = vmatprep.subr.mxu0 0.0
        %6015 = vmatpush1.msra.mxu0 %v5611
        %6016 = vmatprep.subr.mxu0 0.0
        %6017 = vmatpush1.msra.mxu0 %v5609
        %6018 = vmatprep.subr.mxu0 0.0
        %6019 = vmatpush1.msra.mxu0 %v5641
        %6020 = vmatprep.subr.mxu0 0.0
        %6021 = vmatpush1.msra.mxu0 %v5640
        %6022 = vmatprep.subr.mxu0 0.0
        %6023 = vmatpush1.msra.mxu0 %v5639
        %6024 = vmatprep.subr.mxu0 0.0
        %6025 = vmatpush1.msra.mxu0 %v5638
        %6026 = vmatprep.subr.mxu0 0.0
        %6027 = vmatpush1.msra.mxu0 %v5637
        %6028 = vmatprep.subr.mxu0 0.0
        %6029 = vmatpush1.msra.mxu0 %v5636
        %6030 = vmatprep.subr.mxu0 0.0
        %6031 = vmatpush1.msra.mxu0 %v5547
        %6032 = vmatprep.subr.mxu0 0.0
        %6033 = vmatpush1.msra.mxu0 %v5546
        %6034 = vmatprep.subr.mxu0 0.0
        %6035 = vmatpush2.msra.mxu0 0.0
        %6036 = vmatprep.subr.mxu0 0.0
        %6037 = vmatpush2.msra.mxu0 0.0
        %6038 = vmatprep.subr.mxu0 0.0
        %6039 = vmatpush2.msra.mxu0 0.0
        %6040 = vmatprep.subr.mxu0 0.0
        %6041 = vmatpush2.msra.mxu0 0.0
        %6042 = vmatprep.subr.mxu0 0.0
        %6043 = vmatpush2.msra.mxu0 0.0
        %6044 = vmatprep.subr.mxu0 0.0
        %6045 = vmatpush2.msra.mxu0 0.0
        %6046 = vmatprep.subr.mxu0 0.0
        %6047 = vmatpush2.msra.mxu0 0.0
        %6048 = vmatprep.subr.mxu0 0.0
        %6049 = vmatpush2.msra.mxu0 0.0
        %6050 = vmatprep.subr.mxu0 0.0
        %6051 = vmatpush2.msra.mxu0 0.0
        %6052 = vmatprep.subr.mxu0 0.0
        %6053 = vmatpush2.msra.mxu0 0.0
        %6054 = vmatprep.subr.mxu0 0.0
        %6055 = vmatpush2.msra.mxu0 0.0
        %6056 = vmatprep.subr.mxu0 0.0
        %6057 = vmatpush2.msra.mxu0 0.0
        %6058 = vmatprep.subr.mxu0 0.0
        %6059 = vmatpush2.msra.mxu0 0.0
        %6060 = vmatprep.subr.mxu0 0.0
        %6061 = vmatpush2.msra.mxu0 0.0
        %6062 = vmatprep.subr.mxu0 0.0
        %6063 = vmatpush2.msra.mxu0 %v5647
        %6064 = vmatprep.subr.mxu0 0.0
        %6065 = vmatpush2.msra.mxu0 %v5646
        %6066 = vmatprep.mubr.f32.mxu0 %v5818
        %6067 = vmatmul.mubr.f32.gmra.mxu0 %v5668
        %v6068 = vpop.f32.mrf.mxu0
        %v6069 = vadd.f32 %v5929, %v6068
        %v6070 = vpop.f32.mrf.mxu0
        %6071 = vmatprep.mubr.f32.mxu0 %v5821
        %6072 = vmatmul.mubr.f32.gmra.mxu0 %v5672
        %v6073 = vpop.f32.mrf.mxu0
        %v6074 = vadd.f32 %v5934, %v6073
        %v6075 = vpop.f32.mrf.mxu0
        %6076 = vmatprep.mubr.f32.mxu0 %v5824
        %6077 = vmatmul.mubr.f32.gmra.mxu0 %v5676
        %v6078 = vpop.f32.mrf.mxu0
        %v6079 = vadd.f32 %v5939, %v6078
        %v6080 = vpop.f32.mrf.mxu0
        %6081 = vmatprep.mubr.f32.mxu0 %v5827
        %6082 = vmatmul.mubr.f32.gmra.mxu0 %v5680
        %v6083 = vpop.f32.mrf.mxu0
        %v6084 = vadd.f32 %v5944, %v6083
        %v6085 = vpop.f32.mrf.mxu0
        %6086 = vmatprep.mubr.f32.mxu0 %v5830
        %6087 = vmatmul.mubr.f32.gmra.mxu0 %v5684
        %v6088 = vpop.f32.mrf.mxu0
        %v6089 = vadd.f32 %v5949, %v6088
        %v6090 = vpop.f32.mrf.mxu0
        %6091 = vmatprep.mubr.f32.mxu0 %v5833
        %6092 = vmatmul.mubr.f32.gmra.mxu0 %v5688
        %v6093 = vpop.f32.mrf.mxu0
        %v6094 = vadd.f32 %v5954, %v6093
        %v6095 = vpop.f32.mrf.mxu0
        %6096 = vmatprep.mubr.f32.mxu0 %v5836
        %6097 = vmatmul.mubr.f32.gmra.mxu0 %v5692
        %v6098 = vpop.f32.mrf.mxu0
        %v6099 = vadd.f32 %v5959, %v6098
        %v6100 = vpop.f32.mrf.mxu0
        %6101 = vmatprep.mubr.f32.mxu0 %v5839
        %6102 = vmatmul.mubr.f32.gmra.mxu0 %v5696
        %v6103 = vpop.f32.mrf.mxu0
        %v6104 = vadd.f32 %v5964, %v6103
        %v6105 = vpop.f32.mrf.mxu0
        %6106 = vmatprep.mubr.f32.mxu0 %v5842
        %6107 = vmatmul.mubr.f32.gmra.mxu0 %v5700
        %v6108 = vpop.f32.mrf.mxu0
        %v6109 = vadd.f32 %v5969, %v6108
        %v6110 = vpop.f32.mrf.mxu0
        %6111 = vmatprep.mubr.f32.mxu0 %v5845
        %6112 = vmatmul.mubr.f32.gmra.mxu0 %v5704
        %v6113 = vpop.f32.mrf.mxu0
        %v6114 = vadd.f32 %v5974, %v6113
        %v6115 = vpop.f32.mrf.mxu0
        %6116 = vmatprep.mubr.f32.mxu0 %v5848
        %6117 = vmatmul.mubr.f32.gmra.mxu0 %v5708
        %v6118 = vpop.f32.mrf.mxu0
        %v6119 = vadd.f32 %v5979, %v6118
        %v6120 = vpop.f32.mrf.mxu0
        %6121 = vmatprep.mubr.f32.mxu0 %v5851
        %6122 = vmatmul.mubr.f32.gmra.mxu0 %v5712
        %v6123 = vpop.f32.mrf.mxu0
        %v6124 = vadd.f32 %v5984, %v6123
        %v6125 = vpop.f32.mrf.mxu0
        %6126 = vmatprep.mubr.f32.mxu0 %v5854
        %6127 = vmatmul.mubr.f32.gmra.mxu0 %v5716
        %v6128 = vpop.f32.mrf.mxu0
        %v6129 = vadd.f32 %v5989, %v6128
        %v6130 = vpop.f32.mrf.mxu0
        %6131 = vmatprep.mubr.f32.mxu0 %v5857
        %6132 = vmatmul.mubr.f32.gmra.mxu0 %v5720
        %v6133 = vpop.f32.mrf.mxu0
        %v6134 = vadd.f32 %v5994, %v6133
        %v6135 = vpop.f32.mrf.mxu0
        %6136 = vmatprep.mubr.f32.mxu0 %v5860
        %6137 = vmatmul.mubr.f32.gmra.mxu0 %v5724
        %v6138 = vpop.f32.mrf.mxu0
        %v6139 = vadd.f32 %v5999, %v6138
        %v6140 = vpop.f32.mrf.mxu0
        %6141 = vdwg.mxu0
        %v6142 = vmax.f32 %v6069, 0.0
        %v6143 = vmax.f32 %v6074, 0.0
        %v6144 = vmax.f32 %v6079, 0.0
        %v6145 = vmax.f32 %v6084, 0.0
        %v6146 = vmax.f32 %v6089, 0.0
        %v6147 = vmax.f32 %v6094, 0.0
        %v6148 = vmax.f32 %v6099, 0.0
        %v6149 = vmax.f32 %v6104, 0.0
        %v6150 = vmax.f32 %v6109, 0.0
        %v6151 = vmax.f32 %v6114, 0.0
        %v6152 = vmax.f32 %v6119, 0.0
        %v6153 = vmax.f32 %v6124, 0.0
        %v6154 = vmax.f32 %v6129, 0.0
        %v6155 = vmax.f32 %v6134, 0.0
        %v6156 = vmax.f32 %v6139, 0.0
        %v6157 = vld [vmem:[#allocation19] sm:$0xff]
        %v6158 = vld [vmem:[#allocation19 + $0x8] sm:$0xff]
        %v6159 = vld [vmem:[#allocation19 + $0x10] sm:$0xff]
        %v6160 = vld [vmem:[#allocation19 + $0x18] sm:$0xff]
        %v6161 = vld [vmem:[#allocation19 + $0x20] sm:$0xff]
        %v6162 = vld [vmem:[#allocation19 + $0x28] sm:$0xff]
        %v6163 = vld [vmem:[#allocation19 + $0x30] sm:$0xff]
        %v6164 = vld [vmem:[#allocation19 + $0x38] sm:$0xff]
        %v6165 = vld [vmem:[#allocation19 + $0x40] sm:$0xff]
        %v6166 = vld [vmem:[#allocation19 + $0x48] sm:$0xff]
        %v6167 = vld [vmem:[#allocation19 + $0x50] sm:$0xf]
        %v6168 = vld [vmem:[#allocation20] sm:$0xff]
        %v6169 = vld [vmem:[#allocation20 + $0x8] sm:$0xff]
        %v6170 = vld [vmem:[#allocation20 + $0x10] sm:$0xff]
        %v6171 = vld [vmem:[#allocation20 + $0x18] sm:$0xff]
        %v6172 = vld [vmem:[#allocation20 + $0x20] sm:$0xff]
        %v6173 = vld [vmem:[#allocation20 + $0x28] sm:$0xff]
        %v6174 = vld [vmem:[#allocation20 + $0x30] sm:$0xff]
        %v6175 = vld [vmem:[#allocation20 + $0x38] sm:$0xff]
        %v6176 = vld [vmem:[#allocation20 + $0x40] sm:$0xff]
        %v6177 = vld [vmem:[#allocation20 + $0x48] sm:$0xff]
        %v6178 = vld [vmem:[#allocation20 + $0x50] sm:$0xf]
        %6180 = vset.pattern.permute.xlu0 0
        %6181 = vperm.xlu0 %6180, %v6168
        %v6182 = vpop.permute.xlu0 %6181
        %6185 = vset.pattern.permute.xlu0 0
        %6186 = vperm.xlu0 %6185, %v6169
        %v6187 = vpop.permute.xlu0 %6186
        %6190 = vset.pattern.permute.xlu0 0
        %6191 = vperm.xlu0 %6190, %v6170
        %v6192 = vpop.permute.xlu0 %6191
        %6195 = vset.pattern.permute.xlu0 0
        %6196 = vperm.xlu0 %6195, %v6171
        %v6197 = vpop.permute.xlu0 %6196
        %6200 = vset.pattern.permute.xlu0 0
        %6201 = vperm.xlu0 %6200, %v6172
        %v6202 = vpop.permute.xlu0 %6201
        %6205 = vset.pattern.permute.xlu0 0
        %6206 = vperm.xlu0 %6205, %v6173
        %v6207 = vpop.permute.xlu0 %6206
        %6210 = vset.pattern.permute.xlu0 0
        %6211 = vperm.xlu0 %6210, %v6174
        %v6212 = vpop.permute.xlu0 %6211
        %6215 = vset.pattern.permute.xlu0 0
        %6216 = vperm.xlu0 %6215, %v6175
        %v6217 = vpop.permute.xlu0 %6216
        %6220 = vset.pattern.permute.xlu0 0
        %6221 = vperm.xlu0 %6220, %v6176
        %v6222 = vpop.permute.xlu0 %6221
        %6225 = vset.pattern.permute.xlu0 0
        %6226 = vperm.xlu0 %6225, %v6177
        %v6227 = vpop.permute.xlu0 %6226
        %6230 = vset.pattern.permute.xlu0 0
        %6231 = vperm.xlu0 %6230, %v6178
        %v6232 = vpop.permute.xlu0 %6231
        %v6235 = vsel %vm4198, %v6157, 0
        %v6238 = vsel %vm4198, %v6158, 0
        %v6241 = vsel %vm4198, %v6159, 0
        %v6244 = vsel %vm4198, %v6160, 0
        %v6247 = vsel %vm4198, %v6161, 0
        %v6250 = vsel %vm4198, %v6162, 0
        %v6253 = vsel %vm4198, %v6163, 0
        %v6256 = vsel %vm4198, %v6164, 0
        %v6259 = vsel %vm4198, %v6165, 0
        %v6262 = vsel %vm4198, %v6166, 0
        %v6265 = vsel %vm4198, %v6167, 0
        %6267 = vmatprep.subr.mxu0 0.0
        %6268 = vmatpush1.msra.mxu0 0.0
        %6269 = vmatprep.subr.mxu0 0.0
        %6270 = vmatpush1.msra.mxu0 %v6156
        %6271 = vmatprep.subr.mxu0 0.0
        %6272 = vmatpush1.msra.mxu0 %v6155
        %6273 = vmatprep.subr.mxu0 0.0
        %6274 = vmatpush1.msra.mxu0 %v6154
        %6275 = vmatprep.subr.mxu0 0.0
        %6276 = vmatpush1.msra.mxu0 %v6153
        %6277 = vmatprep.subr.mxu0 0.0
        %6278 = vmatpush1.msra.mxu0 %v6152
        %6279 = vmatprep.subr.mxu0 0.0
        %6280 = vmatpush1.msra.mxu0 %v6151
        %6281 = vmatprep.subr.mxu0 0.0
        %6282 = vmatpush1.msra.mxu0 %v6150
        %6283 = vmatprep.subr.mxu0 0.0
        %6284 = vmatpush1.msra.mxu0 %v6149
        %6285 = vmatprep.subr.mxu0 0.0
        %6286 = vmatpush1.msra.mxu0 %v6148
        %6287 = vmatprep.subr.mxu0 0.0
        %6288 = vmatpush1.msra.mxu0 %v6147
        %6289 = vmatprep.subr.mxu0 0.0
        %6290 = vmatpush1.msra.mxu0 %v6146
        %6291 = vmatprep.subr.mxu0 0.0
        %6292 = vmatpush1.msra.mxu0 %v6145
        %6293 = vmatprep.subr.mxu0 0.0
        %6294 = vmatpush1.msra.mxu0 %v6144
        %6295 = vmatprep.subr.mxu0 0.0
        %6296 = vmatpush1.msra.mxu0 %v6143
        %6297 = vmatprep.subr.mxu0 0.0
        %6298 = vmatpush1.msra.mxu0 %v6142
        %6299 = vmatprep.subr.mxu0 0.0
        %6300 = vmatpush2.msra.mxu0 0.0
        %6301 = vmatprep.subr.mxu0 0.0
        %6302 = vmatpush2.msra.mxu0 0.0
        %6303 = vmatprep.subr.mxu0 0.0
        %6304 = vmatpush2.msra.mxu0 0.0
        %6305 = vmatprep.subr.mxu0 0.0
        %6306 = vmatpush2.msra.mxu0 0.0
        %6307 = vmatprep.subr.mxu0 0.0
        %6308 = vmatpush2.msra.mxu0 0.0
        %6309 = vmatprep.subr.mxu0 0.0
        %6310 = vmatpush2.msra.mxu0 0.0
        %6311 = vmatprep.subr.mxu0 0.0
        %6312 = vmatpush2.msra.mxu0 0.0
        %6313 = vmatprep.subr.mxu0 0.0
        %6314 = vmatpush2.msra.mxu0 0.0
        %6315 = vmatprep.subr.mxu0 0.0
        %6316 = vmatpush2.msra.mxu0 0.0
        %6317 = vmatprep.subr.mxu0 0.0
        %6318 = vmatpush2.msra.mxu0 0.0
        %6319 = vmatprep.subr.mxu0 0.0
        %6320 = vmatpush2.msra.mxu0 0.0
        %6321 = vmatprep.subr.mxu0 0.0
        %6322 = vmatpush2.msra.mxu0 0.0
        %6323 = vmatprep.subr.mxu0 0.0
        %6324 = vmatpush2.msra.mxu0 0.0
        %6325 = vmatprep.subr.mxu0 0.0
        %6326 = vmatpush2.msra.mxu0 0.0
        %6327 = vmatprep.subr.mxu0 0.0
        %6328 = vmatpush2.msra.mxu0 0.0
        %6329 = vmatprep.subr.mxu0 0.0
        %6330 = vmatpush2.msra.mxu0 0.0
        %6331 = vmatprep.mubr.f32.mxu0 0.0
        %6332 = vmatmul.mubr.f32.gmra.mxu0 %v6235
        %v6333 = vpop.f32.mrf.mxu0
        %v6334 = vadd.f32 %v6182, %v6333
        %v6335 = vpop.f32.mrf.mxu0
        %6336 = vmatprep.mubr.f32.mxu0 0.0
        %6337 = vmatmul.mubr.f32.gmra.mxu0 %v6238
        %v6338 = vpop.f32.mrf.mxu0
        %v6339 = vadd.f32 %v6187, %v6338
        %v6340 = vpop.f32.mrf.mxu0
        %6341 = vmatprep.mubr.f32.mxu0 0.0
        %6342 = vmatmul.mubr.f32.gmra.mxu0 %v6241
        %v6343 = vpop.f32.mrf.mxu0
        %v6344 = vadd.f32 %v6192, %v6343
        %v6345 = vpop.f32.mrf.mxu0
        %6346 = vmatprep.mubr.f32.mxu0 0.0
        %6347 = vmatmul.mubr.f32.gmra.mxu0 %v6244
        %v6348 = vpop.f32.mrf.mxu0
        %v6349 = vadd.f32 %v6197, %v6348
        %v6350 = vpop.f32.mrf.mxu0
        %6351 = vmatprep.mubr.f32.mxu0 0.0
        %6352 = vmatmul.mubr.f32.gmra.mxu0 %v6247
        %v6353 = vpop.f32.mrf.mxu0
        %v6354 = vadd.f32 %v6202, %v6353
        %v6355 = vpop.f32.mrf.mxu0
        %6356 = vmatprep.mubr.f32.mxu0 0.0
        %6357 = vmatmul.mubr.f32.gmra.mxu0 %v6250
        %v6358 = vpop.f32.mrf.mxu0
        %v6359 = vadd.f32 %v6207, %v6358
        %v6360 = vpop.f32.mrf.mxu0
        %6361 = vmatprep.mubr.f32.mxu0 0.0
        %6362 = vmatmul.mubr.f32.gmra.mxu0 %v6253
        %v6363 = vpop.f32.mrf.mxu0
        %v6364 = vadd.f32 %v6212, %v6363
        %v6365 = vpop.f32.mrf.mxu0
        %6366 = vmatprep.mubr.f32.mxu0 0.0
        %6367 = vmatmul.mubr.f32.gmra.mxu0 %v6256
        %v6368 = vpop.f32.mrf.mxu0
        %v6369 = vadd.f32 %v6217, %v6368
        %v6370 = vpop.f32.mrf.mxu0
        %6371 = vmatprep.mubr.f32.mxu0 0.0
        %6372 = vmatmul.mubr.f32.gmra.mxu0 %v6259
        %v6373 = vpop.f32.mrf.mxu0
        %v6374 = vadd.f32 %v6222, %v6373
        %v6375 = vpop.f32.mrf.mxu0
        %6376 = vmatprep.mubr.f32.mxu0 0.0
        %6377 = vmatmul.mubr.f32.gmra.mxu0 %v6262
        %v6378 = vpop.f32.mrf.mxu0
        %v6379 = vadd.f32 %v6227, %v6378
        %v6380 = vpop.f32.mrf.mxu0
        %6381 = vmatprep.mubr.f32.mxu0 0.0
        %6382 = vmatmul.mubr.f32.gmra.mxu0 %v6265
        %v6383 = vpop.f32.mrf.mxu0
        %v6384 = vadd.f32 %v6232, %v6383
        %v6385 = vpop.f32.mrf.mxu0
        %6386 = vdwg.mxu0
        %v6387 = vmax.f32 %v6334, 0.0
        %v6388 = vmax.f32 %v6339, 0.0
        %v6389 = vmax.f32 %v6344, 0.0
        %v6390 = vmax.f32 %v6349, 0.0
        %v6391 = vmax.f32 %v6354, 0.0
        %v6392 = vmax.f32 %v6359, 0.0
        %v6393 = vmax.f32 %v6364, 0.0
        %v6394 = vmax.f32 %v6369, 0.0
        %v6395 = vmax.f32 %v6374, 0.0
        %v6396 = vmax.f32 %v6379, 0.0
        %v6397 = vmax.f32 %v6384, 0.0
        %v6398 = vld [vmem:[#allocation22] sm:$0xff]
        %v6399 = vld [vmem:[#allocation22 + $0x8] sm:$0x3]
        %v6400 = vld [vmem:[%s14] sm:$0xff]
        %v6401 = vld [vmem:[%s14 + $0x8] sm:$0x3]
        %6403 = vset.pattern.permute.xlu0 0
        %6404 = vperm.xlu0 %6403, %v6400
        %v6405 = vpop.permute.xlu0 %6404
        %6408 = vset.pattern.permute.xlu0 0
        %6409 = vperm.xlu0 %6408, %v6401
        %v6410 = vpop.permute.xlu0 %6409
        %vm6412 = vcmask 687104
        %v6414 = vsel %vm6412, %v6398, 0
        %v6417 = vsel %vm6412, %v6399, 0
        %vm6419 = vcmask 1043456
        %v6421 = vsel %vm6419, %v6397, 0
        %6423 = vmatprep.subr.mxu0 0.0
        %6424 = vmatpush1.msra.mxu0 0.0
        %6425 = vmatprep.subr.mxu0 0.0
        %6426 = vmatpush1.msra.mxu0 0.0
        %6427 = vmatprep.subr.mxu0 0.0
        %6428 = vmatpush1.msra.mxu0 0.0
        %6429 = vmatprep.subr.mxu0 0.0
        %6430 = vmatpush1.msra.mxu0 0.0
        %6431 = vmatprep.subr.mxu0 0.0
        %6432 = vmatpush1.msra.mxu0 0.0
        %6433 = vmatprep.subr.mxu0 0.0
        %6434 = vmatpush1.msra.mxu0 %v6421
        %6435 = vmatprep.subr.mxu0 0.0
        %6436 = vmatpush1.msra.mxu0 %v6396
        %6437 = vmatprep.subr.mxu0 0.0
        %6438 = vmatpush1.msra.mxu0 %v6395
        %6439 = vmatprep.subr.mxu0 0.0
        %6440 = vmatpush1.msra.mxu0 %v6394
        %6441 = vmatprep.subr.mxu0 0.0
        %6442 = vmatpush1.msra.mxu0 %v6393
        %6443 = vmatprep.subr.mxu0 0.0
        %6444 = vmatpush1.msra.mxu0 %v6392
        %6445 = vmatprep.subr.mxu0 0.0
        %6446 = vmatpush1.msra.mxu0 %v6391
        %6447 = vmatprep.subr.mxu0 0.0
        %6448 = vmatpush1.msra.mxu0 %v6390
        %6449 = vmatprep.subr.mxu0 0.0
        %6450 = vmatpush1.msra.mxu0 %v6389
        %6451 = vmatprep.subr.mxu0 0.0
        %6452 = vmatpush1.msra.mxu0 %v6388
        %6453 = vmatprep.subr.mxu0 0.0
        %6454 = vmatpush1.msra.mxu0 %v6387
        %6455 = vmatprep.subr.mxu0 0.0
        %6456 = vmatpush2.msra.mxu0 0.0
        %6457 = vmatprep.subr.mxu0 0.0
        %6458 = vmatpush2.msra.mxu0 0.0
        %6459 = vmatprep.subr.mxu0 0.0
        %6460 = vmatpush2.msra.mxu0 0.0
        %6461 = vmatprep.subr.mxu0 0.0
        %6462 = vmatpush2.msra.mxu0 0.0
        %6463 = vmatprep.subr.mxu0 0.0
        %6464 = vmatpush2.msra.mxu0 0.0
        %6465 = vmatprep.subr.mxu0 0.0
        %6466 = vmatpush2.msra.mxu0 0.0
        %6467 = vmatprep.subr.mxu0 0.0
        %6468 = vmatpush2.msra.mxu0 0.0
        %6469 = vmatprep.subr.mxu0 0.0
        %6470 = vmatpush2.msra.mxu0 0.0
        %6471 = vmatprep.subr.mxu0 0.0
        %6472 = vmatpush2.msra.mxu0 0.0
        %6473 = vmatprep.subr.mxu0 0.0
        %6474 = vmatpush2.msra.mxu0 0.0
        %6475 = vmatprep.subr.mxu0 0.0
        %6476 = vmatpush2.msra.mxu0 0.0
        %6477 = vmatprep.subr.mxu0 0.0
        %6478 = vmatpush2.msra.mxu0 0.0
        %6479 = vmatprep.subr.mxu0 0.0
        %6480 = vmatpush2.msra.mxu0 0.0
        %6481 = vmatprep.subr.mxu0 0.0
        %6482 = vmatpush2.msra.mxu0 0.0
        %6483 = vmatprep.subr.mxu0 0.0
        %6484 = vmatpush2.msra.mxu0 0.0
        %6485 = vmatprep.subr.mxu0 0.0
        %6486 = vmatpush2.msra.mxu0 0.0
        %6487 = vmatprep.mubr.f32.mxu0 0.0
        %6488 = vmatmul.mubr.f32.gmra.mxu0 %v6414
        %v6489 = vpop.f32.mrf.mxu0
        %v6490 = vadd.f32 %v6405, %v6489
        %v6491 = vpop.f32.mrf.mxu0
        %6492 = vmatprep.mubr.f32.mxu0 0.0
        %6493 = vmatmul.mubr.f32.gmra.mxu0 %v6417
        %v6494 = vpop.f32.mrf.mxu0
        %v6495 = vadd.f32 %v6410, %v6494
        %v6496 = vpop.f32.mrf.mxu0
        %6497 = vdwg.mxu0
        %vm6498 = vcmask 1041408
        %v6499 = vsel %vm6498, %v6495, -inf
        %v6500 = vmax.f32 %v6490, %v6499
        %v6501 = vrot.slane %v6500, 4
        %v6502 = vmax.f32 %v6500, %v6501
        %v6503 = vrot.slane %v6502, 2
        %v6504 = vmax.f32 %v6502, %v6503
        %v6505 = vrot.slane %v6504, 1
        %v6506 = vmax.f32 %v6504, %v6505
        %v6507 = vsub.f32 %v6490, %v6506
        %v6508 = vsub.f32 %v6495, %v6506
        %v6509 = vmul.f32 %v6507, 1.442695
        %v6510 = vpow.pop %v6509
        %v6511 = vmul.f32 %v6508, 1.442695
        %v6512 = vpow.pop %v6511
        %v6513 = vsel %vm6498, %v6512, 0.0
        %v6514 = vadd.f32 %v6510, %v6513
        %v6515 = vrot.slane %v6514, 4
        %v6516 = vadd.f32 %v6514, %v6515
        %v6517 = vrot.slane %v6516, 2
        %v6518 = vadd.f32 %v6516, %v6517
        %v6519 = vrot.slane %v6518, 1
        %v6520 = vadd.f32 %v6518, %v6519
        %v6521 = vrcp.pop %v6520
        %v6522 = vmul.f32 %v6510, %v6521
        %v6523 = vmul.f32 %v6512, %v6521
        %vm6524 = vcmask 7168
        %6525 = vst.msk [vmem:[%s668] sm:$0xff] %vm6524, %v6522
        %vm6526 = vcmask 1024
        %6527 = vst.msk [vmem:[%s668 + $0x8] sm:$0x3] %vm6526, %v6523
        %p6528 = scmp.lt.s32.totalorder %s33, 1
        %s6529 = scalar_select %p6528, %s33, 1
        %s6530 = smul.addr %s6529, 2
        %s6531 = smul.addr %s6530, 8
        %s6532 = scalar_lea.vmem %s16, %s6531
        // Predicated region
        $region129: #{_lambda_.1} parent=83 // pred_check
          %p6533 = pneg %p392
        $region130: #{_lambda_.1} parent=83 // pred_check_branch
          %6535 = sbr.rel (%p6533) target = $region132
        $region131: #{_lambda_.1} parent=83 // pred_region
          _
        $region132: #{_lambda_.1} parent=83 // pred_fallthru
          _
      $region84: #{_lambda_.1} parent=5 // pred_fallthru
        _
      %p6536 = scmp.le.s32.totalorder 2, %s28
      // Predicated region
      $region133: #{_lambda_.1} parent=5 // pred_check
        %p6537 = pneg %p6536
      $region134: #{_lambda_.1} parent=5 // pred_check_branch
        %6539 = sbr.rel (%p6537) target = $region136
      $region135: #{_lambda_.1} parent=5 // pred_region
        %s6540 = ssub.s32 %s28, 2
        // Predicated region
        $region137: #{_lambda_.1} parent=135 // pred_check
          %p6541 = pneg %p398
        $region138: #{_lambda_.1} parent=135 // pred_check_branch
          %6543 = sbr.rel (%p6541) target = $region140
        $region139: #{_lambda_.1} parent=135 // pred_region
          %p6544 = scmp.lt.s32.totalorder %s34, 1
          %s6545 = scalar_select %p6544, %s34, 1
          %s6546 = smul.addr %s6545, 2
          %s6547 = smul.addr %s6546, 8
          %s6548 = scalar_lea.vmem %s16, %s6547
        $region140: #{_lambda_.1} parent=135 // pred_fallthru
          _
      $region136: #{_lambda_.1} parent=5 // pred_fallthru
        _
    $region6: #{_lambda_.1} parent=1 // loop_footer
      %s32 = sadd.s32 1, %s28
    $region7: #{_lambda_.1} parent=1 // loop_footer_branch
      %27 = sbr.rel target = $region3
    $region8: #{_lambda_.1} parent=1 // loop_exit
      _
    %6549 = vsyncpa [#allocation7], 1
    %s6550 = scalar_lea.sflag [#allocation7], 1
    %6551 = vsyncpa %s6550, 1
    %6552 = vsyncpa [#allocation9], 1
    %6553 = vsyncpa [#allocation12], 1
    %6554 = vsyncpa [#allocation15], 1
    %6555 = vsyncpa [#allocation18], 1
    %6556 = vsyncpa [#allocation21], 1

</llo_original>
